<compile_context>
chip_gen: v6e
topology: v6e:2x2x1
jax: 0.10.0
libtpu: 0.0.40
codegen_flags: <defaults>
</compile_context>

<pallas_src>
import functools

import jax
import jax.numpy as jnp
from jax.experimental import pallas as pl
from jax.experimental.pallas import tpu as pltpu

EPS = 1e-5
LANES = 128


def _round_up(x, m):
    return (x + m - 1) // m * m


def _pad_last(x, target):
    pad = target - x.shape[-1]
    if pad == 0:
        return x
    return jnp.pad(x, [(0, 0)] * (x.ndim - 1) + [(0, pad)])


def _conv3x3_accum(read_patch, w_ref, hw, cp):
    """Sum of nine shifted (HW, C) @ (C, C) matmuls, f32 accumulation."""
    acc = jnp.zeros((hw, cp), jnp.float32)
    for ky in range(3):
        for kx in range(3):
            acc = acc + jnp.dot(read_patch(ky, kx), w_ref[ky * 3 + kx],
                                preferred_element_type=jnp.float32)
    return acc


# ---------------------------------------------------------------------------
# Kernel 1: conv1 (9 shifted matmuls) + bias, per-batch BN partial sums.
# ---------------------------------------------------------------------------
def _conv1_kernel(H, W, Cp, xp_ref, w_ref, b_ref, y_ref, s_ref, q_ref):
    hw = H * W

    def patch(ky, kx):                       # (HW, Cp) bf16 slice of padded img
        return xp_ref[0, ky:ky + H, kx:kx + W, :].reshape(hw, Cp)

    y = _conv3x3_accum(patch, w_ref, hw, Cp) + b_ref[...]
    y_ref[0] = y
    s_ref[0] = jnp.sum(y, axis=0, keepdims=True)
    q_ref[0] = jnp.sum(y * y, axis=0, keepdims=True)


# ---------------------------------------------------------------------------
# Kernel 2: bn1 affine + relu + conv2 + bias, per-batch BN/SE partial sums.
# ---------------------------------------------------------------------------
def _conv2_kernel(H, W, Cp, y_ref, a_ref, c_ref, w_ref, b_ref,
                  z_ref, s_ref, q_ref, pad_ref):
    hw = H * W
    act = jnp.maximum(y_ref[0] * a_ref[...] + c_ref[...], 0.0)   # (HW, Cp) f32

    # Spatially padded activation in a VMEM scratch (zero halo each step so the
    # kernel stays correct when the batch axis is sharded across cores).
    pad_ref[...] = jnp.zeros_like(pad_ref)
    pad_ref[1:H + 1, 1:W + 1, :] = act.reshape(H, W, Cp)

    def patch(ky, kx):                       # bf16 operand for the MXU
        return pad_ref[ky:ky + H, kx:kx + W, :].reshape(hw, Cp).astype(jnp.bfloat16)

    z = _conv3x3_accum(patch, w_ref, hw, Cp) + b_ref[...]
    z_ref[0] = z
    s_ref[0] = jnp.sum(z, axis=0, keepdims=True)
    q_ref[0] = jnp.sum(z * z, axis=0, keepdims=True)


# ---------------------------------------------------------------------------
# Kernel 3: bn2 affine + SE (fc1/relu/fc2/sigmoid, once per image) + excite
#           + residual add + relu.
# ---------------------------------------------------------------------------
def _epilogue_kernel(z_ref, i_ref, a_ref, c_ref, sq_ref,
                     wf1_ref, bf1_ref, wf2_ref, bf2_ref, o_ref):
    h = jnp.dot(sq_ref[0], wf1_ref[...], preferred_element_type=jnp.float32)
    h = jnp.maximum(h + bf1_ref[...], 0.0)                        # (1, Crp)
    logit = jnp.dot(h, wf2_ref[...], preferred_element_type=jnp.float32)
    logit = logit + bf2_ref[...]                                  # (1, Cp)
    gate = pl.reciprocal(1.0 + jnp.exp(-logit), approx=True)      # sigmoid (EUP)
    zbn = z_ref[0] * a_ref[...] + c_ref[...]
    o_ref[0] = jnp.maximum(zbn * gate + i_ref[0], 0.0)


# ---------------------------------------------------------------------------
# JAX glue
# ---------------------------------------------------------------------------
def _affine_from_stats(sum_c, sqsum_c, count, gamma, beta):
    mean = sum_c / count
    var = jnp.maximum(sqsum_c / count - mean * mean, 0.0)   # biased (train mode)
    scale = gamma * jax.lax.rsqrt(var + EPS)
    shift = beta - mean * scale
    return scale, shift


def init_params(key, cin, cout, ratio_reduce=2):
    cr = cout // ratio_reduce
    ks = jax.random.split(key, 6)
    return dict(
        w1=jax.random.normal(ks[0], (3, 3, cin, cout), jnp.float32) * 0.1,   # HWIO
        b1=jax.random.normal(ks[1], (cout,), jnp.float32) * 0.1,
        g1=jnp.ones((cout,), jnp.float32),
        be1=jnp.zeros((cout,), jnp.float32),
        w2=jax.random.normal(ks[2], (3, 3, cout, cout), jnp.float32) * 0.1,
        b2=jax.random.normal(ks[3], (cout,), jnp.float32) * 0.1,
        g2=jnp.ones((cout,), jnp.float32),
        be2=jnp.zeros((cout,), jnp.float32),
        wf1=jax.random.normal(ks[4], (cout, cr), jnp.float32) * 0.3,
        bf1=jnp.zeros((cr,), jnp.float32),
        wf2=jax.random.normal(ks[5], (cr, cout), jnp.float32) * 0.3,
        bf2=jnp.zeros((cout,), jnp.float32),
    )


def block_forward(x_nchw, P):
    N, Cin, H, W = x_nchw.shape
    Cout = P['w1'].shape[-1]
    Cr = P['wf1'].shape[-1]
    assert Cin == Cout, "identity_downsample=None requires Cin == Cout"
    HW, M = H * W, N * H * W
    Cp = _round_up(Cout, LANES)           # lane-dense channel axis
    Crp = _round_up(Cr, LANES)

    cparams = pltpu.CompilerParams(
        dimension_semantics=("parallel",),            # batch tiles -> megacore
        vmem_limit_bytes=32 * 1024 * 1024)

    x_nhwc = jnp.transpose(x_nchw, (0, 2, 3, 1)).astype(jnp.float32)
    idn = _pad_last(x_nhwc, Cp).reshape(N, HW, Cp)                           # f32
    xp = jnp.pad(x_nhwc, ((0, 0), (1, 1), (1, 1), (0, Cp - Cin))).astype(jnp.bfloat16)

    def conv_w(w):    # (3,3,ci,co) -> (9, Cp, Cp) bf16
        ci, co = w.shape[2], w.shape[3]
        wp = jnp.pad(w, ((0, 0), (0, 0), (0, Cp - ci), (0, Cp - co)))
        return wp.reshape(9, Cp, Cp).astype(jnp.bfloat16)

    w1 = conv_w(P['w1']); b1 = _pad_last(P['b1'], Cp).reshape(1, Cp)
    w2 = conv_w(P['w2']); b2 = _pad_last(P['b2'], Cp).reshape(1, Cp)
    g1 = _pad_last(P['g1'], Cp); be1 = _pad_last(P['be1'], Cp)
    g2 = _pad_last(P['g2'], Cp); be2 = _pad_last(P['be2'], Cp)
    wf1 = jnp.pad(P['wf1'], ((0, Cp - Cout), (0, Crp - Cr)))
    bf1 = _pad_last(P['bf1'], Crp).reshape(1, Crp)
    wf2 = jnp.pad(P['wf2'], ((0, Crp - Cr), (0, Cp - Cout)))
    bf2 = _pad_last(P['bf2'], Cp).reshape(1, Cp)

    # ---- pass 1: conv1 + bias  (+ per-batch BN partial sums) ---------------
    y_raw, s1, q1 = pl.pallas_call(
        functools.partial(_conv1_kernel, H, W, Cp),
        grid=(N,),
        in_specs=[
            pl.BlockSpec((1, H + 2, W + 2, Cp), lambda n: (n, 0, 0, 0)),
            pl.BlockSpec((9, Cp, Cp), lambda n: (0, 0, 0)),
            pl.BlockSpec((1, Cp), lambda n: (0, 0)),
        ],
        out_specs=[
            pl.BlockSpec((1, HW, Cp), lambda n: (n, 0, 0)),
            pl.BlockSpec((1, 1, Cp), lambda n: (n, 0, 0)),
            pl.BlockSpec((1, 1, Cp), lambda n: (n, 0, 0)),
        ],
        out_shape=[
            jax.ShapeDtypeStruct((N, HW, Cp), jnp.float32),
            jax.ShapeDtypeStruct((N, 1, Cp), jnp.float32),
            jax.ShapeDtypeStruct((N, 1, Cp), jnp.float32),
        ],
        compiler_params=cparams,
    )(xp, w1, b1)

    a1, c1 = _affine_from_stats(s1.sum(axis=0)[0], q1.sum(axis=0)[0], M, g1, be1)

    # ---- pass 2: bn1 affine + relu + conv2 + bias (+ BN/SE partial sums) ---
    z_raw, s2, q2 = pl.pallas_call(
        functools.partial(_conv2_kernel, H, W, Cp),
        grid=(N,),
        in_specs=[
            pl.BlockSpec((1, HW, Cp), lambda n: (n, 0, 0)),
            pl.BlockSpec((1, Cp), lambda n: (0, 0)),
            pl.BlockSpec((1, Cp), lambda n: (0, 0)),
            pl.BlockSpec((9, Cp, Cp), lambda n: (0, 0, 0)),
            pl.BlockSpec((1, Cp), lambda n: (0, 0)),
        ],
        out_specs=[
            pl.BlockSpec((1, HW, Cp), lambda n: (n, 0, 0)),
            pl.BlockSpec((1, 1, Cp), lambda n: (n, 0, 0)),
            pl.BlockSpec((1, 1, Cp), lambda n: (n, 0, 0)),
        ],
        out_shape=[
            jax.ShapeDtypeStruct((N, HW, Cp), jnp.float32),
            jax.ShapeDtypeStruct((N, 1, Cp), jnp.float32),
            jax.ShapeDtypeStruct((N, 1, Cp), jnp.float32),
        ],
        scratch_shapes=[pltpu.VMEM((H + 2, W + 2, Cp), jnp.float32)],
        compiler_params=cparams,
    )(y_raw, a1.reshape(1, Cp), c1.reshape(1, Cp), w2, b2)

    a2, c2 = _affine_from_stats(s2.sum(axis=0)[0], q2.sum(axis=0)[0], M, g2, be2)
    # SE squeeze = mean over HW of bn2(z) = (per-batch raw sum / HW)*a2 + c2
    sq = (s2[:, 0, :] / HW * a2[None, :] + c2[None, :]).reshape(N, 1, Cp)

    # ---- pass 3: bn2 affine + SE + residual + relu -------------------------
    out = pl.pallas_call(
        _epilogue_kernel,
        grid=(N,),
        in_specs=[
            pl.BlockSpec((1, HW, Cp), lambda n: (n, 0, 0)),
            pl.BlockSpec((1, HW, Cp), lambda n: (n, 0, 0)),
            pl.BlockSpec((1, Cp), lambda n: (0, 0)),
            pl.BlockSpec((1, Cp), lambda n: (0, 0)),
            pl.BlockSpec((1, 1, Cp), lambda n: (n, 0, 0)),
            pl.BlockSpec((Cp, Crp), lambda n: (0, 0)),
            pl.BlockSpec((1, Crp), lambda n: (0, 0)),
            pl.BlockSpec((Crp, Cp), lambda n: (0, 0)),
            pl.BlockSpec((1, Cp), lambda n: (0, 0)),
        ],
        out_specs=pl.BlockSpec((1, HW, Cp), lambda n: (n, 0, 0)),
        out_shape=jax.ShapeDtypeStruct((N, HW, Cp), jnp.float32),
        compiler_params=cparams,
    )(z_raw, idn, a2.reshape(1, Cp), c2.reshape(1, Cp), sq, wf1, bf1, wf2, bf2)

    out = out.reshape(N, H, W, Cp)[:, :, :, :Cout]
    return jnp.transpose(out, (0, 3, 1, 2))   # back to NCHW


# ---------------------------------------------------------------------------
# Pure-JAX reference (f32) for the self-check
# ---------------------------------------------------------------------------
def _reference_forward(x_nchw, P):
    dn = ('NCHW', 'HWIO', 'NCHW')

    def bn(t, g, b):
        m = t.mean(axis=(0, 2, 3), keepdims=True)
        v = ((t - m) ** 2).mean(axis=(0, 2, 3), keepdims=True)
        return (t - m) / jnp.sqrt(v + EPS) * g.reshape(1, -1, 1, 1) + b.reshape(1, -1, 1, 1)

    y = jax.lax.conv_general_dilated(x_nchw, P['w1'], (1, 1), 'SAME', dimension_numbers=dn)
    y = jnp.maximum(bn(y + P['b1'].reshape(1, -1, 1, 1), P['g1'], P['be1']), 0.0)
    z = jax.lax.conv_general_dilated(y, P['w2'], (1, 1), 'SAME', dimension_numbers=dn)
    z = bn(z + P['b2'].reshape(1, -1, 1, 1), P['g2'], P['be2'])
    sq = z.mean(axis=(2, 3))
    h = jnp.maximum(sq @ P['wf1'] + P['bf1'][None, :], 0.0)
    s = 1.0 / (1.0 + jnp.exp(-(h @ P['wf2'] + P['bf2'][None, :])))
    return jnp.maximum(z * s[:, :, None, None] + x_nchw, 0.0)


if __name__ == "__main__":
    key = jax.random.PRNGKey(0)
    k_x, k_p = jax.random.split(key)

    N, C, H, W = 2, 8, 16, 16            # in_channels == out_channels == 8
    x = jax.random.normal(k_x, (N, C, H, W), jnp.float32)
    params = init_params(k_p, cin=C, cout=C, ratio_reduce=2)

    out = jax.jit(block_forward)(x, params)
    out = jax.block_until_ready(out)

    ref = _reference_forward(x, params)
    assert out.shape == (N, C, H, W)
    err = float(jnp.max(jnp.abs(out - ref)))
    # Conv matmul operands are bf16 on the MXU; tolerance sized accordingly
    # (the f32 reference differs by the bf16 operand rounding).
    assert jnp.allclose(out, ref, atol=5e-2, rtol=5e-2), err

    print("KERNEL_OK")
</pallas_src>

<mosaic_0001>
module attributes {stable_mosaic.version = 11 : i64} {
  func.func @_conv1_kernel(%arg0: i32, %arg1: memref<1x18x18x128xbf16, #tpu.memory_space<vmem>>, %arg2: memref<9x128x128xbf16, #tpu.memory_space<vmem>>, %arg3: memref<1x128xf32, #tpu.memory_space<vmem>>, %arg4: memref<1x256x128xf32, #tpu.memory_space<vmem>>, %arg5: memref<1x1x128xf32, #tpu.memory_space<vmem>>, %arg6: memref<1x1x128xf32, #tpu.memory_space<vmem>>) attributes {dimension_semantics = [#tpu.dimension_semantics<parallel>], iteration_bounds = array<i64: 2>, scalar_prefetch = 0 : i64, scratch_operands = 0 : i64, tpu.core_type = #tpu.core_type<tc>, window_params = [{transform_indices = @transform_0, window_bounds = array<i64: 1, 18, 18, 128>}, {pipeline_mode = #tpu.pipeline_mode<synchronous>, transform_indices = @transform_1, window_bounds = array<i64: 9, 128, 128>}, {pipeline_mode = #tpu.pipeline_mode<synchronous>, transform_indices = @transform_2, window_bounds = array<i64: 1, 128>}, {transform_indices = @transform_3, window_bounds = array<i64: 1, 256, 128>}, {transform_indices = @transform_4, window_bounds = array<i64: 1, 1, 128>}, {transform_indices = @transform_5, window_bounds = array<i64: 1, 1, 128>}]} {
    %cst = arith.constant 0.000000e+00 : f32
    %0 = vector.broadcast %cst : f32 to vector<256x128xf32>
    %c0 = arith.constant 0 : index
    %c0_0 = arith.constant 0 : index
    %c0_1 = arith.constant 0 : index
    %c0_2 = arith.constant 0 : index
    %1 = vector.load %arg1[%c0, %c0_0, %c0_1, %c0_2] : memref<1x18x18x128xbf16, #tpu.memory_space<vmem>>, vector<1x16x16x128xbf16>
    %2 = vector.shape_cast %1 : vector<1x16x16x128xbf16> to vector<16x16x128xbf16>
    %3 = vector.shape_cast %2 : vector<16x16x128xbf16> to vector<256x128xbf16>
    %c0_3 = arith.constant 0 : index
    %c0_4 = arith.constant 0 : index
    %c0_5 = arith.constant 0 : index
    %4 = vector.load %arg2[%c0_3, %c0_4, %c0_5] : memref<9x128x128xbf16, #tpu.memory_space<vmem>>, vector<1x128x128xbf16>
    %5 = vector.shape_cast %4 : vector<1x128x128xbf16> to vector<128x128xbf16>
    %cst_6 = arith.constant dense<0.000000e+00> : vector<256x128xf32>
    %6 = tpu.matmul %3, %5, %cst_6 {dimension_numbers = #tpu.dot_dimension_numbers<[1], [0], [0], [1], [0, 0, 1, 1], [], []>} : vector<256x128xbf16>, vector<128x128xbf16>, vector<256x128xf32> -> vector<256x128xf32>
    %7 = arith.addf %0, %6 : vector<256x128xf32>
    %c0_7 = arith.constant 0 : index
    %c0_8 = arith.constant 0 : index
    %c1 = arith.constant 1 : index
    %c0_9 = arith.constant 0 : index
    %8 = vector.load %arg1[%c0_7, %c0_8, %c1, %c0_9] : memref<1x18x18x128xbf16, #tpu.memory_space<vmem>>, vector<1x16x16x128xbf16>
    %9 = vector.shape_cast %8 : vector<1x16x16x128xbf16> to vector<16x16x128xbf16>
    %10 = vector.shape_cast %9 : vector<16x16x128xbf16> to vector<256x128xbf16>
    %c1_10 = arith.constant 1 : index
    %c0_11 = arith.constant 0 : index
    %c0_12 = arith.constant 0 : index
    %11 = vector.load %arg2[%c1_10, %c0_11, %c0_12] : memref<9x128x128xbf16, #tpu.memory_space<vmem>>, vector<1x128x128xbf16>
    %12 = vector.shape_cast %11 : vector<1x128x128xbf16> to vector<128x128xbf16>
    %cst_13 = arith.constant dense<0.000000e+00> : vector<256x128xf32>
    %13 = tpu.matmul %10, %12, %cst_13 {dimension_numbers = #tpu.dot_dimension_numbers<[1], [0], [0], [1], [0, 0, 1, 1], [], []>} : vector<256x128xbf16>, vector<128x128xbf16>, vector<256x128xf32> -> vector<256x128xf32>
    %14 = arith.addf %7, %13 : vector<256x128xf32>
    %c0_14 = arith.constant 0 : index
    %c0_15 = arith.constant 0 : index
    %c2 = arith.constant 2 : index
    %c0_16 = arith.constant 0 : index
    %15 = vector.load %arg1[%c0_14, %c0_15, %c2, %c0_16] : memref<1x18x18x128xbf16, #tpu.memory_space<vmem>>, vector<1x16x16x128xbf16>
    %16 = vector.shape_cast %15 : vector<1x16x16x128xbf16> to vector<16x16x128xbf16>
    %17 = vector.shape_cast %16 : vector<16x16x128xbf16> to vector<256x128xbf16>
    %c2_17 = arith.constant 2 : index
    %c0_18 = arith.constant 0 : index
    %c0_19 = arith.constant 0 : index
    %18 = vector.load %arg2[%c2_17, %c0_18, %c0_19] : memref<9x128x128xbf16, #tpu.memory_space<vmem>>, vector<1x128x128xbf16>
    %19 = vector.shape_cast %18 : vector<1x128x128xbf16> to vector<128x128xbf16>
    %cst_20 = arith.constant dense<0.000000e+00> : vector<256x128xf32>
    %20 = tpu.matmul %17, %19, %cst_20 {dimension_numbers = #tpu.dot_dimension_numbers<[1], [0], [0], [1], [0, 0, 1, 1], [], []>} : vector<256x128xbf16>, vector<128x128xbf16>, vector<256x128xf32> -> vector<256x128xf32>
    %21 = arith.addf %14, %20 : vector<256x128xf32>
    %c0_21 = arith.constant 0 : index
    %c1_22 = arith.constant 1 : index
    %c0_23 = arith.constant 0 : index
    %c0_24 = arith.constant 0 : index
    %22 = vector.load %arg1[%c0_21, %c1_22, %c0_23, %c0_24] : memref<1x18x18x128xbf16, #tpu.memory_space<vmem>>, vector<1x16x16x128xbf16>
    %23 = vector.shape_cast %22 : vector<1x16x16x128xbf16> to vector<16x16x128xbf16>
    %24 = vector.shape_cast %23 : vector<16x16x128xbf16> to vector<256x128xbf16>
    %c3 = arith.constant 3 : index
    %c0_25 = arith.constant 0 : index
    %c0_26 = arith.constant 0 : index
    %25 = vector.load %arg2[%c3, %c0_25, %c0_26] : memref<9x128x128xbf16, #tpu.memory_space<vmem>>, vector<1x128x128xbf16>
    %26 = vector.shape_cast %25 : vector<1x128x128xbf16> to vector<128x128xbf16>
    %cst_27 = arith.constant dense<0.000000e+00> : vector<256x128xf32>
    %27 = tpu.matmul %24, %26, %cst_27 {dimension_numbers = #tpu.dot_dimension_numbers<[1], [0], [0], [1], [0, 0, 1, 1], [], []>} : vector<256x128xbf16>, vector<128x128xbf16>, vector<256x128xf32> -> vector<256x128xf32>
    %28 = arith.addf %21, %27 : vector<256x128xf32>
    %c0_28 = arith.constant 0 : index
    %c1_29 = arith.constant 1 : index
    %c1_30 = arith.constant 1 : index
    %c0_31 = arith.constant 0 : index
    %29 = vector.load %arg1[%c0_28, %c1_29, %c1_30, %c0_31] : memref<1x18x18x128xbf16, #tpu.memory_space<vmem>>, vector<1x16x16x128xbf16>
    %30 = vector.shape_cast %29 : vector<1x16x16x128xbf16> to vector<16x16x128xbf16>
    %31 = vector.shape_cast %30 : vector<16x16x128xbf16> to vector<256x128xbf16>
    %c4 = arith.constant 4 : index
    %c0_32 = arith.constant 0 : index
    %c0_33 = arith.constant 0 : index
    %32 = vector.load %arg2[%c4, %c0_32, %c0_33] : memref<9x128x128xbf16, #tpu.memory_space<vmem>>, vector<1x128x128xbf16>
    %33 = vector.shape_cast %32 : vector<1x128x128xbf16> to vector<128x128xbf16>
    %cst_34 = arith.constant dense<0.000000e+00> : vector<256x128xf32>
    %34 = tpu.matmul %31, %33, %cst_34 {dimension_numbers = #tpu.dot_dimension_numbers<[1], [0], [0], [1], [0, 0, 1, 1], [], []>} : vector<256x128xbf16>, vector<128x128xbf16>, vector<256x128xf32> -> vector<256x128xf32>
    %35 = arith.addf %28, %34 : vector<256x128xf32>
    %c0_35 = arith.constant 0 : index
    %c1_36 = arith.constant 1 : index
    %c2_37 = arith.constant 2 : index
    %c0_38 = arith.constant 0 : index
    %36 = vector.load %arg1[%c0_35, %c1_36, %c2_37, %c0_38] : memref<1x18x18x128xbf16, #tpu.memory_space<vmem>>, vector<1x16x16x128xbf16>
    %37 = vector.shape_cast %36 : vector<1x16x16x128xbf16> to vector<16x16x128xbf16>
    %38 = vector.shape_cast %37 : vector<16x16x128xbf16> to vector<256x128xbf16>
    %c5 = arith.constant 5 : index
    %c0_39 = arith.constant 0 : index
    %c0_40 = arith.constant 0 : index
    %39 = vector.load %arg2[%c5, %c0_39, %c0_40] : memref<9x128x128xbf16, #tpu.memory_space<vmem>>, vector<1x128x128xbf16>
    %40 = vector.shape_cast %39 : vector<1x128x128xbf16> to vector<128x128xbf16>
    %cst_41 = arith.constant dense<0.000000e+00> : vector<256x128xf32>
    %41 = tpu.matmul %38, %40, %cst_41 {dimension_numbers = #tpu.dot_dimension_numbers<[1], [0], [0], [1], [0, 0, 1, 1], [], []>} : vector<256x128xbf16>, vector<128x128xbf16>, vector<256x128xf32> -> vector<256x128xf32>
    %42 = arith.addf %35, %41 : vector<256x128xf32>
    %c0_42 = arith.constant 0 : index
    %c2_43 = arith.constant 2 : index
    %c0_44 = arith.constant 0 : index
    %c0_45 = arith.constant 0 : index
    %43 = vector.load %arg1[%c0_42, %c2_43, %c0_44, %c0_45] : memref<1x18x18x128xbf16, #tpu.memory_space<vmem>>, vector<1x16x16x128xbf16>
    %44 = vector.shape_cast %43 : vector<1x16x16x128xbf16> to vector<16x16x128xbf16>
    %45 = vector.shape_cast %44 : vector<16x16x128xbf16> to vector<256x128xbf16>
    %c6 = arith.constant 6 : index
    %c0_46 = arith.constant 0 : index
    %c0_47 = arith.constant 0 : index
    %46 = vector.load %arg2[%c6, %c0_46, %c0_47] : memref<9x128x128xbf16, #tpu.memory_space<vmem>>, vector<1x128x128xbf16>
    %47 = vector.shape_cast %46 : vector<1x128x128xbf16> to vector<128x128xbf16>
    %cst_48 = arith.constant dense<0.000000e+00> : vector<256x128xf32>
    %48 = tpu.matmul %45, %47, %cst_48 {dimension_numbers = #tpu.dot_dimension_numbers<[1], [0], [0], [1], [0, 0, 1, 1], [], []>} : vector<256x128xbf16>, vector<128x128xbf16>, vector<256x128xf32> -> vector<256x128xf32>
    %49 = arith.addf %42, %48 : vector<256x128xf32>
    %c0_49 = arith.constant 0 : index
    %c2_50 = arith.constant 2 : index
    %c1_51 = arith.constant 1 : index
    %c0_52 = arith.constant 0 : index
    %50 = vector.load %arg1[%c0_49, %c2_50, %c1_51, %c0_52] : memref<1x18x18x128xbf16, #tpu.memory_space<vmem>>, vector<1x16x16x128xbf16>
    %51 = vector.shape_cast %50 : vector<1x16x16x128xbf16> to vector<16x16x128xbf16>
    %52 = vector.shape_cast %51 : vector<16x16x128xbf16> to vector<256x128xbf16>
    %c7 = arith.constant 7 : index
    %c0_53 = arith.constant 0 : index
    %c0_54 = arith.constant 0 : index
    %53 = vector.load %arg2[%c7, %c0_53, %c0_54] : memref<9x128x128xbf16, #tpu.memory_space<vmem>>, vector<1x128x128xbf16>
    %54 = vector.shape_cast %53 : vector<1x128x128xbf16> to vector<128x128xbf16>
    %cst_55 = arith.constant dense<0.000000e+00> : vector<256x128xf32>
    %55 = tpu.matmul %52, %54, %cst_55 {dimension_numbers = #tpu.dot_dimension_numbers<[1], [0], [0], [1], [0, 0, 1, 1], [], []>} : vector<256x128xbf16>, vector<128x128xbf16>, vector<256x128xf32> -> vector<256x128xf32>
    %56 = arith.addf %49, %55 : vector<256x128xf32>
    %c0_56 = arith.constant 0 : index
    %c2_57 = arith.constant 2 : index
    %c2_58 = arith.constant 2 : index
    %c0_59 = arith.constant 0 : index
    %57 = vector.load %arg1[%c0_56, %c2_57, %c2_58, %c0_59] : memref<1x18x18x128xbf16, #tpu.memory_space<vmem>>, vector<1x16x16x128xbf16>
    %58 = vector.shape_cast %57 : vector<1x16x16x128xbf16> to vector<16x16x128xbf16>
    %59 = vector.shape_cast %58 : vector<16x16x128xbf16> to vector<256x128xbf16>
    %c8 = arith.constant 8 : index
    %c0_60 = arith.constant 0 : index
    %c0_61 = arith.constant 0 : index
    %60 = vector.load %arg2[%c8, %c0_60, %c0_61] : memref<9x128x128xbf16, #tpu.memory_space<vmem>>, vector<1x128x128xbf16>
    %61 = vector.shape_cast %60 : vector<1x128x128xbf16> to vector<128x128xbf16>
    %cst_62 = arith.constant dense<0.000000e+00> : vector<256x128xf32>
    %62 = tpu.matmul %59, %61, %cst_62 {dimension_numbers = #tpu.dot_dimension_numbers<[1], [0], [0], [1], [0, 0, 1, 1], [], []>} : vector<256x128xbf16>, vector<128x128xbf16>, vector<256x128xf32> -> vector<256x128xf32>
    %63 = arith.addf %56, %62 : vector<256x128xf32>
    %c0_63 = arith.constant 0 : index
    %c0_64 = arith.constant 0 : index
    %64 = vector.load %arg3[%c0_63, %c0_64] : memref<1x128xf32, #tpu.memory_space<vmem>>, vector<1x128xf32>
    %65 = vector.broadcast %64 : vector<1x128xf32> to vector<256x128xf32>
    %66 = arith.addf %63, %65 : vector<256x128xf32>
    %c0_65 = arith.constant 0 : index
    %c0_66 = arith.constant 0 : index
    %c0_67 = arith.constant 0 : index
    %67 = vector.load %arg4[%c0_65, %c0_66, %c0_67] : memref<1x256x128xf32, #tpu.memory_space<vmem>>, vector<1x256x128xf32>
    %68 = vector.shape_cast %67 : vector<1x256x128xf32> to vector<256x128xf32>
    %69 = vector.shape_cast %66 : vector<256x128xf32> to vector<1x256x128xf32>
    tpu.vector_store %arg4[%c0_65, %c0_66, %c0_67], %69 {strides = array<i32>} : memref<1x256x128xf32, #tpu.memory_space<vmem>>, vector<1x256x128xf32>,
    %cst_68 = arith.constant dense<0.000000e+00> : vector<128xf32>
    %70 = vector.multi_reduction <add>, %66, %cst_68 [0] : vector<256x128xf32> to vector<128xf32>
    %71 = vector.shape_cast %70 : vector<128xf32> to vector<1x128xf32>
    %c0_69 = arith.constant 0 : index
    %c0_70 = arith.constant 0 : index
    %c0_71 = arith.constant 0 : index
    %72 = vector.load %arg5[%c0_69, %c0_70, %c0_71] : memref<1x1x128xf32, #tpu.memory_space<vmem>>, vector<1x1x128xf32>
    %73 = vector.shape_cast %72 : vector<1x1x128xf32> to vector<1x128xf32>
    %74 = vector.shape_cast %71 : vector<1x128xf32> to vector<1x1x128xf32>
    tpu.vector_store %arg5[%c0_69, %c0_70, %c0_71], %74 {strides = array<i32>} : memref<1x1x128xf32, #tpu.memory_space<vmem>>, vector<1x1x128xf32>,
    %75 = arith.mulf %66, %66 : vector<256x128xf32>
    %cst_72 = arith.constant dense<0.000000e+00> : vector<128xf32>
    %76 = vector.multi_reduction <add>, %75, %cst_72 [0] : vector<256x128xf32> to vector<128xf32>
    %77 = vector.shape_cast %76 : vector<128xf32> to vector<1x128xf32>
    %c0_73 = arith.constant 0 : index
    %c0_74 = arith.constant 0 : index
    %c0_75 = arith.constant 0 : index
    %78 = vector.load %arg6[%c0_73, %c0_74, %c0_75] : memref<1x1x128xf32, #tpu.memory_space<vmem>>, vector<1x1x128xf32>
    %79 = vector.shape_cast %78 : vector<1x1x128xf32> to vector<1x128xf32>
    %80 = vector.shape_cast %77 : vector<1x128xf32> to vector<1x1x128xf32>
    tpu.vector_store %arg6[%c0_73, %c0_74, %c0_75], %80 {strides = array<i32>} : memref<1x1x128xf32, #tpu.memory_space<vmem>>, vector<1x1x128xf32>,
    return
  }
  func.func @transform_0(%arg0: i32) -> (i32, i32, i32, i32) {
    %c0_i32 = arith.constant 0 : i32
    %c0_i32_0 = arith.constant 0 : i32
    %c0_i32_1 = arith.constant 0 : i32
    %c0_i32_2 = arith.constant 0 : i32
    return %arg0, %c0_i32, %c0_i32_0, %c0_i32_1 : i32, i32, i32, i32
  }
  func.func @transform_1(%arg0: i32) -> (i32, i32, i32) {
    %c0_i32 = arith.constant 0 : i32
    %c0_i32_0 = arith.constant 0 : i32
    %c0_i32_1 = arith.constant 0 : i32
    %c0_i32_2 = arith.constant 0 : i32
    return %c0_i32, %c0_i32_0, %c0_i32_1 : i32, i32, i32
  }
  func.func @transform_2(%arg0: i32) -> (i32, i32) {
    %c0_i32 = arith.constant 0 : i32
    %c0_i32_0 = arith.constant 0 : i32
    %c0_i32_1 = arith.constant 0 : i32
    return %c0_i32, %c0_i32_0 : i32, i32
  }
  func.func @transform_3(%arg0: i32) -> (i32, i32, i32) {
    %c0_i32 = arith.constant 0 : i32
    %c0_i32_0 = arith.constant 0 : i32
    %c0_i32_1 = arith.constant 0 : i32
    return %arg0, %c0_i32, %c0_i32_0 : i32, i32, i32
  }
  func.func @transform_4(%arg0: i32) -> (i32, i32, i32) {
    %c0_i32 = arith.constant 0 : i32
    %c0_i32_0 = arith.constant 0 : i32
    %c0_i32_1 = arith.constant 0 : i32
    return %arg0, %c0_i32, %c0_i32_0 : i32, i32, i32
  }
  func.func @transform_5(%arg0: i32) -> (i32, i32, i32) {
    %c0_i32 = arith.constant 0 : i32
    %c0_i32_0 = arith.constant 0 : i32
    %c0_i32_1 = arith.constant 0 : i32
    return %arg0, %c0_i32, %c0_i32_0 : i32, i32, i32
  }
}

module attributes {stable_mosaic.version = 11 : i64} {
  func.func @_conv2_kernel(%arg0: i32, %arg1: memref<1x256x128xf32, #tpu.memory_space<vmem>>, %arg2: memref<1x128xf32, #tpu.memory_space<vmem>>, %arg3: memref<1x128xf32, #tpu.memory_space<vmem>>, %arg4: memref<9x128x128xbf16, #tpu.memory_space<vmem>>, %arg5: memref<1x128xf32, #tpu.memory_space<vmem>>, %arg6: memref<1x256x128xf32, #tpu.memory_space<vmem>>, %arg7: memref<1x1x128xf32, #tpu.memory_space<vmem>>, %arg8: memref<1x1x128xf32, #tpu.memory_space<vmem>>, %arg9: memref<18x18x128xf32, #tpu.memory_space<vmem>>) attributes {dimension_semantics = [#tpu.dimension_semantics<parallel>], iteration_bounds = array<i64: 2>, scalar_prefetch = 0 : i64, scratch_operands = 1 : i64, tpu.core_type = #tpu.core_type<tc>, window_params = [{transform_indices = @transform_0, window_bounds = array<i64: 1, 256, 128>}, {pipeline_mode = #tpu.pipeline_mode<synchronous>, transform_indices = @transform_1, window_bounds = array<i64: 1, 128>}, {pipeline_mode = #tpu.pipeline_mode<synchronous>, transform_indices = @transform_2, window_bounds = array<i64: 1, 128>}, {pipeline_mode = #tpu.pipeline_mode<synchronous>, transform_indices = @transform_3, window_bounds = array<i64: 9, 128, 128>}, {pipeline_mode = #tpu.pipeline_mode<synchronous>, transform_indices = @transform_4, window_bounds = array<i64: 1, 128>}, {transform_indices = @transform_5, window_bounds = array<i64: 1, 256, 128>}, {transform_indices = @transform_6, window_bounds = array<i64: 1, 1, 128>}, {transform_indices = @transform_7, window_bounds = array<i64: 1, 1, 128>}]} {
    %c0 = arith.constant 0 : index
    %c0_0 = arith.constant 0 : index
    %c0_1 = arith.constant 0 : index
    %0 = vector.load %arg1[%c0, %c0_0, %c0_1] : memref<1x256x128xf32, #tpu.memory_space<vmem>>, vector<1x256x128xf32>
    %1 = vector.shape_cast %0 : vector<1x256x128xf32> to vector<256x128xf32>
    %c0_2 = arith.constant 0 : index
    %c0_3 = arith.constant 0 : index
    %2 = vector.load %arg2[%c0_2, %c0_3] : memref<1x128xf32, #tpu.memory_space<vmem>>, vector<1x128xf32>
    %3 = vector.broadcast %2 : vector<1x128xf32> to vector<256x128xf32>
    %4 = arith.mulf %1, %3 : vector<256x128xf32>
    %c0_4 = arith.constant 0 : index
    %c0_5 = arith.constant 0 : index
    %5 = vector.load %arg3[%c0_4, %c0_5] : memref<1x128xf32, #tpu.memory_space<vmem>>, vector<1x128xf32>
    %6 = vector.broadcast %5 : vector<1x128xf32> to vector<256x128xf32>
    %7 = arith.addf %4, %6 : vector<256x128xf32>
    %cst = arith.constant 0.000000e+00 : f32
    %8 = vector.broadcast %cst : f32 to vector<256x128xf32>
    %9 = arith.maximumf %7, %8 : vector<256x128xf32>
    %cst_6 = arith.constant 0.000000e+00 : f32
    %10 = vector.broadcast %cst_6 : f32 to vector<18x18x128xf32>
    %c0_7 = arith.constant 0 : index
    %c0_8 = arith.constant 0 : index
    %c0_9 = arith.constant 0 : index
    %11 = vector.load %arg9[%c0_7, %c0_8, %c0_9] : memref<18x18x128xf32, #tpu.memory_space<vmem>>, vector<18x18x128xf32>
    tpu.vector_store %arg9[%c0_7, %c0_8, %c0_9], %10 {strides = array<i32>} : memref<18x18x128xf32, #tpu.memory_space<vmem>>, vector<18x18x128xf32>,
    %12 = vector.shape_cast %9 : vector<256x128xf32> to vector<16x16x128xf32>
    %c1 = arith.constant 1 : index
    %c1_10 = arith.constant 1 : index
    %c0_11 = arith.constant 0 : index
    %13 = vector.load %arg9[%c1, %c1_10, %c0_11] : memref<18x18x128xf32, #tpu.memory_space<vmem>>, vector<16x16x128xf32>
    tpu.vector_store %arg9[%c1, %c1_10, %c0_11], %12 {strides = array<i32>} : memref<18x18x128xf32, #tpu.memory_space<vmem>>, vector<16x16x128xf32>,
    %cst_12 = arith.constant 0.000000e+00 : f32
    %14 = vector.broadcast %cst_12 : f32 to vector<256x128xf32>
    %c0_13 = arith.constant 0 : index
    %c0_14 = arith.constant 0 : index
    %c0_15 = arith.constant 0 : index
    %15 = vector.load %arg9[%c0_13, %c0_14, %c0_15] : memref<18x18x128xf32, #tpu.memory_space<vmem>>, vector<16x16x128xf32>
    %16 = vector.shape_cast %15 : vector<16x16x128xf32> to vector<256x128xf32>
    %17 = arith.truncf %16 : vector<256x128xf32> to vector<256x128xbf16>
    %c0_16 = arith.constant 0 : index
    %c0_17 = arith.constant 0 : index
    %c0_18 = arith.constant 0 : index
    %18 = vector.load %arg4[%c0_16, %c0_17, %c0_18] : memref<9x128x128xbf16, #tpu.memory_space<vmem>>, vector<1x128x128xbf16>
    %19 = vector.shape_cast %18 : vector<1x128x128xbf16> to vector<128x128xbf16>
    %cst_19 = arith.constant dense<0.000000e+00> : vector<256x128xf32>
    %20 = tpu.matmul %17, %19, %cst_19 {dimension_numbers = #tpu.dot_dimension_numbers<[1], [0], [0], [1], [0, 0, 1, 1], [], []>} : vector<256x128xbf16>, vector<128x128xbf16>, vector<256x128xf32> -> vector<256x128xf32>
    %21 = arith.addf %14, %20 : vector<256x128xf32>
    %c0_20 = arith.constant 0 : index
    %c1_21 = arith.constant 1 : index
    %c0_22 = arith.constant 0 : index
    %22 = vector.load %arg9[%c0_20, %c1_21, %c0_22] : memref<18x18x128xf32, #tpu.memory_space<vmem>>, vector<16x16x128xf32>
    %23 = vector.shape_cast %22 : vector<16x16x128xf32> to vector<256x128xf32>
    %24 = arith.truncf %23 : vector<256x128xf32> to vector<256x128xbf16>
    %c1_23 = arith.constant 1 : index
    %c0_24 = arith.constant 0 : index
    %c0_25 = arith.constant 0 : index
    %25 = vector.load %arg4[%c1_23, %c0_24, %c0_25] : memref<9x128x128xbf16, #tpu.memory_space<vmem>>, vector<1x128x128xbf16>
    %26 = vector.shape_cast %25 : vector<1x128x128xbf16> to vector<128x128xbf16>
    %cst_26 = arith.constant dense<0.000000e+00> : vector<256x128xf32>
    %27 = tpu.matmul %24, %26, %cst_26 {dimension_numbers = #tpu.dot_dimension_numbers<[1], [0], [0], [1], [0, 0, 1, 1], [], []>} : vector<256x128xbf16>, vector<128x128xbf16>, vector<256x128xf32> -> vector<256x128xf32>
    %28 = arith.addf %21, %27 : vector<256x128xf32>
    %c0_27 = arith.constant 0 : index
    %c2 = arith.constant 2 : index
    %c0_28 = arith.constant 0 : index
    %29 = vector.load %arg9[%c0_27, %c2, %c0_28] : memref<18x18x128xf32, #tpu.memory_space<vmem>>, vector<16x16x128xf32>
    %30 = vector.shape_cast %29 : vector<16x16x128xf32> to vector<256x128xf32>
    %31 = arith.truncf %30 : vector<256x128xf32> to vector<256x128xbf16>
    %c2_29 = arith.constant 2 : index
    %c0_30 = arith.constant 0 : index
    %c0_31 = arith.constant 0 : index
    %32 = vector.load %arg4[%c2_29, %c0_30, %c0_31] : memref<9x128x128xbf16, #tpu.memory_space<vmem>>, vector<1x128x128xbf16>
    %33 = vector.shape_cast %32 : vector<1x128x128xbf16> to vector<128x128xbf16>
    %cst_32 = arith.constant dense<0.000000e+00> : vector<256x128xf32>
    %34 = tpu.matmul %31, %33, %cst_32 {dimension_numbers = #tpu.dot_dimension_numbers<[1], [0], [0], [1], [0, 0, 1, 1], [], []>} : vector<256x128xbf16>, vector<128x128xbf16>, vector<256x128xf32> -> vector<256x128xf32>
    %35 = arith.addf %28, %34 : vector<256x128xf32>
    %c1_33 = arith.constant 1 : index
    %c0_34 = arith.constant 0 : index
    %c0_35 = arith.constant 0 : index
    %36 = vector.load %arg9[%c1_33, %c0_34, %c0_35] : memref<18x18x128xf32, #tpu.memory_space<vmem>>, vector<16x16x128xf32>
    %37 = vector.shape_cast %36 : vector<16x16x128xf32> to vector<256x128xf32>
    %38 = arith.truncf %37 : vector<256x128xf32> to vector<256x128xbf16>
    %c3 = arith.constant 3 : index
    %c0_36 = arith.constant 0 : index
    %c0_37 = arith.constant 0 : index
    %39 = vector.load %arg4[%c3, %c0_36, %c0_37] : memref<9x128x128xbf16, #tpu.memory_space<vmem>>, vector<1x128x128xbf16>
    %40 = vector.shape_cast %39 : vector<1x128x128xbf16> to vector<128x128xbf16>
    %cst_38 = arith.constant dense<0.000000e+00> : vector<256x128xf32>
    %41 = tpu.matmul %38, %40, %cst_38 {dimension_numbers = #tpu.dot_dimension_numbers<[1], [0], [0], [1], [0, 0, 1, 1], [], []>} : vector<256x128xbf16>, vector<128x128xbf16>, vector<256x128xf32> -> vector<256x128xf32>
    %42 = arith.addf %35, %41 : vector<256x128xf32>
    %c1_39 = arith.constant 1 : index
    %c1_40 = arith.constant 1 : index
    %c0_41 = arith.constant 0 : index
    %43 = vector.load %arg9[%c1_39, %c1_40, %c0_41] : memref<18x18x128xf32, #tpu.memory_space<vmem>>, vector<16x16x128xf32>
    %44 = vector.shape_cast %43 : vector<16x16x128xf32> to vector<256x128xf32>
    %45 = arith.truncf %44 : vector<256x128xf32> to vector<256x128xbf16>
    %c4 = arith.constant 4 : index
    %c0_42 = arith.constant 0 : index
    %c0_43 = arith.constant 0 : index
    %46 = vector.load %arg4[%c4, %c0_42, %c0_43] : memref<9x128x128xbf16, #tpu.memory_space<vmem>>, vector<1x128x128xbf16>
    %47 = vector.shape_cast %46 : vector<1x128x128xbf16> to vector<128x128xbf16>
    %cst_44 = arith.constant dense<0.000000e+00> : vector<256x128xf32>
    %48 = tpu.matmul %45, %47, %cst_44 {dimension_numbers = #tpu.dot_dimension_numbers<[1], [0], [0], [1], [0, 0, 1, 1], [], []>} : vector<256x128xbf16>, vector<128x128xbf16>, vector<256x128xf32> -> vector<256x128xf32>
    %49 = arith.addf %42, %48 : vector<256x128xf32>
    %c1_45 = arith.constant 1 : index
    %c2_46 = arith.constant 2 : index
    %c0_47 = arith.constant 0 : index
    %50 = vector.load %arg9[%c1_45, %c2_46, %c0_47] : memref<18x18x128xf32, #tpu.memory_space<vmem>>, vector<16x16x128xf32>
    %51 = vector.shape_cast %50 : vector<16x16x128xf32> to vector<256x128xf32>
    %52 = arith.truncf %51 : vector<256x128xf32> to vector<256x128xbf16>
    %c5 = arith.constant 5 : index
    %c0_48 = arith.constant 0 : index
    %c0_49 = arith.constant 0 : index
    %53 = vector.load %arg4[%c5, %c0_48, %c0_49] : memref<9x128x128xbf16, #tpu.memory_space<vmem>>, vector<1x128x128xbf16>
    %54 = vector.shape_cast %53 : vector<1x128x128xbf16> to vector<128x128xbf16>
    %cst_50 = arith.constant dense<0.000000e+00> : vector<256x128xf32>
    %55 = tpu.matmul %52, %54, %cst_50 {dimension_numbers = #tpu.dot_dimension_numbers<[1], [0], [0], [1], [0, 0, 1, 1], [], []>} : vector<256x128xbf16>, vector<128x128xbf16>, vector<256x128xf32> -> vector<256x128xf32>
    %56 = arith.addf %49, %55 : vector<256x128xf32>
    %c2_51 = arith.constant 2 : index
    %c0_52 = arith.constant 0 : index
    %c0_53 = arith.constant 0 : index
    %57 = vector.load %arg9[%c2_51, %c0_52, %c0_53] : memref<18x18x128xf32, #tpu.memory_space<vmem>>, vector<16x16x128xf32>
    %58 = vector.shape_cast %57 : vector<16x16x128xf32> to vector<256x128xf32>
    %59 = arith.truncf %58 : vector<256x128xf32> to vector<256x128xbf16>
    %c6 = arith.constant 6 : index
    %c0_54 = arith.constant 0 : index
    %c0_55 = arith.constant 0 : index
    %60 = vector.load %arg4[%c6, %c0_54, %c0_55] : memref<9x128x128xbf16, #tpu.memory_space<vmem>>, vector<1x128x128xbf16>
    %61 = vector.shape_cast %60 : vector<1x128x128xbf16> to vector<128x128xbf16>
    %cst_56 = arith.constant dense<0.000000e+00> : vector<256x128xf32>
    %62 = tpu.matmul %59, %61, %cst_56 {dimension_numbers = #tpu.dot_dimension_numbers<[1], [0], [0], [1], [0, 0, 1, 1], [], []>} : vector<256x128xbf16>, vector<128x128xbf16>, vector<256x128xf32> -> vector<256x128xf32>
    %63 = arith.addf %56, %62 : vector<256x128xf32>
    %c2_57 = arith.constant 2 : index
    %c1_58 = arith.constant 1 : index
    %c0_59 = arith.constant 0 : index
    %64 = vector.load %arg9[%c2_57, %c1_58, %c0_59] : memref<18x18x128xf32, #tpu.memory_space<vmem>>, vector<16x16x128xf32>
    %65 = vector.shape_cast %64 : vector<16x16x128xf32> to vector<256x128xf32>
    %66 = arith.truncf %65 : vector<256x128xf32> to vector<256x128xbf16>
    %c7 = arith.constant 7 : index
    %c0_60 = arith.constant 0 : index
    %c0_61 = arith.constant 0 : index
    %67 = vector.load %arg4[%c7, %c0_60, %c0_61] : memref<9x128x128xbf16, #tpu.memory_space<vmem>>, vector<1x128x128xbf16>
    %68 = vector.shape_cast %67 : vector<1x128x128xbf16> to vector<128x128xbf16>
    %cst_62 = arith.constant dense<0.000000e+00> : vector<256x128xf32>
    %69 = tpu.matmul %66, %68, %cst_62 {dimension_numbers = #tpu.dot_dimension_numbers<[1], [0], [0], [1], [0, 0, 1, 1], [], []>} : vector<256x128xbf16>, vector<128x128xbf16>, vector<256x128xf32> -> vector<256x128xf32>
    %70 = arith.addf %63, %69 : vector<256x128xf32>
    %c2_63 = arith.constant 2 : index
    %c2_64 = arith.constant 2 : index
    %c0_65 = arith.constant 0 : index
    %71 = vector.load %arg9[%c2_63, %c2_64, %c0_65] : memref<18x18x128xf32, #tpu.memory_space<vmem>>, vector<16x16x128xf32>
    %72 = vector.shape_cast %71 : vector<16x16x128xf32> to vector<256x128xf32>
    %73 = arith.truncf %72 : vector<256x128xf32> to vector<256x128xbf16>
    %c8 = arith.constant 8 : index
    %c0_66 = arith.constant 0 : index
    %c0_67 = arith.constant 0 : index
    %74 = vector.load %arg4[%c8, %c0_66, %c0_67] : memref<9x128x128xbf16, #tpu.memory_space<vmem>>, vector<1x128x128xbf16>
    %75 = vector.shape_cast %74 : vector<1x128x128xbf16> to vector<128x128xbf16>
    %cst_68 = arith.constant dense<0.000000e+00> : vector<256x128xf32>
    %76 = tpu.matmul %73, %75, %cst_68 {dimension_numbers = #tpu.dot_dimension_numbers<[1], [0], [0], [1], [0, 0, 1, 1], [], []>} : vector<256x128xbf16>, vector<128x128xbf16>, vector<256x128xf32> -> vector<256x128xf32>
    %77 = arith.addf %70, %76 : vector<256x128xf32>
    %c0_69 = arith.constant 0 : index
    %c0_70 = arith.constant 0 : index
    %78 = vector.load %arg5[%c0_69, %c0_70] : memref<1x128xf32, #tpu.memory_space<vmem>>, vector<1x128xf32>
    %79 = vector.broadcast %78 : vector<1x128xf32> to vector<256x128xf32>
    %80 = arith.addf %77, %79 : vector<256x128xf32>
    %c0_71 = arith.constant 0 : index
    %c0_72 = arith.constant 0 : index
    %c0_73 = arith.constant 0 : index
    %81 = vector.load %arg6[%c0_71, %c0_72, %c0_73] : memref<1x256x128xf32, #tpu.memory_space<vmem>>, vector<1x256x128xf32>
    %82 = vector.shape_cast %81 : vector<1x256x128xf32> to vector<256x128xf32>
    %83 = vector.shape_cast %80 : vector<256x128xf32> to vector<1x256x128xf32>
    tpu.vector_store %arg6[%c0_71, %c0_72, %c0_73], %83 {strides = array<i32>} : memref<1x256x128xf32, #tpu.memory_space<vmem>>, vector<1x256x128xf32>,
    %cst_74 = arith.constant dense<0.000000e+00> : vector<128xf32>
    %84 = vector.multi_reduction <add>, %80, %cst_74 [0] : vector<256x128xf32> to vector<128xf32>
    %85 = vector.shape_cast %84 : vector<128xf32> to vector<1x128xf32>
    %c0_75 = arith.constant 0 : index
    %c0_76 = arith.constant 0 : index
    %c0_77 = arith.constant 0 : index
    %86 = vector.load %arg7[%c0_75, %c0_76, %c0_77] : memref<1x1x128xf32, #tpu.memory_space<vmem>>, vector<1x1x128xf32>
    %87 = vector.shape_cast %86 : vector<1x1x128xf32> to vector<1x128xf32>
    %88 = vector.shape_cast %85 : vector<1x128xf32> to vector<1x1x128xf32>
    tpu.vector_store %arg7[%c0_75, %c0_76, %c0_77], %88 {strides = array<i32>} : memref<1x1x128xf32, #tpu.memory_space<vmem>>, vector<1x1x128xf32>,
    %89 = arith.mulf %80, %80 : vector<256x128xf32>
    %cst_78 = arith.constant dense<0.000000e+00> : vector<128xf32>
    %90 = vector.multi_reduction <add>, %89, %cst_78 [0] : vector<256x128xf32> to vector<128xf32>
    %91 = vector.shape_cast %90 : vector<128xf32> to vector<1x128xf32>
    %c0_79 = arith.constant 0 : index
    %c0_80 = arith.constant 0 : index
    %c0_81 = arith.constant 0 : index
    %92 = vector.load %arg8[%c0_79, %c0_80, %c0_81] : memref<1x1x128xf32, #tpu.memory_space<vmem>>, vector<1x1x128xf32>
    %93 = vector.shape_cast %92 : vector<1x1x128xf32> to vector<1x128xf32>
    %94 = vector.shape_cast %91 : vector<1x128xf32> to vector<1x1x128xf32>
    tpu.vector_store %arg8[%c0_79, %c0_80, %c0_81], %94 {strides = array<i32>} : memref<1x1x128xf32, #tpu.memory_space<vmem>>, vector<1x1x128xf32>,
    return
  }
  func.func @transform_0(%arg0: i32) -> (i32, i32, i32) {
    %c0_i32 = arith.constant 0 : i32
    %c0_i32_0 = arith.constant 0 : i32
    %c0_i32_1 = arith.constant 0 : i32
    return %arg0, %c0_i32, %c0_i32_0 : i32, i32, i32
  }
  func.func @transform_1(%arg0: i32) -> (i32, i32) {
    %c0_i32 = arith.constant 0 : i32
    %c0_i32_0 = arith.constant 0 : i32
    %c0_i32_1 = arith.constant 0 : i32
    return %c0_i32, %c0_i32_0 : i32, i32
  }
  func.func @transform_2(%arg0: i32) -> (i32, i32) {
    %c0_i32 = arith.constant 0 : i32
    %c0_i32_0 = arith.constant 0 : i32
    %c0_i32_1 = arith.constant 0 : i32
    return %c0_i32, %c0_i32_0 : i32, i32
  }
  func.func @transform_3(%arg0: i32) -> (i32, i32, i32) {
    %c0_i32 = arith.constant 0 : i32
    %c0_i32_0 = arith.constant 0 : i32
    %c0_i32_1 = arith.constant 0 : i32
    %c0_i32_2 = arith.constant 0 : i32
    return %c0_i32, %c0_i32_0, %c0_i32_1 : i32, i32, i32
  }
  func.func @transform_4(%arg0: i32) -> (i32, i32) {
    %c0_i32 = arith.constant 0 : i32
    %c0_i32_0 = arith.constant 0 : i32
    %c0_i32_1 = arith.constant 0 : i32
    return %c0_i32, %c0_i32_0 : i32, i32
  }
  func.func @transform_5(%arg0: i32) -> (i32, i32, i32) {
    %c0_i32 = arith.constant 0 : i32
    %c0_i32_0 = arith.constant 0 : i32
    %c0_i32_1 = arith.constant 0 : i32
    return %arg0, %c0_i32, %c0_i32_0 : i32, i32, i32
  }
  func.func @transform_6(%arg0: i32) -> (i32, i32, i32) {
    %c0_i32 = arith.constant 0 : i32
    %c0_i32_0 = arith.constant 0 : i32
    %c0_i32_1 = arith.constant 0 : i32
    return %arg0, %c0_i32, %c0_i32_0 : i32, i32, i32
  }
  func.func @transform_7(%arg0: i32) -> (i32, i32, i32) {
    %c0_i32 = arith.constant 0 : i32
    %c0_i32_0 = arith.constant 0 : i32
    %c0_i32_1 = arith.constant 0 : i32
    return %arg0, %c0_i32, %c0_i32_0 : i32, i32, i32
  }
}

module attributes {stable_mosaic.version = 11 : i64} {
  func.func @_epilogue_kernel(%arg0: i32, %arg1: memref<1x256x128xf32, #tpu.memory_space<vmem>>, %arg2: memref<1x256x128xf32, #tpu.memory_space<vmem>>, %arg3: memref<1x128xf32, #tpu.memory_space<vmem>>, %arg4: memref<1x128xf32, #tpu.memory_space<vmem>>, %arg5: memref<1x1x128xf32, #tpu.memory_space<vmem>>, %arg6: memref<128x128xf32, #tpu.memory_space<vmem>>, %arg7: memref<1x128xf32, #tpu.memory_space<vmem>>, %arg8: memref<128x128xf32, #tpu.memory_space<vmem>>, %arg9: memref<1x128xf32, #tpu.memory_space<vmem>>, %arg10: memref<1x256x128xf32, #tpu.memory_space<vmem>>) attributes {dimension_semantics = [#tpu.dimension_semantics<parallel>], iteration_bounds = array<i64: 2>, scalar_prefetch = 0 : i64, scratch_operands = 0 : i64, tpu.core_type = #tpu.core_type<tc>, window_params = [{transform_indices = @transform_0, window_bounds = array<i64: 1, 256, 128>}, {transform_indices = @transform_1, window_bounds = array<i64: 1, 256, 128>}, {pipeline_mode = #tpu.pipeline_mode<synchronous>, transform_indices = @transform_2, window_bounds = array<i64: 1, 128>}, {pipeline_mode = #tpu.pipeline_mode<synchronous>, transform_indices = @transform_3, window_bounds = array<i64: 1, 128>}, {transform_indices = @transform_4, window_bounds = array<i64: 1, 1, 128>}, {pipeline_mode = #tpu.pipeline_mode<synchronous>, transform_indices = @transform_5, window_bounds = array<i64: 128, 128>}, {pipeline_mode = #tpu.pipeline_mode<synchronous>, transform_indices = @transform_6, window_bounds = array<i64: 1, 128>}, {pipeline_mode = #tpu.pipeline_mode<synchronous>, transform_indices = @transform_7, window_bounds = array<i64: 128, 128>}, {pipeline_mode = #tpu.pipeline_mode<synchronous>, transform_indices = @transform_8, window_bounds = array<i64: 1, 128>}, {transform_indices = @transform_9, window_bounds = array<i64: 1, 256, 128>}]} {
    %c0 = arith.constant 0 : index
    %c0_0 = arith.constant 0 : index
    %c0_1 = arith.constant 0 : index
    %0 = vector.load %arg5[%c0, %c0_0, %c0_1] : memref<1x1x128xf32, #tpu.memory_space<vmem>>, vector<1x1x128xf32>
    %1 = vector.shape_cast %0 : vector<1x1x128xf32> to vector<1x128xf32>
    %c0_2 = arith.constant 0 : index
    %c0_3 = arith.constant 0 : index
    %2 = vector.load %arg6[%c0_2, %c0_3] : memref<128x128xf32, #tpu.memory_space<vmem>>, vector<128x128xf32>
    %cst = arith.constant dense<0.000000e+00> : vector<1x128xf32>
    %3 = tpu.matmul %1, %2, %cst {dimension_numbers = #tpu.dot_dimension_numbers<[1], [0], [0], [1], [0, 0, 1, 1], [], []>} : vector<1x128xf32>, vector<128x128xf32>, vector<1x128xf32> -> vector<1x128xf32>
    %c0_4 = arith.constant 0 : index
    %c0_5 = arith.constant 0 : index
    %4 = vector.load %arg7[%c0_4, %c0_5] : memref<1x128xf32, #tpu.memory_space<vmem>>, vector<1x128xf32>
    %5 = arith.addf %3, %4 : vector<1x128xf32>
    %cst_6 = arith.constant 0.000000e+00 : f32
    %6 = vector.broadcast %cst_6 : f32 to vector<1x128xf32>
    %7 = arith.maximumf %5, %6 : vector<1x128xf32>
    %c0_7 = arith.constant 0 : index
    %c0_8 = arith.constant 0 : index
    %8 = vector.load %arg8[%c0_7, %c0_8] : memref<128x128xf32, #tpu.memory_space<vmem>>, vector<128x128xf32>
    %cst_9 = arith.constant dense<0.000000e+00> : vector<1x128xf32>
    %9 = tpu.matmul %7, %8, %cst_9 {dimension_numbers = #tpu.dot_dimension_numbers<[1], [0], [0], [1], [0, 0, 1, 1], [], []>} : vector<1x128xf32>, vector<128x128xf32>, vector<1x128xf32> -> vector<1x128xf32>
    %c0_10 = arith.constant 0 : index
    %c0_11 = arith.constant 0 : index
    %10 = vector.load %arg9[%c0_10, %c0_11] : memref<1x128xf32, #tpu.memory_space<vmem>>, vector<1x128xf32>
    %11 = arith.addf %9, %10 : vector<1x128xf32>
    %cst_12 = arith.constant 0.000000e+00 : f32
    %12 = vector.broadcast %cst_12 : f32 to vector<1x128xf32>
    %13 = arith.subf %12, %11 : vector<1x128xf32>
    %14 = math.exp %13 : vector<1x128xf32>
    %cst_13 = arith.constant 1.000000e+00 : f32
    %15 = vector.broadcast %cst_13 : f32 to vector<1x128xf32>
    %16 = arith.addf %15, %14 : vector<1x128xf32>
    %17 = tpu.reciprocal %16 {approx = true} : vector<1x128xf32> -> vector<1x128xf32>
    %c0_14 = arith.constant 0 : index
    %c0_15 = arith.constant 0 : index
    %c0_16 = arith.constant 0 : index
    %18 = vector.load %arg1[%c0_14, %c0_15, %c0_16] : memref<1x256x128xf32, #tpu.memory_space<vmem>>, vector<1x256x128xf32>
    %19 = vector.shape_cast %18 : vector<1x256x128xf32> to vector<256x128xf32>
    %c0_17 = arith.constant 0 : index
    %c0_18 = arith.constant 0 : index
    %20 = vector.load %arg3[%c0_17, %c0_18] : memref<1x128xf32, #tpu.memory_space<vmem>>, vector<1x128xf32>
    %21 = vector.broadcast %20 : vector<1x128xf32> to vector<256x128xf32>
    %22 = arith.mulf %19, %21 : vector<256x128xf32>
    %c0_19 = arith.constant 0 : index
    %c0_20 = arith.constant 0 : index
    %23 = vector.load %arg4[%c0_19, %c0_20] : memref<1x128xf32, #tpu.memory_space<vmem>>, vector<1x128xf32>
    %24 = vector.broadcast %23 : vector<1x128xf32> to vector<256x128xf32>
    %25 = arith.addf %22, %24 : vector<256x128xf32>
    %26 = vector.broadcast %17 : vector<1x128xf32> to vector<256x128xf32>
    %27 = arith.mulf %25, %26 : vector<256x128xf32>
    %c0_21 = arith.constant 0 : index
    %c0_22 = arith.constant 0 : index
    %c0_23 = arith.constant 0 : index
    %28 = vector.load %arg2[%c0_21, %c0_22, %c0_23] : memref<1x256x128xf32, #tpu.memory_space<vmem>>, vector<1x256x128xf32>
    %29 = vector.shape_cast %28 : vector<1x256x128xf32> to vector<256x128xf32>
    %30 = arith.addf %27, %29 : vector<256x128xf32>
    %cst_24 = arith.constant 0.000000e+00 : f32
    %31 = vector.broadcast %cst_24 : f32 to vector<256x128xf32>
    %32 = arith.maximumf %30, %31 : vector<256x128xf32>
    %c0_25 = arith.constant 0 : index
    %c0_26 = arith.constant 0 : index
    %c0_27 = arith.constant 0 : index
    %33 = vector.load %arg10[%c0_25, %c0_26, %c0_27] : memref<1x256x128xf32, #tpu.memory_space<vmem>>, vector<1x256x128xf32>
    %34 = vector.shape_cast %33 : vector<1x256x128xf32> to vector<256x128xf32>
    %35 = vector.shape_cast %32 : vector<256x128xf32> to vector<1x256x128xf32>
    tpu.vector_store %arg10[%c0_25, %c0_26, %c0_27], %35 {strides = array<i32>} : memref<1x256x128xf32, #tpu.memory_space<vmem>>, vector<1x256x128xf32>,
    return
  }
  func.func @transform_0(%arg0: i32) -> (i32, i32, i32) {
    %c0_i32 = arith.constant 0 : i32
    %c0_i32_0 = arith.constant 0 : i32
    %c0_i32_1 = arith.constant 0 : i32
    return %arg0, %c0_i32, %c0_i32_0 : i32, i32, i32
  }
  func.func @transform_1(%arg0: i32) -> (i32, i32, i32) {
    %c0_i32 = arith.constant 0 : i32
    %c0_i32_0 = arith.constant 0 : i32
    %c0_i32_1 = arith.constant 0 : i32
    return %arg0, %c0_i32, %c0_i32_0 : i32, i32, i32
  }
  func.func @transform_2(%arg0: i32) -> (i32, i32) {
    %c0_i32 = arith.constant 0 : i32
    %c0_i32_0 = arith.constant 0 : i32
    %c0_i32_1 = arith.constant 0 : i32
    return %c0_i32, %c0_i32_0 : i32, i32
  }
  func.func @transform_3(%arg0: i32) -> (i32, i32) {
    %c0_i32 = arith.constant 0 : i32
    %c0_i32_0 = arith.constant 0 : i32
    %c0_i32_1 = arith.constant 0 : i32
    return %c0_i32, %c0_i32_0 : i32, i32
  }
  func.func @transform_4(%arg0: i32) -> (i32, i32, i32) {
    %c0_i32 = arith.constant 0 : i32
    %c0_i32_0 = arith.constant 0 : i32
    %c0_i32_1 = arith.constant 0 : i32
    return %arg0, %c0_i32, %c0_i32_0 : i32, i32, i32
  }
  func.func @transform_5(%arg0: i32) -> (i32, i32) {
    %c0_i32 = arith.constant 0 : i32
    %c0_i32_0 = arith.constant 0 : i32
    %c0_i32_1 = arith.constant 0 : i32
    return %c0_i32, %c0_i32_0 : i32, i32
  }
  func.func @transform_6(%arg0: i32) -> (i32, i32) {
    %c0_i32 = arith.constant 0 : i32
    %c0_i32_0 = arith.constant 0 : i32
    %c0_i32_1 = arith.constant 0 : i32
    return %c0_i32, %c0_i32_0 : i32, i32
  }
  func.func @transform_7(%arg0: i32) -> (i32, i32) {
    %c0_i32 = arith.constant 0 : i32
    %c0_i32_0 = arith.constant 0 : i32
    %c0_i32_1 = arith.constant 0 : i32
    return %c0_i32, %c0_i32_0 : i32, i32
  }
  func.func @transform_8(%arg0: i32) -> (i32, i32) {
    %c0_i32 = arith.constant 0 : i32
    %c0_i32_0 = arith.constant 0 : i32
    %c0_i32_1 = arith.constant 0 : i32
    return %c0_i32, %c0_i32_0 : i32, i32
  }
  func.func @transform_9(%arg0: i32) -> (i32, i32, i32) {
    %c0_i32 = arith.constant 0 : i32
    %c0_i32_0 = arith.constant 0 : i32
    %c0_i32_1 = arith.constant 0 : i32
    return %arg0, %c0_i32, %c0_i32_0 : i32, i32, i32
  }
}

</mosaic_0001>

<llo_original>
// kernel: block_forward.5
$region0: #{block_forward.5}
  #allocation0 [shape = 'u32[]', space=smem, size = 0x4, offset = 0x4, fixed_abs, tag = 'smem constant byte address 0x4 - core index']
  #allocation1 [shape = 'u32[144,128]{1,0:T(1,128)}', space=vmem, size = 0x12000, scoped, tag = 'internal scratch']
  %s0 = inlined_call_operand.vmem [shape: f32[2,256,128], index: 0, kind: input, shape index: {}]
  %s1 = inlined_call_operand.vmem [shape: f32[2,256,128], index: 1, kind: input, shape index: {}]
  %s2 = inlined_call_operand.vmem [shape: f32[1,128], index: 2, kind: input, shape index: {}]
  %s3 = inlined_call_operand.vmem [shape: f32[1,128], index: 3, kind: input, shape index: {}]
  %s4 = inlined_call_operand.vmem [shape: f32[2,1,128], index: 4, kind: input, shape index: {}]
  %s5 = inlined_call_operand.vmem [shape: f32[128,128], index: 5, kind: input, shape index: {}]
  %s6 = inlined_call_operand.vmem [shape: f32[1,128], index: 6, kind: input, shape index: {}]
  %s7 = inlined_call_operand.vmem [shape: f32[128,128], index: 7, kind: input, shape index: {}]
  %s8 = inlined_call_operand.vmem [shape: f32[1,128], index: 8, kind: input, shape index: {}]
  %s9 = inlined_call_operand.vmem [shape: f32[2,256,128], index: 9, kind: output, shape index: {}]
  %s10 = sld [smem:[#allocation0]]
  $region69: #{block_forward.5} parent=0
    _
  %s12 = ssub.s32 1, %s10
  %s13 = scalar_select 0, %s12, %s10
  loop: start=0, step=1, limit=4
  $region2: #{block_forward.5} parent=0 // loop_pre_header
    _
  $region3: #{block_forward.5} parent=0 // loop_header
    %s15 = sphi 0, %s19
    %p16 = scmp.ge.s32.totalorder %s15, 4
    %s25 = sphi 0, %s27
    %s28 = sphi 0, %s25
    %s29 = sphi 0, %s28
    %s45 = sphi 0, %s29
    %s51 = sphi 0, %s53
    %s54 = sphi 0, %s51
    %s55 = sphi 0, %s54
    %s71 = sphi 0, %s55
    %s75 = sphi 0, %s75
    %s77 = sphi 0, %s75
    %s78 = sphi 0, %s77
    %s92 = sphi 0, %s78
    %s96 = sphi 0, %s96
    %s98 = sphi 0, %s96
    %s99 = sphi 0, %s98
    %s113 = sphi 0, %s99
    %s119 = sphi 0, %s121
    %s122 = sphi 0, %s119
    %s123 = sphi 0, %s122
    %s139 = sphi 0, %s123
    %s143 = sphi 0, %s143
    %s145 = sphi 0, %s143
    %s146 = sphi 0, %s145
    %s160 = sphi 0, %s146
    %s164 = sphi 0, %s164
    %s166 = sphi 0, %s164
    %s167 = sphi 0, %s166
    %s181 = sphi 0, %s167
    %s185 = sphi 0, %s185
    %s187 = sphi 0, %s185
    %s188 = sphi 0, %s187
    %s202 = sphi 0, %s188
    %s206 = sphi 0, %s206
    %s208 = sphi 0, %s206
    %s209 = sphi 0, %s208
    %s223 = sphi 0, %s209
    %s229 = sphi 0, %s231
    %s232 = sphi 0, %s229
    %s233 = sphi 0, %s232
    %s249 = sphi 0, %s233
  $region4: #{block_forward.5} parent=0 // loop_header_branch
    %18 = sbr.rel (%p16) target = $region8
  $region5: #{block_forward.5} parent=0 // loop_body
    %s20 = ssub.s32 %s15, 1
    %s21 = ssub.s32 %s15, 2
    %s22 = sadd.s32 %s15, 1
    %s23 = ssub.s32 %s15, %s22
    %p24 = scmp.eq.s32.totalorder %s23, 0
    %s26 = sadd.s32 %s25, 1
    %s27 = scalar_select %p24, %s25, %s26
    %p30 = pneg %p24
    %p31 = scmp.eq.s32.totalorder %s15, 1
    %p32 = por %p30, %p31
    %p33 = scmp.ne.s32.totalorder %s25, %s28
    %p34 = scmp.eq.s32.totalorder %s15, 0
    %p35 = por %p33, %p34
    %p36 = scmp.ne.s32.totalorder %s25, %s28
    %p37 = scmp.eq.s32.totalorder %s20, 1
    %p38 = por %p36, %p37
    %p39 = scmp.ne.s32.totalorder %s28, %s29
    %p40 = scmp.eq.s32.totalorder %s20, 0
    %p41 = por %p39, %p40
    %p42 = scmp.ne.s32.totalorder %s28, %s29
    %p43 = scmp.eq.s32.totalorder %s21, 1
    %p44 = por %p42, %p43
    %p46 = scmp.ne.s32.totalorder %s29, %s45
    %p47 = scmp.eq.s32.totalorder %s21, 0
    %p48 = por %p46, %p47
    %s49 = ssub.s32 %s15, %s22
    %p50 = scmp.eq.s32.totalorder %s49, 0
    %s52 = sadd.s32 %s51, 1
    %s53 = scalar_select %p50, %s51, %s52
    %p56 = pneg %p50
    %p57 = scmp.eq.s32.totalorder %s15, 1
    %p58 = por %p56, %p57
    %p59 = scmp.ne.s32.totalorder %s51, %s54
    %p60 = scmp.eq.s32.totalorder %s15, 0
    %p61 = por %p59, %p60
    %p62 = scmp.ne.s32.totalorder %s51, %s54
    %p63 = scmp.eq.s32.totalorder %s20, 1
    %p64 = por %p62, %p63
    %p65 = scmp.ne.s32.totalorder %s54, %s55
    %p66 = scmp.eq.s32.totalorder %s20, 0
    %p67 = por %p65, %p66
    %p68 = scmp.ne.s32.totalorder %s54, %s55
    %p69 = scmp.eq.s32.totalorder %s21, 1
    %p70 = por %p68, %p69
    %p72 = scmp.ne.s32.totalorder %s55, %s71
    %p73 = scmp.eq.s32.totalorder %s21, 0
    %p74 = por %p72, %p73
    %s76 = sadd.s32 %s75, 1
    %p79 = scmp.eq.s32.totalorder %s15, 1
    %p80 = scmp.ne.s32.totalorder %s75, %s77
    %p81 = scmp.eq.s32.totalorder %s15, 0
    %p82 = por %p80, %p81
    %p83 = scmp.ne.s32.totalorder %s75, %s77
    %p84 = scmp.eq.s32.totalorder %s20, 1
    %p85 = por %p83, %p84
    %p86 = scmp.ne.s32.totalorder %s77, %s78
    %p87 = scmp.eq.s32.totalorder %s20, 0
    %p88 = por %p86, %p87
    %p89 = scmp.ne.s32.totalorder %s77, %s78
    %p90 = scmp.eq.s32.totalorder %s21, 1
    %p91 = por %p89, %p90
    %p93 = scmp.ne.s32.totalorder %s78, %s92
    %p94 = scmp.eq.s32.totalorder %s21, 0
    %p95 = por %p93, %p94
    %s97 = sadd.s32 %s96, 1
    %p100 = scmp.eq.s32.totalorder %s15, 1
    %p101 = scmp.ne.s32.totalorder %s96, %s98
    %p102 = scmp.eq.s32.totalorder %s15, 0
    %p103 = por %p101, %p102
    %p104 = scmp.ne.s32.totalorder %s96, %s98
    %p105 = scmp.eq.s32.totalorder %s20, 1
    %p106 = por %p104, %p105
    %p107 = scmp.ne.s32.totalorder %s98, %s99
    %p108 = scmp.eq.s32.totalorder %s20, 0
    %p109 = por %p107, %p108
    %p110 = scmp.ne.s32.totalorder %s98, %s99
    %p111 = scmp.eq.s32.totalorder %s21, 1
    %p112 = por %p110, %p111
    %p114 = scmp.ne.s32.totalorder %s99, %s113
    %p115 = scmp.eq.s32.totalorder %s21, 0
    %p116 = por %p114, %p115
    %s117 = ssub.s32 %s15, %s22
    %p118 = scmp.eq.s32.totalorder %s117, 0
    %s120 = sadd.s32 %s119, 1
    %s121 = scalar_select %p118, %s119, %s120
    %p124 = pneg %p118
    %p125 = scmp.eq.s32.totalorder %s15, 1
    %p126 = por %p124, %p125
    %p127 = scmp.ne.s32.totalorder %s119, %s122
    %p128 = scmp.eq.s32.totalorder %s15, 0
    %p129 = por %p127, %p128
    %p130 = scmp.ne.s32.totalorder %s119, %s122
    %p131 = scmp.eq.s32.totalorder %s20, 1
    %p132 = por %p130, %p131
    %p133 = scmp.ne.s32.totalorder %s122, %s123
    %p134 = scmp.eq.s32.totalorder %s20, 0
    %p135 = por %p133, %p134
    %p136 = scmp.ne.s32.totalorder %s122, %s123
    %p137 = scmp.eq.s32.totalorder %s21, 1
    %p138 = por %p136, %p137
    %p140 = scmp.ne.s32.totalorder %s123, %s139
    %p141 = scmp.eq.s32.totalorder %s21, 0
    %p142 = por %p140, %p141
    %s144 = sadd.s32 %s143, 1
    %p147 = scmp.eq.s32.totalorder %s15, 1
    %p148 = scmp.ne.s32.totalorder %s143, %s145
    %p149 = scmp.eq.s32.totalorder %s15, 0
    %p150 = por %p148, %p149
    %p151 = scmp.ne.s32.totalorder %s143, %s145
    %p152 = scmp.eq.s32.totalorder %s20, 1
    %p153 = por %p151, %p152
    %p154 = scmp.ne.s32.totalorder %s145, %s146
    %p155 = scmp.eq.s32.totalorder %s20, 0
    %p156 = por %p154, %p155
    %p157 = scmp.ne.s32.totalorder %s145, %s146
    %p158 = scmp.eq.s32.totalorder %s21, 1
    %p159 = por %p157, %p158
    %p161 = scmp.ne.s32.totalorder %s146, %s160
    %p162 = scmp.eq.s32.totalorder %s21, 0
    %p163 = por %p161, %p162
    %s165 = sadd.s32 %s164, 1
    %p168 = scmp.eq.s32.totalorder %s15, 1
    %p169 = scmp.ne.s32.totalorder %s164, %s166
    %p170 = scmp.eq.s32.totalorder %s15, 0
    %p171 = por %p169, %p170
    %p172 = scmp.ne.s32.totalorder %s164, %s166
    %p173 = scmp.eq.s32.totalorder %s20, 1
    %p174 = por %p172, %p173
    %p175 = scmp.ne.s32.totalorder %s166, %s167
    %p176 = scmp.eq.s32.totalorder %s20, 0
    %p177 = por %p175, %p176
    %p178 = scmp.ne.s32.totalorder %s166, %s167
    %p179 = scmp.eq.s32.totalorder %s21, 1
    %p180 = por %p178, %p179
    %p182 = scmp.ne.s32.totalorder %s167, %s181
    %p183 = scmp.eq.s32.totalorder %s21, 0
    %p184 = por %p182, %p183
    %s186 = sadd.s32 %s185, 1
    %p189 = scmp.eq.s32.totalorder %s15, 1
    %p190 = scmp.ne.s32.totalorder %s185, %s187
    %p191 = scmp.eq.s32.totalorder %s15, 0
    %p192 = por %p190, %p191
    %p193 = scmp.ne.s32.totalorder %s185, %s187
    %p194 = scmp.eq.s32.totalorder %s20, 1
    %p195 = por %p193, %p194
    %p196 = scmp.ne.s32.totalorder %s187, %s188
    %p197 = scmp.eq.s32.totalorder %s20, 0
    %p198 = por %p196, %p197
    %p199 = scmp.ne.s32.totalorder %s187, %s188
    %p200 = scmp.eq.s32.totalorder %s21, 1
    %p201 = por %p199, %p200
    %p203 = scmp.ne.s32.totalorder %s188, %s202
    %p204 = scmp.eq.s32.totalorder %s21, 0
    %p205 = por %p203, %p204
    %s207 = sadd.s32 %s206, 1
    %p210 = scmp.eq.s32.totalorder %s15, 1
    %p211 = scmp.ne.s32.totalorder %s206, %s208
    %p212 = scmp.eq.s32.totalorder %s15, 0
    %p213 = por %p211, %p212
    %p214 = scmp.ne.s32.totalorder %s206, %s208
    %p215 = scmp.eq.s32.totalorder %s20, 1
    %p216 = por %p214, %p215
    %p217 = scmp.ne.s32.totalorder %s208, %s209
    %p218 = scmp.eq.s32.totalorder %s20, 0
    %p219 = por %p217, %p218
    %p220 = scmp.ne.s32.totalorder %s208, %s209
    %p221 = scmp.eq.s32.totalorder %s21, 1
    %p222 = por %p220, %p221
    %p224 = scmp.ne.s32.totalorder %s209, %s223
    %p225 = scmp.eq.s32.totalorder %s21, 0
    %p226 = por %p224, %p225
    %s227 = ssub.s32 %s15, %s22
    %p228 = scmp.eq.s32.totalorder %s227, 0
    %s230 = sadd.s32 %s229, 1
    %s231 = scalar_select %p228, %s229, %s230
    %p234 = pneg %p228
    %p235 = scmp.eq.s32.totalorder %s15, 1
    %p236 = por %p234, %p235
    %p237 = scmp.ne.s32.totalorder %s229, %s232
    %p238 = scmp.eq.s32.totalorder %s15, 0
    %p239 = por %p237, %p238
    %p240 = scmp.ne.s32.totalorder %s229, %s232
    %p241 = scmp.eq.s32.totalorder %s20, 1
    %p242 = por %p240, %p241
    %p243 = scmp.ne.s32.totalorder %s232, %s233
    %p244 = scmp.eq.s32.totalorder %s20, 0
    %p245 = por %p243, %p244
    %p246 = scmp.ne.s32.totalorder %s232, %s233
    %p247 = scmp.eq.s32.totalorder %s21, 1
    %p248 = por %p246, %p247
    %p250 = scmp.ne.s32.totalorder %s233, %s249
    %p251 = scmp.eq.s32.totalorder %s21, 0
    %p252 = por %p250, %p251
    %p253 = scmp.le.s32.totalorder 1, %s15
    %p254 = scmp.lt.s32.totalorder %s15, 3
    %p255 = pnand %p253, %p254
    %p256 = pneg %p255
    // Predicated region
    $region9: #{block_forward.5} parent=5 // pred_check
      _
    $region10: #{block_forward.5} parent=5 // pred_check_branch
      %258 = sbr.rel (%p255) target = $region12
    $region11: #{block_forward.5} parent=5 // pred_region
      %s259 = ssub.s32 %s15, 1
      // Predicated region
      $region13: #{block_forward.5} parent=11 // pred_check
        %p260 = pneg %p88
      $region14: #{block_forward.5} parent=11 // pred_check_branch
        %262 = sbr.rel (%p260) target = $region16
      $region15: #{block_forward.5} parent=11 // pred_region
        _
      $region16: #{block_forward.5} parent=11 // pred_fallthru
        _
      // Predicated region
      $region17: #{block_forward.5} parent=11 // pred_check
        %p263 = pneg %p109
      $region18: #{block_forward.5} parent=11 // pred_check_branch
        %265 = sbr.rel (%p263) target = $region20
      $region19: #{block_forward.5} parent=11 // pred_region
        _
      $region20: #{block_forward.5} parent=11 // pred_fallthru
        _
      // Predicated region
      $region21: #{block_forward.5} parent=11 // pred_check
        %p266 = pneg %p156
      $region22: #{block_forward.5} parent=11 // pred_check_branch
        %268 = sbr.rel (%p266) target = $region24
      $region23: #{block_forward.5} parent=11 // pred_region
        _
      $region24: #{block_forward.5} parent=11 // pred_fallthru
        _
      // Predicated region
      $region25: #{block_forward.5} parent=11 // pred_check
        %p269 = pneg %p177
      $region26: #{block_forward.5} parent=11 // pred_check_branch
        %271 = sbr.rel (%p269) target = $region28
      $region27: #{block_forward.5} parent=11 // pred_region
        _
      $region28: #{block_forward.5} parent=11 // pred_fallthru
        _
      // Predicated region
      $region29: #{block_forward.5} parent=11 // pred_check
        %p272 = pneg %p198
      $region30: #{block_forward.5} parent=11 // pred_check_branch
        %274 = sbr.rel (%p272) target = $region32
      $region31: #{block_forward.5} parent=11 // pred_region
        _
      $region32: #{block_forward.5} parent=11 // pred_fallthru
        _
      // Predicated region
      $region33: #{block_forward.5} parent=11 // pred_check
        %p275 = pneg %p219
      $region34: #{block_forward.5} parent=11 // pred_check_branch
        %277 = sbr.rel (%p275) target = $region36
      $region35: #{block_forward.5} parent=11 // pred_region
        _
      $region36: #{block_forward.5} parent=11 // pred_fallthru
        _
    $region12: #{block_forward.5} parent=5 // pred_fallthru
      _
    %p278 = scmp.lt.s32.totalorder %s15, 2
    // Predicated region
    $region37: #{block_forward.5} parent=5 // pred_check
      %p279 = pneg %p278
    $region38: #{block_forward.5} parent=5 // pred_check_branch
      %281 = sbr.rel (%p279) target = $region40
    $region39: #{block_forward.5} parent=5 // pred_region
      // Predicated region
      $region41: #{block_forward.5} parent=39 // pred_check
        %p282 = pneg %p35
      $region42: #{block_forward.5} parent=39 // pred_check_branch
        %284 = sbr.rel (%p282) target = $region44
      $region43: #{block_forward.5} parent=39 // pred_region
        %p285 = scmp.lt.s32.totalorder %s15, 1
        %s286 = scalar_select %p285, %s15, 1
        %s287 = smul.addr %s286, 32
        %s288 = smul.addr %s287, 8
        %s289 = scalar_lea.vmem %s0, %s288
      $region44: #{block_forward.5} parent=39 // pred_fallthru
        _
      // Predicated region
      $region45: #{block_forward.5} parent=39 // pred_check
        %p290 = pneg %p61
      $region46: #{block_forward.5} parent=39 // pred_check_branch
        %292 = sbr.rel (%p290) target = $region48
      $region47: #{block_forward.5} parent=39 // pred_region
        %p293 = scmp.lt.s32.totalorder %s15, 1
        %s294 = scalar_select %p293, %s15, 1
        %s295 = smul.addr %s294, 32
        %s296 = smul.addr %s295, 8
        %s297 = scalar_lea.vmem %s1, %s296
      $region48: #{block_forward.5} parent=39 // pred_fallthru
        _
      // Predicated region
      $region49: #{block_forward.5} parent=39 // pred_check
        %p298 = pneg %p129
      $region50: #{block_forward.5} parent=39 // pred_check_branch
        %300 = sbr.rel (%p298) target = $region52
      $region51: #{block_forward.5} parent=39 // pred_region
        %p301 = scmp.lt.s32.totalorder %s15, 1
        %s302 = scalar_select %p301, %s15, 1
        %s303 = scalar_lea.vmem %s4, %s302
      $region52: #{block_forward.5} parent=39 // pred_fallthru
        _
    $region40: #{block_forward.5} parent=5 // pred_fallthru
      _
    %p304 = scmp.le.s32.totalorder 1, %s15
    %p305 = scmp.lt.s32.totalorder %s15, 3
    %p306 = pnand %p304, %p305
    %p307 = pneg %p306
    // Predicated region
    $region53: #{block_forward.5} parent=5 // pred_check
      _
    $region54: #{block_forward.5} parent=5 // pred_check_branch
      %309 = sbr.rel (%p306) target = $region56
    $region55: #{block_forward.5} parent=5 // pred_region
      %s310 = ssub.s32 %s15, 1
      %p311 = scmp.lt.s32.totalorder %s20, 1
      %s312 = scalar_select %p311, %s20, 1
      %s313 = smul.addr %s312, 32
      %s314 = smul.addr %s313, 8
      %s315 = scalar_lea.vmem %s0, %s314
      %p316 = pneg %p41
      %p317 = pneg %p38
      %p318 = scmp.lt.s32.totalorder %s20, 1
      %s319 = scalar_select %p318, %s20, 1
      %s320 = smul.addr %s319, 32
      %s321 = smul.addr %s320, 8
      %s322 = scalar_lea.vmem %s1, %s321
      %p323 = pneg %p67
      %p324 = pneg %p64
      %p325 = pneg %p88
      %p326 = pneg %p85
      %p327 = pneg %p109
      %p328 = pneg %p106
      %p329 = scmp.lt.s32.totalorder %s20, 1
      %s330 = scalar_select %p329, %s20, 1
      %s331 = scalar_lea.vmem %s4, %s330
      %p332 = pneg %p135
      %p333 = pneg %p132
      %p334 = pneg %p156
      %p335 = pneg %p153
      %p336 = pneg %p177
      %p337 = pneg %p174
      %p338 = pneg %p198
      %p339 = pneg %p195
      %p340 = pneg %p219
      %p341 = pneg %p216
      %p342 = pneg %p245
      %p343 = pneg %p242
      %p344 = scmp.lt.s32.totalorder %s20, 1
      %s345 = scalar_select %p344, %s20, 1
      %s346 = smul.addr %s345, 32
      %s347 = smul.addr %s346, 8
      %s348 = scalar_lea.vmem %s9, %s347
      %p349 = scmp.lt.s32.totalorder %s20, 1
      %s350 = scalar_select %p349, %s20, 1
      %s351 = smul.addr %s350, 32
      %s352 = smul.addr %s351, 8
      %s353 = scalar_lea.vmem %s0, %s352
      %p354 = scmp.lt.s32.totalorder %s20, 1
      %s355 = scalar_select %p354, %s20, 1
      %s356 = smul.addr %s355, 32
      %s357 = smul.addr %s356, 8
      %s358 = scalar_lea.vmem %s1, %s357
      %p359 = scmp.lt.s32.totalorder %s20, 1
      %s360 = scalar_select %p359, %s20, 1
      %s361 = scalar_lea.vmem %s4, %s360
      %p362 = scmp.lt.s32.totalorder %s20, 1
      %s363 = scalar_select %p362, %s20, 1
      %s364 = smul.addr %s363, 32
      %s365 = smul.addr %s364, 8
      %s366 = scalar_lea.vmem %s9, %s365
      %v367 = vld [vmem:[%s361] sm:$0x1]
      %v368 = vld [vmem:[%s5] sm:$0xff]
      %v369 = vld [vmem:[%s5 + $0x8] sm:$0xff]
      %v370 = vld [vmem:[%s5 + $0x10] sm:$0xff]
      %v371 = vld [vmem:[%s5 + $0x18] sm:$0xff]
      %v372 = vld [vmem:[%s5 + $0x20] sm:$0xff]
      %v373 = vld [vmem:[%s5 + $0x28] sm:$0xff]
      %v374 = vld [vmem:[%s5 + $0x30] sm:$0xff]
      %v375 = vld [vmem:[%s5 + $0x38] sm:$0xff]
      %v376 = vld [vmem:[%s5 + $0x40] sm:$0xff]
      %v377 = vld [vmem:[%s5 + $0x48] sm:$0xff]
      %v378 = vld [vmem:[%s5 + $0x50] sm:$0xff]
      %v379 = vld [vmem:[%s5 + $0x58] sm:$0xff]
      %v380 = vld [vmem:[%s5 + $0x60] sm:$0xff]
      %v381 = vld [vmem:[%s5 + $0x68] sm:$0xff]
      %v382 = vld [vmem:[%s5 + $0x70] sm:$0xff]
      %v383 = vld [vmem:[%s5 + $0x78] sm:$0xff]
      %v384 = vld [vmem:[%s6] sm:$0x1]
      %385 = vmatprep.subr.mxu0 0.0
      %386 = vmatpush1.msra.mxu0 %v383
      %387 = vmatprep.subr.mxu0 0.0
      %388 = vmatpush1.msra.mxu0 %v382
      %389 = vmatprep.subr.mxu0 0.0
      %390 = vmatpush1.msra.mxu0 %v381
      %391 = vmatprep.subr.mxu0 0.0
      %392 = vmatpush1.msra.mxu0 %v380
      %393 = vmatprep.subr.mxu0 0.0
      %394 = vmatpush1.msra.mxu0 %v379
      %395 = vmatprep.subr.mxu0 0.0
      %396 = vmatpush1.msra.mxu0 %v378
      %397 = vmatprep.subr.mxu0 0.0
      %398 = vmatpush1.msra.mxu0 %v377
      %399 = vmatprep.subr.mxu0 0.0
      %400 = vmatpush1.msra.mxu0 %v376
      %401 = vmatprep.subr.mxu0 0.0
      %402 = vmatpush1.msra.mxu0 %v375
      %403 = vmatprep.subr.mxu0 0.0
      %404 = vmatpush1.msra.mxu0 %v374
      %405 = vmatprep.subr.mxu0 0.0
      %406 = vmatpush1.msra.mxu0 %v373
      %407 = vmatprep.subr.mxu0 0.0
      %408 = vmatpush1.msra.mxu0 %v372
      %409 = vmatprep.subr.mxu0 0.0
      %410 = vmatpush1.msra.mxu0 %v371
      %411 = vmatprep.subr.mxu0 0.0
      %412 = vmatpush1.msra.mxu0 %v370
      %413 = vmatprep.subr.mxu0 0.0
      %414 = vmatpush1.msra.mxu0 %v369
      %415 = vmatprep.subr.mxu0 0.0
      %416 = vmatpush1.msra.mxu0 %v368
      %417 = vmatprep.subr.mxu0 0.0
      %418 = vmatpush2.msra.mxu0 0.0
      %419 = vmatprep.subr.mxu0 0.0
      %420 = vmatpush2.msra.mxu0 0.0
      %421 = vmatprep.subr.mxu0 0.0
      %422 = vmatpush2.msra.mxu0 0.0
      %423 = vmatprep.subr.mxu0 0.0
      %424 = vmatpush2.msra.mxu0 0.0
      %425 = vmatprep.subr.mxu0 0.0
      %426 = vmatpush2.msra.mxu0 0.0
      %427 = vmatprep.subr.mxu0 0.0
      %428 = vmatpush2.msra.mxu0 0.0
      %429 = vmatprep.subr.mxu0 0.0
      %430 = vmatpush2.msra.mxu0 0.0
      %431 = vmatprep.subr.mxu0 0.0
      %432 = vmatpush2.msra.mxu0 0.0
      %433 = vmatprep.subr.mxu0 0.0
      %434 = vmatpush2.msra.mxu0 0.0
      %435 = vmatprep.subr.mxu0 0.0
      %436 = vmatpush2.msra.mxu0 0.0
      %437 = vmatprep.subr.mxu0 0.0
      %438 = vmatpush2.msra.mxu0 0.0
      %439 = vmatprep.subr.mxu0 0.0
      %440 = vmatpush2.msra.mxu0 0.0
      %441 = vmatprep.subr.mxu0 0.0
      %442 = vmatpush2.msra.mxu0 0.0
      %443 = vmatprep.subr.mxu0 0.0
      %444 = vmatpush2.msra.mxu0 0.0
      %445 = vmatprep.subr.mxu0 0.0
      %446 = vmatpush2.msra.mxu0 0.0
      %447 = vmatprep.subr.mxu0 0.0
      %448 = vmatpush2.msra.mxu0 0.0
      %449 = vmatprep.mubr.f32.mxu0 0.0
      %450 = vmatmul.mubr.f32.gmra.mxu0 %v367
      %v451 = vpop.f32.mrf.mxu0
      %v452 = vadd.f32 %v384, %v451
      %v453 = vpop.f32.mrf.mxu0
      %454 = vdwg.mxu0
      %v455 = vmax.f32 %v452, 0.0
      %v456 = vld [vmem:[%s7] sm:$0xff]
      %v457 = vld [vmem:[%s7 + $0x8] sm:$0xff]
      %v458 = vld [vmem:[%s7 + $0x10] sm:$0xff]
      %v459 = vld [vmem:[%s7 + $0x18] sm:$0xff]
      %v460 = vld [vmem:[%s7 + $0x20] sm:$0xff]
      %v461 = vld [vmem:[%s7 + $0x28] sm:$0xff]
      %v462 = vld [vmem:[%s7 + $0x30] sm:$0xff]
      %v463 = vld [vmem:[%s7 + $0x38] sm:$0xff]
      %v464 = vld [vmem:[%s7 + $0x40] sm:$0xff]
      %v465 = vld [vmem:[%s7 + $0x48] sm:$0xff]
      %v466 = vld [vmem:[%s7 + $0x50] sm:$0xff]
      %v467 = vld [vmem:[%s7 + $0x58] sm:$0xff]
      %v468 = vld [vmem:[%s7 + $0x60] sm:$0xff]
      %v469 = vld [vmem:[%s7 + $0x68] sm:$0xff]
      %v470 = vld [vmem:[%s7 + $0x70] sm:$0xff]
      %v471 = vld [vmem:[%s7 + $0x78] sm:$0xff]
      %v472 = vld [vmem:[%s8] sm:$0x1]
      %473 = vmatprep.subr.mxu0 0.0
      %474 = vmatpush1.msra.mxu0 %v471
      %475 = vmatprep.subr.mxu0 0.0
      %476 = vmatpush1.msra.mxu0 %v470
      %477 = vmatprep.subr.mxu0 0.0
      %478 = vmatpush1.msra.mxu0 %v469
      %479 = vmatprep.subr.mxu0 0.0
      %480 = vmatpush1.msra.mxu0 %v468
      %481 = vmatprep.subr.mxu0 0.0
      %482 = vmatpush1.msra.mxu0 %v467
      %483 = vmatprep.subr.mxu0 0.0
      %484 = vmatpush1.msra.mxu0 %v466
      %485 = vmatprep.subr.mxu0 0.0
      %486 = vmatpush1.msra.mxu0 %v465
      %487 = vmatprep.subr.mxu0 0.0
      %488 = vmatpush1.msra.mxu0 %v464
      %489 = vmatprep.subr.mxu0 0.0
      %490 = vmatpush1.msra.mxu0 %v463
      %491 = vmatprep.subr.mxu0 0.0
      %492 = vmatpush1.msra.mxu0 %v462
      %493 = vmatprep.subr.mxu0 0.0
      %494 = vmatpush1.msra.mxu0 %v461
      %495 = vmatprep.subr.mxu0 0.0
      %496 = vmatpush1.msra.mxu0 %v460
      %497 = vmatprep.subr.mxu0 0.0
      %498 = vmatpush1.msra.mxu0 %v459
      %499 = vmatprep.subr.mxu0 0.0
      %500 = vmatpush1.msra.mxu0 %v458
      %501 = vmatprep.subr.mxu0 0.0
      %502 = vmatpush1.msra.mxu0 %v457
      %503 = vmatprep.subr.mxu0 0.0
      %504 = vmatpush1.msra.mxu0 %v456
      %505 = vmatprep.subr.mxu0 0.0
      %506 = vmatpush2.msra.mxu0 0.0
      %507 = vmatprep.subr.mxu0 0.0
      %508 = vmatpush2.msra.mxu0 0.0
      %509 = vmatprep.subr.mxu0 0.0
      %510 = vmatpush2.msra.mxu0 0.0
      %511 = vmatprep.subr.mxu0 0.0
      %512 = vmatpush2.msra.mxu0 0.0
      %513 = vmatprep.subr.mxu0 0.0
      %514 = vmatpush2.msra.mxu0 0.0
      %515 = vmatprep.subr.mxu0 0.0
      %516 = vmatpush2.msra.mxu0 0.0
      %517 = vmatprep.subr.mxu0 0.0
      %518 = vmatpush2.msra.mxu0 0.0
      %519 = vmatprep.subr.mxu0 0.0
      %520 = vmatpush2.msra.mxu0 0.0
      %521 = vmatprep.subr.mxu0 0.0
      %522 = vmatpush2.msra.mxu0 0.0
      %523 = vmatprep.subr.mxu0 0.0
      %524 = vmatpush2.msra.mxu0 0.0
      %525 = vmatprep.subr.mxu0 0.0
      %526 = vmatpush2.msra.mxu0 0.0
      %527 = vmatprep.subr.mxu0 0.0
      %528 = vmatpush2.msra.mxu0 0.0
      %529 = vmatprep.subr.mxu0 0.0
      %530 = vmatpush2.msra.mxu0 0.0
      %531 = vmatprep.subr.mxu0 0.0
      %532 = vmatpush2.msra.mxu0 0.0
      %533 = vmatprep.subr.mxu0 0.0
      %534 = vmatpush2.msra.mxu0 0.0
      %535 = vmatprep.subr.mxu0 0.0
      %536 = vmatpush2.msra.mxu0 0.0
      %537 = vmatprep.mubr.f32.mxu0 0.0
      %538 = vmatmul.mubr.f32.gmra.mxu0 %v455
      %v539 = vpop.f32.mrf.mxu0
      %v540 = vadd.f32 %v472, %v539
      %v541 = vpop.f32.mrf.mxu0
      %542 = vdwg.mxu0
      %v543 = vsub.f32 0.0, %v540
      %v544 = vmul.f32 %v543, 1.442695
      %v545 = vpow.pop %v544
      %v546 = vadd.f32 %v545, 1.0
      %v547 = vrcp.pop %v546
      %v548 = vld [vmem:[%s353] sm:$0xff]
      %v549 = vld [vmem:[%s353 + $0x8] sm:$0xff]
      %v550 = vld [vmem:[%s353 + $0x10] sm:$0xff]
      %v551 = vld [vmem:[%s353 + $0x18] sm:$0xff]
      %v552 = vld [vmem:[%s353 + $0x20] sm:$0xff]
      %v553 = vld [vmem:[%s353 + $0x28] sm:$0xff]
      %v554 = vld [vmem:[%s353 + $0x30] sm:$0xff]
      %v555 = vld [vmem:[%s353 + $0x38] sm:$0xff]
      %v556 = vld [vmem:[%s353 + $0x40] sm:$0xff]
      %v557 = vld [vmem:[%s353 + $0x48] sm:$0xff]
      %v558 = vld [vmem:[%s353 + $0x50] sm:$0xff]
      %v559 = vld [vmem:[%s353 + $0x58] sm:$0xff]
      %v560 = vld [vmem:[%s353 + $0x60] sm:$0xff]
      %v561 = vld [vmem:[%s353 + $0x68] sm:$0xff]
      %v562 = vld [vmem:[%s353 + $0x70] sm:$0xff]
      %v563 = vld [vmem:[%s353 + $0x78] sm:$0xff]
      %v564 = vld [vmem:[%s353 + $0x80] sm:$0xff]
      %v565 = vld [vmem:[%s353 + $0x88] sm:$0xff]
      %v566 = vld [vmem:[%s353 + $0x90] sm:$0xff]
      %v567 = vld [vmem:[%s353 + $0x98] sm:$0xff]
      %v568 = vld [vmem:[%s353 + $0xa0] sm:$0xff]
      %v569 = vld [vmem:[%s353 + $0xa8] sm:$0xff]
      %v570 = vld [vmem:[%s353 + $0xb0] sm:$0xff]
      %v571 = vld [vmem:[%s353 + $0xb8] sm:$0xff]
      %v572 = vld [vmem:[%s353 + $0xc0] sm:$0xff]
      %v573 = vld [vmem:[%s353 + $0xc8] sm:$0xff]
      %v574 = vld [vmem:[%s353 + $0xd0] sm:$0xff]
      %v575 = vld [vmem:[%s353 + $0xd8] sm:$0xff]
      %v576 = vld [vmem:[%s353 + $0xe0] sm:$0xff]
      %v577 = vld [vmem:[%s353 + $0xe8] sm:$0xff]
      %v578 = vld [vmem:[%s353 + $0xf0] sm:$0xff]
      %v579 = vld [vmem:[%s353 + $0xf8] sm:$0xff]
      %v580 = vld [vmem:[%s2] sm:$0x1]
      %v582 = vlaneseq
      %v583 = vshrl.u32 %v582, 7
      %v584 = vsub.s32 0, %v583
      %v585 = vrot.slane %v580, %v584
      %v587 = vmul.f32 %v548, %v585
      %v588 = vmul.f32 %v549, %v585
      %v589 = vmul.f32 %v550, %v585
      %v590 = vmul.f32 %v551, %v585
      %v591 = vmul.f32 %v552, %v585
      %v592 = vmul.f32 %v553, %v585
      %v593 = vmul.f32 %v554, %v585
      %v594 = vmul.f32 %v555, %v585
      %v595 = vmul.f32 %v556, %v585
      %v596 = vmul.f32 %v557, %v585
      %v597 = vmul.f32 %v558, %v585
      %v598 = vmul.f32 %v559, %v585
      %v599 = vmul.f32 %v560, %v585
      %v600 = vmul.f32 %v561, %v585
      %v601 = vmul.f32 %v562, %v585
      %v602 = vmul.f32 %v563, %v585
      %v603 = vmul.f32 %v564, %v585
      %v604 = vmul.f32 %v565, %v585
      %v605 = vmul.f32 %v566, %v585
      %v606 = vmul.f32 %v567, %v585
      %v607 = vmul.f32 %v568, %v585
      %v608 = vmul.f32 %v569, %v585
      %v609 = vmul.f32 %v570, %v585
      %v610 = vmul.f32 %v571, %v585
      %v611 = vmul.f32 %v572, %v585
      %v612 = vmul.f32 %v573, %v585
      %v613 = vmul.f32 %v574, %v585
      %v614 = vmul.f32 %v575, %v585
      %v615 = vmul.f32 %v576, %v585
      %v616 = vmul.f32 %v577, %v585
      %v617 = vmul.f32 %v578, %v585
      %v618 = vmul.f32 %v579, %v585
      %v619 = vld [vmem:[%s3] sm:$0x1]
      %v621 = vlaneseq
      %v622 = vshrl.u32 %v621, 7
      %v623 = vsub.s32 0, %v622
      %v624 = vrot.slane %v619, %v623
      %v626 = vadd.f32 %v587, %v624
      %v627 = vadd.f32 %v588, %v624
      %v628 = vadd.f32 %v589, %v624
      %v629 = vadd.f32 %v590, %v624
      %v630 = vadd.f32 %v591, %v624
      %v631 = vadd.f32 %v592, %v624
      %v632 = vadd.f32 %v593, %v624
      %v633 = vadd.f32 %v594, %v624
      %v634 = vadd.f32 %v595, %v624
      %v635 = vadd.f32 %v596, %v624
      %v636 = vadd.f32 %v597, %v624
      %v637 = vadd.f32 %v598, %v624
      %v638 = vadd.f32 %v599, %v624
      %v639 = vadd.f32 %v600, %v624
      %v640 = vadd.f32 %v601, %v624
      %v641 = vadd.f32 %v602, %v624
      %v642 = vadd.f32 %v603, %v624
      %v643 = vadd.f32 %v604, %v624
      %v644 = vadd.f32 %v605, %v624
      %v645 = vadd.f32 %v606, %v624
      %v646 = vadd.f32 %v607, %v624
      %v647 = vadd.f32 %v608, %v624
      %v648 = vadd.f32 %v609, %v624
      %v649 = vadd.f32 %v610, %v624
      %v650 = vadd.f32 %v611, %v624
      %v651 = vadd.f32 %v612, %v624
      %v652 = vadd.f32 %v613, %v624
      %v653 = vadd.f32 %v614, %v624
      %v654 = vadd.f32 %v615, %v624
      %v655 = vadd.f32 %v616, %v624
      %v656 = vadd.f32 %v617, %v624
      %v657 = vadd.f32 %v618, %v624
      %v658 = vlaneseq
      %v659 = vshrl.u32 %v658, 7
      %v660 = vsub.s32 0, %v659
      %v661 = vrot.slane %v547, %v660
      %v662 = vmul.f32 %v626, %v661
      %v663 = vmul.f32 %v627, %v661
      %v664 = vmul.f32 %v628, %v661
      %v665 = vmul.f32 %v629, %v661
      %v666 = vmul.f32 %v630, %v661
      %v667 = vmul.f32 %v631, %v661
      %v668 = vmul.f32 %v632, %v661
      %v669 = vmul.f32 %v633, %v661
      %v670 = vmul.f32 %v634, %v661
      %v671 = vmul.f32 %v635, %v661
      %v672 = vmul.f32 %v636, %v661
      %v673 = vmul.f32 %v637, %v661
      %v674 = vmul.f32 %v638, %v661
      %v675 = vmul.f32 %v639, %v661
      %v676 = vmul.f32 %v640, %v661
      %v677 = vmul.f32 %v641, %v661
      %v678 = vmul.f32 %v642, %v661
      %v679 = vmul.f32 %v643, %v661
      %v680 = vmul.f32 %v644, %v661
      %v681 = vmul.f32 %v645, %v661
      %v682 = vmul.f32 %v646, %v661
      %v683 = vmul.f32 %v647, %v661
      %v684 = vmul.f32 %v648, %v661
      %v685 = vmul.f32 %v649, %v661
      %v686 = vmul.f32 %v650, %v661
      %v687 = vmul.f32 %v651, %v661
      %v688 = vmul.f32 %v652, %v661
      %v689 = vmul.f32 %v653, %v661
      %v690 = vmul.f32 %v654, %v661
      %v691 = vmul.f32 %v655, %v661
      %v692 = vmul.f32 %v656, %v661
      %v693 = vmul.f32 %v657, %v661
      %v694 = vld [vmem:[%s358] sm:$0xff]
      %v695 = vld [vmem:[%s358 + $0x8] sm:$0xff]
      %v696 = vld [vmem:[%s358 + $0x10] sm:$0xff]
      %v697 = vld [vmem:[%s358 + $0x18] sm:$0xff]
      %v698 = vld [vmem:[%s358 + $0x20] sm:$0xff]
      %v699 = vld [vmem:[%s358 + $0x28] sm:$0xff]
      %v700 = vld [vmem:[%s358 + $0x30] sm:$0xff]
      %v701 = vld [vmem:[%s358 + $0x38] sm:$0xff]
      %v702 = vld [vmem:[%s358 + $0x40] sm:$0xff]
      %v703 = vld [vmem:[%s358 + $0x48] sm:$0xff]
      %v704 = vld [vmem:[%s358 + $0x50] sm:$0xff]
      %v705 = vld [vmem:[%s358 + $0x58] sm:$0xff]
      %v706 = vld [vmem:[%s358 + $0x60] sm:$0xff]
      %v707 = vld [vmem:[%s358 + $0x68] sm:$0xff]
      %v708 = vld [vmem:[%s358 + $0x70] sm:$0xff]
      %v709 = vld [vmem:[%s358 + $0x78] sm:$0xff]
      %v710 = vld [vmem:[%s358 + $0x80] sm:$0xff]
      %v711 = vld [vmem:[%s358 + $0x88] sm:$0xff]
      %v712 = vld [vmem:[%s358 + $0x90] sm:$0xff]
      %v713 = vld [vmem:[%s358 + $0x98] sm:$0xff]
      %v714 = vld [vmem:[%s358 + $0xa0] sm:$0xff]
      %v715 = vld [vmem:[%s358 + $0xa8] sm:$0xff]
      %v716 = vld [vmem:[%s358 + $0xb0] sm:$0xff]
      %v717 = vld [vmem:[%s358 + $0xb8] sm:$0xff]
      %v718 = vld [vmem:[%s358 + $0xc0] sm:$0xff]
      %v719 = vld [vmem:[%s358 + $0xc8] sm:$0xff]
      %v720 = vld [vmem:[%s358 + $0xd0] sm:$0xff]
      %v721 = vld [vmem:[%s358 + $0xd8] sm:$0xff]
      %v722 = vld [vmem:[%s358 + $0xe0] sm:$0xff]
      %v723 = vld [vmem:[%s358 + $0xe8] sm:$0xff]
      %v724 = vld [vmem:[%s358 + $0xf0] sm:$0xff]
      %v725 = vld [vmem:[%s358 + $0xf8] sm:$0xff]
      %v726 = vadd.f32 %v662, %v694
      %v727 = vadd.f32 %v663, %v695
      %v728 = vadd.f32 %v664, %v696
      %v729 = vadd.f32 %v665, %v697
      %v730 = vadd.f32 %v666, %v698
      %v731 = vadd.f32 %v667, %v699
      %v732 = vadd.f32 %v668, %v700
      %v733 = vadd.f32 %v669, %v701
      %v734 = vadd.f32 %v670, %v702
      %v735 = vadd.f32 %v671, %v703
      %v736 = vadd.f32 %v672, %v704
      %v737 = vadd.f32 %v673, %v705
      %v738 = vadd.f32 %v674, %v706
      %v739 = vadd.f32 %v675, %v707
      %v740 = vadd.f32 %v676, %v708
      %v741 = vadd.f32 %v677, %v709
      %v742 = vadd.f32 %v678, %v710
      %v743 = vadd.f32 %v679, %v711
      %v744 = vadd.f32 %v680, %v712
      %v745 = vadd.f32 %v681, %v713
      %v746 = vadd.f32 %v682, %v714
      %v747 = vadd.f32 %v683, %v715
      %v748 = vadd.f32 %v684, %v716
      %v749 = vadd.f32 %v685, %v717
      %v750 = vadd.f32 %v686, %v718
      %v751 = vadd.f32 %v687, %v719
      %v752 = vadd.f32 %v688, %v720
      %v753 = vadd.f32 %v689, %v721
      %v754 = vadd.f32 %v690, %v722
      %v755 = vadd.f32 %v691, %v723
      %v756 = vadd.f32 %v692, %v724
      %v757 = vadd.f32 %v693, %v725
      %v758 = vmax.f32 %v726, 0.0
      %v759 = vmax.f32 %v727, 0.0
      %v760 = vmax.f32 %v728, 0.0
      %v761 = vmax.f32 %v729, 0.0
      %v762 = vmax.f32 %v730, 0.0
      %v763 = vmax.f32 %v731, 0.0
      %v764 = vmax.f32 %v732, 0.0
      %v765 = vmax.f32 %v733, 0.0
      %v766 = vmax.f32 %v734, 0.0
      %v767 = vmax.f32 %v735, 0.0
      %v768 = vmax.f32 %v736, 0.0
      %v769 = vmax.f32 %v737, 0.0
      %v770 = vmax.f32 %v738, 0.0
      %v771 = vmax.f32 %v739, 0.0
      %v772 = vmax.f32 %v740, 0.0
      %v773 = vmax.f32 %v741, 0.0
      %v774 = vmax.f32 %v742, 0.0
      %v775 = vmax.f32 %v743, 0.0
      %v776 = vmax.f32 %v744, 0.0
      %v777 = vmax.f32 %v745, 0.0
      %v778 = vmax.f32 %v746, 0.0
      %v779 = vmax.f32 %v747, 0.0
      %v780 = vmax.f32 %v748, 0.0
      %v781 = vmax.f32 %v749, 0.0
      %v782 = vmax.f32 %v750, 0.0
      %v783 = vmax.f32 %v751, 0.0
      %v784 = vmax.f32 %v752, 0.0
      %v785 = vmax.f32 %v753, 0.0
      %v786 = vmax.f32 %v754, 0.0
      %v787 = vmax.f32 %v755, 0.0
      %v788 = vmax.f32 %v756, 0.0
      %v789 = vmax.f32 %v757, 0.0
      %790 = vst [vmem:[%s366] sm:$0xff] %v758
      %791 = vst [vmem:[%s366 + $0x8] sm:$0xff] %v759
      %792 = vst [vmem:[%s366 + $0x10] sm:$0xff] %v760
      %793 = vst [vmem:[%s366 + $0x18] sm:$0xff] %v761
      %794 = vst [vmem:[%s366 + $0x20] sm:$0xff] %v762
      %795 = vst [vmem:[%s366 + $0x28] sm:$0xff] %v763
      %796 = vst [vmem:[%s366 + $0x30] sm:$0xff] %v764
      %797 = vst [vmem:[%s366 + $0x38] sm:$0xff] %v765
      %798 = vst [vmem:[%s366 + $0x40] sm:$0xff] %v766
      %799 = vst [vmem:[%s366 + $0x48] sm:$0xff] %v767
      %800 = vst [vmem:[%s366 + $0x50] sm:$0xff] %v768
      %801 = vst [vmem:[%s366 + $0x58] sm:$0xff] %v769
      %802 = vst [vmem:[%s366 + $0x60] sm:$0xff] %v770
      %803 = vst [vmem:[%s366 + $0x68] sm:$0xff] %v771
      %804 = vst [vmem:[%s366 + $0x70] sm:$0xff] %v772
      %805 = vst [vmem:[%s366 + $0x78] sm:$0xff] %v773
      %806 = vst [vmem:[%s366 + $0x80] sm:$0xff] %v774
      %807 = vst [vmem:[%s366 + $0x88] sm:$0xff] %v775
      %808 = vst [vmem:[%s366 + $0x90] sm:$0xff] %v776
      %809 = vst [vmem:[%s366 + $0x98] sm:$0xff] %v777
      %810 = vst [vmem:[%s366 + $0xa0] sm:$0xff] %v778
      %811 = vst [vmem:[%s366 + $0xa8] sm:$0xff] %v779
      %812 = vst [vmem:[%s366 + $0xb0] sm:$0xff] %v780
      %813 = vst [vmem:[%s366 + $0xb8] sm:$0xff] %v781
      %814 = vst [vmem:[%s366 + $0xc0] sm:$0xff] %v782
      %815 = vst [vmem:[%s366 + $0xc8] sm:$0xff] %v783
      %816 = vst [vmem:[%s366 + $0xd0] sm:$0xff] %v784
      %817 = vst [vmem:[%s366 + $0xd8] sm:$0xff] %v785
      %818 = vst [vmem:[%s366 + $0xe0] sm:$0xff] %v786
      %819 = vst [vmem:[%s366 + $0xe8] sm:$0xff] %v787
      %820 = vst [vmem:[%s366 + $0xf0] sm:$0xff] %v788
      %821 = vst [vmem:[%s366 + $0xf8] sm:$0xff] %v789
      %p822 = scmp.lt.s32.totalorder %s20, 1
      %s823 = scalar_select %p822, %s20, 1
      %s824 = smul.addr %s823, 32
      %s825 = smul.addr %s824, 8
      %s826 = scalar_lea.vmem %s9, %s825
      // Predicated region
      $region57: #{block_forward.5} parent=55 // pred_check
        %p827 = pneg %p242
      $region58: #{block_forward.5} parent=55 // pred_check_branch
        %829 = sbr.rel (%p827) target = $region60
      $region59: #{block_forward.5} parent=55 // pred_region
        _
      $region60: #{block_forward.5} parent=55 // pred_fallthru
        _
    $region56: #{block_forward.5} parent=5 // pred_fallthru
      _
    %p830 = scmp.le.s32.totalorder 2, %s15
    // Predicated region
    $region61: #{block_forward.5} parent=5 // pred_check
      %p831 = pneg %p830
    $region62: #{block_forward.5} parent=5 // pred_check_branch
      %833 = sbr.rel (%p831) target = $region64
    $region63: #{block_forward.5} parent=5 // pred_region
      %s834 = ssub.s32 %s15, 2
      // Predicated region
      $region65: #{block_forward.5} parent=63 // pred_check
        %p835 = pneg %p248
      $region66: #{block_forward.5} parent=63 // pred_check_branch
        %837 = sbr.rel (%p835) target = $region68
      $region67: #{block_forward.5} parent=63 // pred_region
        %p838 = scmp.lt.s32.totalorder %s21, 1
        %s839 = scalar_select %p838, %s21, 1
        %s840 = smul.addr %s839, 32
        %s841 = smul.addr %s840, 8
        %s842 = scalar_lea.vmem %s9, %s841
      $region68: #{block_forward.5} parent=63 // pred_fallthru
        _
    $region64: #{block_forward.5} parent=5 // pred_fallthru
      _
  $region6: #{block_forward.5} parent=0 // loop_footer
    %s19 = sadd.s32 1, %s15
  $region7: #{block_forward.5} parent=0 // loop_footer_branch
    %14 = sbr.rel target = $region3
  $region8: #{block_forward.5} parent=0 // loop_exit
    _

// kernel: block_forward.4
$region0: #{block_forward.4}
  #allocation0 [shape = 'u32[]', space=smem, size = 0x4, offset = 0x4, fixed_abs, tag = 'smem constant byte address 0x4 - core index']
  #allocation1 [shape = 'u32[144,128]{1,0:T(1,128)}', space=vmem, size = 0x12000, scoped, tag = 'internal scratch']
  #allocation2 [shape = 'f32[18,18,128]{2,1,0:T(8,128)}', space=vmem, size = 0x36000, scoped, tag = 'scratch operand']
  %s0 = inlined_call_operand.vmem [shape: f32[2,256,128], index: 0, kind: input, shape index: {}]
  %s1 = inlined_call_operand.vmem [shape: f32[1,128], index: 1, kind: input, shape index: {}]
  %s2 = inlined_call_operand.vmem [shape: f32[1,128], index: 2, kind: input, shape index: {}]
  %s3 = inlined_call_operand.vmem [shape: bf16[9,128,128], index: 3, kind: input, shape index: {}]
  %s4 = inlined_call_operand.vmem [shape: f32[1,128], index: 4, kind: input, shape index: {}]
  %s5 = inlined_call_operand.vmem [shape: f32[2,256,128], index: 5, kind: output, shape index: {0}]
  %s6 = inlined_call_operand.vmem [shape: f32[2,1,128], index: 6, kind: output, shape index: {1}]
  %s7 = inlined_call_operand.vmem [shape: f32[2,1,128], index: 7, kind: output, shape index: {2}]
  %8 = xla_tuple %s5, %s6, %s7
  %s9 = sld [smem:[#allocation0]]
  $region69: #{block_forward.4} parent=0
    _
  %s11 = ssub.s32 1, %s9
  %s12 = scalar_select 0, %s11, %s9
  loop: start=0, step=1, limit=4
  $region2: #{block_forward.4} parent=0 // loop_pre_header
    _
  $region3: #{block_forward.4} parent=0 // loop_header
    %s14 = sphi 0, %s18
    %p15 = scmp.ge.s32.totalorder %s14, 4
    %s24 = sphi 0, %s26
    %s27 = sphi 0, %s24
    %s28 = sphi 0, %s27
    %s44 = sphi 0, %s28
    %s48 = sphi 0, %s48
    %s50 = sphi 0, %s48
    %s51 = sphi 0, %s50
    %s65 = sphi 0, %s51
    %s69 = sphi 0, %s69
    %s71 = sphi 0, %s69
    %s72 = sphi 0, %s71
    %s86 = sphi 0, %s72
    %s90 = sphi 0, %s90
    %s92 = sphi 0, %s90
    %s93 = sphi 0, %s92
    %s107 = sphi 0, %s93
    %s111 = sphi 0, %s111
    %s113 = sphi 0, %s111
    %s114 = sphi 0, %s113
    %s128 = sphi 0, %s114
    %s134 = sphi 0, %s136
    %s137 = sphi 0, %s134
    %s138 = sphi 0, %s137
    %s154 = sphi 0, %s138
    %s160 = sphi 0, %s162
    %s163 = sphi 0, %s160
    %s164 = sphi 0, %s163
    %s180 = sphi 0, %s164
    %s186 = sphi 0, %s188
    %s189 = sphi 0, %s186
    %s190 = sphi 0, %s189
    %s206 = sphi 0, %s190
  $region4: #{block_forward.4} parent=0 // loop_header_branch
    %17 = sbr.rel (%p15) target = $region8
  $region5: #{block_forward.4} parent=0 // loop_body
    %s19 = ssub.s32 %s14, 1
    %s20 = ssub.s32 %s14, 2
    %s21 = sadd.s32 %s14, 1
    %s22 = ssub.s32 %s14, %s21
    %p23 = scmp.eq.s32.totalorder %s22, 0
    %s25 = sadd.s32 %s24, 1
    %s26 = scalar_select %p23, %s24, %s25
    %p29 = pneg %p23
    %p30 = scmp.eq.s32.totalorder %s14, 1
    %p31 = por %p29, %p30
    %p32 = scmp.ne.s32.totalorder %s24, %s27
    %p33 = scmp.eq.s32.totalorder %s14, 0
    %p34 = por %p32, %p33
    %p35 = scmp.ne.s32.totalorder %s24, %s27
    %p36 = scmp.eq.s32.totalorder %s19, 1
    %p37 = por %p35, %p36
    %p38 = scmp.ne.s32.totalorder %s27, %s28
    %p39 = scmp.eq.s32.totalorder %s19, 0
    %p40 = por %p38, %p39
    %p41 = scmp.ne.s32.totalorder %s27, %s28
    %p42 = scmp.eq.s32.totalorder %s20, 1
    %p43 = por %p41, %p42
    %p45 = scmp.ne.s32.totalorder %s28, %s44
    %p46 = scmp.eq.s32.totalorder %s20, 0
    %p47 = por %p45, %p46
    %s49 = sadd.s32 %s48, 1
    %p52 = scmp.eq.s32.totalorder %s14, 1
    %p53 = scmp.ne.s32.totalorder %s48, %s50
    %p54 = scmp.eq.s32.totalorder %s14, 0
    %p55 = por %p53, %p54
    %p56 = scmp.ne.s32.totalorder %s48, %s50
    %p57 = scmp.eq.s32.totalorder %s19, 1
    %p58 = por %p56, %p57
    %p59 = scmp.ne.s32.totalorder %s50, %s51
    %p60 = scmp.eq.s32.totalorder %s19, 0
    %p61 = por %p59, %p60
    %p62 = scmp.ne.s32.totalorder %s50, %s51
    %p63 = scmp.eq.s32.totalorder %s20, 1
    %p64 = por %p62, %p63
    %p66 = scmp.ne.s32.totalorder %s51, %s65
    %p67 = scmp.eq.s32.totalorder %s20, 0
    %p68 = por %p66, %p67
    %s70 = sadd.s32 %s69, 1
    %p73 = scmp.eq.s32.totalorder %s14, 1
    %p74 = scmp.ne.s32.totalorder %s69, %s71
    %p75 = scmp.eq.s32.totalorder %s14, 0
    %p76 = por %p74, %p75
    %p77 = scmp.ne.s32.totalorder %s69, %s71
    %p78 = scmp.eq.s32.totalorder %s19, 1
    %p79 = por %p77, %p78
    %p80 = scmp.ne.s32.totalorder %s71, %s72
    %p81 = scmp.eq.s32.totalorder %s19, 0
    %p82 = por %p80, %p81
    %p83 = scmp.ne.s32.totalorder %s71, %s72
    %p84 = scmp.eq.s32.totalorder %s20, 1
    %p85 = por %p83, %p84
    %p87 = scmp.ne.s32.totalorder %s72, %s86
    %p88 = scmp.eq.s32.totalorder %s20, 0
    %p89 = por %p87, %p88
    %s91 = sadd.s32 %s90, 1
    %p94 = scmp.eq.s32.totalorder %s14, 1
    %p95 = scmp.ne.s32.totalorder %s90, %s92
    %p96 = scmp.eq.s32.totalorder %s14, 0
    %p97 = por %p95, %p96
    %p98 = scmp.ne.s32.totalorder %s90, %s92
    %p99 = scmp.eq.s32.totalorder %s19, 1
    %p100 = por %p98, %p99
    %p101 = scmp.ne.s32.totalorder %s92, %s93
    %p102 = scmp.eq.s32.totalorder %s19, 0
    %p103 = por %p101, %p102
    %p104 = scmp.ne.s32.totalorder %s92, %s93
    %p105 = scmp.eq.s32.totalorder %s20, 1
    %p106 = por %p104, %p105
    %p108 = scmp.ne.s32.totalorder %s93, %s107
    %p109 = scmp.eq.s32.totalorder %s20, 0
    %p110 = por %p108, %p109
    %s112 = sadd.s32 %s111, 1
    %p115 = scmp.eq.s32.totalorder %s14, 1
    %p116 = scmp.ne.s32.totalorder %s111, %s113
    %p117 = scmp.eq.s32.totalorder %s14, 0
    %p118 = por %p116, %p117
    %p119 = scmp.ne.s32.totalorder %s111, %s113
    %p120 = scmp.eq.s32.totalorder %s19, 1
    %p121 = por %p119, %p120
    %p122 = scmp.ne.s32.totalorder %s113, %s114
    %p123 = scmp.eq.s32.totalorder %s19, 0
    %p124 = por %p122, %p123
    %p125 = scmp.ne.s32.totalorder %s113, %s114
    %p126 = scmp.eq.s32.totalorder %s20, 1
    %p127 = por %p125, %p126
    %p129 = scmp.ne.s32.totalorder %s114, %s128
    %p130 = scmp.eq.s32.totalorder %s20, 0
    %p131 = por %p129, %p130
    %s132 = ssub.s32 %s14, %s21
    %p133 = scmp.eq.s32.totalorder %s132, 0
    %s135 = sadd.s32 %s134, 1
    %s136 = scalar_select %p133, %s134, %s135
    %p139 = pneg %p133
    %p140 = scmp.eq.s32.totalorder %s14, 1
    %p141 = por %p139, %p140
    %p142 = scmp.ne.s32.totalorder %s134, %s137
    %p143 = scmp.eq.s32.totalorder %s14, 0
    %p144 = por %p142, %p143
    %p145 = scmp.ne.s32.totalorder %s134, %s137
    %p146 = scmp.eq.s32.totalorder %s19, 1
    %p147 = por %p145, %p146
    %p148 = scmp.ne.s32.totalorder %s137, %s138
    %p149 = scmp.eq.s32.totalorder %s19, 0
    %p150 = por %p148, %p149
    %p151 = scmp.ne.s32.totalorder %s137, %s138
    %p152 = scmp.eq.s32.totalorder %s20, 1
    %p153 = por %p151, %p152
    %p155 = scmp.ne.s32.totalorder %s138, %s154
    %p156 = scmp.eq.s32.totalorder %s20, 0
    %p157 = por %p155, %p156
    %s158 = ssub.s32 %s14, %s21
    %p159 = scmp.eq.s32.totalorder %s158, 0
    %s161 = sadd.s32 %s160, 1
    %s162 = scalar_select %p159, %s160, %s161
    %p165 = pneg %p159
    %p166 = scmp.eq.s32.totalorder %s14, 1
    %p167 = por %p165, %p166
    %p168 = scmp.ne.s32.totalorder %s160, %s163
    %p169 = scmp.eq.s32.totalorder %s14, 0
    %p170 = por %p168, %p169
    %p171 = scmp.ne.s32.totalorder %s160, %s163
    %p172 = scmp.eq.s32.totalorder %s19, 1
    %p173 = por %p171, %p172
    %p174 = scmp.ne.s32.totalorder %s163, %s164
    %p175 = scmp.eq.s32.totalorder %s19, 0
    %p176 = por %p174, %p175
    %p177 = scmp.ne.s32.totalorder %s163, %s164
    %p178 = scmp.eq.s32.totalorder %s20, 1
    %p179 = por %p177, %p178
    %p181 = scmp.ne.s32.totalorder %s164, %s180
    %p182 = scmp.eq.s32.totalorder %s20, 0
    %p183 = por %p181, %p182
    %s184 = ssub.s32 %s14, %s21
    %p185 = scmp.eq.s32.totalorder %s184, 0
    %s187 = sadd.s32 %s186, 1
    %s188 = scalar_select %p185, %s186, %s187
    %p191 = pneg %p185
    %p192 = scmp.eq.s32.totalorder %s14, 1
    %p193 = por %p191, %p192
    %p194 = scmp.ne.s32.totalorder %s186, %s189
    %p195 = scmp.eq.s32.totalorder %s14, 0
    %p196 = por %p194, %p195
    %p197 = scmp.ne.s32.totalorder %s186, %s189
    %p198 = scmp.eq.s32.totalorder %s19, 1
    %p199 = por %p197, %p198
    %p200 = scmp.ne.s32.totalorder %s189, %s190
    %p201 = scmp.eq.s32.totalorder %s19, 0
    %p202 = por %p200, %p201
    %p203 = scmp.ne.s32.totalorder %s189, %s190
    %p204 = scmp.eq.s32.totalorder %s20, 1
    %p205 = por %p203, %p204
    %p207 = scmp.ne.s32.totalorder %s190, %s206
    %p208 = scmp.eq.s32.totalorder %s20, 0
    %p209 = por %p207, %p208
    %p210 = scmp.le.s32.totalorder 1, %s14
    %p211 = scmp.lt.s32.totalorder %s14, 3
    %p212 = pnand %p210, %p211
    %p213 = pneg %p212
    // Predicated region
    $region9: #{block_forward.4} parent=5 // pred_check
      _
    $region10: #{block_forward.4} parent=5 // pred_check_branch
      %215 = sbr.rel (%p212) target = $region12
    $region11: #{block_forward.4} parent=5 // pred_region
      %s216 = ssub.s32 %s14, 1
      // Predicated region
      $region13: #{block_forward.4} parent=11 // pred_check
        %p217 = pneg %p61
      $region14: #{block_forward.4} parent=11 // pred_check_branch
        %219 = sbr.rel (%p217) target = $region16
      $region15: #{block_forward.4} parent=11 // pred_region
        _
      $region16: #{block_forward.4} parent=11 // pred_fallthru
        _
      // Predicated region
      $region17: #{block_forward.4} parent=11 // pred_check
        %p220 = pneg %p82
      $region18: #{block_forward.4} parent=11 // pred_check_branch
        %222 = sbr.rel (%p220) target = $region20
      $region19: #{block_forward.4} parent=11 // pred_region
        _
      $region20: #{block_forward.4} parent=11 // pred_fallthru
        _
      // Predicated region
      $region21: #{block_forward.4} parent=11 // pred_check
        %p223 = pneg %p103
      $region22: #{block_forward.4} parent=11 // pred_check_branch
        %225 = sbr.rel (%p223) target = $region24
      $region23: #{block_forward.4} parent=11 // pred_region
        _
      $region24: #{block_forward.4} parent=11 // pred_fallthru
        _
      // Predicated region
      $region25: #{block_forward.4} parent=11 // pred_check
        %p226 = pneg %p124
      $region26: #{block_forward.4} parent=11 // pred_check_branch
        %228 = sbr.rel (%p226) target = $region28
      $region27: #{block_forward.4} parent=11 // pred_region
        _
      $region28: #{block_forward.4} parent=11 // pred_fallthru
        _
    $region12: #{block_forward.4} parent=5 // pred_fallthru
      _
    %p229 = scmp.lt.s32.totalorder %s14, 2
    // Predicated region
    $region29: #{block_forward.4} parent=5 // pred_check
      %p230 = pneg %p229
    $region30: #{block_forward.4} parent=5 // pred_check_branch
      %232 = sbr.rel (%p230) target = $region32
    $region31: #{block_forward.4} parent=5 // pred_region
      // Predicated region
      $region33: #{block_forward.4} parent=31 // pred_check
        %p233 = pneg %p34
      $region34: #{block_forward.4} parent=31 // pred_check_branch
        %235 = sbr.rel (%p233) target = $region36
      $region35: #{block_forward.4} parent=31 // pred_region
        %p236 = scmp.lt.s32.totalorder %s14, 1
        %s237 = scalar_select %p236, %s14, 1
        %s238 = smul.addr %s237, 32
        %s239 = smul.addr %s238, 8
        %s240 = scalar_lea.vmem %s0, %s239
      $region36: #{block_forward.4} parent=31 // pred_fallthru
        _
    $region32: #{block_forward.4} parent=5 // pred_fallthru
      _
    %p241 = scmp.le.s32.totalorder 1, %s14
    %p242 = scmp.lt.s32.totalorder %s14, 3
    %p243 = pnand %p241, %p242
    %p244 = pneg %p243
    // Predicated region
    $region37: #{block_forward.4} parent=5 // pred_check
      _
    $region38: #{block_forward.4} parent=5 // pred_check_branch
      %246 = sbr.rel (%p243) target = $region40
    $region39: #{block_forward.4} parent=5 // pred_region
      %s247 = ssub.s32 %s14, 1
      %p248 = scmp.lt.s32.totalorder %s19, 1
      %s249 = scalar_select %p248, %s19, 1
      %s250 = smul.addr %s249, 32
      %s251 = smul.addr %s250, 8
      %s252 = scalar_lea.vmem %s0, %s251
      %p253 = pneg %p40
      %p254 = pneg %p37
      %p255 = pneg %p61
      %p256 = pneg %p58
      %p257 = pneg %p82
      %p258 = pneg %p79
      %p259 = pneg %p103
      %p260 = pneg %p100
      %p261 = pneg %p124
      %p262 = pneg %p121
      %p263 = pneg %p150
      %p264 = pneg %p147
      %p265 = scmp.lt.s32.totalorder %s19, 1
      %s266 = scalar_select %p265, %s19, 1
      %s267 = smul.addr %s266, 32
      %s268 = smul.addr %s267, 8
      %s269 = scalar_lea.vmem %s5, %s268
      %p270 = pneg %p176
      %p271 = pneg %p173
      %p272 = scmp.lt.s32.totalorder %s19, 1
      %s273 = scalar_select %p272, %s19, 1
      %s274 = scalar_lea.vmem %s6, %s273
      %p275 = pneg %p202
      %p276 = pneg %p199
      %p277 = scmp.lt.s32.totalorder %s19, 1
      %s278 = scalar_select %p277, %s19, 1
      %s279 = scalar_lea.vmem %s7, %s278
      %p280 = scmp.lt.s32.totalorder %s19, 1
      %s281 = scalar_select %p280, %s19, 1
      %s282 = smul.addr %s281, 32
      %s283 = smul.addr %s282, 8
      %s284 = scalar_lea.vmem %s0, %s283
      %p285 = scmp.lt.s32.totalorder %s19, 1
      %s286 = scalar_select %p285, %s19, 1
      %s287 = smul.addr %s286, 32
      %s288 = smul.addr %s287, 8
      %s289 = scalar_lea.vmem %s5, %s288
      %p290 = scmp.lt.s32.totalorder %s19, 1
      %s291 = scalar_select %p290, %s19, 1
      %s292 = scalar_lea.vmem %s6, %s291
      %p293 = scmp.lt.s32.totalorder %s19, 1
      %s294 = scalar_select %p293, %s19, 1
      %s295 = scalar_lea.vmem %s7, %s294
      %v297 = vld [vmem:[%s284] sm:$0xff]
      %v298 = vld [vmem:[%s284 + $0x8] sm:$0xff]
      %v299 = vld [vmem:[%s284 + $0x10] sm:$0xff]
      %v300 = vld [vmem:[%s284 + $0x18] sm:$0xff]
      %v301 = vld [vmem:[%s284 + $0x20] sm:$0xff]
      %v302 = vld [vmem:[%s284 + $0x28] sm:$0xff]
      %v303 = vld [vmem:[%s284 + $0x30] sm:$0xff]
      %v304 = vld [vmem:[%s284 + $0x38] sm:$0xff]
      %v305 = vld [vmem:[%s284 + $0x40] sm:$0xff]
      %v306 = vld [vmem:[%s284 + $0x48] sm:$0xff]
      %v307 = vld [vmem:[%s284 + $0x50] sm:$0xff]
      %v308 = vld [vmem:[%s284 + $0x58] sm:$0xff]
      %v309 = vld [vmem:[%s284 + $0x60] sm:$0xff]
      %v310 = vld [vmem:[%s284 + $0x68] sm:$0xff]
      %v311 = vld [vmem:[%s284 + $0x70] sm:$0xff]
      %v312 = vld [vmem:[%s284 + $0x78] sm:$0xff]
      %v313 = vld [vmem:[%s284 + $0x80] sm:$0xff]
      %v314 = vld [vmem:[%s284 + $0x88] sm:$0xff]
      %v315 = vld [vmem:[%s284 + $0x90] sm:$0xff]
      %v316 = vld [vmem:[%s284 + $0x98] sm:$0xff]
      %v317 = vld [vmem:[%s284 + $0xa0] sm:$0xff]
      %v318 = vld [vmem:[%s284 + $0xa8] sm:$0xff]
      %v319 = vld [vmem:[%s284 + $0xb0] sm:$0xff]
      %v320 = vld [vmem:[%s284 + $0xb8] sm:$0xff]
      %v321 = vld [vmem:[%s284 + $0xc0] sm:$0xff]
      %v322 = vld [vmem:[%s284 + $0xc8] sm:$0xff]
      %v323 = vld [vmem:[%s284 + $0xd0] sm:$0xff]
      %v324 = vld [vmem:[%s284 + $0xd8] sm:$0xff]
      %v325 = vld [vmem:[%s284 + $0xe0] sm:$0xff]
      %v326 = vld [vmem:[%s284 + $0xe8] sm:$0xff]
      %v327 = vld [vmem:[%s284 + $0xf0] sm:$0xff]
      %v328 = vld [vmem:[%s284 + $0xf8] sm:$0xff]
      %v329 = vld [vmem:[%s1] sm:$0x1]
      %v331 = vlaneseq
      %v332 = vshrl.u32 %v331, 7
      %v333 = vsub.s32 0, %v332
      %v334 = vrot.slane %v329, %v333
      %v336 = vmul.f32 %v297, %v334
      %v337 = vmul.f32 %v298, %v334
      %v338 = vmul.f32 %v299, %v334
      %v339 = vmul.f32 %v300, %v334
      %v340 = vmul.f32 %v301, %v334
      %v341 = vmul.f32 %v302, %v334
      %v342 = vmul.f32 %v303, %v334
      %v343 = vmul.f32 %v304, %v334
      %v344 = vmul.f32 %v305, %v334
      %v345 = vmul.f32 %v306, %v334
      %v346 = vmul.f32 %v307, %v334
      %v347 = vmul.f32 %v308, %v334
      %v348 = vmul.f32 %v309, %v334
      %v349 = vmul.f32 %v310, %v334
      %v350 = vmul.f32 %v311, %v334
      %v351 = vmul.f32 %v312, %v334
      %v352 = vmul.f32 %v313, %v334
      %v353 = vmul.f32 %v314, %v334
      %v354 = vmul.f32 %v315, %v334
      %v355 = vmul.f32 %v316, %v334
      %v356 = vmul.f32 %v317, %v334
      %v357 = vmul.f32 %v318, %v334
      %v358 = vmul.f32 %v319, %v334
      %v359 = vmul.f32 %v320, %v334
      %v360 = vmul.f32 %v321, %v334
      %v361 = vmul.f32 %v322, %v334
      %v362 = vmul.f32 %v323, %v334
      %v363 = vmul.f32 %v324, %v334
      %v364 = vmul.f32 %v325, %v334
      %v365 = vmul.f32 %v326, %v334
      %v366 = vmul.f32 %v327, %v334
      %v367 = vmul.f32 %v328, %v334
      %v368 = vld [vmem:[%s2] sm:$0x1]
      %v370 = vlaneseq
      %v371 = vshrl.u32 %v370, 7
      %v372 = vsub.s32 0, %v371
      %v373 = vrot.slane %v368, %v372
      %v375 = vadd.f32 %v336, %v373
      %v376 = vadd.f32 %v337, %v373
      %v377 = vadd.f32 %v338, %v373
      %v378 = vadd.f32 %v339, %v373
      %v379 = vadd.f32 %v340, %v373
      %v380 = vadd.f32 %v341, %v373
      %v381 = vadd.f32 %v342, %v373
      %v382 = vadd.f32 %v343, %v373
      %v383 = vadd.f32 %v344, %v373
      %v384 = vadd.f32 %v345, %v373
      %v385 = vadd.f32 %v346, %v373
      %v386 = vadd.f32 %v347, %v373
      %v387 = vadd.f32 %v348, %v373
      %v388 = vadd.f32 %v349, %v373
      %v389 = vadd.f32 %v350, %v373
      %v390 = vadd.f32 %v351, %v373
      %v391 = vadd.f32 %v352, %v373
      %v392 = vadd.f32 %v353, %v373
      %v393 = vadd.f32 %v354, %v373
      %v394 = vadd.f32 %v355, %v373
      %v395 = vadd.f32 %v356, %v373
      %v396 = vadd.f32 %v357, %v373
      %v397 = vadd.f32 %v358, %v373
      %v398 = vadd.f32 %v359, %v373
      %v399 = vadd.f32 %v360, %v373
      %v400 = vadd.f32 %v361, %v373
      %v401 = vadd.f32 %v362, %v373
      %v402 = vadd.f32 %v363, %v373
      %v403 = vadd.f32 %v364, %v373
      %v404 = vadd.f32 %v365, %v373
      %v405 = vadd.f32 %v366, %v373
      %v406 = vadd.f32 %v367, %v373
      %v407 = vmax.f32 %v375, 0.0
      %v408 = vmax.f32 %v376, 0.0
      %v409 = vmax.f32 %v377, 0.0
      %v410 = vmax.f32 %v378, 0.0
      %v411 = vmax.f32 %v379, 0.0
      %v412 = vmax.f32 %v380, 0.0
      %v413 = vmax.f32 %v381, 0.0
      %v414 = vmax.f32 %v382, 0.0
      %v415 = vmax.f32 %v383, 0.0
      %v416 = vmax.f32 %v384, 0.0
      %v417 = vmax.f32 %v385, 0.0
      %v418 = vmax.f32 %v386, 0.0
      %v419 = vmax.f32 %v387, 0.0
      %v420 = vmax.f32 %v388, 0.0
      %v421 = vmax.f32 %v389, 0.0
      %v422 = vmax.f32 %v390, 0.0
      %v423 = vmax.f32 %v391, 0.0
      %v424 = vmax.f32 %v392, 0.0
      %v425 = vmax.f32 %v393, 0.0
      %v426 = vmax.f32 %v394, 0.0
      %v427 = vmax.f32 %v395, 0.0
      %v428 = vmax.f32 %v396, 0.0
      %v429 = vmax.f32 %v397, 0.0
      %v430 = vmax.f32 %v398, 0.0
      %v431 = vmax.f32 %v399, 0.0
      %v432 = vmax.f32 %v400, 0.0
      %v433 = vmax.f32 %v401, 0.0
      %v434 = vmax.f32 %v402, 0.0
      %v435 = vmax.f32 %v403, 0.0
      %v436 = vmax.f32 %v404, 0.0
      %v437 = vmax.f32 %v405, 0.0
      %v438 = vmax.f32 %v406, 0.0
      %439 = vst [vmem:[#allocation2] sm:$0xff] 0.0
      %440 = vst [vmem:[#allocation2 + $0x8] sm:$0xff] 0.0
      %441 = vst [vmem:[#allocation2 + $0x10] sm:$0x3] 0.0
      %442 = vst [vmem:[#allocation2 + $0x18] sm:$0xff] 0.0
      %443 = vst [vmem:[#allocation2 + $0x20] sm:$0xff] 0.0
      %444 = vst [vmem:[#allocation2 + $0x28] sm:$0x3] 0.0
      %445 = vst [vmem:[#allocation2 + $0x30] sm:$0xff] 0.0
      %446 = vst [vmem:[#allocation2 + $0x38] sm:$0xff] 0.0
      %447 = vst [vmem:[#allocation2 + $0x40] sm:$0x3] 0.0
      %448 = vst [vmem:[#allocation2 + $0x48] sm:$0xff] 0.0
      %449 = vst [vmem:[#allocation2 + $0x50] sm:$0xff] 0.0
      %450 = vst [vmem:[#allocation2 + $0x58] sm:$0x3] 0.0
      %451 = vst [vmem:[#allocation2 + $0x60] sm:$0xff] 0.0
      %452 = vst [vmem:[#allocation2 + $0x68] sm:$0xff] 0.0
      %453 = vst [vmem:[#allocation2 + $0x70] sm:$0x3] 0.0
      %454 = vst [vmem:[#allocation2 + $0x78] sm:$0xff] 0.0
      %455 = vst [vmem:[#allocation2 + $0x80] sm:$0xff] 0.0
      %456 = vst [vmem:[#allocation2 + $0x88] sm:$0x3] 0.0
      %457 = vst [vmem:[#allocation2 + $0x90] sm:$0xff] 0.0
      %458 = vst [vmem:[#allocation2 + $0x98] sm:$0xff] 0.0
      %459 = vst [vmem:[#allocation2 + $0xa0] sm:$0x3] 0.0
      %460 = vst [vmem:[#allocation2 + $0xa8] sm:$0xff] 0.0
      %461 = vst [vmem:[#allocation2 + $0xb0] sm:$0xff] 0.0
      %462 = vst [vmem:[#allocation2 + $0xb8] sm:$0x3] 0.0
      %463 = vst [vmem:[#allocation2 + $0xc0] sm:$0xff] 0.0
      %464 = vst [vmem:[#allocation2 + $0xc8] sm:$0xff] 0.0
      %465 = vst [vmem:[#allocation2 + $0xd0] sm:$0x3] 0.0
      %466 = vst [vmem:[#allocation2 + $0xd8] sm:$0xff] 0.0
      %467 = vst [vmem:[#allocation2 + $0xe0] sm:$0xff] 0.0
      %468 = vst [vmem:[#allocation2 + $0xe8] sm:$0x3] 0.0
      %469 = vst [vmem:[#allocation2 + $0xf0] sm:$0xff] 0.0
      %470 = vst [vmem:[#allocation2 + $0xf8] sm:$0xff] 0.0
      %471 = vst [vmem:[#allocation2 + $0x100] sm:$0x3] 0.0
      %472 = vst [vmem:[#allocation2 + $0x108] sm:$0xff] 0.0
      %473 = vst [vmem:[#allocation2 + $0x110] sm:$0xff] 0.0
      %474 = vst [vmem:[#allocation2 + $0x118] sm:$0x3] 0.0
      %475 = vst [vmem:[#allocation2 + $0x120] sm:$0xff] 0.0
      %476 = vst [vmem:[#allocation2 + $0x128] sm:$0xff] 0.0
      %477 = vst [vmem:[#allocation2 + $0x130] sm:$0x3] 0.0
      %478 = vst [vmem:[#allocation2 + $0x138] sm:$0xff] 0.0
      %479 = vst [vmem:[#allocation2 + $0x140] sm:$0xff] 0.0
      %480 = vst [vmem:[#allocation2 + $0x148] sm:$0x3] 0.0
      %481 = vst [vmem:[#allocation2 + $0x150] sm:$0xff] 0.0
      %482 = vst [vmem:[#allocation2 + $0x158] sm:$0xff] 0.0
      %483 = vst [vmem:[#allocation2 + $0x160] sm:$0x3] 0.0
      %484 = vst [vmem:[#allocation2 + $0x168] sm:$0xff] 0.0
      %485 = vst [vmem:[#allocation2 + $0x170] sm:$0xff] 0.0
      %486 = vst [vmem:[#allocation2 + $0x178] sm:$0x3] 0.0
      %487 = vst [vmem:[#allocation2 + $0x180] sm:$0xff] 0.0
      %488 = vst [vmem:[#allocation2 + $0x188] sm:$0xff] 0.0
      %489 = vst [vmem:[#allocation2 + $0x190] sm:$0x3] 0.0
      %490 = vst [vmem:[#allocation2 + $0x198] sm:$0xff] 0.0
      %491 = vst [vmem:[#allocation2 + $0x1a0] sm:$0xff] 0.0
      %492 = vst [vmem:[#allocation2 + $0x1a8] sm:$0x3] 0.0
      %s493 = scalar_lea.vmem [#allocation2], 24
      %494 = vst [vmem:[%s493 + $0x1] sm:$0xff] %v407
      %495 = vst [vmem:[%s493 + $0x9] sm:$0xff] %v408
      %496 = vst [vmem:[%s493 + $0x19] sm:$0xff] %v409
      %497 = vst [vmem:[%s493 + $0x21] sm:$0xff] %v410
      %498 = vst [vmem:[%s493 + $0x31] sm:$0xff] %v411
      %499 = vst [vmem:[%s493 + $0x39] sm:$0xff] %v412
      %500 = vst [vmem:[%s493 + $0x49] sm:$0xff] %v413
      %501 = vst [vmem:[%s493 + $0x51] sm:$0xff] %v414
      %502 = vst [vmem:[%s493 + $0x61] sm:$0xff] %v415
      %503 = vst [vmem:[%s493 + $0x69] sm:$0xff] %v416
      %504 = vst [vmem:[%s493 + $0x79] sm:$0xff] %v417
      %505 = vst [vmem:[%s493 + $0x81] sm:$0xff] %v418
      %506 = vst [vmem:[%s493 + $0x91] sm:$0xff] %v419
      %507 = vst [vmem:[%s493 + $0x99] sm:$0xff] %v420
      %508 = vst [vmem:[%s493 + $0xa9] sm:$0xff] %v421
      %509 = vst [vmem:[%s493 + $0xb1] sm:$0xff] %v422
      %510 = vst [vmem:[%s493 + $0xc1] sm:$0xff] %v423
      %511 = vst [vmem:[%s493 + $0xc9] sm:$0xff] %v424
      %512 = vst [vmem:[%s493 + $0xd9] sm:$0xff] %v425
      %513 = vst [vmem:[%s493 + $0xe1] sm:$0xff] %v426
      %514 = vst [vmem:[%s493 + $0xf1] sm:$0xff] %v427
      %515 = vst [vmem:[%s493 + $0xf9] sm:$0xff] %v428
      %516 = vst [vmem:[%s493 + $0x109] sm:$0xff] %v429
      %517 = vst [vmem:[%s493 + $0x111] sm:$0xff] %v430
      %518 = vst [vmem:[%s493 + $0x121] sm:$0xff] %v431
      %519 = vst [vmem:[%s493 + $0x129] sm:$0xff] %v432
      %520 = vst [vmem:[%s493 + $0x139] sm:$0xff] %v433
      %521 = vst [vmem:[%s493 + $0x141] sm:$0xff] %v434
      %522 = vst [vmem:[%s493 + $0x151] sm:$0xff] %v435
      %523 = vst [vmem:[%s493 + $0x159] sm:$0xff] %v436
      %524 = vst [vmem:[%s493 + $0x169] sm:$0xff] %v437
      %525 = vst [vmem:[%s493 + $0x171] sm:$0xff] %v438
      %v526 = vld [vmem:[#allocation2] sm:$0xff]
      %v527 = vld [vmem:[#allocation2 + $0x8] sm:$0xff]
      %v528 = vld [vmem:[#allocation2 + $0x18] sm:$0xff]
      %v529 = vld [vmem:[#allocation2 + $0x20] sm:$0xff]
      %v530 = vld [vmem:[#allocation2 + $0x30] sm:$0xff]
      %v531 = vld [vmem:[#allocation2 + $0x38] sm:$0xff]
      %v532 = vld [vmem:[#allocation2 + $0x48] sm:$0xff]
      %v533 = vld [vmem:[#allocation2 + $0x50] sm:$0xff]
      %v534 = vld [vmem:[#allocation2 + $0x60] sm:$0xff]
      %v535 = vld [vmem:[#allocation2 + $0x68] sm:$0xff]
      %v536 = vld [vmem:[#allocation2 + $0x78] sm:$0xff]
      %v537 = vld [vmem:[#allocation2 + $0x80] sm:$0xff]
      %v538 = vld [vmem:[#allocation2 + $0x90] sm:$0xff]
      %v539 = vld [vmem:[#allocation2 + $0x98] sm:$0xff]
      %v540 = vld [vmem:[#allocation2 + $0xa8] sm:$0xff]
      %v541 = vld [vmem:[#allocation2 + $0xb0] sm:$0xff]
      %v542 = vld [vmem:[#allocation2 + $0xc0] sm:$0xff]
      %v543 = vld [vmem:[#allocation2 + $0xc8] sm:$0xff]
      %v544 = vld [vmem:[#allocation2 + $0xd8] sm:$0xff]
      %v545 = vld [vmem:[#allocation2 + $0xe0] sm:$0xff]
      %v546 = vld [vmem:[#allocation2 + $0xf0] sm:$0xff]
      %v547 = vld [vmem:[#allocation2 + $0xf8] sm:$0xff]
      %v548 = vld [vmem:[#allocation2 + $0x108] sm:$0xff]
      %v549 = vld [vmem:[#allocation2 + $0x110] sm:$0xff]
      %v550 = vld [vmem:[#allocation2 + $0x120] sm:$0xff]
      %v551 = vld [vmem:[#allocation2 + $0x128] sm:$0xff]
      %v552 = vld [vmem:[#allocation2 + $0x138] sm:$0xff]
      %v553 = vld [vmem:[#allocation2 + $0x140] sm:$0xff]
      %v554 = vld [vmem:[#allocation2 + $0x150] sm:$0xff]
      %v555 = vld [vmem:[#allocation2 + $0x158] sm:$0xff]
      %v556 = vld [vmem:[#allocation2 + $0x168] sm:$0xff]
      %v557 = vld [vmem:[#allocation2 + $0x170] sm:$0xff]
      %v558 = vpack.c.bf16 %v527, %v526
      %v559 = vpack.c.bf16 %v529, %v528
      %v560 = vpack.c.bf16 %v531, %v530
      %v561 = vpack.c.bf16 %v533, %v532
      %v562 = vpack.c.bf16 %v535, %v534
      %v563 = vpack.c.bf16 %v537, %v536
      %v564 = vpack.c.bf16 %v539, %v538
      %v565 = vpack.c.bf16 %v541, %v540
      %v566 = vpack.c.bf16 %v543, %v542
      %v567 = vpack.c.bf16 %v545, %v544
      %v568 = vpack.c.bf16 %v547, %v546
      %v569 = vpack.c.bf16 %v549, %v548
      %v570 = vpack.c.bf16 %v551, %v550
      %v571 = vpack.c.bf16 %v553, %v552
      %v572 = vpack.c.bf16 %v555, %v554
      %v573 = vpack.c.bf16 %v557, %v556
      %v574 = vld [vmem:[%s3] sm:$0xf]
      %v575 = vld [vmem:[%s3 + $0x4] sm:$0xf]
      %v576 = vld [vmem:[%s3 + $0x8] sm:$0xf]
      %v577 = vld [vmem:[%s3 + $0xc] sm:$0xf]
      %v578 = vld [vmem:[%s3 + $0x10] sm:$0xf]
      %v579 = vld [vmem:[%s3 + $0x14] sm:$0xf]
      %v580 = vld [vmem:[%s3 + $0x18] sm:$0xf]
      %v581 = vld [vmem:[%s3 + $0x1c] sm:$0xf]
      %v582 = vld [vmem:[%s3 + $0x20] sm:$0xf]
      %v583 = vld [vmem:[%s3 + $0x24] sm:$0xf]
      %v584 = vld [vmem:[%s3 + $0x28] sm:$0xf]
      %v585 = vld [vmem:[%s3 + $0x2c] sm:$0xf]
      %v586 = vld [vmem:[%s3 + $0x30] sm:$0xf]
      %v587 = vld [vmem:[%s3 + $0x34] sm:$0xf]
      %v588 = vld [vmem:[%s3 + $0x38] sm:$0xf]
      %v589 = vld [vmem:[%s3 + $0x3c] sm:$0xf]
      %v590 = vld [vmem:[#allocation2 + $0x1] sm:$0xff]
      %v591 = vld [vmem:[#allocation2 + $0x9] sm:$0xff]
      %v592 = vld [vmem:[#allocation2 + $0x19] sm:$0xff]
      %v593 = vld [vmem:[#allocation2 + $0x21] sm:$0xff]
      %v594 = vld [vmem:[#allocation2 + $0x31] sm:$0xff]
      %v595 = vld [vmem:[#allocation2 + $0x39] sm:$0xff]
      %v596 = vld [vmem:[#allocation2 + $0x49] sm:$0xff]
      %v597 = vld [vmem:[#allocation2 + $0x51] sm:$0xff]
      %v598 = vld [vmem:[#allocation2 + $0x61] sm:$0xff]
      %v599 = vld [vmem:[#allocation2 + $0x69] sm:$0xff]
      %v600 = vld [vmem:[#allocation2 + $0x79] sm:$0xff]
      %v601 = vld [vmem:[#allocation2 + $0x81] sm:$0xff]
      %v602 = vld [vmem:[#allocation2 + $0x91] sm:$0xff]
      %v603 = vld [vmem:[#allocation2 + $0x99] sm:$0xff]
      %v604 = vld [vmem:[#allocation2 + $0xa9] sm:$0xff]
      %v605 = vld [vmem:[#allocation2 + $0xb1] sm:$0xff]
      %v606 = vld [vmem:[#allocation2 + $0xc1] sm:$0xff]
      %v607 = vld [vmem:[#allocation2 + $0xc9] sm:$0xff]
      %v608 = vld [vmem:[#allocation2 + $0xd9] sm:$0xff]
      %v609 = vld [vmem:[#allocation2 + $0xe1] sm:$0xff]
      %v610 = vld [vmem:[#allocation2 + $0xf1] sm:$0xff]
      %v611 = vld [vmem:[#allocation2 + $0xf9] sm:$0xff]
      %v612 = vld [vmem:[#allocation2 + $0x109] sm:$0xff]
      %v613 = vld [vmem:[#allocation2 + $0x111] sm:$0xff]
      %v614 = vld [vmem:[#allocation2 + $0x121] sm:$0xff]
      %v615 = vld [vmem:[#allocation2 + $0x129] sm:$0xff]
      %v616 = vld [vmem:[#allocation2 + $0x139] sm:$0xff]
      %v617 = vld [vmem:[#allocation2 + $0x141] sm:$0xff]
      %v618 = vld [vmem:[#allocation2 + $0x151] sm:$0xff]
      %v619 = vld [vmem:[#allocation2 + $0x159] sm:$0xff]
      %v620 = vld [vmem:[#allocation2 + $0x169] sm:$0xff]
      %v621 = vld [vmem:[#allocation2 + $0x171] sm:$0xff]
      %v622 = vpack.c.bf16 %v591, %v590
      %v623 = vpack.c.bf16 %v593, %v592
      %v624 = vpack.c.bf16 %v595, %v594
      %v625 = vpack.c.bf16 %v597, %v596
      %v626 = vpack.c.bf16 %v599, %v598
      %v627 = vpack.c.bf16 %v601, %v600
      %v628 = vpack.c.bf16 %v603, %v602
      %v629 = vpack.c.bf16 %v605, %v604
      %v630 = vpack.c.bf16 %v607, %v606
      %v631 = vpack.c.bf16 %v609, %v608
      %v632 = vpack.c.bf16 %v611, %v610
      %v633 = vpack.c.bf16 %v613, %v612
      %v634 = vpack.c.bf16 %v615, %v614
      %v635 = vpack.c.bf16 %v617, %v616
      %v636 = vpack.c.bf16 %v619, %v618
      %v637 = vpack.c.bf16 %v621, %v620
      %s638 = scalar_lea.vmem %s3, 64
      %v639 = vld [vmem:[%s638] sm:$0xf]
      %v640 = vld [vmem:[%s638 + $0x4] sm:$0xf]
      %v641 = vld [vmem:[%s638 + $0x8] sm:$0xf]
      %v642 = vld [vmem:[%s638 + $0xc] sm:$0xf]
      %v643 = vld [vmem:[%s638 + $0x10] sm:$0xf]
      %v644 = vld [vmem:[%s638 + $0x14] sm:$0xf]
      %v645 = vld [vmem:[%s638 + $0x18] sm:$0xf]
      %v646 = vld [vmem:[%s638 + $0x1c] sm:$0xf]
      %v647 = vld [vmem:[%s638 + $0x20] sm:$0xf]
      %v648 = vld [vmem:[%s638 + $0x24] sm:$0xf]
      %v649 = vld [vmem:[%s638 + $0x28] sm:$0xf]
      %v650 = vld [vmem:[%s638 + $0x2c] sm:$0xf]
      %v651 = vld [vmem:[%s638 + $0x30] sm:$0xf]
      %v652 = vld [vmem:[%s638 + $0x34] sm:$0xf]
      %v653 = vld [vmem:[%s638 + $0x38] sm:$0xf]
      %v654 = vld [vmem:[%s638 + $0x3c] sm:$0xf]
      %v671 = vunpack.c.l.b16 %v639
      %v672 = vunpack.c.l.b16 %v640
      %v673 = vunpack.c.l.b16 %v641
      %v674 = vunpack.c.l.b16 %v642
      %v675 = vunpack.c.l.b16 %v643
      %v676 = vunpack.c.l.b16 %v644
      %v677 = vunpack.c.l.b16 %v645
      %v678 = vunpack.c.l.b16 %v646
      %v679 = vunpack.c.l.b16 %v647
      %v680 = vunpack.c.l.b16 %v648
      %v681 = vunpack.c.l.b16 %v649
      %v682 = vunpack.c.l.b16 %v650
      %v683 = vunpack.c.l.b16 %v651
      %v684 = vunpack.c.l.b16 %v652
      %v685 = vunpack.c.l.b16 %v653
      %v686 = vunpack.c.l.b16 %v654
      %v687 = vpack.c.b16 %v672, %v671
      %v688 = vpack.c.b16 %v674, %v673
      %v689 = vpack.c.b16 %v676, %v675
      %v690 = vpack.c.b16 %v678, %v677
      %v691 = vpack.c.b16 %v680, %v679
      %v692 = vpack.c.b16 %v682, %v681
      %v693 = vpack.c.b16 %v684, %v683
      %v694 = vpack.c.b16 %v686, %v685
      %703 = vmatprep.subr.bf16.mxu0 0
      %704 = vmatpush1.bf16.msra.mxu0 %v694
      %705 = vmatprep.subr.bf16.mxu0 0
      %706 = vmatpush1.bf16.msra.mxu0 %v693
      %707 = vmatprep.subr.bf16.mxu0 0
      %708 = vmatpush1.bf16.msra.mxu0 %v692
      %709 = vmatprep.subr.bf16.mxu0 0
      %710 = vmatpush1.bf16.msra.mxu0 %v691
      %711 = vmatprep.subr.bf16.mxu0 0
      %712 = vmatpush1.bf16.msra.mxu0 %v690
      %713 = vmatprep.subr.bf16.mxu0 0
      %714 = vmatpush1.bf16.msra.mxu0 %v689
      %715 = vmatprep.subr.bf16.mxu0 0
      %716 = vmatpush1.bf16.msra.mxu0 %v688
      %717 = vmatprep.subr.bf16.mxu0 0
      %718 = vmatpush1.bf16.msra.mxu0 %v687
      %719 = vmatprep.subr.bf16.mxu0 0
      %720 = vmatpush2.bf16.msra.mxu0 0
      %721 = vmatprep.subr.bf16.mxu0 0
      %722 = vmatpush2.bf16.msra.mxu0 0
      %723 = vmatprep.subr.bf16.mxu0 0
      %724 = vmatpush2.bf16.msra.mxu0 0
      %725 = vmatprep.subr.bf16.mxu0 0
      %726 = vmatpush2.bf16.msra.mxu0 0
      %727 = vmatprep.subr.bf16.mxu0 0
      %728 = vmatpush2.bf16.msra.mxu0 0
      %729 = vmatprep.subr.bf16.mxu0 0
      %730 = vmatpush2.bf16.msra.mxu0 0
      %731 = vmatprep.subr.bf16.mxu0 0
      %732 = vmatpush2.bf16.msra.mxu0 0
      %733 = vmatprep.subr.bf16.mxu0 0
      %734 = vmatpush2.bf16.msra.mxu0 0
      %735 = vmatprep.mubr.bf16.mxu0 0
      %736 = vmatmul.mubr.bf16.gmra.mxu0 %v622
      %v737 = vpop.f32.mrf.mxu0
      %v738 = vadd.f32 0.0, %v737
      %v739 = vpop.f32.mrf.mxu0
      %v740 = vpop.f32.mrf.mxu0
      %v741 = vadd.f32 0.0, %v740
      %v742 = vpop.f32.mrf.mxu0
      %743 = vmatprep.mubr.bf16.mxu0 0
      %744 = vmatmul.mubr.bf16.gmra.mxu0 %v623
      %v745 = vpop.f32.mrf.mxu0
      %v746 = vadd.f32 0.0, %v745
      %v747 = vpop.f32.mrf.mxu0
      %v748 = vpop.f32.mrf.mxu0
      %v749 = vadd.f32 0.0, %v748
      %v750 = vpop.f32.mrf.mxu0
      %751 = vmatprep.mubr.bf16.mxu0 0
      %752 = vmatmul.mubr.bf16.gmra.mxu0 %v624
      %v753 = vpop.f32.mrf.mxu0
      %v754 = vadd.f32 0.0, %v753
      %v755 = vpop.f32.mrf.mxu0
      %v756 = vpop.f32.mrf.mxu0
      %v757 = vadd.f32 0.0, %v756
      %v758 = vpop.f32.mrf.mxu0
      %759 = vmatprep.mubr.bf16.mxu0 0
      %760 = vmatmul.mubr.bf16.gmra.mxu0 %v625
      %v761 = vpop.f32.mrf.mxu0
      %v762 = vadd.f32 0.0, %v761
      %v763 = vpop.f32.mrf.mxu0
      %v764 = vpop.f32.mrf.mxu0
      %v765 = vadd.f32 0.0, %v764
      %v766 = vpop.f32.mrf.mxu0
      %767 = vmatprep.mubr.bf16.mxu0 0
      %768 = vmatmul.mubr.bf16.gmra.mxu0 %v626
      %v769 = vpop.f32.mrf.mxu0
      %v770 = vadd.f32 0.0, %v769
      %v771 = vpop.f32.mrf.mxu0
      %v772 = vpop.f32.mrf.mxu0
      %v773 = vadd.f32 0.0, %v772
      %v774 = vpop.f32.mrf.mxu0
      %775 = vmatprep.mubr.bf16.mxu0 0
      %776 = vmatmul.mubr.bf16.gmra.mxu0 %v627
      %v777 = vpop.f32.mrf.mxu0
      %v778 = vadd.f32 0.0, %v777
      %v779 = vpop.f32.mrf.mxu0
      %v780 = vpop.f32.mrf.mxu0
      %v781 = vadd.f32 0.0, %v780
      %v782 = vpop.f32.mrf.mxu0
      %783 = vmatprep.mubr.bf16.mxu0 0
      %784 = vmatmul.mubr.bf16.gmra.mxu0 %v628
      %v785 = vpop.f32.mrf.mxu0
      %v786 = vadd.f32 0.0, %v785
      %v787 = vpop.f32.mrf.mxu0
      %v788 = vpop.f32.mrf.mxu0
      %v789 = vadd.f32 0.0, %v788
      %v790 = vpop.f32.mrf.mxu0
      %791 = vmatprep.mubr.bf16.mxu0 0
      %792 = vmatmul.mubr.bf16.gmra.mxu0 %v629
      %v793 = vpop.f32.mrf.mxu0
      %v794 = vadd.f32 0.0, %v793
      %v795 = vpop.f32.mrf.mxu0
      %v796 = vpop.f32.mrf.mxu0
      %v797 = vadd.f32 0.0, %v796
      %v798 = vpop.f32.mrf.mxu0
      %799 = vmatprep.mubr.bf16.mxu0 0
      %800 = vmatmul.mubr.bf16.gmra.mxu0 %v630
      %v801 = vpop.f32.mrf.mxu0
      %v802 = vadd.f32 0.0, %v801
      %v803 = vpop.f32.mrf.mxu0
      %v804 = vpop.f32.mrf.mxu0
      %v805 = vadd.f32 0.0, %v804
      %v806 = vpop.f32.mrf.mxu0
      %807 = vmatprep.mubr.bf16.mxu0 0
      %808 = vmatmul.mubr.bf16.gmra.mxu0 %v631
      %v809 = vpop.f32.mrf.mxu0
      %v810 = vadd.f32 0.0, %v809
      %v811 = vpop.f32.mrf.mxu0
      %v812 = vpop.f32.mrf.mxu0
      %v813 = vadd.f32 0.0, %v812
      %v814 = vpop.f32.mrf.mxu0
      %815 = vmatprep.mubr.bf16.mxu0 0
      %816 = vmatmul.mubr.bf16.gmra.mxu0 %v632
      %v817 = vpop.f32.mrf.mxu0
      %v818 = vadd.f32 0.0, %v817
      %v819 = vpop.f32.mrf.mxu0
      %v820 = vpop.f32.mrf.mxu0
      %v821 = vadd.f32 0.0, %v820
      %v822 = vpop.f32.mrf.mxu0
      %823 = vmatprep.mubr.bf16.mxu0 0
      %824 = vmatmul.mubr.bf16.gmra.mxu0 %v633
      %v825 = vpop.f32.mrf.mxu0
      %v826 = vadd.f32 0.0, %v825
      %v827 = vpop.f32.mrf.mxu0
      %v828 = vpop.f32.mrf.mxu0
      %v829 = vadd.f32 0.0, %v828
      %v830 = vpop.f32.mrf.mxu0
      %831 = vmatprep.mubr.bf16.mxu0 0
      %832 = vmatmul.mubr.bf16.gmra.mxu0 %v634
      %v833 = vpop.f32.mrf.mxu0
      %v834 = vadd.f32 0.0, %v833
      %v835 = vpop.f32.mrf.mxu0
      %v836 = vpop.f32.mrf.mxu0
      %v837 = vadd.f32 0.0, %v836
      %v838 = vpop.f32.mrf.mxu0
      %839 = vmatprep.mubr.bf16.mxu0 0
      %840 = vmatmul.mubr.bf16.gmra.mxu0 %v635
      %v841 = vpop.f32.mrf.mxu0
      %v842 = vadd.f32 0.0, %v841
      %v843 = vpop.f32.mrf.mxu0
      %v844 = vpop.f32.mrf.mxu0
      %v845 = vadd.f32 0.0, %v844
      %v846 = vpop.f32.mrf.mxu0
      %847 = vmatprep.mubr.bf16.mxu0 0
      %848 = vmatmul.mubr.bf16.gmra.mxu0 %v636
      %v849 = vpop.f32.mrf.mxu0
      %v850 = vadd.f32 0.0, %v849
      %v851 = vpop.f32.mrf.mxu0
      %v852 = vpop.f32.mrf.mxu0
      %v853 = vadd.f32 0.0, %v852
      %v854 = vpop.f32.mrf.mxu0
      %855 = vmatprep.mubr.bf16.mxu0 0
      %856 = vmatmul.mubr.bf16.gmra.mxu0 %v637
      %v857 = vpop.f32.mrf.mxu0
      %v858 = vadd.f32 0.0, %v857
      %v859 = vpop.f32.mrf.mxu0
      %v860 = vpop.f32.mrf.mxu0
      %v861 = vadd.f32 0.0, %v860
      %v862 = vpop.f32.mrf.mxu0
      %863 = vdwg.mxu0
      %v880 = vunpack.c.l.b16 %v574
      %v881 = vunpack.c.l.b16 %v575
      %v882 = vunpack.c.l.b16 %v576
      %v883 = vunpack.c.l.b16 %v577
      %v884 = vunpack.c.l.b16 %v578
      %v885 = vunpack.c.l.b16 %v579
      %v886 = vunpack.c.l.b16 %v580
      %v887 = vunpack.c.l.b16 %v581
      %v888 = vunpack.c.l.b16 %v582
      %v889 = vunpack.c.l.b16 %v583
      %v890 = vunpack.c.l.b16 %v584
      %v891 = vunpack.c.l.b16 %v585
      %v892 = vunpack.c.l.b16 %v586
      %v893 = vunpack.c.l.b16 %v587
      %v894 = vunpack.c.l.b16 %v588
      %v895 = vunpack.c.l.b16 %v589
      %v896 = vpack.c.b16 %v881, %v880
      %v897 = vpack.c.b16 %v883, %v882
      %v898 = vpack.c.b16 %v885, %v884
      %v899 = vpack.c.b16 %v887, %v886
      %v900 = vpack.c.b16 %v889, %v888
      %v901 = vpack.c.b16 %v891, %v890
      %v902 = vpack.c.b16 %v893, %v892
      %v903 = vpack.c.b16 %v895, %v894
      %912 = vmatprep.subr.bf16.mxu0 0
      %913 = vmatpush1.bf16.msra.mxu0 %v903
      %914 = vmatprep.subr.bf16.mxu0 0
      %915 = vmatpush1.bf16.msra.mxu0 %v902
      %916 = vmatprep.subr.bf16.mxu0 0
      %917 = vmatpush1.bf16.msra.mxu0 %v901
      %918 = vmatprep.subr.bf16.mxu0 0
      %919 = vmatpush1.bf16.msra.mxu0 %v900
      %920 = vmatprep.subr.bf16.mxu0 0
      %921 = vmatpush1.bf16.msra.mxu0 %v899
      %922 = vmatprep.subr.bf16.mxu0 0
      %923 = vmatpush1.bf16.msra.mxu0 %v898
      %924 = vmatprep.subr.bf16.mxu0 0
      %925 = vmatpush1.bf16.msra.mxu0 %v897
      %926 = vmatprep.subr.bf16.mxu0 0
      %927 = vmatpush1.bf16.msra.mxu0 %v896
      %928 = vmatprep.subr.bf16.mxu0 0
      %929 = vmatpush2.bf16.msra.mxu0 0
      %930 = vmatprep.subr.bf16.mxu0 0
      %931 = vmatpush2.bf16.msra.mxu0 0
      %932 = vmatprep.subr.bf16.mxu0 0
      %933 = vmatpush2.bf16.msra.mxu0 0
      %934 = vmatprep.subr.bf16.mxu0 0
      %935 = vmatpush2.bf16.msra.mxu0 0
      %936 = vmatprep.subr.bf16.mxu0 0
      %937 = vmatpush2.bf16.msra.mxu0 0
      %938 = vmatprep.subr.bf16.mxu0 0
      %939 = vmatpush2.bf16.msra.mxu0 0
      %940 = vmatprep.subr.bf16.mxu0 0
      %941 = vmatpush2.bf16.msra.mxu0 0
      %942 = vmatprep.subr.bf16.mxu0 0
      %943 = vmatpush2.bf16.msra.mxu0 0
      %944 = vmatprep.mubr.bf16.mxu0 0
      %945 = vmatmul.mubr.bf16.gmra.mxu0 %v558
      %v946 = vpop.f32.mrf.mxu0
      %v947 = vadd.f32 %v738, %v946
      %v948 = vpop.f32.mrf.mxu0
      %v949 = vpop.f32.mrf.mxu0
      %v950 = vadd.f32 %v741, %v949
      %v951 = vpop.f32.mrf.mxu0
      %952 = vmatprep.mubr.bf16.mxu0 0
      %953 = vmatmul.mubr.bf16.gmra.mxu0 %v559
      %v954 = vpop.f32.mrf.mxu0
      %v955 = vadd.f32 %v746, %v954
      %v956 = vpop.f32.mrf.mxu0
      %v957 = vpop.f32.mrf.mxu0
      %v958 = vadd.f32 %v749, %v957
      %v959 = vpop.f32.mrf.mxu0
      %960 = vmatprep.mubr.bf16.mxu0 0
      %961 = vmatmul.mubr.bf16.gmra.mxu0 %v560
      %v962 = vpop.f32.mrf.mxu0
      %v963 = vadd.f32 %v754, %v962
      %v964 = vpop.f32.mrf.mxu0
      %v965 = vpop.f32.mrf.mxu0
      %v966 = vadd.f32 %v757, %v965
      %v967 = vpop.f32.mrf.mxu0
      %968 = vmatprep.mubr.bf16.mxu0 0
      %969 = vmatmul.mubr.bf16.gmra.mxu0 %v561
      %v970 = vpop.f32.mrf.mxu0
      %v971 = vadd.f32 %v762, %v970
      %v972 = vpop.f32.mrf.mxu0
      %v973 = vpop.f32.mrf.mxu0
      %v974 = vadd.f32 %v765, %v973
      %v975 = vpop.f32.mrf.mxu0
      %976 = vmatprep.mubr.bf16.mxu0 0
      %977 = vmatmul.mubr.bf16.gmra.mxu0 %v562
      %v978 = vpop.f32.mrf.mxu0
      %v979 = vadd.f32 %v770, %v978
      %v980 = vpop.f32.mrf.mxu0
      %v981 = vpop.f32.mrf.mxu0
      %v982 = vadd.f32 %v773, %v981
      %v983 = vpop.f32.mrf.mxu0
      %984 = vmatprep.mubr.bf16.mxu0 0
      %985 = vmatmul.mubr.bf16.gmra.mxu0 %v563
      %v986 = vpop.f32.mrf.mxu0
      %v987 = vadd.f32 %v778, %v986
      %v988 = vpop.f32.mrf.mxu0
      %v989 = vpop.f32.mrf.mxu0
      %v990 = vadd.f32 %v781, %v989
      %v991 = vpop.f32.mrf.mxu0
      %992 = vmatprep.mubr.bf16.mxu0 0
      %993 = vmatmul.mubr.bf16.gmra.mxu0 %v564
      %v994 = vpop.f32.mrf.mxu0
      %v995 = vadd.f32 %v786, %v994
      %v996 = vpop.f32.mrf.mxu0
      %v997 = vpop.f32.mrf.mxu0
      %v998 = vadd.f32 %v789, %v997
      %v999 = vpop.f32.mrf.mxu0
      %1000 = vmatprep.mubr.bf16.mxu0 0
      %1001 = vmatmul.mubr.bf16.gmra.mxu0 %v565
      %v1002 = vpop.f32.mrf.mxu0
      %v1003 = vadd.f32 %v794, %v1002
      %v1004 = vpop.f32.mrf.mxu0
      %v1005 = vpop.f32.mrf.mxu0
      %v1006 = vadd.f32 %v797, %v1005
      %v1007 = vpop.f32.mrf.mxu0
      %1008 = vmatprep.mubr.bf16.mxu0 0
      %1009 = vmatmul.mubr.bf16.gmra.mxu0 %v566
      %v1010 = vpop.f32.mrf.mxu0
      %v1011 = vadd.f32 %v802, %v1010
      %v1012 = vpop.f32.mrf.mxu0
      %v1013 = vpop.f32.mrf.mxu0
      %v1014 = vadd.f32 %v805, %v1013
      %v1015 = vpop.f32.mrf.mxu0
      %1016 = vmatprep.mubr.bf16.mxu0 0
      %1017 = vmatmul.mubr.bf16.gmra.mxu0 %v567
      %v1018 = vpop.f32.mrf.mxu0
      %v1019 = vadd.f32 %v810, %v1018
      %v1020 = vpop.f32.mrf.mxu0
      %v1021 = vpop.f32.mrf.mxu0
      %v1022 = vadd.f32 %v813, %v1021
      %v1023 = vpop.f32.mrf.mxu0
      %1024 = vmatprep.mubr.bf16.mxu0 0
      %1025 = vmatmul.mubr.bf16.gmra.mxu0 %v568
      %v1026 = vpop.f32.mrf.mxu0
      %v1027 = vadd.f32 %v818, %v1026
      %v1028 = vpop.f32.mrf.mxu0
      %v1029 = vpop.f32.mrf.mxu0
      %v1030 = vadd.f32 %v821, %v1029
      %v1031 = vpop.f32.mrf.mxu0
      %1032 = vmatprep.mubr.bf16.mxu0 0
      %1033 = vmatmul.mubr.bf16.gmra.mxu0 %v569
      %v1034 = vpop.f32.mrf.mxu0
      %v1035 = vadd.f32 %v826, %v1034
      %v1036 = vpop.f32.mrf.mxu0
      %v1037 = vpop.f32.mrf.mxu0
      %v1038 = vadd.f32 %v829, %v1037
      %v1039 = vpop.f32.mrf.mxu0
      %1040 = vmatprep.mubr.bf16.mxu0 0
      %1041 = vmatmul.mubr.bf16.gmra.mxu0 %v570
      %v1042 = vpop.f32.mrf.mxu0
      %v1043 = vadd.f32 %v834, %v1042
      %v1044 = vpop.f32.mrf.mxu0
      %v1045 = vpop.f32.mrf.mxu0
      %v1046 = vadd.f32 %v837, %v1045
      %v1047 = vpop.f32.mrf.mxu0
      %1048 = vmatprep.mubr.bf16.mxu0 0
      %1049 = vmatmul.mubr.bf16.gmra.mxu0 %v571
      %v1050 = vpop.f32.mrf.mxu0
      %v1051 = vadd.f32 %v842, %v1050
      %v1052 = vpop.f32.mrf.mxu0
      %v1053 = vpop.f32.mrf.mxu0
      %v1054 = vadd.f32 %v845, %v1053
      %v1055 = vpop.f32.mrf.mxu0
      %1056 = vmatprep.mubr.bf16.mxu0 0
      %1057 = vmatmul.mubr.bf16.gmra.mxu0 %v572
      %v1058 = vpop.f32.mrf.mxu0
      %v1059 = vadd.f32 %v850, %v1058
      %v1060 = vpop.f32.mrf.mxu0
      %v1061 = vpop.f32.mrf.mxu0
      %v1062 = vadd.f32 %v853, %v1061
      %v1063 = vpop.f32.mrf.mxu0
      %1064 = vmatprep.mubr.bf16.mxu0 0
      %1065 = vmatmul.mubr.bf16.gmra.mxu0 %v573
      %v1066 = vpop.f32.mrf.mxu0
      %v1067 = vadd.f32 %v858, %v1066
      %v1068 = vpop.f32.mrf.mxu0
      %v1069 = vpop.f32.mrf.mxu0
      %v1070 = vadd.f32 %v861, %v1069
      %v1071 = vpop.f32.mrf.mxu0
      %1072 = vdwg.mxu0
      %v1073 = vld [vmem:[#allocation2 + $0x2] sm:$0xff]
      %v1074 = vld [vmem:[#allocation2 + $0xa] sm:$0xff]
      %v1075 = vld [vmem:[#allocation2 + $0x1a] sm:$0xff]
      %v1076 = vld [vmem:[#allocation2 + $0x22] sm:$0xff]
      %v1077 = vld [vmem:[#allocation2 + $0x32] sm:$0xff]
      %v1078 = vld [vmem:[#allocation2 + $0x3a] sm:$0xff]
      %v1079 = vld [vmem:[#allocation2 + $0x4a] sm:$0xff]
      %v1080 = vld [vmem:[#allocation2 + $0x52] sm:$0xff]
      %v1081 = vld [vmem:[#allocation2 + $0x62] sm:$0xff]
      %v1082 = vld [vmem:[#allocation2 + $0x6a] sm:$0xff]
      %v1083 = vld [vmem:[#allocation2 + $0x7a] sm:$0xff]
      %v1084 = vld [vmem:[#allocation2 + $0x82] sm:$0xff]
      %v1085 = vld [vmem:[#allocation2 + $0x92] sm:$0xff]
      %v1086 = vld [vmem:[#allocation2 + $0x9a] sm:$0xff]
      %v1087 = vld [vmem:[#allocation2 + $0xaa] sm:$0xff]
      %v1088 = vld [vmem:[#allocation2 + $0xb2] sm:$0xff]
      %v1089 = vld [vmem:[#allocation2 + $0xc2] sm:$0xff]
      %v1090 = vld [vmem:[#allocation2 + $0xca] sm:$0xff]
      %v1091 = vld [vmem:[#allocation2 + $0xda] sm:$0xff]
      %v1092 = vld [vmem:[#allocation2 + $0xe2] sm:$0xff]
      %v1093 = vld [vmem:[#allocation2 + $0xf2] sm:$0xff]
      %v1094 = vld [vmem:[#allocation2 + $0xfa] sm:$0xff]
      %v1095 = vld [vmem:[#allocation2 + $0x10a] sm:$0xff]
      %v1096 = vld [vmem:[#allocation2 + $0x112] sm:$0xff]
      %v1097 = vld [vmem:[#allocation2 + $0x122] sm:$0xff]
      %v1098 = vld [vmem:[#allocation2 + $0x12a] sm:$0xff]
      %v1099 = vld [vmem:[#allocation2 + $0x13a] sm:$0xff]
      %v1100 = vld [vmem:[#allocation2 + $0x142] sm:$0xff]
      %v1101 = vld [vmem:[#allocation2 + $0x152] sm:$0xff]
      %v1102 = vld [vmem:[#allocation2 + $0x15a] sm:$0xff]
      %v1103 = vld [vmem:[#allocation2 + $0x16a] sm:$0xff]
      %v1104 = vld [vmem:[#allocation2 + $0x172] sm:$0xff]
      %v1105 = vpack.c.bf16 %v1074, %v1073
      %v1106 = vpack.c.bf16 %v1076, %v1075
      %v1107 = vpack.c.bf16 %v1078, %v1077
      %v1108 = vpack.c.bf16 %v1080, %v1079
      %v1109 = vpack.c.bf16 %v1082, %v1081
      %v1110 = vpack.c.bf16 %v1084, %v1083
      %v1111 = vpack.c.bf16 %v1086, %v1085
      %v1112 = vpack.c.bf16 %v1088, %v1087
      %v1113 = vpack.c.bf16 %v1090, %v1089
      %v1114 = vpack.c.bf16 %v1092, %v1091
      %v1115 = vpack.c.bf16 %v1094, %v1093
      %v1116 = vpack.c.bf16 %v1096, %v1095
      %v1117 = vpack.c.bf16 %v1098, %v1097
      %v1118 = vpack.c.bf16 %v1100, %v1099
      %v1119 = vpack.c.bf16 %v1102, %v1101
      %v1120 = vpack.c.bf16 %v1104, %v1103
      %s1121 = scalar_lea.vmem %s3, 128
      %v1122 = vld [vmem:[%s1121] sm:$0xf]
      %v1123 = vld [vmem:[%s1121 + $0x4] sm:$0xf]
      %v1124 = vld [vmem:[%s1121 + $0x8] sm:$0xf]
      %v1125 = vld [vmem:[%s1121 + $0xc] sm:$0xf]
      %v1126 = vld [vmem:[%s1121 + $0x10] sm:$0xf]
      %v1127 = vld [vmem:[%s1121 + $0x14] sm:$0xf]
      %v1128 = vld [vmem:[%s1121 + $0x18] sm:$0xf]
      %v1129 = vld [vmem:[%s1121 + $0x1c] sm:$0xf]
      %v1130 = vld [vmem:[%s1121 + $0x20] sm:$0xf]
      %v1131 = vld [vmem:[%s1121 + $0x24] sm:$0xf]
      %v1132 = vld [vmem:[%s1121 + $0x28] sm:$0xf]
      %v1133 = vld [vmem:[%s1121 + $0x2c] sm:$0xf]
      %v1134 = vld [vmem:[%s1121 + $0x30] sm:$0xf]
      %v1135 = vld [vmem:[%s1121 + $0x34] sm:$0xf]
      %v1136 = vld [vmem:[%s1121 + $0x38] sm:$0xf]
      %v1137 = vld [vmem:[%s1121 + $0x3c] sm:$0xf]
      %v1154 = vunpack.c.l.b16 %v1122
      %v1155 = vunpack.c.l.b16 %v1123
      %v1156 = vunpack.c.l.b16 %v1124
      %v1157 = vunpack.c.l.b16 %v1125
      %v1158 = vunpack.c.l.b16 %v1126
      %v1159 = vunpack.c.l.b16 %v1127
      %v1160 = vunpack.c.l.b16 %v1128
      %v1161 = vunpack.c.l.b16 %v1129
      %v1162 = vunpack.c.l.b16 %v1130
      %v1163 = vunpack.c.l.b16 %v1131
      %v1164 = vunpack.c.l.b16 %v1132
      %v1165 = vunpack.c.l.b16 %v1133
      %v1166 = vunpack.c.l.b16 %v1134
      %v1167 = vunpack.c.l.b16 %v1135
      %v1168 = vunpack.c.l.b16 %v1136
      %v1169 = vunpack.c.l.b16 %v1137
      %v1170 = vpack.c.b16 %v1155, %v1154
      %v1171 = vpack.c.b16 %v1157, %v1156
      %v1172 = vpack.c.b16 %v1159, %v1158
      %v1173 = vpack.c.b16 %v1161, %v1160
      %v1174 = vpack.c.b16 %v1163, %v1162
      %v1175 = vpack.c.b16 %v1165, %v1164
      %v1176 = vpack.c.b16 %v1167, %v1166
      %v1177 = vpack.c.b16 %v1169, %v1168
      %1186 = vmatprep.subr.bf16.mxu0 0
      %1187 = vmatpush1.bf16.msra.mxu0 %v1177
      %1188 = vmatprep.subr.bf16.mxu0 0
      %1189 = vmatpush1.bf16.msra.mxu0 %v1176
      %1190 = vmatprep.subr.bf16.mxu0 0
      %1191 = vmatpush1.bf16.msra.mxu0 %v1175
      %1192 = vmatprep.subr.bf16.mxu0 0
      %1193 = vmatpush1.bf16.msra.mxu0 %v1174
      %1194 = vmatprep.subr.bf16.mxu0 0
      %1195 = vmatpush1.bf16.msra.mxu0 %v1173
      %1196 = vmatprep.subr.bf16.mxu0 0
      %1197 = vmatpush1.bf16.msra.mxu0 %v1172
      %1198 = vmatprep.subr.bf16.mxu0 0
      %1199 = vmatpush1.bf16.msra.mxu0 %v1171
      %1200 = vmatprep.subr.bf16.mxu0 0
      %1201 = vmatpush1.bf16.msra.mxu0 %v1170
      %1202 = vmatprep.subr.bf16.mxu0 0
      %1203 = vmatpush2.bf16.msra.mxu0 0
      %1204 = vmatprep.subr.bf16.mxu0 0
      %1205 = vmatpush2.bf16.msra.mxu0 0
      %1206 = vmatprep.subr.bf16.mxu0 0
      %1207 = vmatpush2.bf16.msra.mxu0 0
      %1208 = vmatprep.subr.bf16.mxu0 0
      %1209 = vmatpush2.bf16.msra.mxu0 0
      %1210 = vmatprep.subr.bf16.mxu0 0
      %1211 = vmatpush2.bf16.msra.mxu0 0
      %1212 = vmatprep.subr.bf16.mxu0 0
      %1213 = vmatpush2.bf16.msra.mxu0 0
      %1214 = vmatprep.subr.bf16.mxu0 0
      %1215 = vmatpush2.bf16.msra.mxu0 0
      %1216 = vmatprep.subr.bf16.mxu0 0
      %1217 = vmatpush2.bf16.msra.mxu0 0
      %1218 = vmatprep.mubr.bf16.mxu0 0
      %1219 = vmatmul.mubr.bf16.gmra.mxu0 %v1105
      %v1220 = vpop.f32.mrf.mxu0
      %v1221 = vadd.f32 0.0, %v1220
      %v1222 = vpop.f32.mrf.mxu0
      %v1223 = vpop.f32.mrf.mxu0
      %v1224 = vadd.f32 0.0, %v1223
      %v1225 = vpop.f32.mrf.mxu0
      %1226 = vmatprep.mubr.bf16.mxu0 0
      %1227 = vmatmul.mubr.bf16.gmra.mxu0 %v1106
      %v1228 = vpop.f32.mrf.mxu0
      %v1229 = vadd.f32 0.0, %v1228
      %v1230 = vpop.f32.mrf.mxu0
      %v1231 = vpop.f32.mrf.mxu0
      %v1232 = vadd.f32 0.0, %v1231
      %v1233 = vpop.f32.mrf.mxu0
      %1234 = vmatprep.mubr.bf16.mxu0 0
      %1235 = vmatmul.mubr.bf16.gmra.mxu0 %v1107
      %v1236 = vpop.f32.mrf.mxu0
      %v1237 = vadd.f32 0.0, %v1236
      %v1238 = vpop.f32.mrf.mxu0
      %v1239 = vpop.f32.mrf.mxu0
      %v1240 = vadd.f32 0.0, %v1239
      %v1241 = vpop.f32.mrf.mxu0
      %1242 = vmatprep.mubr.bf16.mxu0 0
      %1243 = vmatmul.mubr.bf16.gmra.mxu0 %v1108
      %v1244 = vpop.f32.mrf.mxu0
      %v1245 = vadd.f32 0.0, %v1244
      %v1246 = vpop.f32.mrf.mxu0
      %v1247 = vpop.f32.mrf.mxu0
      %v1248 = vadd.f32 0.0, %v1247
      %v1249 = vpop.f32.mrf.mxu0
      %1250 = vmatprep.mubr.bf16.mxu0 0
      %1251 = vmatmul.mubr.bf16.gmra.mxu0 %v1109
      %v1252 = vpop.f32.mrf.mxu0
      %v1253 = vadd.f32 0.0, %v1252
      %v1254 = vpop.f32.mrf.mxu0
      %v1255 = vpop.f32.mrf.mxu0
      %v1256 = vadd.f32 0.0, %v1255
      %v1257 = vpop.f32.mrf.mxu0
      %1258 = vmatprep.mubr.bf16.mxu0 0
      %1259 = vmatmul.mubr.bf16.gmra.mxu0 %v1110
      %v1260 = vpop.f32.mrf.mxu0
      %v1261 = vadd.f32 0.0, %v1260
      %v1262 = vpop.f32.mrf.mxu0
      %v1263 = vpop.f32.mrf.mxu0
      %v1264 = vadd.f32 0.0, %v1263
      %v1265 = vpop.f32.mrf.mxu0
      %1266 = vmatprep.mubr.bf16.mxu0 0
      %1267 = vmatmul.mubr.bf16.gmra.mxu0 %v1111
      %v1268 = vpop.f32.mrf.mxu0
      %v1269 = vadd.f32 0.0, %v1268
      %v1270 = vpop.f32.mrf.mxu0
      %v1271 = vpop.f32.mrf.mxu0
      %v1272 = vadd.f32 0.0, %v1271
      %v1273 = vpop.f32.mrf.mxu0
      %1274 = vmatprep.mubr.bf16.mxu0 0
      %1275 = vmatmul.mubr.bf16.gmra.mxu0 %v1112
      %v1276 = vpop.f32.mrf.mxu0
      %v1277 = vadd.f32 0.0, %v1276
      %v1278 = vpop.f32.mrf.mxu0
      %v1279 = vpop.f32.mrf.mxu0
      %v1280 = vadd.f32 0.0, %v1279
      %v1281 = vpop.f32.mrf.mxu0
      %1282 = vmatprep.mubr.bf16.mxu0 0
      %1283 = vmatmul.mubr.bf16.gmra.mxu0 %v1113
      %v1284 = vpop.f32.mrf.mxu0
      %v1285 = vadd.f32 0.0, %v1284
      %v1286 = vpop.f32.mrf.mxu0
      %v1287 = vpop.f32.mrf.mxu0
      %v1288 = vadd.f32 0.0, %v1287
      %v1289 = vpop.f32.mrf.mxu0
      %1290 = vmatprep.mubr.bf16.mxu0 0
      %1291 = vmatmul.mubr.bf16.gmra.mxu0 %v1114
      %v1292 = vpop.f32.mrf.mxu0
      %v1293 = vadd.f32 0.0, %v1292
      %v1294 = vpop.f32.mrf.mxu0
      %v1295 = vpop.f32.mrf.mxu0
      %v1296 = vadd.f32 0.0, %v1295
      %v1297 = vpop.f32.mrf.mxu0
      %1298 = vmatprep.mubr.bf16.mxu0 0
      %1299 = vmatmul.mubr.bf16.gmra.mxu0 %v1115
      %v1300 = vpop.f32.mrf.mxu0
      %v1301 = vadd.f32 0.0, %v1300
      %v1302 = vpop.f32.mrf.mxu0
      %v1303 = vpop.f32.mrf.mxu0
      %v1304 = vadd.f32 0.0, %v1303
      %v1305 = vpop.f32.mrf.mxu0
      %1306 = vmatprep.mubr.bf16.mxu0 0
      %1307 = vmatmul.mubr.bf16.gmra.mxu0 %v1116
      %v1308 = vpop.f32.mrf.mxu0
      %v1309 = vadd.f32 0.0, %v1308
      %v1310 = vpop.f32.mrf.mxu0
      %v1311 = vpop.f32.mrf.mxu0
      %v1312 = vadd.f32 0.0, %v1311
      %v1313 = vpop.f32.mrf.mxu0
      %1314 = vmatprep.mubr.bf16.mxu0 0
      %1315 = vmatmul.mubr.bf16.gmra.mxu0 %v1117
      %v1316 = vpop.f32.mrf.mxu0
      %v1317 = vadd.f32 0.0, %v1316
      %v1318 = vpop.f32.mrf.mxu0
      %v1319 = vpop.f32.mrf.mxu0
      %v1320 = vadd.f32 0.0, %v1319
      %v1321 = vpop.f32.mrf.mxu0
      %1322 = vmatprep.mubr.bf16.mxu0 0
      %1323 = vmatmul.mubr.bf16.gmra.mxu0 %v1118
      %v1324 = vpop.f32.mrf.mxu0
      %v1325 = vadd.f32 0.0, %v1324
      %v1326 = vpop.f32.mrf.mxu0
      %v1327 = vpop.f32.mrf.mxu0
      %v1328 = vadd.f32 0.0, %v1327
      %v1329 = vpop.f32.mrf.mxu0
      %1330 = vmatprep.mubr.bf16.mxu0 0
      %1331 = vmatmul.mubr.bf16.gmra.mxu0 %v1119
      %v1332 = vpop.f32.mrf.mxu0
      %v1333 = vadd.f32 0.0, %v1332
      %v1334 = vpop.f32.mrf.mxu0
      %v1335 = vpop.f32.mrf.mxu0
      %v1336 = vadd.f32 0.0, %v1335
      %v1337 = vpop.f32.mrf.mxu0
      %1338 = vmatprep.mubr.bf16.mxu0 0
      %1339 = vmatmul.mubr.bf16.gmra.mxu0 %v1120
      %v1340 = vpop.f32.mrf.mxu0
      %v1341 = vadd.f32 0.0, %v1340
      %v1342 = vpop.f32.mrf.mxu0
      %v1343 = vpop.f32.mrf.mxu0
      %v1344 = vadd.f32 0.0, %v1343
      %v1345 = vpop.f32.mrf.mxu0
      %1346 = vdwg.mxu0
      %v1347 = vadd.f32 %v947, %v1221
      %v1348 = vadd.f32 %v950, %v1224
      %v1349 = vadd.f32 %v955, %v1229
      %v1350 = vadd.f32 %v958, %v1232
      %v1351 = vadd.f32 %v963, %v1237
      %v1352 = vadd.f32 %v966, %v1240
      %v1353 = vadd.f32 %v971, %v1245
      %v1354 = vadd.f32 %v974, %v1248
      %v1355 = vadd.f32 %v979, %v1253
      %v1356 = vadd.f32 %v982, %v1256
      %v1357 = vadd.f32 %v987, %v1261
      %v1358 = vadd.f32 %v990, %v1264
      %v1359 = vadd.f32 %v995, %v1269
      %v1360 = vadd.f32 %v998, %v1272
      %v1361 = vadd.f32 %v1003, %v1277
      %v1362 = vadd.f32 %v1006, %v1280
      %v1363 = vadd.f32 %v1011, %v1285
      %v1364 = vadd.f32 %v1014, %v1288
      %v1365 = vadd.f32 %v1019, %v1293
      %v1366 = vadd.f32 %v1022, %v1296
      %v1367 = vadd.f32 %v1027, %v1301
      %v1368 = vadd.f32 %v1030, %v1304
      %v1369 = vadd.f32 %v1035, %v1309
      %v1370 = vadd.f32 %v1038, %v1312
      %v1371 = vadd.f32 %v1043, %v1317
      %v1372 = vadd.f32 %v1046, %v1320
      %v1373 = vadd.f32 %v1051, %v1325
      %v1374 = vadd.f32 %v1054, %v1328
      %v1375 = vadd.f32 %v1059, %v1333
      %v1376 = vadd.f32 %v1062, %v1336
      %v1377 = vadd.f32 %v1067, %v1341
      %v1378 = vadd.f32 %v1070, %v1344
      %v1379 = vld [vmem:[%s493] sm:$0xff]
      %v1380 = vld [vmem:[%s493 + $0x8] sm:$0xff]
      %v1381 = vld [vmem:[%s493 + $0x18] sm:$0xff]
      %v1382 = vld [vmem:[%s493 + $0x20] sm:$0xff]
      %v1383 = vld [vmem:[%s493 + $0x30] sm:$0xff]
      %v1384 = vld [vmem:[%s493 + $0x38] sm:$0xff]
      %v1385 = vld [vmem:[%s493 + $0x48] sm:$0xff]
      %v1386 = vld [vmem:[%s493 + $0x50] sm:$0xff]
      %v1387 = vld [vmem:[%s493 + $0x60] sm:$0xff]
      %v1388 = vld [vmem:[%s493 + $0x68] sm:$0xff]
      %v1389 = vld [vmem:[%s493 + $0x78] sm:$0xff]
      %v1390 = vld [vmem:[%s493 + $0x80] sm:$0xff]
      %v1391 = vld [vmem:[%s493 + $0x90] sm:$0xff]
      %v1392 = vld [vmem:[%s493 + $0x98] sm:$0xff]
      %v1393 = vld [vmem:[%s493 + $0xa8] sm:$0xff]
      %v1394 = vld [vmem:[%s493 + $0xb0] sm:$0xff]
      %v1395 = vld [vmem:[%s493 + $0xc0] sm:$0xff]
      %v1396 = vld [vmem:[%s493 + $0xc8] sm:$0xff]
      %v1397 = vld [vmem:[%s493 + $0xd8] sm:$0xff]
      %v1398 = vld [vmem:[%s493 + $0xe0] sm:$0xff]
      %v1399 = vld [vmem:[%s493 + $0xf0] sm:$0xff]
      %v1400 = vld [vmem:[%s493 + $0xf8] sm:$0xff]
      %v1401 = vld [vmem:[%s493 + $0x108] sm:$0xff]
      %v1402 = vld [vmem:[%s493 + $0x110] sm:$0xff]
      %v1403 = vld [vmem:[%s493 + $0x120] sm:$0xff]
      %v1404 = vld [vmem:[%s493 + $0x128] sm:$0xff]
      %v1405 = vld [vmem:[%s493 + $0x138] sm:$0xff]
      %v1406 = vld [vmem:[%s493 + $0x140] sm:$0xff]
      %v1407 = vld [vmem:[%s493 + $0x150] sm:$0xff]
      %v1408 = vld [vmem:[%s493 + $0x158] sm:$0xff]
      %v1409 = vld [vmem:[%s493 + $0x168] sm:$0xff]
      %v1410 = vld [vmem:[%s493 + $0x170] sm:$0xff]
      %v1411 = vpack.c.bf16 %v1380, %v1379
      %v1412 = vpack.c.bf16 %v1382, %v1381
      %v1413 = vpack.c.bf16 %v1384, %v1383
      %v1414 = vpack.c.bf16 %v1386, %v1385
      %v1415 = vpack.c.bf16 %v1388, %v1387
      %v1416 = vpack.c.bf16 %v1390, %v1389
      %v1417 = vpack.c.bf16 %v1392, %v1391
      %v1418 = vpack.c.bf16 %v1394, %v1393
      %v1419 = vpack.c.bf16 %v1396, %v1395
      %v1420 = vpack.c.bf16 %v1398, %v1397
      %v1421 = vpack.c.bf16 %v1400, %v1399
      %v1422 = vpack.c.bf16 %v1402, %v1401
      %v1423 = vpack.c.bf16 %v1404, %v1403
      %v1424 = vpack.c.bf16 %v1406, %v1405
      %v1425 = vpack.c.bf16 %v1408, %v1407
      %v1426 = vpack.c.bf16 %v1410, %v1409
      %s1427 = scalar_lea.vmem %s3, 192
      %v1428 = vld [vmem:[%s1427] sm:$0xf]
      %v1429 = vld [vmem:[%s1427 + $0x4] sm:$0xf]
      %v1430 = vld [vmem:[%s1427 + $0x8] sm:$0xf]
      %v1431 = vld [vmem:[%s1427 + $0xc] sm:$0xf]
      %v1432 = vld [vmem:[%s1427 + $0x10] sm:$0xf]
      %v1433 = vld [vmem:[%s1427 + $0x14] sm:$0xf]
      %v1434 = vld [vmem:[%s1427 + $0x18] sm:$0xf]
      %v1435 = vld [vmem:[%s1427 + $0x1c] sm:$0xf]
      %v1436 = vld [vmem:[%s1427 + $0x20] sm:$0xf]
      %v1437 = vld [vmem:[%s1427 + $0x24] sm:$0xf]
      %v1438 = vld [vmem:[%s1427 + $0x28] sm:$0xf]
      %v1439 = vld [vmem:[%s1427 + $0x2c] sm:$0xf]
      %v1440 = vld [vmem:[%s1427 + $0x30] sm:$0xf]
      %v1441 = vld [vmem:[%s1427 + $0x34] sm:$0xf]
      %v1442 = vld [vmem:[%s1427 + $0x38] sm:$0xf]
      %v1443 = vld [vmem:[%s1427 + $0x3c] sm:$0xf]
      %v1460 = vunpack.c.l.b16 %v1428
      %v1461 = vunpack.c.l.b16 %v1429
      %v1462 = vunpack.c.l.b16 %v1430
      %v1463 = vunpack.c.l.b16 %v1431
      %v1464 = vunpack.c.l.b16 %v1432
      %v1465 = vunpack.c.l.b16 %v1433
      %v1466 = vunpack.c.l.b16 %v1434
      %v1467 = vunpack.c.l.b16 %v1435
      %v1468 = vunpack.c.l.b16 %v1436
      %v1469 = vunpack.c.l.b16 %v1437
      %v1470 = vunpack.c.l.b16 %v1438
      %v1471 = vunpack.c.l.b16 %v1439
      %v1472 = vunpack.c.l.b16 %v1440
      %v1473 = vunpack.c.l.b16 %v1441
      %v1474 = vunpack.c.l.b16 %v1442
      %v1475 = vunpack.c.l.b16 %v1443
      %v1476 = vpack.c.b16 %v1461, %v1460
      %v1477 = vpack.c.b16 %v1463, %v1462
      %v1478 = vpack.c.b16 %v1465, %v1464
      %v1479 = vpack.c.b16 %v1467, %v1466
      %v1480 = vpack.c.b16 %v1469, %v1468
      %v1481 = vpack.c.b16 %v1471, %v1470
      %v1482 = vpack.c.b16 %v1473, %v1472
      %v1483 = vpack.c.b16 %v1475, %v1474
      %1492 = vmatprep.subr.bf16.mxu0 0
      %1493 = vmatpush1.bf16.msra.mxu0 %v1483
      %1494 = vmatprep.subr.bf16.mxu0 0
      %1495 = vmatpush1.bf16.msra.mxu0 %v1482
      %1496 = vmatprep.subr.bf16.mxu0 0
      %1497 = vmatpush1.bf16.msra.mxu0 %v1481
      %1498 = vmatprep.subr.bf16.mxu0 0
      %1499 = vmatpush1.bf16.msra.mxu0 %v1480
      %1500 = vmatprep.subr.bf16.mxu0 0
      %1501 = vmatpush1.bf16.msra.mxu0 %v1479
      %1502 = vmatprep.subr.bf16.mxu0 0
      %1503 = vmatpush1.bf16.msra.mxu0 %v1478
      %1504 = vmatprep.subr.bf16.mxu0 0
      %1505 = vmatpush1.bf16.msra.mxu0 %v1477
      %1506 = vmatprep.subr.bf16.mxu0 0
      %1507 = vmatpush1.bf16.msra.mxu0 %v1476
      %1508 = vmatprep.subr.bf16.mxu0 0
      %1509 = vmatpush2.bf16.msra.mxu0 0
      %1510 = vmatprep.subr.bf16.mxu0 0
      %1511 = vmatpush2.bf16.msra.mxu0 0
      %1512 = vmatprep.subr.bf16.mxu0 0
      %1513 = vmatpush2.bf16.msra.mxu0 0
      %1514 = vmatprep.subr.bf16.mxu0 0
      %1515 = vmatpush2.bf16.msra.mxu0 0
      %1516 = vmatprep.subr.bf16.mxu0 0
      %1517 = vmatpush2.bf16.msra.mxu0 0
      %1518 = vmatprep.subr.bf16.mxu0 0
      %1519 = vmatpush2.bf16.msra.mxu0 0
      %1520 = vmatprep.subr.bf16.mxu0 0
      %1521 = vmatpush2.bf16.msra.mxu0 0
      %1522 = vmatprep.subr.bf16.mxu0 0
      %1523 = vmatpush2.bf16.msra.mxu0 0
      %1524 = vmatprep.mubr.bf16.mxu0 0
      %1525 = vmatmul.mubr.bf16.gmra.mxu0 %v1411
      %v1526 = vpop.f32.mrf.mxu0
      %v1527 = vadd.f32 0.0, %v1526
      %v1528 = vpop.f32.mrf.mxu0
      %v1529 = vpop.f32.mrf.mxu0
      %v1530 = vadd.f32 0.0, %v1529
      %v1531 = vpop.f32.mrf.mxu0
      %1532 = vmatprep.mubr.bf16.mxu0 0
      %1533 = vmatmul.mubr.bf16.gmra.mxu0 %v1412
      %v1534 = vpop.f32.mrf.mxu0
      %v1535 = vadd.f32 0.0, %v1534
      %v1536 = vpop.f32.mrf.mxu0
      %v1537 = vpop.f32.mrf.mxu0
      %v1538 = vadd.f32 0.0, %v1537
      %v1539 = vpop.f32.mrf.mxu0
      %1540 = vmatprep.mubr.bf16.mxu0 0
      %1541 = vmatmul.mubr.bf16.gmra.mxu0 %v1413
      %v1542 = vpop.f32.mrf.mxu0
      %v1543 = vadd.f32 0.0, %v1542
      %v1544 = vpop.f32.mrf.mxu0
      %v1545 = vpop.f32.mrf.mxu0
      %v1546 = vadd.f32 0.0, %v1545
      %v1547 = vpop.f32.mrf.mxu0
      %1548 = vmatprep.mubr.bf16.mxu0 0
      %1549 = vmatmul.mubr.bf16.gmra.mxu0 %v1414
      %v1550 = vpop.f32.mrf.mxu0
      %v1551 = vadd.f32 0.0, %v1550
      %v1552 = vpop.f32.mrf.mxu0
      %v1553 = vpop.f32.mrf.mxu0
      %v1554 = vadd.f32 0.0, %v1553
      %v1555 = vpop.f32.mrf.mxu0
      %1556 = vmatprep.mubr.bf16.mxu0 0
      %1557 = vmatmul.mubr.bf16.gmra.mxu0 %v1415
      %v1558 = vpop.f32.mrf.mxu0
      %v1559 = vadd.f32 0.0, %v1558
      %v1560 = vpop.f32.mrf.mxu0
      %v1561 = vpop.f32.mrf.mxu0
      %v1562 = vadd.f32 0.0, %v1561
      %v1563 = vpop.f32.mrf.mxu0
      %1564 = vmatprep.mubr.bf16.mxu0 0
      %1565 = vmatmul.mubr.bf16.gmra.mxu0 %v1416
      %v1566 = vpop.f32.mrf.mxu0
      %v1567 = vadd.f32 0.0, %v1566
      %v1568 = vpop.f32.mrf.mxu0
      %v1569 = vpop.f32.mrf.mxu0
      %v1570 = vadd.f32 0.0, %v1569
      %v1571 = vpop.f32.mrf.mxu0
      %1572 = vmatprep.mubr.bf16.mxu0 0
      %1573 = vmatmul.mubr.bf16.gmra.mxu0 %v1417
      %v1574 = vpop.f32.mrf.mxu0
      %v1575 = vadd.f32 0.0, %v1574
      %v1576 = vpop.f32.mrf.mxu0
      %v1577 = vpop.f32.mrf.mxu0
      %v1578 = vadd.f32 0.0, %v1577
      %v1579 = vpop.f32.mrf.mxu0
      %1580 = vmatprep.mubr.bf16.mxu0 0
      %1581 = vmatmul.mubr.bf16.gmra.mxu0 %v1418
      %v1582 = vpop.f32.mrf.mxu0
      %v1583 = vadd.f32 0.0, %v1582
      %v1584 = vpop.f32.mrf.mxu0
      %v1585 = vpop.f32.mrf.mxu0
      %v1586 = vadd.f32 0.0, %v1585
      %v1587 = vpop.f32.mrf.mxu0
      %1588 = vmatprep.mubr.bf16.mxu0 0
      %1589 = vmatmul.mubr.bf16.gmra.mxu0 %v1419
      %v1590 = vpop.f32.mrf.mxu0
      %v1591 = vadd.f32 0.0, %v1590
      %v1592 = vpop.f32.mrf.mxu0
      %v1593 = vpop.f32.mrf.mxu0
      %v1594 = vadd.f32 0.0, %v1593
      %v1595 = vpop.f32.mrf.mxu0
      %1596 = vmatprep.mubr.bf16.mxu0 0
      %1597 = vmatmul.mubr.bf16.gmra.mxu0 %v1420
      %v1598 = vpop.f32.mrf.mxu0
      %v1599 = vadd.f32 0.0, %v1598
      %v1600 = vpop.f32.mrf.mxu0
      %v1601 = vpop.f32.mrf.mxu0
      %v1602 = vadd.f32 0.0, %v1601
      %v1603 = vpop.f32.mrf.mxu0
      %1604 = vmatprep.mubr.bf16.mxu0 0
      %1605 = vmatmul.mubr.bf16.gmra.mxu0 %v1421
      %v1606 = vpop.f32.mrf.mxu0
      %v1607 = vadd.f32 0.0, %v1606
      %v1608 = vpop.f32.mrf.mxu0
      %v1609 = vpop.f32.mrf.mxu0
      %v1610 = vadd.f32 0.0, %v1609
      %v1611 = vpop.f32.mrf.mxu0
      %1612 = vmatprep.mubr.bf16.mxu0 0
      %1613 = vmatmul.mubr.bf16.gmra.mxu0 %v1422
      %v1614 = vpop.f32.mrf.mxu0
      %v1615 = vadd.f32 0.0, %v1614
      %v1616 = vpop.f32.mrf.mxu0
      %v1617 = vpop.f32.mrf.mxu0
      %v1618 = vadd.f32 0.0, %v1617
      %v1619 = vpop.f32.mrf.mxu0
      %1620 = vmatprep.mubr.bf16.mxu0 0
      %1621 = vmatmul.mubr.bf16.gmra.mxu0 %v1423
      %v1622 = vpop.f32.mrf.mxu0
      %v1623 = vadd.f32 0.0, %v1622
      %v1624 = vpop.f32.mrf.mxu0
      %v1625 = vpop.f32.mrf.mxu0
      %v1626 = vadd.f32 0.0, %v1625
      %v1627 = vpop.f32.mrf.mxu0
      %1628 = vmatprep.mubr.bf16.mxu0 0
      %1629 = vmatmul.mubr.bf16.gmra.mxu0 %v1424
      %v1630 = vpop.f32.mrf.mxu0
      %v1631 = vadd.f32 0.0, %v1630
      %v1632 = vpop.f32.mrf.mxu0
      %v1633 = vpop.f32.mrf.mxu0
      %v1634 = vadd.f32 0.0, %v1633
      %v1635 = vpop.f32.mrf.mxu0
      %1636 = vmatprep.mubr.bf16.mxu0 0
      %1637 = vmatmul.mubr.bf16.gmra.mxu0 %v1425
      %v1638 = vpop.f32.mrf.mxu0
      %v1639 = vadd.f32 0.0, %v1638
      %v1640 = vpop.f32.mrf.mxu0
      %v1641 = vpop.f32.mrf.mxu0
      %v1642 = vadd.f32 0.0, %v1641
      %v1643 = vpop.f32.mrf.mxu0
      %1644 = vmatprep.mubr.bf16.mxu0 0
      %1645 = vmatmul.mubr.bf16.gmra.mxu0 %v1426
      %v1646 = vpop.f32.mrf.mxu0
      %v1647 = vadd.f32 0.0, %v1646
      %v1648 = vpop.f32.mrf.mxu0
      %v1649 = vpop.f32.mrf.mxu0
      %v1650 = vadd.f32 0.0, %v1649
      %v1651 = vpop.f32.mrf.mxu0
      %1652 = vdwg.mxu0
      %v1653 = vadd.f32 %v1347, %v1527
      %v1654 = vadd.f32 %v1348, %v1530
      %v1655 = vadd.f32 %v1349, %v1535
      %v1656 = vadd.f32 %v1350, %v1538
      %v1657 = vadd.f32 %v1351, %v1543
      %v1658 = vadd.f32 %v1352, %v1546
      %v1659 = vadd.f32 %v1353, %v1551
      %v1660 = vadd.f32 %v1354, %v1554
      %v1661 = vadd.f32 %v1355, %v1559
      %v1662 = vadd.f32 %v1356, %v1562
      %v1663 = vadd.f32 %v1357, %v1567
      %v1664 = vadd.f32 %v1358, %v1570
      %v1665 = vadd.f32 %v1359, %v1575
      %v1666 = vadd.f32 %v1360, %v1578
      %v1667 = vadd.f32 %v1361, %v1583
      %v1668 = vadd.f32 %v1362, %v1586
      %v1669 = vadd.f32 %v1363, %v1591
      %v1670 = vadd.f32 %v1364, %v1594
      %v1671 = vadd.f32 %v1365, %v1599
      %v1672 = vadd.f32 %v1366, %v1602
      %v1673 = vadd.f32 %v1367, %v1607
      %v1674 = vadd.f32 %v1368, %v1610
      %v1675 = vadd.f32 %v1369, %v1615
      %v1676 = vadd.f32 %v1370, %v1618
      %v1677 = vadd.f32 %v1371, %v1623
      %v1678 = vadd.f32 %v1372, %v1626
      %v1679 = vadd.f32 %v1373, %v1631
      %v1680 = vadd.f32 %v1374, %v1634
      %v1681 = vadd.f32 %v1375, %v1639
      %v1682 = vadd.f32 %v1376, %v1642
      %v1683 = vadd.f32 %v1377, %v1647
      %v1684 = vadd.f32 %v1378, %v1650
      %v1685 = vld [vmem:[%s493 + $0x1] sm:$0xff]
      %v1686 = vld [vmem:[%s493 + $0x9] sm:$0xff]
      %v1687 = vld [vmem:[%s493 + $0x19] sm:$0xff]
      %v1688 = vld [vmem:[%s493 + $0x21] sm:$0xff]
      %v1689 = vld [vmem:[%s493 + $0x31] sm:$0xff]
      %v1690 = vld [vmem:[%s493 + $0x39] sm:$0xff]
      %v1691 = vld [vmem:[%s493 + $0x49] sm:$0xff]
      %v1692 = vld [vmem:[%s493 + $0x51] sm:$0xff]
      %v1693 = vld [vmem:[%s493 + $0x61] sm:$0xff]
      %v1694 = vld [vmem:[%s493 + $0x69] sm:$0xff]
      %v1695 = vld [vmem:[%s493 + $0x79] sm:$0xff]
      %v1696 = vld [vmem:[%s493 + $0x81] sm:$0xff]
      %v1697 = vld [vmem:[%s493 + $0x91] sm:$0xff]
      %v1698 = vld [vmem:[%s493 + $0x99] sm:$0xff]
      %v1699 = vld [vmem:[%s493 + $0xa9] sm:$0xff]
      %v1700 = vld [vmem:[%s493 + $0xb1] sm:$0xff]
      %v1701 = vld [vmem:[%s493 + $0xc1] sm:$0xff]
      %v1702 = vld [vmem:[%s493 + $0xc9] sm:$0xff]
      %v1703 = vld [vmem:[%s493 + $0xd9] sm:$0xff]
      %v1704 = vld [vmem:[%s493 + $0xe1] sm:$0xff]
      %v1705 = vld [vmem:[%s493 + $0xf1] sm:$0xff]
      %v1706 = vld [vmem:[%s493 + $0xf9] sm:$0xff]
      %v1707 = vld [vmem:[%s493 + $0x109] sm:$0xff]
      %v1708 = vld [vmem:[%s493 + $0x111] sm:$0xff]
      %v1709 = vld [vmem:[%s493 + $0x121] sm:$0xff]
      %v1710 = vld [vmem:[%s493 + $0x129] sm:$0xff]
      %v1711 = vld [vmem:[%s493 + $0x139] sm:$0xff]
      %v1712 = vld [vmem:[%s493 + $0x141] sm:$0xff]
      %v1713 = vld [vmem:[%s493 + $0x151] sm:$0xff]
      %v1714 = vld [vmem:[%s493 + $0x159] sm:$0xff]
      %v1715 = vld [vmem:[%s493 + $0x169] sm:$0xff]
      %v1716 = vld [vmem:[%s493 + $0x171] sm:$0xff]
      %v1717 = vpack.c.bf16 %v1686, %v1685
      %v1718 = vpack.c.bf16 %v1688, %v1687
      %v1719 = vpack.c.bf16 %v1690, %v1689
      %v1720 = vpack.c.bf16 %v1692, %v1691
      %v1721 = vpack.c.bf16 %v1694, %v1693
      %v1722 = vpack.c.bf16 %v1696, %v1695
      %v1723 = vpack.c.bf16 %v1698, %v1697
      %v1724 = vpack.c.bf16 %v1700, %v1699
      %v1725 = vpack.c.bf16 %v1702, %v1701
      %v1726 = vpack.c.bf16 %v1704, %v1703
      %v1727 = vpack.c.bf16 %v1706, %v1705
      %v1728 = vpack.c.bf16 %v1708, %v1707
      %v1729 = vpack.c.bf16 %v1710, %v1709
      %v1730 = vpack.c.bf16 %v1712, %v1711
      %v1731 = vpack.c.bf16 %v1714, %v1713
      %v1732 = vpack.c.bf16 %v1716, %v1715
      %s1733 = scalar_lea.vmem %s3, 256
      %v1734 = vld [vmem:[%s1733] sm:$0xf]
      %v1735 = vld [vmem:[%s1733 + $0x4] sm:$0xf]
      %v1736 = vld [vmem:[%s1733 + $0x8] sm:$0xf]
      %v1737 = vld [vmem:[%s1733 + $0xc] sm:$0xf]
      %v1738 = vld [vmem:[%s1733 + $0x10] sm:$0xf]
      %v1739 = vld [vmem:[%s1733 + $0x14] sm:$0xf]
      %v1740 = vld [vmem:[%s1733 + $0x18] sm:$0xf]
      %v1741 = vld [vmem:[%s1733 + $0x1c] sm:$0xf]
      %v1742 = vld [vmem:[%s1733 + $0x20] sm:$0xf]
      %v1743 = vld [vmem:[%s1733 + $0x24] sm:$0xf]
      %v1744 = vld [vmem:[%s1733 + $0x28] sm:$0xf]
      %v1745 = vld [vmem:[%s1733 + $0x2c] sm:$0xf]
      %v1746 = vld [vmem:[%s1733 + $0x30] sm:$0xf]
      %v1747 = vld [vmem:[%s1733 + $0x34] sm:$0xf]
      %v1748 = vld [vmem:[%s1733 + $0x38] sm:$0xf]
      %v1749 = vld [vmem:[%s1733 + $0x3c] sm:$0xf]
      %v1766 = vunpack.c.l.b16 %v1734
      %v1767 = vunpack.c.l.b16 %v1735
      %v1768 = vunpack.c.l.b16 %v1736
      %v1769 = vunpack.c.l.b16 %v1737
      %v1770 = vunpack.c.l.b16 %v1738
      %v1771 = vunpack.c.l.b16 %v1739
      %v1772 = vunpack.c.l.b16 %v1740
      %v1773 = vunpack.c.l.b16 %v1741
      %v1774 = vunpack.c.l.b16 %v1742
      %v1775 = vunpack.c.l.b16 %v1743
      %v1776 = vunpack.c.l.b16 %v1744
      %v1777 = vunpack.c.l.b16 %v1745
      %v1778 = vunpack.c.l.b16 %v1746
      %v1779 = vunpack.c.l.b16 %v1747
      %v1780 = vunpack.c.l.b16 %v1748
      %v1781 = vunpack.c.l.b16 %v1749
      %v1782 = vpack.c.b16 %v1767, %v1766
      %v1783 = vpack.c.b16 %v1769, %v1768
      %v1784 = vpack.c.b16 %v1771, %v1770
      %v1785 = vpack.c.b16 %v1773, %v1772
      %v1786 = vpack.c.b16 %v1775, %v1774
      %v1787 = vpack.c.b16 %v1777, %v1776
      %v1788 = vpack.c.b16 %v1779, %v1778
      %v1789 = vpack.c.b16 %v1781, %v1780
      %1798 = vmatprep.subr.bf16.mxu0 0
      %1799 = vmatpush1.bf16.msra.mxu0 %v1789
      %1800 = vmatprep.subr.bf16.mxu0 0
      %1801 = vmatpush1.bf16.msra.mxu0 %v1788
      %1802 = vmatprep.subr.bf16.mxu0 0
      %1803 = vmatpush1.bf16.msra.mxu0 %v1787
      %1804 = vmatprep.subr.bf16.mxu0 0
      %1805 = vmatpush1.bf16.msra.mxu0 %v1786
      %1806 = vmatprep.subr.bf16.mxu0 0
      %1807 = vmatpush1.bf16.msra.mxu0 %v1785
      %1808 = vmatprep.subr.bf16.mxu0 0
      %1809 = vmatpush1.bf16.msra.mxu0 %v1784
      %1810 = vmatprep.subr.bf16.mxu0 0
      %1811 = vmatpush1.bf16.msra.mxu0 %v1783
      %1812 = vmatprep.subr.bf16.mxu0 0
      %1813 = vmatpush1.bf16.msra.mxu0 %v1782
      %1814 = vmatprep.subr.bf16.mxu0 0
      %1815 = vmatpush2.bf16.msra.mxu0 0
      %1816 = vmatprep.subr.bf16.mxu0 0
      %1817 = vmatpush2.bf16.msra.mxu0 0
      %1818 = vmatprep.subr.bf16.mxu0 0
      %1819 = vmatpush2.bf16.msra.mxu0 0
      %1820 = vmatprep.subr.bf16.mxu0 0
      %1821 = vmatpush2.bf16.msra.mxu0 0
      %1822 = vmatprep.subr.bf16.mxu0 0
      %1823 = vmatpush2.bf16.msra.mxu0 0
      %1824 = vmatprep.subr.bf16.mxu0 0
      %1825 = vmatpush2.bf16.msra.mxu0 0
      %1826 = vmatprep.subr.bf16.mxu0 0
      %1827 = vmatpush2.bf16.msra.mxu0 0
      %1828 = vmatprep.subr.bf16.mxu0 0
      %1829 = vmatpush2.bf16.msra.mxu0 0
      %1830 = vmatprep.mubr.bf16.mxu0 0
      %1831 = vmatmul.mubr.bf16.gmra.mxu0 %v1717
      %v1832 = vpop.f32.mrf.mxu0
      %v1833 = vadd.f32 0.0, %v1832
      %v1834 = vpop.f32.mrf.mxu0
      %v1835 = vpop.f32.mrf.mxu0
      %v1836 = vadd.f32 0.0, %v1835
      %v1837 = vpop.f32.mrf.mxu0
      %1838 = vmatprep.mubr.bf16.mxu0 0
      %1839 = vmatmul.mubr.bf16.gmra.mxu0 %v1718
      %v1840 = vpop.f32.mrf.mxu0
      %v1841 = vadd.f32 0.0, %v1840
      %v1842 = vpop.f32.mrf.mxu0
      %v1843 = vpop.f32.mrf.mxu0
      %v1844 = vadd.f32 0.0, %v1843
      %v1845 = vpop.f32.mrf.mxu0
      %1846 = vmatprep.mubr.bf16.mxu0 0
      %1847 = vmatmul.mubr.bf16.gmra.mxu0 %v1719
      %v1848 = vpop.f32.mrf.mxu0
      %v1849 = vadd.f32 0.0, %v1848
      %v1850 = vpop.f32.mrf.mxu0
      %v1851 = vpop.f32.mrf.mxu0
      %v1852 = vadd.f32 0.0, %v1851
      %v1853 = vpop.f32.mrf.mxu0
      %1854 = vmatprep.mubr.bf16.mxu0 0
      %1855 = vmatmul.mubr.bf16.gmra.mxu0 %v1720
      %v1856 = vpop.f32.mrf.mxu0
      %v1857 = vadd.f32 0.0, %v1856
      %v1858 = vpop.f32.mrf.mxu0
      %v1859 = vpop.f32.mrf.mxu0
      %v1860 = vadd.f32 0.0, %v1859
      %v1861 = vpop.f32.mrf.mxu0
      %1862 = vmatprep.mubr.bf16.mxu0 0
      %1863 = vmatmul.mubr.bf16.gmra.mxu0 %v1721
      %v1864 = vpop.f32.mrf.mxu0
      %v1865 = vadd.f32 0.0, %v1864
      %v1866 = vpop.f32.mrf.mxu0
      %v1867 = vpop.f32.mrf.mxu0
      %v1868 = vadd.f32 0.0, %v1867
      %v1869 = vpop.f32.mrf.mxu0
      %1870 = vmatprep.mubr.bf16.mxu0 0
      %1871 = vmatmul.mubr.bf16.gmra.mxu0 %v1722
      %v1872 = vpop.f32.mrf.mxu0
      %v1873 = vadd.f32 0.0, %v1872
      %v1874 = vpop.f32.mrf.mxu0
      %v1875 = vpop.f32.mrf.mxu0
      %v1876 = vadd.f32 0.0, %v1875
      %v1877 = vpop.f32.mrf.mxu0
      %1878 = vmatprep.mubr.bf16.mxu0 0
      %1879 = vmatmul.mubr.bf16.gmra.mxu0 %v1723
      %v1880 = vpop.f32.mrf.mxu0
      %v1881 = vadd.f32 0.0, %v1880
      %v1882 = vpop.f32.mrf.mxu0
      %v1883 = vpop.f32.mrf.mxu0
      %v1884 = vadd.f32 0.0, %v1883
      %v1885 = vpop.f32.mrf.mxu0
      %1886 = vmatprep.mubr.bf16.mxu0 0
      %1887 = vmatmul.mubr.bf16.gmra.mxu0 %v1724
      %v1888 = vpop.f32.mrf.mxu0
      %v1889 = vadd.f32 0.0, %v1888
      %v1890 = vpop.f32.mrf.mxu0
      %v1891 = vpop.f32.mrf.mxu0
      %v1892 = vadd.f32 0.0, %v1891
      %v1893 = vpop.f32.mrf.mxu0
      %1894 = vmatprep.mubr.bf16.mxu0 0
      %1895 = vmatmul.mubr.bf16.gmra.mxu0 %v1725
      %v1896 = vpop.f32.mrf.mxu0
      %v1897 = vadd.f32 0.0, %v1896
      %v1898 = vpop.f32.mrf.mxu0
      %v1899 = vpop.f32.mrf.mxu0
      %v1900 = vadd.f32 0.0, %v1899
      %v1901 = vpop.f32.mrf.mxu0
      %1902 = vmatprep.mubr.bf16.mxu0 0
      %1903 = vmatmul.mubr.bf16.gmra.mxu0 %v1726
      %v1904 = vpop.f32.mrf.mxu0
      %v1905 = vadd.f32 0.0, %v1904
      %v1906 = vpop.f32.mrf.mxu0
      %v1907 = vpop.f32.mrf.mxu0
      %v1908 = vadd.f32 0.0, %v1907
      %v1909 = vpop.f32.mrf.mxu0
      %1910 = vmatprep.mubr.bf16.mxu0 0
      %1911 = vmatmul.mubr.bf16.gmra.mxu0 %v1727
      %v1912 = vpop.f32.mrf.mxu0
      %v1913 = vadd.f32 0.0, %v1912
      %v1914 = vpop.f32.mrf.mxu0
      %v1915 = vpop.f32.mrf.mxu0
      %v1916 = vadd.f32 0.0, %v1915
      %v1917 = vpop.f32.mrf.mxu0
      %1918 = vmatprep.mubr.bf16.mxu0 0
      %1919 = vmatmul.mubr.bf16.gmra.mxu0 %v1728
      %v1920 = vpop.f32.mrf.mxu0
      %v1921 = vadd.f32 0.0, %v1920
      %v1922 = vpop.f32.mrf.mxu0
      %v1923 = vpop.f32.mrf.mxu0
      %v1924 = vadd.f32 0.0, %v1923
      %v1925 = vpop.f32.mrf.mxu0
      %1926 = vmatprep.mubr.bf16.mxu0 0
      %1927 = vmatmul.mubr.bf16.gmra.mxu0 %v1729
      %v1928 = vpop.f32.mrf.mxu0
      %v1929 = vadd.f32 0.0, %v1928
      %v1930 = vpop.f32.mrf.mxu0
      %v1931 = vpop.f32.mrf.mxu0
      %v1932 = vadd.f32 0.0, %v1931
      %v1933 = vpop.f32.mrf.mxu0
      %1934 = vmatprep.mubr.bf16.mxu0 0
      %1935 = vmatmul.mubr.bf16.gmra.mxu0 %v1730
      %v1936 = vpop.f32.mrf.mxu0
      %v1937 = vadd.f32 0.0, %v1936
      %v1938 = vpop.f32.mrf.mxu0
      %v1939 = vpop.f32.mrf.mxu0
      %v1940 = vadd.f32 0.0, %v1939
      %v1941 = vpop.f32.mrf.mxu0
      %1942 = vmatprep.mubr.bf16.mxu0 0
      %1943 = vmatmul.mubr.bf16.gmra.mxu0 %v1731
      %v1944 = vpop.f32.mrf.mxu0
      %v1945 = vadd.f32 0.0, %v1944
      %v1946 = vpop.f32.mrf.mxu0
      %v1947 = vpop.f32.mrf.mxu0
      %v1948 = vadd.f32 0.0, %v1947
      %v1949 = vpop.f32.mrf.mxu0
      %1950 = vmatprep.mubr.bf16.mxu0 0
      %1951 = vmatmul.mubr.bf16.gmra.mxu0 %v1732
      %v1952 = vpop.f32.mrf.mxu0
      %v1953 = vadd.f32 0.0, %v1952
      %v1954 = vpop.f32.mrf.mxu0
      %v1955 = vpop.f32.mrf.mxu0
      %v1956 = vadd.f32 0.0, %v1955
      %v1957 = vpop.f32.mrf.mxu0
      %1958 = vdwg.mxu0
      %v1959 = vadd.f32 %v1653, %v1833
      %v1960 = vadd.f32 %v1654, %v1836
      %v1961 = vadd.f32 %v1655, %v1841
      %v1962 = vadd.f32 %v1656, %v1844
      %v1963 = vadd.f32 %v1657, %v1849
      %v1964 = vadd.f32 %v1658, %v1852
      %v1965 = vadd.f32 %v1659, %v1857
      %v1966 = vadd.f32 %v1660, %v1860
      %v1967 = vadd.f32 %v1661, %v1865
      %v1968 = vadd.f32 %v1662, %v1868
      %v1969 = vadd.f32 %v1663, %v1873
      %v1970 = vadd.f32 %v1664, %v1876
      %v1971 = vadd.f32 %v1665, %v1881
      %v1972 = vadd.f32 %v1666, %v1884
      %v1973 = vadd.f32 %v1667, %v1889
      %v1974 = vadd.f32 %v1668, %v1892
      %v1975 = vadd.f32 %v1669, %v1897
      %v1976 = vadd.f32 %v1670, %v1900
      %v1977 = vadd.f32 %v1671, %v1905
      %v1978 = vadd.f32 %v1672, %v1908
      %v1979 = vadd.f32 %v1673, %v1913
      %v1980 = vadd.f32 %v1674, %v1916
      %v1981 = vadd.f32 %v1675, %v1921
      %v1982 = vadd.f32 %v1676, %v1924
      %v1983 = vadd.f32 %v1677, %v1929
      %v1984 = vadd.f32 %v1678, %v1932
      %v1985 = vadd.f32 %v1679, %v1937
      %v1986 = vadd.f32 %v1680, %v1940
      %v1987 = vadd.f32 %v1681, %v1945
      %v1988 = vadd.f32 %v1682, %v1948
      %v1989 = vadd.f32 %v1683, %v1953
      %v1990 = vadd.f32 %v1684, %v1956
      %v1991 = vld [vmem:[%s493 + $0x2] sm:$0xff]
      %v1992 = vld [vmem:[%s493 + $0xa] sm:$0xff]
      %v1993 = vld [vmem:[%s493 + $0x1a] sm:$0xff]
      %v1994 = vld [vmem:[%s493 + $0x22] sm:$0xff]
      %v1995 = vld [vmem:[%s493 + $0x32] sm:$0xff]
      %v1996 = vld [vmem:[%s493 + $0x3a] sm:$0xff]
      %v1997 = vld [vmem:[%s493 + $0x4a] sm:$0xff]
      %v1998 = vld [vmem:[%s493 + $0x52] sm:$0xff]
      %v1999 = vld [vmem:[%s493 + $0x62] sm:$0xff]
      %v2000 = vld [vmem:[%s493 + $0x6a] sm:$0xff]
      %v2001 = vld [vmem:[%s493 + $0x7a] sm:$0xff]
      %v2002 = vld [vmem:[%s493 + $0x82] sm:$0xff]
      %v2003 = vld [vmem:[%s493 + $0x92] sm:$0xff]
      %v2004 = vld [vmem:[%s493 + $0x9a] sm:$0xff]
      %v2005 = vld [vmem:[%s493 + $0xaa] sm:$0xff]
      %v2006 = vld [vmem:[%s493 + $0xb2] sm:$0xff]
      %v2007 = vld [vmem:[%s493 + $0xc2] sm:$0xff]
      %v2008 = vld [vmem:[%s493 + $0xca] sm:$0xff]
      %v2009 = vld [vmem:[%s493 + $0xda] sm:$0xff]
      %v2010 = vld [vmem:[%s493 + $0xe2] sm:$0xff]
      %v2011 = vld [vmem:[%s493 + $0xf2] sm:$0xff]
      %v2012 = vld [vmem:[%s493 + $0xfa] sm:$0xff]
      %v2013 = vld [vmem:[%s493 + $0x10a] sm:$0xff]
      %v2014 = vld [vmem:[%s493 + $0x112] sm:$0xff]
      %v2015 = vld [vmem:[%s493 + $0x122] sm:$0xff]
      %v2016 = vld [vmem:[%s493 + $0x12a] sm:$0xff]
      %v2017 = vld [vmem:[%s493 + $0x13a] sm:$0xff]
      %v2018 = vld [vmem:[%s493 + $0x142] sm:$0xff]
      %v2019 = vld [vmem:[%s493 + $0x152] sm:$0xff]
      %v2020 = vld [vmem:[%s493 + $0x15a] sm:$0xff]
      %v2021 = vld [vmem:[%s493 + $0x16a] sm:$0xff]
      %v2022 = vld [vmem:[%s493 + $0x172] sm:$0xff]
      %v2023 = vpack.c.bf16 %v1992, %v1991
      %v2024 = vpack.c.bf16 %v1994, %v1993
      %v2025 = vpack.c.bf16 %v1996, %v1995
      %v2026 = vpack.c.bf16 %v1998, %v1997
      %v2027 = vpack.c.bf16 %v2000, %v1999
      %v2028 = vpack.c.bf16 %v2002, %v2001
      %v2029 = vpack.c.bf16 %v2004, %v2003
      %v2030 = vpack.c.bf16 %v2006, %v2005
      %v2031 = vpack.c.bf16 %v2008, %v2007
      %v2032 = vpack.c.bf16 %v2010, %v2009
      %v2033 = vpack.c.bf16 %v2012, %v2011
      %v2034 = vpack.c.bf16 %v2014, %v2013
      %v2035 = vpack.c.bf16 %v2016, %v2015
      %v2036 = vpack.c.bf16 %v2018, %v2017
      %v2037 = vpack.c.bf16 %v2020, %v2019
      %v2038 = vpack.c.bf16 %v2022, %v2021
      %s2039 = scalar_lea.vmem %s3, 320
      %v2040 = vld [vmem:[%s2039] sm:$0xf]
      %v2041 = vld [vmem:[%s2039 + $0x4] sm:$0xf]
      %v2042 = vld [vmem:[%s2039 + $0x8] sm:$0xf]
      %v2043 = vld [vmem:[%s2039 + $0xc] sm:$0xf]
      %v2044 = vld [vmem:[%s2039 + $0x10] sm:$0xf]
      %v2045 = vld [vmem:[%s2039 + $0x14] sm:$0xf]
      %v2046 = vld [vmem:[%s2039 + $0x18] sm:$0xf]
      %v2047 = vld [vmem:[%s2039 + $0x1c] sm:$0xf]
      %v2048 = vld [vmem:[%s2039 + $0x20] sm:$0xf]
      %v2049 = vld [vmem:[%s2039 + $0x24] sm:$0xf]
      %v2050 = vld [vmem:[%s2039 + $0x28] sm:$0xf]
      %v2051 = vld [vmem:[%s2039 + $0x2c] sm:$0xf]
      %v2052 = vld [vmem:[%s2039 + $0x30] sm:$0xf]
      %v2053 = vld [vmem:[%s2039 + $0x34] sm:$0xf]
      %v2054 = vld [vmem:[%s2039 + $0x38] sm:$0xf]
      %v2055 = vld [vmem:[%s2039 + $0x3c] sm:$0xf]
      %v2072 = vunpack.c.l.b16 %v2040
      %v2073 = vunpack.c.l.b16 %v2041
      %v2074 = vunpack.c.l.b16 %v2042
      %v2075 = vunpack.c.l.b16 %v2043
      %v2076 = vunpack.c.l.b16 %v2044
      %v2077 = vunpack.c.l.b16 %v2045
      %v2078 = vunpack.c.l.b16 %v2046
      %v2079 = vunpack.c.l.b16 %v2047
      %v2080 = vunpack.c.l.b16 %v2048
      %v2081 = vunpack.c.l.b16 %v2049
      %v2082 = vunpack.c.l.b16 %v2050
      %v2083 = vunpack.c.l.b16 %v2051
      %v2084 = vunpack.c.l.b16 %v2052
      %v2085 = vunpack.c.l.b16 %v2053
      %v2086 = vunpack.c.l.b16 %v2054
      %v2087 = vunpack.c.l.b16 %v2055
      %v2088 = vpack.c.b16 %v2073, %v2072
      %v2089 = vpack.c.b16 %v2075, %v2074
      %v2090 = vpack.c.b16 %v2077, %v2076
      %v2091 = vpack.c.b16 %v2079, %v2078
      %v2092 = vpack.c.b16 %v2081, %v2080
      %v2093 = vpack.c.b16 %v2083, %v2082
      %v2094 = vpack.c.b16 %v2085, %v2084
      %v2095 = vpack.c.b16 %v2087, %v2086
      %2104 = vmatprep.subr.bf16.mxu0 0
      %2105 = vmatpush1.bf16.msra.mxu0 %v2095
      %2106 = vmatprep.subr.bf16.mxu0 0
      %2107 = vmatpush1.bf16.msra.mxu0 %v2094
      %2108 = vmatprep.subr.bf16.mxu0 0
      %2109 = vmatpush1.bf16.msra.mxu0 %v2093
      %2110 = vmatprep.subr.bf16.mxu0 0
      %2111 = vmatpush1.bf16.msra.mxu0 %v2092
      %2112 = vmatprep.subr.bf16.mxu0 0
      %2113 = vmatpush1.bf16.msra.mxu0 %v2091
      %2114 = vmatprep.subr.bf16.mxu0 0
      %2115 = vmatpush1.bf16.msra.mxu0 %v2090
      %2116 = vmatprep.subr.bf16.mxu0 0
      %2117 = vmatpush1.bf16.msra.mxu0 %v2089
      %2118 = vmatprep.subr.bf16.mxu0 0
      %2119 = vmatpush1.bf16.msra.mxu0 %v2088
      %2120 = vmatprep.subr.bf16.mxu0 0
      %2121 = vmatpush2.bf16.msra.mxu0 0
      %2122 = vmatprep.subr.bf16.mxu0 0
      %2123 = vmatpush2.bf16.msra.mxu0 0
      %2124 = vmatprep.subr.bf16.mxu0 0
      %2125 = vmatpush2.bf16.msra.mxu0 0
      %2126 = vmatprep.subr.bf16.mxu0 0
      %2127 = vmatpush2.bf16.msra.mxu0 0
      %2128 = vmatprep.subr.bf16.mxu0 0
      %2129 = vmatpush2.bf16.msra.mxu0 0
      %2130 = vmatprep.subr.bf16.mxu0 0
      %2131 = vmatpush2.bf16.msra.mxu0 0
      %2132 = vmatprep.subr.bf16.mxu0 0
      %2133 = vmatpush2.bf16.msra.mxu0 0
      %2134 = vmatprep.subr.bf16.mxu0 0
      %2135 = vmatpush2.bf16.msra.mxu0 0
      %2136 = vmatprep.mubr.bf16.mxu0 0
      %2137 = vmatmul.mubr.bf16.gmra.mxu0 %v2023
      %v2138 = vpop.f32.mrf.mxu0
      %v2139 = vadd.f32 0.0, %v2138
      %v2140 = vpop.f32.mrf.mxu0
      %v2141 = vpop.f32.mrf.mxu0
      %v2142 = vadd.f32 0.0, %v2141
      %v2143 = vpop.f32.mrf.mxu0
      %2144 = vmatprep.mubr.bf16.mxu0 0
      %2145 = vmatmul.mubr.bf16.gmra.mxu0 %v2024
      %v2146 = vpop.f32.mrf.mxu0
      %v2147 = vadd.f32 0.0, %v2146
      %v2148 = vpop.f32.mrf.mxu0
      %v2149 = vpop.f32.mrf.mxu0
      %v2150 = vadd.f32 0.0, %v2149
      %v2151 = vpop.f32.mrf.mxu0
      %2152 = vmatprep.mubr.bf16.mxu0 0
      %2153 = vmatmul.mubr.bf16.gmra.mxu0 %v2025
      %v2154 = vpop.f32.mrf.mxu0
      %v2155 = vadd.f32 0.0, %v2154
      %v2156 = vpop.f32.mrf.mxu0
      %v2157 = vpop.f32.mrf.mxu0
      %v2158 = vadd.f32 0.0, %v2157
      %v2159 = vpop.f32.mrf.mxu0
      %2160 = vmatprep.mubr.bf16.mxu0 0
      %2161 = vmatmul.mubr.bf16.gmra.mxu0 %v2026
      %v2162 = vpop.f32.mrf.mxu0
      %v2163 = vadd.f32 0.0, %v2162
      %v2164 = vpop.f32.mrf.mxu0
      %v2165 = vpop.f32.mrf.mxu0
      %v2166 = vadd.f32 0.0, %v2165
      %v2167 = vpop.f32.mrf.mxu0
      %2168 = vmatprep.mubr.bf16.mxu0 0
      %2169 = vmatmul.mubr.bf16.gmra.mxu0 %v2027
      %v2170 = vpop.f32.mrf.mxu0
      %v2171 = vadd.f32 0.0, %v2170
      %v2172 = vpop.f32.mrf.mxu0
      %v2173 = vpop.f32.mrf.mxu0
      %v2174 = vadd.f32 0.0, %v2173
      %v2175 = vpop.f32.mrf.mxu0
      %2176 = vmatprep.mubr.bf16.mxu0 0
      %2177 = vmatmul.mubr.bf16.gmra.mxu0 %v2028
      %v2178 = vpop.f32.mrf.mxu0
      %v2179 = vadd.f32 0.0, %v2178
      %v2180 = vpop.f32.mrf.mxu0
      %v2181 = vpop.f32.mrf.mxu0
      %v2182 = vadd.f32 0.0, %v2181
      %v2183 = vpop.f32.mrf.mxu0
      %2184 = vmatprep.mubr.bf16.mxu0 0
      %2185 = vmatmul.mubr.bf16.gmra.mxu0 %v2029
      %v2186 = vpop.f32.mrf.mxu0
      %v2187 = vadd.f32 0.0, %v2186
      %v2188 = vpop.f32.mrf.mxu0
      %v2189 = vpop.f32.mrf.mxu0
      %v2190 = vadd.f32 0.0, %v2189
      %v2191 = vpop.f32.mrf.mxu0
      %2192 = vmatprep.mubr.bf16.mxu0 0
      %2193 = vmatmul.mubr.bf16.gmra.mxu0 %v2030
      %v2194 = vpop.f32.mrf.mxu0
      %v2195 = vadd.f32 0.0, %v2194
      %v2196 = vpop.f32.mrf.mxu0
      %v2197 = vpop.f32.mrf.mxu0
      %v2198 = vadd.f32 0.0, %v2197
      %v2199 = vpop.f32.mrf.mxu0
      %2200 = vmatprep.mubr.bf16.mxu0 0
      %2201 = vmatmul.mubr.bf16.gmra.mxu0 %v2031
      %v2202 = vpop.f32.mrf.mxu0
      %v2203 = vadd.f32 0.0, %v2202
      %v2204 = vpop.f32.mrf.mxu0
      %v2205 = vpop.f32.mrf.mxu0
      %v2206 = vadd.f32 0.0, %v2205
      %v2207 = vpop.f32.mrf.mxu0
      %2208 = vmatprep.mubr.bf16.mxu0 0
      %2209 = vmatmul.mubr.bf16.gmra.mxu0 %v2032
      %v2210 = vpop.f32.mrf.mxu0
      %v2211 = vadd.f32 0.0, %v2210
      %v2212 = vpop.f32.mrf.mxu0
      %v2213 = vpop.f32.mrf.mxu0
      %v2214 = vadd.f32 0.0, %v2213
      %v2215 = vpop.f32.mrf.mxu0
      %2216 = vmatprep.mubr.bf16.mxu0 0
      %2217 = vmatmul.mubr.bf16.gmra.mxu0 %v2033
      %v2218 = vpop.f32.mrf.mxu0
      %v2219 = vadd.f32 0.0, %v2218
      %v2220 = vpop.f32.mrf.mxu0
      %v2221 = vpop.f32.mrf.mxu0
      %v2222 = vadd.f32 0.0, %v2221
      %v2223 = vpop.f32.mrf.mxu0
      %2224 = vmatprep.mubr.bf16.mxu0 0
      %2225 = vmatmul.mubr.bf16.gmra.mxu0 %v2034
      %v2226 = vpop.f32.mrf.mxu0
      %v2227 = vadd.f32 0.0, %v2226
      %v2228 = vpop.f32.mrf.mxu0
      %v2229 = vpop.f32.mrf.mxu0
      %v2230 = vadd.f32 0.0, %v2229
      %v2231 = vpop.f32.mrf.mxu0
      %2232 = vmatprep.mubr.bf16.mxu0 0
      %2233 = vmatmul.mubr.bf16.gmra.mxu0 %v2035
      %v2234 = vpop.f32.mrf.mxu0
      %v2235 = vadd.f32 0.0, %v2234
      %v2236 = vpop.f32.mrf.mxu0
      %v2237 = vpop.f32.mrf.mxu0
      %v2238 = vadd.f32 0.0, %v2237
      %v2239 = vpop.f32.mrf.mxu0
      %2240 = vmatprep.mubr.bf16.mxu0 0
      %2241 = vmatmul.mubr.bf16.gmra.mxu0 %v2036
      %v2242 = vpop.f32.mrf.mxu0
      %v2243 = vadd.f32 0.0, %v2242
      %v2244 = vpop.f32.mrf.mxu0
      %v2245 = vpop.f32.mrf.mxu0
      %v2246 = vadd.f32 0.0, %v2245
      %v2247 = vpop.f32.mrf.mxu0
      %2248 = vmatprep.mubr.bf16.mxu0 0
      %2249 = vmatmul.mubr.bf16.gmra.mxu0 %v2037
      %v2250 = vpop.f32.mrf.mxu0
      %v2251 = vadd.f32 0.0, %v2250
      %v2252 = vpop.f32.mrf.mxu0
      %v2253 = vpop.f32.mrf.mxu0
      %v2254 = vadd.f32 0.0, %v2253
      %v2255 = vpop.f32.mrf.mxu0
      %2256 = vmatprep.mubr.bf16.mxu0 0
      %2257 = vmatmul.mubr.bf16.gmra.mxu0 %v2038
      %v2258 = vpop.f32.mrf.mxu0
      %v2259 = vadd.f32 0.0, %v2258
      %v2260 = vpop.f32.mrf.mxu0
      %v2261 = vpop.f32.mrf.mxu0
      %v2262 = vadd.f32 0.0, %v2261
      %v2263 = vpop.f32.mrf.mxu0
      %2264 = vdwg.mxu0
      %v2265 = vadd.f32 %v1959, %v2139
      %v2266 = vadd.f32 %v1960, %v2142
      %v2267 = vadd.f32 %v1961, %v2147
      %v2268 = vadd.f32 %v1962, %v2150
      %v2269 = vadd.f32 %v1963, %v2155
      %v2270 = vadd.f32 %v1964, %v2158
      %v2271 = vadd.f32 %v1965, %v2163
      %v2272 = vadd.f32 %v1966, %v2166
      %v2273 = vadd.f32 %v1967, %v2171
      %v2274 = vadd.f32 %v1968, %v2174
      %v2275 = vadd.f32 %v1969, %v2179
      %v2276 = vadd.f32 %v1970, %v2182
      %v2277 = vadd.f32 %v1971, %v2187
      %v2278 = vadd.f32 %v1972, %v2190
      %v2279 = vadd.f32 %v1973, %v2195
      %v2280 = vadd.f32 %v1974, %v2198
      %v2281 = vadd.f32 %v1975, %v2203
      %v2282 = vadd.f32 %v1976, %v2206
      %v2283 = vadd.f32 %v1977, %v2211
      %v2284 = vadd.f32 %v1978, %v2214
      %v2285 = vadd.f32 %v1979, %v2219
      %v2286 = vadd.f32 %v1980, %v2222
      %v2287 = vadd.f32 %v1981, %v2227
      %v2288 = vadd.f32 %v1982, %v2230
      %v2289 = vadd.f32 %v1983, %v2235
      %v2290 = vadd.f32 %v1984, %v2238
      %v2291 = vadd.f32 %v1985, %v2243
      %v2292 = vadd.f32 %v1986, %v2246
      %v2293 = vadd.f32 %v1987, %v2251
      %v2294 = vadd.f32 %v1988, %v2254
      %v2295 = vadd.f32 %v1989, %v2259
      %v2296 = vadd.f32 %v1990, %v2262
      %s2297 = scalar_lea.vmem [#allocation2], 48
      %v2298 = vld [vmem:[%s2297] sm:$0xff]
      %v2299 = vld [vmem:[%s2297 + $0x8] sm:$0xff]
      %v2300 = vld [vmem:[%s2297 + $0x18] sm:$0xff]
      %v2301 = vld [vmem:[%s2297 + $0x20] sm:$0xff]
      %v2302 = vld [vmem:[%s2297 + $0x30] sm:$0xff]
      %v2303 = vld [vmem:[%s2297 + $0x38] sm:$0xff]
      %v2304 = vld [vmem:[%s2297 + $0x48] sm:$0xff]
      %v2305 = vld [vmem:[%s2297 + $0x50] sm:$0xff]
      %v2306 = vld [vmem:[%s2297 + $0x60] sm:$0xff]
      %v2307 = vld [vmem:[%s2297 + $0x68] sm:$0xff]
      %v2308 = vld [vmem:[%s2297 + $0x78] sm:$0xff]
      %v2309 = vld [vmem:[%s2297 + $0x80] sm:$0xff]
      %v2310 = vld [vmem:[%s2297 + $0x90] sm:$0xff]
      %v2311 = vld [vmem:[%s2297 + $0x98] sm:$0xff]
      %v2312 = vld [vmem:[%s2297 + $0xa8] sm:$0xff]
      %v2313 = vld [vmem:[%s2297 + $0xb0] sm:$0xff]
      %v2314 = vld [vmem:[%s2297 + $0xc0] sm:$0xff]
      %v2315 = vld [vmem:[%s2297 + $0xc8] sm:$0xff]
      %v2316 = vld [vmem:[%s2297 + $0xd8] sm:$0xff]
      %v2317 = vld [vmem:[%s2297 + $0xe0] sm:$0xff]
      %v2318 = vld [vmem:[%s2297 + $0xf0] sm:$0xff]
      %v2319 = vld [vmem:[%s2297 + $0xf8] sm:$0xff]
      %v2320 = vld [vmem:[%s2297 + $0x108] sm:$0xff]
      %v2321 = vld [vmem:[%s2297 + $0x110] sm:$0xff]
      %v2322 = vld [vmem:[%s2297 + $0x120] sm:$0xff]
      %v2323 = vld [vmem:[%s2297 + $0x128] sm:$0xff]
      %v2324 = vld [vmem:[%s2297 + $0x138] sm:$0xff]
      %v2325 = vld [vmem:[%s2297 + $0x140] sm:$0xff]
      %v2326 = vld [vmem:[%s2297 + $0x150] sm:$0xff]
      %v2327 = vld [vmem:[%s2297 + $0x158] sm:$0xff]
      %v2328 = vld [vmem:[%s2297 + $0x168] sm:$0xff]
      %v2329 = vld [vmem:[%s2297 + $0x170] sm:$0xff]
      %v2330 = vpack.c.bf16 %v2299, %v2298
      %v2331 = vpack.c.bf16 %v2301, %v2300
      %v2332 = vpack.c.bf16 %v2303, %v2302
      %v2333 = vpack.c.bf16 %v2305, %v2304
      %v2334 = vpack.c.bf16 %v2307, %v2306
      %v2335 = vpack.c.bf16 %v2309, %v2308
      %v2336 = vpack.c.bf16 %v2311, %v2310
      %v2337 = vpack.c.bf16 %v2313, %v2312
      %v2338 = vpack.c.bf16 %v2315, %v2314
      %v2339 = vpack.c.bf16 %v2317, %v2316
      %v2340 = vpack.c.bf16 %v2319, %v2318
      %v2341 = vpack.c.bf16 %v2321, %v2320
      %v2342 = vpack.c.bf16 %v2323, %v2322
      %v2343 = vpack.c.bf16 %v2325, %v2324
      %v2344 = vpack.c.bf16 %v2327, %v2326
      %v2345 = vpack.c.bf16 %v2329, %v2328
      %s2346 = scalar_lea.vmem %s3, 384
      %v2347 = vld [vmem:[%s2346] sm:$0xf]
      %v2348 = vld [vmem:[%s2346 + $0x4] sm:$0xf]
      %v2349 = vld [vmem:[%s2346 + $0x8] sm:$0xf]
      %v2350 = vld [vmem:[%s2346 + $0xc] sm:$0xf]
      %v2351 = vld [vmem:[%s2346 + $0x10] sm:$0xf]
      %v2352 = vld [vmem:[%s2346 + $0x14] sm:$0xf]
      %v2353 = vld [vmem:[%s2346 + $0x18] sm:$0xf]
      %v2354 = vld [vmem:[%s2346 + $0x1c] sm:$0xf]
      %v2355 = vld [vmem:[%s2346 + $0x20] sm:$0xf]
      %v2356 = vld [vmem:[%s2346 + $0x24] sm:$0xf]
      %v2357 = vld [vmem:[%s2346 + $0x28] sm:$0xf]
      %v2358 = vld [vmem:[%s2346 + $0x2c] sm:$0xf]
      %v2359 = vld [vmem:[%s2346 + $0x30] sm:$0xf]
      %v2360 = vld [vmem:[%s2346 + $0x34] sm:$0xf]
      %v2361 = vld [vmem:[%s2346 + $0x38] sm:$0xf]
      %v2362 = vld [vmem:[%s2346 + $0x3c] sm:$0xf]
      %v2379 = vunpack.c.l.b16 %v2347
      %v2380 = vunpack.c.l.b16 %v2348
      %v2381 = vunpack.c.l.b16 %v2349
      %v2382 = vunpack.c.l.b16 %v2350
      %v2383 = vunpack.c.l.b16 %v2351
      %v2384 = vunpack.c.l.b16 %v2352
      %v2385 = vunpack.c.l.b16 %v2353
      %v2386 = vunpack.c.l.b16 %v2354
      %v2387 = vunpack.c.l.b16 %v2355
      %v2388 = vunpack.c.l.b16 %v2356
      %v2389 = vunpack.c.l.b16 %v2357
      %v2390 = vunpack.c.l.b16 %v2358
      %v2391 = vunpack.c.l.b16 %v2359
      %v2392 = vunpack.c.l.b16 %v2360
      %v2393 = vunpack.c.l.b16 %v2361
      %v2394 = vunpack.c.l.b16 %v2362
      %v2395 = vpack.c.b16 %v2380, %v2379
      %v2396 = vpack.c.b16 %v2382, %v2381
      %v2397 = vpack.c.b16 %v2384, %v2383
      %v2398 = vpack.c.b16 %v2386, %v2385
      %v2399 = vpack.c.b16 %v2388, %v2387
      %v2400 = vpack.c.b16 %v2390, %v2389
      %v2401 = vpack.c.b16 %v2392, %v2391
      %v2402 = vpack.c.b16 %v2394, %v2393
      %2411 = vmatprep.subr.bf16.mxu0 0
      %2412 = vmatpush1.bf16.msra.mxu0 %v2402
      %2413 = vmatprep.subr.bf16.mxu0 0
      %2414 = vmatpush1.bf16.msra.mxu0 %v2401
      %2415 = vmatprep.subr.bf16.mxu0 0
      %2416 = vmatpush1.bf16.msra.mxu0 %v2400
      %2417 = vmatprep.subr.bf16.mxu0 0
      %2418 = vmatpush1.bf16.msra.mxu0 %v2399
      %2419 = vmatprep.subr.bf16.mxu0 0
      %2420 = vmatpush1.bf16.msra.mxu0 %v2398
      %2421 = vmatprep.subr.bf16.mxu0 0
      %2422 = vmatpush1.bf16.msra.mxu0 %v2397
      %2423 = vmatprep.subr.bf16.mxu0 0
      %2424 = vmatpush1.bf16.msra.mxu0 %v2396
      %2425 = vmatprep.subr.bf16.mxu0 0
      %2426 = vmatpush1.bf16.msra.mxu0 %v2395
      %2427 = vmatprep.subr.bf16.mxu0 0
      %2428 = vmatpush2.bf16.msra.mxu0 0
      %2429 = vmatprep.subr.bf16.mxu0 0
      %2430 = vmatpush2.bf16.msra.mxu0 0
      %2431 = vmatprep.subr.bf16.mxu0 0
      %2432 = vmatpush2.bf16.msra.mxu0 0
      %2433 = vmatprep.subr.bf16.mxu0 0
      %2434 = vmatpush2.bf16.msra.mxu0 0
      %2435 = vmatprep.subr.bf16.mxu0 0
      %2436 = vmatpush2.bf16.msra.mxu0 0
      %2437 = vmatprep.subr.bf16.mxu0 0
      %2438 = vmatpush2.bf16.msra.mxu0 0
      %2439 = vmatprep.subr.bf16.mxu0 0
      %2440 = vmatpush2.bf16.msra.mxu0 0
      %2441 = vmatprep.subr.bf16.mxu0 0
      %2442 = vmatpush2.bf16.msra.mxu0 0
      %2443 = vmatprep.mubr.bf16.mxu0 0
      %2444 = vmatmul.mubr.bf16.gmra.mxu0 %v2330
      %v2445 = vpop.f32.mrf.mxu0
      %v2446 = vadd.f32 0.0, %v2445
      %v2447 = vpop.f32.mrf.mxu0
      %v2448 = vpop.f32.mrf.mxu0
      %v2449 = vadd.f32 0.0, %v2448
      %v2450 = vpop.f32.mrf.mxu0
      %2451 = vmatprep.mubr.bf16.mxu0 0
      %2452 = vmatmul.mubr.bf16.gmra.mxu0 %v2331
      %v2453 = vpop.f32.mrf.mxu0
      %v2454 = vadd.f32 0.0, %v2453
      %v2455 = vpop.f32.mrf.mxu0
      %v2456 = vpop.f32.mrf.mxu0
      %v2457 = vadd.f32 0.0, %v2456
      %v2458 = vpop.f32.mrf.mxu0
      %2459 = vmatprep.mubr.bf16.mxu0 0
      %2460 = vmatmul.mubr.bf16.gmra.mxu0 %v2332
      %v2461 = vpop.f32.mrf.mxu0
      %v2462 = vadd.f32 0.0, %v2461
      %v2463 = vpop.f32.mrf.mxu0
      %v2464 = vpop.f32.mrf.mxu0
      %v2465 = vadd.f32 0.0, %v2464
      %v2466 = vpop.f32.mrf.mxu0
      %2467 = vmatprep.mubr.bf16.mxu0 0
      %2468 = vmatmul.mubr.bf16.gmra.mxu0 %v2333
      %v2469 = vpop.f32.mrf.mxu0
      %v2470 = vadd.f32 0.0, %v2469
      %v2471 = vpop.f32.mrf.mxu0
      %v2472 = vpop.f32.mrf.mxu0
      %v2473 = vadd.f32 0.0, %v2472
      %v2474 = vpop.f32.mrf.mxu0
      %2475 = vmatprep.mubr.bf16.mxu0 0
      %2476 = vmatmul.mubr.bf16.gmra.mxu0 %v2334
      %v2477 = vpop.f32.mrf.mxu0
      %v2478 = vadd.f32 0.0, %v2477
      %v2479 = vpop.f32.mrf.mxu0
      %v2480 = vpop.f32.mrf.mxu0
      %v2481 = vadd.f32 0.0, %v2480
      %v2482 = vpop.f32.mrf.mxu0
      %2483 = vmatprep.mubr.bf16.mxu0 0
      %2484 = vmatmul.mubr.bf16.gmra.mxu0 %v2335
      %v2485 = vpop.f32.mrf.mxu0
      %v2486 = vadd.f32 0.0, %v2485
      %v2487 = vpop.f32.mrf.mxu0
      %v2488 = vpop.f32.mrf.mxu0
      %v2489 = vadd.f32 0.0, %v2488
      %v2490 = vpop.f32.mrf.mxu0
      %2491 = vmatprep.mubr.bf16.mxu0 0
      %2492 = vmatmul.mubr.bf16.gmra.mxu0 %v2336
      %v2493 = vpop.f32.mrf.mxu0
      %v2494 = vadd.f32 0.0, %v2493
      %v2495 = vpop.f32.mrf.mxu0
      %v2496 = vpop.f32.mrf.mxu0
      %v2497 = vadd.f32 0.0, %v2496
      %v2498 = vpop.f32.mrf.mxu0
      %2499 = vmatprep.mubr.bf16.mxu0 0
      %2500 = vmatmul.mubr.bf16.gmra.mxu0 %v2337
      %v2501 = vpop.f32.mrf.mxu0
      %v2502 = vadd.f32 0.0, %v2501
      %v2503 = vpop.f32.mrf.mxu0
      %v2504 = vpop.f32.mrf.mxu0
      %v2505 = vadd.f32 0.0, %v2504
      %v2506 = vpop.f32.mrf.mxu0
      %2507 = vmatprep.mubr.bf16.mxu0 0
      %2508 = vmatmul.mubr.bf16.gmra.mxu0 %v2338
      %v2509 = vpop.f32.mrf.mxu0
      %v2510 = vadd.f32 0.0, %v2509
      %v2511 = vpop.f32.mrf.mxu0
      %v2512 = vpop.f32.mrf.mxu0
      %v2513 = vadd.f32 0.0, %v2512
      %v2514 = vpop.f32.mrf.mxu0
      %2515 = vmatprep.mubr.bf16.mxu0 0
      %2516 = vmatmul.mubr.bf16.gmra.mxu0 %v2339
      %v2517 = vpop.f32.mrf.mxu0
      %v2518 = vadd.f32 0.0, %v2517
      %v2519 = vpop.f32.mrf.mxu0
      %v2520 = vpop.f32.mrf.mxu0
      %v2521 = vadd.f32 0.0, %v2520
      %v2522 = vpop.f32.mrf.mxu0
      %2523 = vmatprep.mubr.bf16.mxu0 0
      %2524 = vmatmul.mubr.bf16.gmra.mxu0 %v2340
      %v2525 = vpop.f32.mrf.mxu0
      %v2526 = vadd.f32 0.0, %v2525
      %v2527 = vpop.f32.mrf.mxu0
      %v2528 = vpop.f32.mrf.mxu0
      %v2529 = vadd.f32 0.0, %v2528
      %v2530 = vpop.f32.mrf.mxu0
      %2531 = vmatprep.mubr.bf16.mxu0 0
      %2532 = vmatmul.mubr.bf16.gmra.mxu0 %v2341
      %v2533 = vpop.f32.mrf.mxu0
      %v2534 = vadd.f32 0.0, %v2533
      %v2535 = vpop.f32.mrf.mxu0
      %v2536 = vpop.f32.mrf.mxu0
      %v2537 = vadd.f32 0.0, %v2536
      %v2538 = vpop.f32.mrf.mxu0
      %2539 = vmatprep.mubr.bf16.mxu0 0
      %2540 = vmatmul.mubr.bf16.gmra.mxu0 %v2342
      %v2541 = vpop.f32.mrf.mxu0
      %v2542 = vadd.f32 0.0, %v2541
      %v2543 = vpop.f32.mrf.mxu0
      %v2544 = vpop.f32.mrf.mxu0
      %v2545 = vadd.f32 0.0, %v2544
      %v2546 = vpop.f32.mrf.mxu0
      %2547 = vmatprep.mubr.bf16.mxu0 0
      %2548 = vmatmul.mubr.bf16.gmra.mxu0 %v2343
      %v2549 = vpop.f32.mrf.mxu0
      %v2550 = vadd.f32 0.0, %v2549
      %v2551 = vpop.f32.mrf.mxu0
      %v2552 = vpop.f32.mrf.mxu0
      %v2553 = vadd.f32 0.0, %v2552
      %v2554 = vpop.f32.mrf.mxu0
      %2555 = vmatprep.mubr.bf16.mxu0 0
      %2556 = vmatmul.mubr.bf16.gmra.mxu0 %v2344
      %v2557 = vpop.f32.mrf.mxu0
      %v2558 = vadd.f32 0.0, %v2557
      %v2559 = vpop.f32.mrf.mxu0
      %v2560 = vpop.f32.mrf.mxu0
      %v2561 = vadd.f32 0.0, %v2560
      %v2562 = vpop.f32.mrf.mxu0
      %2563 = vmatprep.mubr.bf16.mxu0 0
      %2564 = vmatmul.mubr.bf16.gmra.mxu0 %v2345
      %v2565 = vpop.f32.mrf.mxu0
      %v2566 = vadd.f32 0.0, %v2565
      %v2567 = vpop.f32.mrf.mxu0
      %v2568 = vpop.f32.mrf.mxu0
      %v2569 = vadd.f32 0.0, %v2568
      %v2570 = vpop.f32.mrf.mxu0
      %2571 = vdwg.mxu0
      %v2572 = vadd.f32 %v2265, %v2446
      %v2573 = vadd.f32 %v2266, %v2449
      %v2574 = vadd.f32 %v2267, %v2454
      %v2575 = vadd.f32 %v2268, %v2457
      %v2576 = vadd.f32 %v2269, %v2462
      %v2577 = vadd.f32 %v2270, %v2465
      %v2578 = vadd.f32 %v2271, %v2470
      %v2579 = vadd.f32 %v2272, %v2473
      %v2580 = vadd.f32 %v2273, %v2478
      %v2581 = vadd.f32 %v2274, %v2481
      %v2582 = vadd.f32 %v2275, %v2486
      %v2583 = vadd.f32 %v2276, %v2489
      %v2584 = vadd.f32 %v2277, %v2494
      %v2585 = vadd.f32 %v2278, %v2497
      %v2586 = vadd.f32 %v2279, %v2502
      %v2587 = vadd.f32 %v2280, %v2505
      %v2588 = vadd.f32 %v2281, %v2510
      %v2589 = vadd.f32 %v2282, %v2513
      %v2590 = vadd.f32 %v2283, %v2518
      %v2591 = vadd.f32 %v2284, %v2521
      %v2592 = vadd.f32 %v2285, %v2526
      %v2593 = vadd.f32 %v2286, %v2529
      %v2594 = vadd.f32 %v2287, %v2534
      %v2595 = vadd.f32 %v2288, %v2537
      %v2596 = vadd.f32 %v2289, %v2542
      %v2597 = vadd.f32 %v2290, %v2545
      %v2598 = vadd.f32 %v2291, %v2550
      %v2599 = vadd.f32 %v2292, %v2553
      %v2600 = vadd.f32 %v2293, %v2558
      %v2601 = vadd.f32 %v2294, %v2561
      %v2602 = vadd.f32 %v2295, %v2566
      %v2603 = vadd.f32 %v2296, %v2569
      %v2604 = vld [vmem:[%s2297 + $0x1] sm:$0xff]
      %v2605 = vld [vmem:[%s2297 + $0x9] sm:$0xff]
      %v2606 = vld [vmem:[%s2297 + $0x19] sm:$0xff]
      %v2607 = vld [vmem:[%s2297 + $0x21] sm:$0xff]
      %v2608 = vld [vmem:[%s2297 + $0x31] sm:$0xff]
      %v2609 = vld [vmem:[%s2297 + $0x39] sm:$0xff]
      %v2610 = vld [vmem:[%s2297 + $0x49] sm:$0xff]
      %v2611 = vld [vmem:[%s2297 + $0x51] sm:$0xff]
      %v2612 = vld [vmem:[%s2297 + $0x61] sm:$0xff]
      %v2613 = vld [vmem:[%s2297 + $0x69] sm:$0xff]
      %v2614 = vld [vmem:[%s2297 + $0x79] sm:$0xff]
      %v2615 = vld [vmem:[%s2297 + $0x81] sm:$0xff]
      %v2616 = vld [vmem:[%s2297 + $0x91] sm:$0xff]
      %v2617 = vld [vmem:[%s2297 + $0x99] sm:$0xff]
      %v2618 = vld [vmem:[%s2297 + $0xa9] sm:$0xff]
      %v2619 = vld [vmem:[%s2297 + $0xb1] sm:$0xff]
      %v2620 = vld [vmem:[%s2297 + $0xc1] sm:$0xff]
      %v2621 = vld [vmem:[%s2297 + $0xc9] sm:$0xff]
      %v2622 = vld [vmem:[%s2297 + $0xd9] sm:$0xff]
      %v2623 = vld [vmem:[%s2297 + $0xe1] sm:$0xff]
      %v2624 = vld [vmem:[%s2297 + $0xf1] sm:$0xff]
      %v2625 = vld [vmem:[%s2297 + $0xf9] sm:$0xff]
      %v2626 = vld [vmem:[%s2297 + $0x109] sm:$0xff]
      %v2627 = vld [vmem:[%s2297 + $0x111] sm:$0xff]
      %v2628 = vld [vmem:[%s2297 + $0x121] sm:$0xff]
      %v2629 = vld [vmem:[%s2297 + $0x129] sm:$0xff]
      %v2630 = vld [vmem:[%s2297 + $0x139] sm:$0xff]
      %v2631 = vld [vmem:[%s2297 + $0x141] sm:$0xff]
      %v2632 = vld [vmem:[%s2297 + $0x151] sm:$0xff]
      %v2633 = vld [vmem:[%s2297 + $0x159] sm:$0xff]
      %v2634 = vld [vmem:[%s2297 + $0x169] sm:$0xff]
      %v2635 = vld [vmem:[%s2297 + $0x171] sm:$0xff]
      %v2636 = vpack.c.bf16 %v2605, %v2604
      %v2637 = vpack.c.bf16 %v2607, %v2606
      %v2638 = vpack.c.bf16 %v2609, %v2608
      %v2639 = vpack.c.bf16 %v2611, %v2610
      %v2640 = vpack.c.bf16 %v2613, %v2612
      %v2641 = vpack.c.bf16 %v2615, %v2614
      %v2642 = vpack.c.bf16 %v2617, %v2616
      %v2643 = vpack.c.bf16 %v2619, %v2618
      %v2644 = vpack.c.bf16 %v2621, %v2620
      %v2645 = vpack.c.bf16 %v2623, %v2622
      %v2646 = vpack.c.bf16 %v2625, %v2624
      %v2647 = vpack.c.bf16 %v2627, %v2626
      %v2648 = vpack.c.bf16 %v2629, %v2628
      %v2649 = vpack.c.bf16 %v2631, %v2630
      %v2650 = vpack.c.bf16 %v2633, %v2632
      %v2651 = vpack.c.bf16 %v2635, %v2634
      %s2652 = scalar_lea.vmem %s3, 448
      %v2653 = vld [vmem:[%s2652] sm:$0xf]
      %v2654 = vld [vmem:[%s2652 + $0x4] sm:$0xf]
      %v2655 = vld [vmem:[%s2652 + $0x8] sm:$0xf]
      %v2656 = vld [vmem:[%s2652 + $0xc] sm:$0xf]
      %v2657 = vld [vmem:[%s2652 + $0x10] sm:$0xf]
      %v2658 = vld [vmem:[%s2652 + $0x14] sm:$0xf]
      %v2659 = vld [vmem:[%s2652 + $0x18] sm:$0xf]
      %v2660 = vld [vmem:[%s2652 + $0x1c] sm:$0xf]
      %v2661 = vld [vmem:[%s2652 + $0x20] sm:$0xf]
      %v2662 = vld [vmem:[%s2652 + $0x24] sm:$0xf]
      %v2663 = vld [vmem:[%s2652 + $0x28] sm:$0xf]
      %v2664 = vld [vmem:[%s2652 + $0x2c] sm:$0xf]
      %v2665 = vld [vmem:[%s2652 + $0x30] sm:$0xf]
      %v2666 = vld [vmem:[%s2652 + $0x34] sm:$0xf]
      %v2667 = vld [vmem:[%s2652 + $0x38] sm:$0xf]
      %v2668 = vld [vmem:[%s2652 + $0x3c] sm:$0xf]
      %v2685 = vunpack.c.l.b16 %v2653
      %v2686 = vunpack.c.l.b16 %v2654
      %v2687 = vunpack.c.l.b16 %v2655
      %v2688 = vunpack.c.l.b16 %v2656
      %v2689 = vunpack.c.l.b16 %v2657
      %v2690 = vunpack.c.l.b16 %v2658
      %v2691 = vunpack.c.l.b16 %v2659
      %v2692 = vunpack.c.l.b16 %v2660
      %v2693 = vunpack.c.l.b16 %v2661
      %v2694 = vunpack.c.l.b16 %v2662
      %v2695 = vunpack.c.l.b16 %v2663
      %v2696 = vunpack.c.l.b16 %v2664
      %v2697 = vunpack.c.l.b16 %v2665
      %v2698 = vunpack.c.l.b16 %v2666
      %v2699 = vunpack.c.l.b16 %v2667
      %v2700 = vunpack.c.l.b16 %v2668
      %v2701 = vpack.c.b16 %v2686, %v2685
      %v2702 = vpack.c.b16 %v2688, %v2687
      %v2703 = vpack.c.b16 %v2690, %v2689
      %v2704 = vpack.c.b16 %v2692, %v2691
      %v2705 = vpack.c.b16 %v2694, %v2693
      %v2706 = vpack.c.b16 %v2696, %v2695
      %v2707 = vpack.c.b16 %v2698, %v2697
      %v2708 = vpack.c.b16 %v2700, %v2699
      %2717 = vmatprep.subr.bf16.mxu0 0
      %2718 = vmatpush1.bf16.msra.mxu0 %v2708
      %2719 = vmatprep.subr.bf16.mxu0 0
      %2720 = vmatpush1.bf16.msra.mxu0 %v2707
      %2721 = vmatprep.subr.bf16.mxu0 0
      %2722 = vmatpush1.bf16.msra.mxu0 %v2706
      %2723 = vmatprep.subr.bf16.mxu0 0
      %2724 = vmatpush1.bf16.msra.mxu0 %v2705
      %2725 = vmatprep.subr.bf16.mxu0 0
      %2726 = vmatpush1.bf16.msra.mxu0 %v2704
      %2727 = vmatprep.subr.bf16.mxu0 0
      %2728 = vmatpush1.bf16.msra.mxu0 %v2703
      %2729 = vmatprep.subr.bf16.mxu0 0
      %2730 = vmatpush1.bf16.msra.mxu0 %v2702
      %2731 = vmatprep.subr.bf16.mxu0 0
      %2732 = vmatpush1.bf16.msra.mxu0 %v2701
      %2733 = vmatprep.subr.bf16.mxu0 0
      %2734 = vmatpush2.bf16.msra.mxu0 0
      %2735 = vmatprep.subr.bf16.mxu0 0
      %2736 = vmatpush2.bf16.msra.mxu0 0
      %2737 = vmatprep.subr.bf16.mxu0 0
      %2738 = vmatpush2.bf16.msra.mxu0 0
      %2739 = vmatprep.subr.bf16.mxu0 0
      %2740 = vmatpush2.bf16.msra.mxu0 0
      %2741 = vmatprep.subr.bf16.mxu0 0
      %2742 = vmatpush2.bf16.msra.mxu0 0
      %2743 = vmatprep.subr.bf16.mxu0 0
      %2744 = vmatpush2.bf16.msra.mxu0 0
      %2745 = vmatprep.subr.bf16.mxu0 0
      %2746 = vmatpush2.bf16.msra.mxu0 0
      %2747 = vmatprep.subr.bf16.mxu0 0
      %2748 = vmatpush2.bf16.msra.mxu0 0
      %2749 = vmatprep.mubr.bf16.mxu0 0
      %2750 = vmatmul.mubr.bf16.gmra.mxu0 %v2636
      %v2751 = vpop.f32.mrf.mxu0
      %v2752 = vadd.f32 0.0, %v2751
      %v2753 = vpop.f32.mrf.mxu0
      %v2754 = vpop.f32.mrf.mxu0
      %v2755 = vadd.f32 0.0, %v2754
      %v2756 = vpop.f32.mrf.mxu0
      %2757 = vmatprep.mubr.bf16.mxu0 0
      %2758 = vmatmul.mubr.bf16.gmra.mxu0 %v2637
      %v2759 = vpop.f32.mrf.mxu0
      %v2760 = vadd.f32 0.0, %v2759
      %v2761 = vpop.f32.mrf.mxu0
      %v2762 = vpop.f32.mrf.mxu0
      %v2763 = vadd.f32 0.0, %v2762
      %v2764 = vpop.f32.mrf.mxu0
      %2765 = vmatprep.mubr.bf16.mxu0 0
      %2766 = vmatmul.mubr.bf16.gmra.mxu0 %v2638
      %v2767 = vpop.f32.mrf.mxu0
      %v2768 = vadd.f32 0.0, %v2767
      %v2769 = vpop.f32.mrf.mxu0
      %v2770 = vpop.f32.mrf.mxu0
      %v2771 = vadd.f32 0.0, %v2770
      %v2772 = vpop.f32.mrf.mxu0
      %2773 = vmatprep.mubr.bf16.mxu0 0
      %2774 = vmatmul.mubr.bf16.gmra.mxu0 %v2639
      %v2775 = vpop.f32.mrf.mxu0
      %v2776 = vadd.f32 0.0, %v2775
      %v2777 = vpop.f32.mrf.mxu0
      %v2778 = vpop.f32.mrf.mxu0
      %v2779 = vadd.f32 0.0, %v2778
      %v2780 = vpop.f32.mrf.mxu0
      %2781 = vmatprep.mubr.bf16.mxu0 0
      %2782 = vmatmul.mubr.bf16.gmra.mxu0 %v2640
      %v2783 = vpop.f32.mrf.mxu0
      %v2784 = vadd.f32 0.0, %v2783
      %v2785 = vpop.f32.mrf.mxu0
      %v2786 = vpop.f32.mrf.mxu0
      %v2787 = vadd.f32 0.0, %v2786
      %v2788 = vpop.f32.mrf.mxu0
      %2789 = vmatprep.mubr.bf16.mxu0 0
      %2790 = vmatmul.mubr.bf16.gmra.mxu0 %v2641
      %v2791 = vpop.f32.mrf.mxu0
      %v2792 = vadd.f32 0.0, %v2791
      %v2793 = vpop.f32.mrf.mxu0
      %v2794 = vpop.f32.mrf.mxu0
      %v2795 = vadd.f32 0.0, %v2794
      %v2796 = vpop.f32.mrf.mxu0
      %2797 = vmatprep.mubr.bf16.mxu0 0
      %2798 = vmatmul.mubr.bf16.gmra.mxu0 %v2642
      %v2799 = vpop.f32.mrf.mxu0
      %v2800 = vadd.f32 0.0, %v2799
      %v2801 = vpop.f32.mrf.mxu0
      %v2802 = vpop.f32.mrf.mxu0
      %v2803 = vadd.f32 0.0, %v2802
      %v2804 = vpop.f32.mrf.mxu0
      %2805 = vmatprep.mubr.bf16.mxu0 0
      %2806 = vmatmul.mubr.bf16.gmra.mxu0 %v2643
      %v2807 = vpop.f32.mrf.mxu0
      %v2808 = vadd.f32 0.0, %v2807
      %v2809 = vpop.f32.mrf.mxu0
      %v2810 = vpop.f32.mrf.mxu0
      %v2811 = vadd.f32 0.0, %v2810
      %v2812 = vpop.f32.mrf.mxu0
      %2813 = vmatprep.mubr.bf16.mxu0 0
      %2814 = vmatmul.mubr.bf16.gmra.mxu0 %v2644
      %v2815 = vpop.f32.mrf.mxu0
      %v2816 = vadd.f32 0.0, %v2815
      %v2817 = vpop.f32.mrf.mxu0
      %v2818 = vpop.f32.mrf.mxu0
      %v2819 = vadd.f32 0.0, %v2818
      %v2820 = vpop.f32.mrf.mxu0
      %2821 = vmatprep.mubr.bf16.mxu0 0
      %2822 = vmatmul.mubr.bf16.gmra.mxu0 %v2645
      %v2823 = vpop.f32.mrf.mxu0
      %v2824 = vadd.f32 0.0, %v2823
      %v2825 = vpop.f32.mrf.mxu0
      %v2826 = vpop.f32.mrf.mxu0
      %v2827 = vadd.f32 0.0, %v2826
      %v2828 = vpop.f32.mrf.mxu0
      %2829 = vmatprep.mubr.bf16.mxu0 0
      %2830 = vmatmul.mubr.bf16.gmra.mxu0 %v2646
      %v2831 = vpop.f32.mrf.mxu0
      %v2832 = vadd.f32 0.0, %v2831
      %v2833 = vpop.f32.mrf.mxu0
      %v2834 = vpop.f32.mrf.mxu0
      %v2835 = vadd.f32 0.0, %v2834
      %v2836 = vpop.f32.mrf.mxu0
      %2837 = vmatprep.mubr.bf16.mxu0 0
      %2838 = vmatmul.mubr.bf16.gmra.mxu0 %v2647
      %v2839 = vpop.f32.mrf.mxu0
      %v2840 = vadd.f32 0.0, %v2839
      %v2841 = vpop.f32.mrf.mxu0
      %v2842 = vpop.f32.mrf.mxu0
      %v2843 = vadd.f32 0.0, %v2842
      %v2844 = vpop.f32.mrf.mxu0
      %2845 = vmatprep.mubr.bf16.mxu0 0
      %2846 = vmatmul.mubr.bf16.gmra.mxu0 %v2648
      %v2847 = vpop.f32.mrf.mxu0
      %v2848 = vadd.f32 0.0, %v2847
      %v2849 = vpop.f32.mrf.mxu0
      %v2850 = vpop.f32.mrf.mxu0
      %v2851 = vadd.f32 0.0, %v2850
      %v2852 = vpop.f32.mrf.mxu0
      %2853 = vmatprep.mubr.bf16.mxu0 0
      %2854 = vmatmul.mubr.bf16.gmra.mxu0 %v2649
      %v2855 = vpop.f32.mrf.mxu0
      %v2856 = vadd.f32 0.0, %v2855
      %v2857 = vpop.f32.mrf.mxu0
      %v2858 = vpop.f32.mrf.mxu0
      %v2859 = vadd.f32 0.0, %v2858
      %v2860 = vpop.f32.mrf.mxu0
      %2861 = vmatprep.mubr.bf16.mxu0 0
      %2862 = vmatmul.mubr.bf16.gmra.mxu0 %v2650
      %v2863 = vpop.f32.mrf.mxu0
      %v2864 = vadd.f32 0.0, %v2863
      %v2865 = vpop.f32.mrf.mxu0
      %v2866 = vpop.f32.mrf.mxu0
      %v2867 = vadd.f32 0.0, %v2866
      %v2868 = vpop.f32.mrf.mxu0
      %2869 = vmatprep.mubr.bf16.mxu0 0
      %2870 = vmatmul.mubr.bf16.gmra.mxu0 %v2651
      %v2871 = vpop.f32.mrf.mxu0
      %v2872 = vadd.f32 0.0, %v2871
      %v2873 = vpop.f32.mrf.mxu0
      %v2874 = vpop.f32.mrf.mxu0
      %v2875 = vadd.f32 0.0, %v2874
      %v2876 = vpop.f32.mrf.mxu0
      %2877 = vdwg.mxu0
      %v2878 = vadd.f32 %v2572, %v2752
      %v2879 = vadd.f32 %v2573, %v2755
      %v2880 = vadd.f32 %v2574, %v2760
      %v2881 = vadd.f32 %v2575, %v2763
      %v2882 = vadd.f32 %v2576, %v2768
      %v2883 = vadd.f32 %v2577, %v2771
      %v2884 = vadd.f32 %v2578, %v2776
      %v2885 = vadd.f32 %v2579, %v2779
      %v2886 = vadd.f32 %v2580, %v2784
      %v2887 = vadd.f32 %v2581, %v2787
      %v2888 = vadd.f32 %v2582, %v2792
      %v2889 = vadd.f32 %v2583, %v2795
      %v2890 = vadd.f32 %v2584, %v2800
      %v2891 = vadd.f32 %v2585, %v2803
      %v2892 = vadd.f32 %v2586, %v2808
      %v2893 = vadd.f32 %v2587, %v2811
      %v2894 = vadd.f32 %v2588, %v2816
      %v2895 = vadd.f32 %v2589, %v2819
      %v2896 = vadd.f32 %v2590, %v2824
      %v2897 = vadd.f32 %v2591, %v2827
      %v2898 = vadd.f32 %v2592, %v2832
      %v2899 = vadd.f32 %v2593, %v2835
      %v2900 = vadd.f32 %v2594, %v2840
      %v2901 = vadd.f32 %v2595, %v2843
      %v2902 = vadd.f32 %v2596, %v2848
      %v2903 = vadd.f32 %v2597, %v2851
      %v2904 = vadd.f32 %v2598, %v2856
      %v2905 = vadd.f32 %v2599, %v2859
      %v2906 = vadd.f32 %v2600, %v2864
      %v2907 = vadd.f32 %v2601, %v2867
      %v2908 = vadd.f32 %v2602, %v2872
      %v2909 = vadd.f32 %v2603, %v2875
      %v2910 = vld [vmem:[%s2297 + $0x2] sm:$0xff]
      %v2911 = vld [vmem:[%s2297 + $0xa] sm:$0xff]
      %v2912 = vld [vmem:[%s2297 + $0x1a] sm:$0xff]
      %v2913 = vld [vmem:[%s2297 + $0x22] sm:$0xff]
      %v2914 = vld [vmem:[%s2297 + $0x32] sm:$0xff]
      %v2915 = vld [vmem:[%s2297 + $0x3a] sm:$0xff]
      %v2916 = vld [vmem:[%s2297 + $0x4a] sm:$0xff]
      %v2917 = vld [vmem:[%s2297 + $0x52] sm:$0xff]
      %v2918 = vld [vmem:[%s2297 + $0x62] sm:$0xff]
      %v2919 = vld [vmem:[%s2297 + $0x6a] sm:$0xff]
      %v2920 = vld [vmem:[%s2297 + $0x7a] sm:$0xff]
      %v2921 = vld [vmem:[%s2297 + $0x82] sm:$0xff]
      %v2922 = vld [vmem:[%s2297 + $0x92] sm:$0xff]
      %v2923 = vld [vmem:[%s2297 + $0x9a] sm:$0xff]
      %v2924 = vld [vmem:[%s2297 + $0xaa] sm:$0xff]
      %v2925 = vld [vmem:[%s2297 + $0xb2] sm:$0xff]
      %v2926 = vld [vmem:[%s2297 + $0xc2] sm:$0xff]
      %v2927 = vld [vmem:[%s2297 + $0xca] sm:$0xff]
      %v2928 = vld [vmem:[%s2297 + $0xda] sm:$0xff]
      %v2929 = vld [vmem:[%s2297 + $0xe2] sm:$0xff]
      %v2930 = vld [vmem:[%s2297 + $0xf2] sm:$0xff]
      %v2931 = vld [vmem:[%s2297 + $0xfa] sm:$0xff]
      %v2932 = vld [vmem:[%s2297 + $0x10a] sm:$0xff]
      %v2933 = vld [vmem:[%s2297 + $0x112] sm:$0xff]
      %v2934 = vld [vmem:[%s2297 + $0x122] sm:$0xff]
      %v2935 = vld [vmem:[%s2297 + $0x12a] sm:$0xff]
      %v2936 = vld [vmem:[%s2297 + $0x13a] sm:$0xff]
      %v2937 = vld [vmem:[%s2297 + $0x142] sm:$0xff]
      %v2938 = vld [vmem:[%s2297 + $0x152] sm:$0xff]
      %v2939 = vld [vmem:[%s2297 + $0x15a] sm:$0xff]
      %v2940 = vld [vmem:[%s2297 + $0x16a] sm:$0xff]
      %v2941 = vld [vmem:[%s2297 + $0x172] sm:$0xff]
      %v2942 = vpack.c.bf16 %v2911, %v2910
      %v2943 = vpack.c.bf16 %v2913, %v2912
      %v2944 = vpack.c.bf16 %v2915, %v2914
      %v2945 = vpack.c.bf16 %v2917, %v2916
      %v2946 = vpack.c.bf16 %v2919, %v2918
      %v2947 = vpack.c.bf16 %v2921, %v2920
      %v2948 = vpack.c.bf16 %v2923, %v2922
      %v2949 = vpack.c.bf16 %v2925, %v2924
      %v2950 = vpack.c.bf16 %v2927, %v2926
      %v2951 = vpack.c.bf16 %v2929, %v2928
      %v2952 = vpack.c.bf16 %v2931, %v2930
      %v2953 = vpack.c.bf16 %v2933, %v2932
      %v2954 = vpack.c.bf16 %v2935, %v2934
      %v2955 = vpack.c.bf16 %v2937, %v2936
      %v2956 = vpack.c.bf16 %v2939, %v2938
      %v2957 = vpack.c.bf16 %v2941, %v2940
      %s2958 = scalar_lea.vmem %s3, 512
      %v2959 = vld [vmem:[%s2958] sm:$0xf]
      %v2960 = vld [vmem:[%s2958 + $0x4] sm:$0xf]
      %v2961 = vld [vmem:[%s2958 + $0x8] sm:$0xf]
      %v2962 = vld [vmem:[%s2958 + $0xc] sm:$0xf]
      %v2963 = vld [vmem:[%s2958 + $0x10] sm:$0xf]
      %v2964 = vld [vmem:[%s2958 + $0x14] sm:$0xf]
      %v2965 = vld [vmem:[%s2958 + $0x18] sm:$0xf]
      %v2966 = vld [vmem:[%s2958 + $0x1c] sm:$0xf]
      %v2967 = vld [vmem:[%s2958 + $0x20] sm:$0xf]
      %v2968 = vld [vmem:[%s2958 + $0x24] sm:$0xf]
      %v2969 = vld [vmem:[%s2958 + $0x28] sm:$0xf]
      %v2970 = vld [vmem:[%s2958 + $0x2c] sm:$0xf]
      %v2971 = vld [vmem:[%s2958 + $0x30] sm:$0xf]
      %v2972 = vld [vmem:[%s2958 + $0x34] sm:$0xf]
      %v2973 = vld [vmem:[%s2958 + $0x38] sm:$0xf]
      %v2974 = vld [vmem:[%s2958 + $0x3c] sm:$0xf]
      %v2991 = vunpack.c.l.b16 %v2959
      %v2992 = vunpack.c.l.b16 %v2960
      %v2993 = vunpack.c.l.b16 %v2961
      %v2994 = vunpack.c.l.b16 %v2962
      %v2995 = vunpack.c.l.b16 %v2963
      %v2996 = vunpack.c.l.b16 %v2964
      %v2997 = vunpack.c.l.b16 %v2965
      %v2998 = vunpack.c.l.b16 %v2966
      %v2999 = vunpack.c.l.b16 %v2967
      %v3000 = vunpack.c.l.b16 %v2968
      %v3001 = vunpack.c.l.b16 %v2969
      %v3002 = vunpack.c.l.b16 %v2970
      %v3003 = vunpack.c.l.b16 %v2971
      %v3004 = vunpack.c.l.b16 %v2972
      %v3005 = vunpack.c.l.b16 %v2973
      %v3006 = vunpack.c.l.b16 %v2974
      %v3007 = vpack.c.b16 %v2992, %v2991
      %v3008 = vpack.c.b16 %v2994, %v2993
      %v3009 = vpack.c.b16 %v2996, %v2995
      %v3010 = vpack.c.b16 %v2998, %v2997
      %v3011 = vpack.c.b16 %v3000, %v2999
      %v3012 = vpack.c.b16 %v3002, %v3001
      %v3013 = vpack.c.b16 %v3004, %v3003
      %v3014 = vpack.c.b16 %v3006, %v3005
      %3023 = vmatprep.subr.bf16.mxu0 0
      %3024 = vmatpush1.bf16.msra.mxu0 %v3014
      %3025 = vmatprep.subr.bf16.mxu0 0
      %3026 = vmatpush1.bf16.msra.mxu0 %v3013
      %3027 = vmatprep.subr.bf16.mxu0 0
      %3028 = vmatpush1.bf16.msra.mxu0 %v3012
      %3029 = vmatprep.subr.bf16.mxu0 0
      %3030 = vmatpush1.bf16.msra.mxu0 %v3011
      %3031 = vmatprep.subr.bf16.mxu0 0
      %3032 = vmatpush1.bf16.msra.mxu0 %v3010
      %3033 = vmatprep.subr.bf16.mxu0 0
      %3034 = vmatpush1.bf16.msra.mxu0 %v3009
      %3035 = vmatprep.subr.bf16.mxu0 0
      %3036 = vmatpush1.bf16.msra.mxu0 %v3008
      %3037 = vmatprep.subr.bf16.mxu0 0
      %3038 = vmatpush1.bf16.msra.mxu0 %v3007
      %3039 = vmatprep.subr.bf16.mxu0 0
      %3040 = vmatpush2.bf16.msra.mxu0 0
      %3041 = vmatprep.subr.bf16.mxu0 0
      %3042 = vmatpush2.bf16.msra.mxu0 0
      %3043 = vmatprep.subr.bf16.mxu0 0
      %3044 = vmatpush2.bf16.msra.mxu0 0
      %3045 = vmatprep.subr.bf16.mxu0 0
      %3046 = vmatpush2.bf16.msra.mxu0 0
      %3047 = vmatprep.subr.bf16.mxu0 0
      %3048 = vmatpush2.bf16.msra.mxu0 0
      %3049 = vmatprep.subr.bf16.mxu0 0
      %3050 = vmatpush2.bf16.msra.mxu0 0
      %3051 = vmatprep.subr.bf16.mxu0 0
      %3052 = vmatpush2.bf16.msra.mxu0 0
      %3053 = vmatprep.subr.bf16.mxu0 0
      %3054 = vmatpush2.bf16.msra.mxu0 0
      %3055 = vmatprep.mubr.bf16.mxu0 0
      %3056 = vmatmul.mubr.bf16.gmra.mxu0 %v2942
      %v3057 = vpop.f32.mrf.mxu0
      %v3058 = vadd.f32 0.0, %v3057
      %v3059 = vpop.f32.mrf.mxu0
      %v3060 = vpop.f32.mrf.mxu0
      %v3061 = vadd.f32 0.0, %v3060
      %v3062 = vpop.f32.mrf.mxu0
      %3063 = vmatprep.mubr.bf16.mxu0 0
      %3064 = vmatmul.mubr.bf16.gmra.mxu0 %v2943
      %v3065 = vpop.f32.mrf.mxu0
      %v3066 = vadd.f32 0.0, %v3065
      %v3067 = vpop.f32.mrf.mxu0
      %v3068 = vpop.f32.mrf.mxu0
      %v3069 = vadd.f32 0.0, %v3068
      %v3070 = vpop.f32.mrf.mxu0
      %3071 = vmatprep.mubr.bf16.mxu0 0
      %3072 = vmatmul.mubr.bf16.gmra.mxu0 %v2944
      %v3073 = vpop.f32.mrf.mxu0
      %v3074 = vadd.f32 0.0, %v3073
      %v3075 = vpop.f32.mrf.mxu0
      %v3076 = vpop.f32.mrf.mxu0
      %v3077 = vadd.f32 0.0, %v3076
      %v3078 = vpop.f32.mrf.mxu0
      %3079 = vmatprep.mubr.bf16.mxu0 0
      %3080 = vmatmul.mubr.bf16.gmra.mxu0 %v2945
      %v3081 = vpop.f32.mrf.mxu0
      %v3082 = vadd.f32 0.0, %v3081
      %v3083 = vpop.f32.mrf.mxu0
      %v3084 = vpop.f32.mrf.mxu0
      %v3085 = vadd.f32 0.0, %v3084
      %v3086 = vpop.f32.mrf.mxu0
      %3087 = vmatprep.mubr.bf16.mxu0 0
      %3088 = vmatmul.mubr.bf16.gmra.mxu0 %v2946
      %v3089 = vpop.f32.mrf.mxu0
      %v3090 = vadd.f32 0.0, %v3089
      %v3091 = vpop.f32.mrf.mxu0
      %v3092 = vpop.f32.mrf.mxu0
      %v3093 = vadd.f32 0.0, %v3092
      %v3094 = vpop.f32.mrf.mxu0
      %3095 = vmatprep.mubr.bf16.mxu0 0
      %3096 = vmatmul.mubr.bf16.gmra.mxu0 %v2947
      %v3097 = vpop.f32.mrf.mxu0
      %v3098 = vadd.f32 0.0, %v3097
      %v3099 = vpop.f32.mrf.mxu0
      %v3100 = vpop.f32.mrf.mxu0
      %v3101 = vadd.f32 0.0, %v3100
      %v3102 = vpop.f32.mrf.mxu0
      %3103 = vmatprep.mubr.bf16.mxu0 0
      %3104 = vmatmul.mubr.bf16.gmra.mxu0 %v2948
      %v3105 = vpop.f32.mrf.mxu0
      %v3106 = vadd.f32 0.0, %v3105
      %v3107 = vpop.f32.mrf.mxu0
      %v3108 = vpop.f32.mrf.mxu0
      %v3109 = vadd.f32 0.0, %v3108
      %v3110 = vpop.f32.mrf.mxu0
      %3111 = vmatprep.mubr.bf16.mxu0 0
      %3112 = vmatmul.mubr.bf16.gmra.mxu0 %v2949
      %v3113 = vpop.f32.mrf.mxu0
      %v3114 = vadd.f32 0.0, %v3113
      %v3115 = vpop.f32.mrf.mxu0
      %v3116 = vpop.f32.mrf.mxu0
      %v3117 = vadd.f32 0.0, %v3116
      %v3118 = vpop.f32.mrf.mxu0
      %3119 = vmatprep.mubr.bf16.mxu0 0
      %3120 = vmatmul.mubr.bf16.gmra.mxu0 %v2950
      %v3121 = vpop.f32.mrf.mxu0
      %v3122 = vadd.f32 0.0, %v3121
      %v3123 = vpop.f32.mrf.mxu0
      %v3124 = vpop.f32.mrf.mxu0
      %v3125 = vadd.f32 0.0, %v3124
      %v3126 = vpop.f32.mrf.mxu0
      %3127 = vmatprep.mubr.bf16.mxu0 0
      %3128 = vmatmul.mubr.bf16.gmra.mxu0 %v2951
      %v3129 = vpop.f32.mrf.mxu0
      %v3130 = vadd.f32 0.0, %v3129
      %v3131 = vpop.f32.mrf.mxu0
      %v3132 = vpop.f32.mrf.mxu0
      %v3133 = vadd.f32 0.0, %v3132
      %v3134 = vpop.f32.mrf.mxu0
      %3135 = vmatprep.mubr.bf16.mxu0 0
      %3136 = vmatmul.mubr.bf16.gmra.mxu0 %v2952
      %v3137 = vpop.f32.mrf.mxu0
      %v3138 = vadd.f32 0.0, %v3137
      %v3139 = vpop.f32.mrf.mxu0
      %v3140 = vpop.f32.mrf.mxu0
      %v3141 = vadd.f32 0.0, %v3140
      %v3142 = vpop.f32.mrf.mxu0
      %3143 = vmatprep.mubr.bf16.mxu0 0
      %3144 = vmatmul.mubr.bf16.gmra.mxu0 %v2953
      %v3145 = vpop.f32.mrf.mxu0
      %v3146 = vadd.f32 0.0, %v3145
      %v3147 = vpop.f32.mrf.mxu0
      %v3148 = vpop.f32.mrf.mxu0
      %v3149 = vadd.f32 0.0, %v3148
      %v3150 = vpop.f32.mrf.mxu0
      %3151 = vmatprep.mubr.bf16.mxu0 0
      %3152 = vmatmul.mubr.bf16.gmra.mxu0 %v2954
      %v3153 = vpop.f32.mrf.mxu0
      %v3154 = vadd.f32 0.0, %v3153
      %v3155 = vpop.f32.mrf.mxu0
      %v3156 = vpop.f32.mrf.mxu0
      %v3157 = vadd.f32 0.0, %v3156
      %v3158 = vpop.f32.mrf.mxu0
      %3159 = vmatprep.mubr.bf16.mxu0 0
      %3160 = vmatmul.mubr.bf16.gmra.mxu0 %v2955
      %v3161 = vpop.f32.mrf.mxu0
      %v3162 = vadd.f32 0.0, %v3161
      %v3163 = vpop.f32.mrf.mxu0
      %v3164 = vpop.f32.mrf.mxu0
      %v3165 = vadd.f32 0.0, %v3164
      %v3166 = vpop.f32.mrf.mxu0
      %3167 = vmatprep.mubr.bf16.mxu0 0
      %3168 = vmatmul.mubr.bf16.gmra.mxu0 %v2956
      %v3169 = vpop.f32.mrf.mxu0
      %v3170 = vadd.f32 0.0, %v3169
      %v3171 = vpop.f32.mrf.mxu0
      %v3172 = vpop.f32.mrf.mxu0
      %v3173 = vadd.f32 0.0, %v3172
      %v3174 = vpop.f32.mrf.mxu0
      %3175 = vmatprep.mubr.bf16.mxu0 0
      %3176 = vmatmul.mubr.bf16.gmra.mxu0 %v2957
      %v3177 = vpop.f32.mrf.mxu0
      %v3178 = vadd.f32 0.0, %v3177
      %v3179 = vpop.f32.mrf.mxu0
      %v3180 = vpop.f32.mrf.mxu0
      %v3181 = vadd.f32 0.0, %v3180
      %v3182 = vpop.f32.mrf.mxu0
      %3183 = vdwg.mxu0
      %v3184 = vadd.f32 %v2878, %v3058
      %v3185 = vadd.f32 %v2879, %v3061
      %v3186 = vadd.f32 %v2880, %v3066
      %v3187 = vadd.f32 %v2881, %v3069
      %v3188 = vadd.f32 %v2882, %v3074
      %v3189 = vadd.f32 %v2883, %v3077
      %v3190 = vadd.f32 %v2884, %v3082
      %v3191 = vadd.f32 %v2885, %v3085
      %v3192 = vadd.f32 %v2886, %v3090
      %v3193 = vadd.f32 %v2887, %v3093
      %v3194 = vadd.f32 %v2888, %v3098
      %v3195 = vadd.f32 %v2889, %v3101
      %v3196 = vadd.f32 %v2890, %v3106
      %v3197 = vadd.f32 %v2891, %v3109
      %v3198 = vadd.f32 %v2892, %v3114
      %v3199 = vadd.f32 %v2893, %v3117
      %v3200 = vadd.f32 %v2894, %v3122
      %v3201 = vadd.f32 %v2895, %v3125
      %v3202 = vadd.f32 %v2896, %v3130
      %v3203 = vadd.f32 %v2897, %v3133
      %v3204 = vadd.f32 %v2898, %v3138
      %v3205 = vadd.f32 %v2899, %v3141
      %v3206 = vadd.f32 %v2900, %v3146
      %v3207 = vadd.f32 %v2901, %v3149
      %v3208 = vadd.f32 %v2902, %v3154
      %v3209 = vadd.f32 %v2903, %v3157
      %v3210 = vadd.f32 %v2904, %v3162
      %v3211 = vadd.f32 %v2905, %v3165
      %v3212 = vadd.f32 %v2906, %v3170
      %v3213 = vadd.f32 %v2907, %v3173
      %v3214 = vadd.f32 %v2908, %v3178
      %v3215 = vadd.f32 %v2909, %v3181
      %v3216 = vld [vmem:[%s4] sm:$0x1]
      %v3218 = vlaneseq
      %v3219 = vshrl.u32 %v3218, 7
      %v3220 = vsub.s32 0, %v3219
      %v3221 = vrot.slane %v3216, %v3220
      %v3223 = vadd.f32 %v3184, %v3221
      %v3224 = vadd.f32 %v3185, %v3221
      %v3225 = vadd.f32 %v3186, %v3221
      %v3226 = vadd.f32 %v3187, %v3221
      %v3227 = vadd.f32 %v3188, %v3221
      %v3228 = vadd.f32 %v3189, %v3221
      %v3229 = vadd.f32 %v3190, %v3221
      %v3230 = vadd.f32 %v3191, %v3221
      %v3231 = vadd.f32 %v3192, %v3221
      %v3232 = vadd.f32 %v3193, %v3221
      %v3233 = vadd.f32 %v3194, %v3221
      %v3234 = vadd.f32 %v3195, %v3221
      %v3235 = vadd.f32 %v3196, %v3221
      %v3236 = vadd.f32 %v3197, %v3221
      %v3237 = vadd.f32 %v3198, %v3221
      %v3238 = vadd.f32 %v3199, %v3221
      %v3239 = vadd.f32 %v3200, %v3221
      %v3240 = vadd.f32 %v3201, %v3221
      %v3241 = vadd.f32 %v3202, %v3221
      %v3242 = vadd.f32 %v3203, %v3221
      %v3243 = vadd.f32 %v3204, %v3221
      %v3244 = vadd.f32 %v3205, %v3221
      %v3245 = vadd.f32 %v3206, %v3221
      %v3246 = vadd.f32 %v3207, %v3221
      %v3247 = vadd.f32 %v3208, %v3221
      %v3248 = vadd.f32 %v3209, %v3221
      %v3249 = vadd.f32 %v3210, %v3221
      %v3250 = vadd.f32 %v3211, %v3221
      %v3251 = vadd.f32 %v3212, %v3221
      %v3252 = vadd.f32 %v3213, %v3221
      %v3253 = vadd.f32 %v3214, %v3221
      %v3254 = vadd.f32 %v3215, %v3221
      %3255 = vst [vmem:[%s289] sm:$0xff] %v3223
      %3256 = vst [vmem:[%s289 + $0x8] sm:$0xff] %v3224
      %3257 = vst [vmem:[%s289 + $0x10] sm:$0xff] %v3225
      %3258 = vst [vmem:[%s289 + $0x18] sm:$0xff] %v3226
      %3259 = vst [vmem:[%s289 + $0x20] sm:$0xff] %v3227
      %3260 = vst [vmem:[%s289 + $0x28] sm:$0xff] %v3228
      %3261 = vst [vmem:[%s289 + $0x30] sm:$0xff] %v3229
      %3262 = vst [vmem:[%s289 + $0x38] sm:$0xff] %v3230
      %3263 = vst [vmem:[%s289 + $0x40] sm:$0xff] %v3231
      %3264 = vst [vmem:[%s289 + $0x48] sm:$0xff] %v3232
      %3265 = vst [vmem:[%s289 + $0x50] sm:$0xff] %v3233
      %3266 = vst [vmem:[%s289 + $0x58] sm:$0xff] %v3234
      %3267 = vst [vmem:[%s289 + $0x60] sm:$0xff] %v3235
      %3268 = vst [vmem:[%s289 + $0x68] sm:$0xff] %v3236
      %3269 = vst [vmem:[%s289 + $0x70] sm:$0xff] %v3237
      %3270 = vst [vmem:[%s289 + $0x78] sm:$0xff] %v3238
      %3271 = vst [vmem:[%s289 + $0x80] sm:$0xff] %v3239
      %3272 = vst [vmem:[%s289 + $0x88] sm:$0xff] %v3240
      %3273 = vst [vmem:[%s289 + $0x90] sm:$0xff] %v3241
      %3274 = vst [vmem:[%s289 + $0x98] sm:$0xff] %v3242
      %3275 = vst [vmem:[%s289 + $0xa0] sm:$0xff] %v3243
      %3276 = vst [vmem:[%s289 + $0xa8] sm:$0xff] %v3244
      %3277 = vst [vmem:[%s289 + $0xb0] sm:$0xff] %v3245
      %3278 = vst [vmem:[%s289 + $0xb8] sm:$0xff] %v3246
      %3279 = vst [vmem:[%s289 + $0xc0] sm:$0xff] %v3247
      %3280 = vst [vmem:[%s289 + $0xc8] sm:$0xff] %v3248
      %3281 = vst [vmem:[%s289 + $0xd0] sm:$0xff] %v3249
      %3282 = vst [vmem:[%s289 + $0xd8] sm:$0xff] %v3250
      %3283 = vst [vmem:[%s289 + $0xe0] sm:$0xff] %v3251
      %3284 = vst [vmem:[%s289 + $0xe8] sm:$0xff] %v3252
      %3285 = vst [vmem:[%s289 + $0xf0] sm:$0xff] %v3253
      %3286 = vst [vmem:[%s289 + $0xf8] sm:$0xff] %v3254
      %v3287 = vadd.f32 %v3223, %v3224
      %v3288 = vadd.f32 %v3287, %v3225
      %v3289 = vadd.f32 %v3288, %v3226
      %v3290 = vadd.f32 %v3289, %v3227
      %v3291 = vadd.f32 %v3290, %v3228
      %v3292 = vadd.f32 %v3291, %v3229
      %v3293 = vadd.f32 %v3292, %v3230
      %v3294 = vadd.f32 %v3293, %v3231
      %v3295 = vadd.f32 %v3294, %v3232
      %v3296 = vadd.f32 %v3295, %v3233
      %v3297 = vadd.f32 %v3296, %v3234
      %v3298 = vadd.f32 %v3297, %v3235
      %v3299 = vadd.f32 %v3298, %v3236
      %v3300 = vadd.f32 %v3299, %v3237
      %v3301 = vadd.f32 %v3300, %v3238
      %v3302 = vadd.f32 %v3301, %v3239
      %v3303 = vadd.f32 %v3302, %v3240
      %v3304 = vadd.f32 %v3303, %v3241
      %v3305 = vadd.f32 %v3304, %v3242
      %v3306 = vadd.f32 %v3305, %v3243
      %v3307 = vadd.f32 %v3306, %v3244
      %v3308 = vadd.f32 %v3307, %v3245
      %v3309 = vadd.f32 %v3308, %v3246
      %v3310 = vadd.f32 %v3309, %v3247
      %v3311 = vadd.f32 %v3310, %v3248
      %v3312 = vadd.f32 %v3311, %v3249
      %v3313 = vadd.f32 %v3312, %v3250
      %v3314 = vadd.f32 %v3313, %v3251
      %v3315 = vadd.f32 %v3314, %v3252
      %v3316 = vadd.f32 %v3315, %v3253
      %v3317 = vadd.f32 %v3316, %v3254
      %v3318 = vrot.slane %v3317, 4
      %v3319 = vadd.f32 %v3317, %v3318
      %v3320 = vrot.slane %v3319, 2
      %v3321 = vadd.f32 %v3319, %v3320
      %v3322 = vrot.slane %v3321, 1
      %v3323 = vadd.f32 %v3321, %v3322
      %3324 = vst [vmem:[%s292] sm:$0x1] %v3323
      %v3325 = vmul.f32 %v3223, %v3223
      %v3326 = vmul.f32 %v3224, %v3224
      %v3327 = vmul.f32 %v3225, %v3225
      %v3328 = vmul.f32 %v3226, %v3226
      %v3329 = vmul.f32 %v3227, %v3227
      %v3330 = vmul.f32 %v3228, %v3228
      %v3331 = vmul.f32 %v3229, %v3229
      %v3332 = vmul.f32 %v3230, %v3230
      %v3333 = vmul.f32 %v3231, %v3231
      %v3334 = vmul.f32 %v3232, %v3232
      %v3335 = vmul.f32 %v3233, %v3233
      %v3336 = vmul.f32 %v3234, %v3234
      %v3337 = vmul.f32 %v3235, %v3235
      %v3338 = vmul.f32 %v3236, %v3236
      %v3339 = vmul.f32 %v3237, %v3237
      %v3340 = vmul.f32 %v3238, %v3238
      %v3341 = vmul.f32 %v3239, %v3239
      %v3342 = vmul.f32 %v3240, %v3240
      %v3343 = vmul.f32 %v3241, %v3241
      %v3344 = vmul.f32 %v3242, %v3242
      %v3345 = vmul.f32 %v3243, %v3243
      %v3346 = vmul.f32 %v3244, %v3244
      %v3347 = vmul.f32 %v3245, %v3245
      %v3348 = vmul.f32 %v3246, %v3246
      %v3349 = vmul.f32 %v3247, %v3247
      %v3350 = vmul.f32 %v3248, %v3248
      %v3351 = vmul.f32 %v3249, %v3249
      %v3352 = vmul.f32 %v3250, %v3250
      %v3353 = vmul.f32 %v3251, %v3251
      %v3354 = vmul.f32 %v3252, %v3252
      %v3355 = vmul.f32 %v3253, %v3253
      %v3356 = vmul.f32 %v3254, %v3254
      %v3357 = vadd.f32 %v3325, %v3326
      %v3358 = vadd.f32 %v3357, %v3327
      %v3359 = vadd.f32 %v3358, %v3328
      %v3360 = vadd.f32 %v3359, %v3329
      %v3361 = vadd.f32 %v3360, %v3330
      %v3362 = vadd.f32 %v3361, %v3331
      %v3363 = vadd.f32 %v3362, %v3332
      %v3364 = vadd.f32 %v3363, %v3333
      %v3365 = vadd.f32 %v3364, %v3334
      %v3366 = vadd.f32 %v3365, %v3335
      %v3367 = vadd.f32 %v3366, %v3336
      %v3368 = vadd.f32 %v3367, %v3337
      %v3369 = vadd.f32 %v3368, %v3338
      %v3370 = vadd.f32 %v3369, %v3339
      %v3371 = vadd.f32 %v3370, %v3340
      %v3372 = vadd.f32 %v3371, %v3341
      %v3373 = vadd.f32 %v3372, %v3342
      %v3374 = vadd.f32 %v3373, %v3343
      %v3375 = vadd.f32 %v3374, %v3344
      %v3376 = vadd.f32 %v3375, %v3345
      %v3377 = vadd.f32 %v3376, %v3346
      %v3378 = vadd.f32 %v3377, %v3347
      %v3379 = vadd.f32 %v3378, %v3348
      %v3380 = vadd.f32 %v3379, %v3349
      %v3381 = vadd.f32 %v3380, %v3350
      %v3382 = vadd.f32 %v3381, %v3351
      %v3383 = vadd.f32 %v3382, %v3352
      %v3384 = vadd.f32 %v3383, %v3353
      %v3385 = vadd.f32 %v3384, %v3354
      %v3386 = vadd.f32 %v3385, %v3355
      %v3387 = vadd.f32 %v3386, %v3356
      %v3388 = vrot.slane %v3387, 4
      %v3389 = vadd.f32 %v3387, %v3388
      %v3390 = vrot.slane %v3389, 2
      %v3391 = vadd.f32 %v3389, %v3390
      %v3392 = vrot.slane %v3391, 1
      %v3393 = vadd.f32 %v3391, %v3392
      %3394 = vst [vmem:[%s295] sm:$0x1] %v3393
      %p3395 = scmp.lt.s32.totalorder %s19, 1
      %s3396 = scalar_select %p3395, %s19, 1
      %s3397 = smul.addr %s3396, 32
      %s3398 = smul.addr %s3397, 8
      %s3399 = scalar_lea.vmem %s5, %s3398
      %p3400 = scmp.lt.s32.totalorder %s19, 1
      %s3401 = scalar_select %p3400, %s19, 1
      %s3402 = scalar_lea.vmem %s6, %s3401
      %p3403 = scmp.lt.s32.totalorder %s19, 1
      %s3404 = scalar_select %p3403, %s19, 1
      %s3405 = scalar_lea.vmem %s7, %s3404
      // Predicated region
      $region41: #{block_forward.4} parent=39 // pred_check
        %p3406 = pneg %p147
      $region42: #{block_forward.4} parent=39 // pred_check_branch
        %3408 = sbr.rel (%p3406) target = $region44
      $region43: #{block_forward.4} parent=39 // pred_region
        _
      $region44: #{block_forward.4} parent=39 // pred_fallthru
        _
      // Predicated region
      $region45: #{block_forward.4} parent=39 // pred_check
        %p3409 = pneg %p173
      $region46: #{block_forward.4} parent=39 // pred_check_branch
        %3411 = sbr.rel (%p3409) target = $region48
      $region47: #{block_forward.4} parent=39 // pred_region
        _
      $region48: #{block_forward.4} parent=39 // pred_fallthru
        _
      // Predicated region
      $region49: #{block_forward.4} parent=39 // pred_check
        %p3412 = pneg %p199
      $region50: #{block_forward.4} parent=39 // pred_check_branch
        %3414 = sbr.rel (%p3412) target = $region52
      $region51: #{block_forward.4} parent=39 // pred_region
        _
      $region52: #{block_forward.4} parent=39 // pred_fallthru
        _
    $region40: #{block_forward.4} parent=5 // pred_fallthru
      _
    %p3415 = scmp.le.s32.totalorder 2, %s14
    // Predicated region
    $region53: #{block_forward.4} parent=5 // pred_check
      %p3416 = pneg %p3415
    $region54: #{block_forward.4} parent=5 // pred_check_branch
      %3418 = sbr.rel (%p3416) target = $region56
    $region55: #{block_forward.4} parent=5 // pred_region
      %s3419 = ssub.s32 %s14, 2
      // Predicated region
      $region57: #{block_forward.4} parent=55 // pred_check
        %p3420 = pneg %p153
      $region58: #{block_forward.4} parent=55 // pred_check_branch
        %3422 = sbr.rel (%p3420) target = $region60
      $region59: #{block_forward.4} parent=55 // pred_region
        %p3423 = scmp.lt.s32.totalorder %s20, 1
        %s3424 = scalar_select %p3423, %s20, 1
        %s3425 = smul.addr %s3424, 32
        %s3426 = smul.addr %s3425, 8
        %s3427 = scalar_lea.vmem %s5, %s3426
      $region60: #{block_forward.4} parent=55 // pred_fallthru
        _
      // Predicated region
      $region61: #{block_forward.4} parent=55 // pred_check
        %p3428 = pneg %p179
      $region62: #{block_forward.4} parent=55 // pred_check_branch
        %3430 = sbr.rel (%p3428) target = $region64
      $region63: #{block_forward.4} parent=55 // pred_region
        %p3431 = scmp.lt.s32.totalorder %s20, 1
        %s3432 = scalar_select %p3431, %s20, 1
        %s3433 = scalar_lea.vmem %s6, %s3432
      $region64: #{block_forward.4} parent=55 // pred_fallthru
        _
      // Predicated region
      $region65: #{block_forward.4} parent=55 // pred_check
        %p3434 = pneg %p205
      $region66: #{block_forward.4} parent=55 // pred_check_branch
        %3436 = sbr.rel (%p3434) target = $region68
      $region67: #{block_forward.4} parent=55 // pred_region
        %p3437 = scmp.lt.s32.totalorder %s20, 1
        %s3438 = scalar_select %p3437, %s20, 1
        %s3439 = scalar_lea.vmem %s7, %s3438
      $region68: #{block_forward.4} parent=55 // pred_fallthru
        _
    $region56: #{block_forward.4} parent=5 // pred_fallthru
      _
  $region6: #{block_forward.4} parent=0 // loop_footer
    %s18 = sadd.s32 1, %s14
  $region7: #{block_forward.4} parent=0 // loop_footer_branch
    %13 = sbr.rel target = $region3
  $region8: #{block_forward.4} parent=0 // loop_exit
    _

// kernel: block_forward.3
$region0: #{block_forward.3}
  #allocation0 [shape = 'u32[]', space=smem, size = 0x4, offset = 0x4, fixed_abs, tag = 'smem constant byte address 0x4 - core index']
  #allocation1 [shape = 'u32[144,128]{1,0:T(1,128)}', space=vmem, size = 0x12000, scoped, tag = 'internal scratch']
  %s0 = inlined_call_operand.vmem [shape: bf16[2,18,18,128], index: 0, kind: input, shape index: {}]
  %s1 = inlined_call_operand.vmem [shape: bf16[9,128,128], index: 1, kind: input, shape index: {}]
  %s2 = inlined_call_operand.vmem [shape: f32[1,128], index: 2, kind: input, shape index: {}]
  %s3 = inlined_call_operand.vmem [shape: f32[2,256,128], index: 3, kind: output, shape index: {0}]
  %s4 = inlined_call_operand.vmem [shape: f32[2,1,128], index: 4, kind: output, shape index: {1}]
  %s5 = inlined_call_operand.vmem [shape: f32[2,1,128], index: 5, kind: output, shape index: {2}]
  %6 = xla_tuple %s3, %s4, %s5
  %s7 = sld [smem:[#allocation0]]
  $region61: #{block_forward.3} parent=0
    _
  %s9 = ssub.s32 1, %s7
  %s10 = scalar_select 0, %s9, %s7
  loop: start=0, step=1, limit=4
  $region2: #{block_forward.3} parent=0 // loop_pre_header
    _
  $region3: #{block_forward.3} parent=0 // loop_header
    %s12 = sphi 0, %s16
    %p13 = scmp.ge.s32.totalorder %s12, 4
    %s22 = sphi 0, %s24
    %s25 = sphi 0, %s22
    %s26 = sphi 0, %s25
    %s42 = sphi 0, %s26
    %s46 = sphi 0, %s46
    %s48 = sphi 0, %s46
    %s49 = sphi 0, %s48
    %s63 = sphi 0, %s49
    %s67 = sphi 0, %s67
    %s69 = sphi 0, %s67
    %s70 = sphi 0, %s69
    %s84 = sphi 0, %s70
    %s90 = sphi 0, %s92
    %s93 = sphi 0, %s90
    %s94 = sphi 0, %s93
    %s110 = sphi 0, %s94
    %s116 = sphi 0, %s118
    %s119 = sphi 0, %s116
    %s120 = sphi 0, %s119
    %s136 = sphi 0, %s120
    %s142 = sphi 0, %s144
    %s145 = sphi 0, %s142
    %s146 = sphi 0, %s145
    %s162 = sphi 0, %s146
  $region4: #{block_forward.3} parent=0 // loop_header_branch
    %15 = sbr.rel (%p13) target = $region8
  $region5: #{block_forward.3} parent=0 // loop_body
    %s17 = ssub.s32 %s12, 1
    %s18 = ssub.s32 %s12, 2
    %s19 = sadd.s32 %s12, 1
    %s20 = ssub.s32 %s12, %s19
    %p21 = scmp.eq.s32.totalorder %s20, 0
    %s23 = sadd.s32 %s22, 1
    %s24 = scalar_select %p21, %s22, %s23
    %p27 = pneg %p21
    %p28 = scmp.eq.s32.totalorder %s12, 1
    %p29 = por %p27, %p28
    %p30 = scmp.ne.s32.totalorder %s22, %s25
    %p31 = scmp.eq.s32.totalorder %s12, 0
    %p32 = por %p30, %p31
    %p33 = scmp.ne.s32.totalorder %s22, %s25
    %p34 = scmp.eq.s32.totalorder %s17, 1
    %p35 = por %p33, %p34
    %p36 = scmp.ne.s32.totalorder %s25, %s26
    %p37 = scmp.eq.s32.totalorder %s17, 0
    %p38 = por %p36, %p37
    %p39 = scmp.ne.s32.totalorder %s25, %s26
    %p40 = scmp.eq.s32.totalorder %s18, 1
    %p41 = por %p39, %p40
    %p43 = scmp.ne.s32.totalorder %s26, %s42
    %p44 = scmp.eq.s32.totalorder %s18, 0
    %p45 = por %p43, %p44
    %s47 = sadd.s32 %s46, 1
    %p50 = scmp.eq.s32.totalorder %s12, 1
    %p51 = scmp.ne.s32.totalorder %s46, %s48
    %p52 = scmp.eq.s32.totalorder %s12, 0
    %p53 = por %p51, %p52
    %p54 = scmp.ne.s32.totalorder %s46, %s48
    %p55 = scmp.eq.s32.totalorder %s17, 1
    %p56 = por %p54, %p55
    %p57 = scmp.ne.s32.totalorder %s48, %s49
    %p58 = scmp.eq.s32.totalorder %s17, 0
    %p59 = por %p57, %p58
    %p60 = scmp.ne.s32.totalorder %s48, %s49
    %p61 = scmp.eq.s32.totalorder %s18, 1
    %p62 = por %p60, %p61
    %p64 = scmp.ne.s32.totalorder %s49, %s63
    %p65 = scmp.eq.s32.totalorder %s18, 0
    %p66 = por %p64, %p65
    %s68 = sadd.s32 %s67, 1
    %p71 = scmp.eq.s32.totalorder %s12, 1
    %p72 = scmp.ne.s32.totalorder %s67, %s69
    %p73 = scmp.eq.s32.totalorder %s12, 0
    %p74 = por %p72, %p73
    %p75 = scmp.ne.s32.totalorder %s67, %s69
    %p76 = scmp.eq.s32.totalorder %s17, 1
    %p77 = por %p75, %p76
    %p78 = scmp.ne.s32.totalorder %s69, %s70
    %p79 = scmp.eq.s32.totalorder %s17, 0
    %p80 = por %p78, %p79
    %p81 = scmp.ne.s32.totalorder %s69, %s70
    %p82 = scmp.eq.s32.totalorder %s18, 1
    %p83 = por %p81, %p82
    %p85 = scmp.ne.s32.totalorder %s70, %s84
    %p86 = scmp.eq.s32.totalorder %s18, 0
    %p87 = por %p85, %p86
    %s88 = ssub.s32 %s12, %s19
    %p89 = scmp.eq.s32.totalorder %s88, 0
    %s91 = sadd.s32 %s90, 1
    %s92 = scalar_select %p89, %s90, %s91
    %p95 = pneg %p89
    %p96 = scmp.eq.s32.totalorder %s12, 1
    %p97 = por %p95, %p96
    %p98 = scmp.ne.s32.totalorder %s90, %s93
    %p99 = scmp.eq.s32.totalorder %s12, 0
    %p100 = por %p98, %p99
    %p101 = scmp.ne.s32.totalorder %s90, %s93
    %p102 = scmp.eq.s32.totalorder %s17, 1
    %p103 = por %p101, %p102
    %p104 = scmp.ne.s32.totalorder %s93, %s94
    %p105 = scmp.eq.s32.totalorder %s17, 0
    %p106 = por %p104, %p105
    %p107 = scmp.ne.s32.totalorder %s93, %s94
    %p108 = scmp.eq.s32.totalorder %s18, 1
    %p109 = por %p107, %p108
    %p111 = scmp.ne.s32.totalorder %s94, %s110
    %p112 = scmp.eq.s32.totalorder %s18, 0
    %p113 = por %p111, %p112
    %s114 = ssub.s32 %s12, %s19
    %p115 = scmp.eq.s32.totalorder %s114, 0
    %s117 = sadd.s32 %s116, 1
    %s118 = scalar_select %p115, %s116, %s117
    %p121 = pneg %p115
    %p122 = scmp.eq.s32.totalorder %s12, 1
    %p123 = por %p121, %p122
    %p124 = scmp.ne.s32.totalorder %s116, %s119
    %p125 = scmp.eq.s32.totalorder %s12, 0
    %p126 = por %p124, %p125
    %p127 = scmp.ne.s32.totalorder %s116, %s119
    %p128 = scmp.eq.s32.totalorder %s17, 1
    %p129 = por %p127, %p128
    %p130 = scmp.ne.s32.totalorder %s119, %s120
    %p131 = scmp.eq.s32.totalorder %s17, 0
    %p132 = por %p130, %p131
    %p133 = scmp.ne.s32.totalorder %s119, %s120
    %p134 = scmp.eq.s32.totalorder %s18, 1
    %p135 = por %p133, %p134
    %p137 = scmp.ne.s32.totalorder %s120, %s136
    %p138 = scmp.eq.s32.totalorder %s18, 0
    %p139 = por %p137, %p138
    %s140 = ssub.s32 %s12, %s19
    %p141 = scmp.eq.s32.totalorder %s140, 0
    %s143 = sadd.s32 %s142, 1
    %s144 = scalar_select %p141, %s142, %s143
    %p147 = pneg %p141
    %p148 = scmp.eq.s32.totalorder %s12, 1
    %p149 = por %p147, %p148
    %p150 = scmp.ne.s32.totalorder %s142, %s145
    %p151 = scmp.eq.s32.totalorder %s12, 0
    %p152 = por %p150, %p151
    %p153 = scmp.ne.s32.totalorder %s142, %s145
    %p154 = scmp.eq.s32.totalorder %s17, 1
    %p155 = por %p153, %p154
    %p156 = scmp.ne.s32.totalorder %s145, %s146
    %p157 = scmp.eq.s32.totalorder %s17, 0
    %p158 = por %p156, %p157
    %p159 = scmp.ne.s32.totalorder %s145, %s146
    %p160 = scmp.eq.s32.totalorder %s18, 1
    %p161 = por %p159, %p160
    %p163 = scmp.ne.s32.totalorder %s146, %s162
    %p164 = scmp.eq.s32.totalorder %s18, 0
    %p165 = por %p163, %p164
    %p166 = scmp.le.s32.totalorder 1, %s12
    %p167 = scmp.lt.s32.totalorder %s12, 3
    %p168 = pnand %p166, %p167
    %p169 = pneg %p168
    // Predicated region
    $region9: #{block_forward.3} parent=5 // pred_check
      _
    $region10: #{block_forward.3} parent=5 // pred_check_branch
      %171 = sbr.rel (%p168) target = $region12
    $region11: #{block_forward.3} parent=5 // pred_region
      %s172 = ssub.s32 %s12, 1
      // Predicated region
      $region13: #{block_forward.3} parent=11 // pred_check
        %p173 = pneg %p59
      $region14: #{block_forward.3} parent=11 // pred_check_branch
        %175 = sbr.rel (%p173) target = $region16
      $region15: #{block_forward.3} parent=11 // pred_region
        _
      $region16: #{block_forward.3} parent=11 // pred_fallthru
        _
      // Predicated region
      $region17: #{block_forward.3} parent=11 // pred_check
        %p176 = pneg %p80
      $region18: #{block_forward.3} parent=11 // pred_check_branch
        %178 = sbr.rel (%p176) target = $region20
      $region19: #{block_forward.3} parent=11 // pred_region
        _
      $region20: #{block_forward.3} parent=11 // pred_fallthru
        _
    $region12: #{block_forward.3} parent=5 // pred_fallthru
      _
    %p179 = scmp.lt.s32.totalorder %s12, 2
    // Predicated region
    $region21: #{block_forward.3} parent=5 // pred_check
      %p180 = pneg %p179
    $region22: #{block_forward.3} parent=5 // pred_check_branch
      %182 = sbr.rel (%p180) target = $region24
    $region23: #{block_forward.3} parent=5 // pred_region
      // Predicated region
      $region25: #{block_forward.3} parent=23 // pred_check
        %p183 = pneg %p32
      $region26: #{block_forward.3} parent=23 // pred_check_branch
        %185 = sbr.rel (%p183) target = $region28
      $region27: #{block_forward.3} parent=23 // pred_region
        %p186 = scmp.lt.s32.totalorder %s12, 1
        %s187 = scalar_select %p186, %s12, 1
        %s188 = smul.addr %s187, 54
        %s189 = smul.addr %s188, 4
        %s190 = scalar_lea.vmem %s0, %s189
      $region28: #{block_forward.3} parent=23 // pred_fallthru
        _
    $region24: #{block_forward.3} parent=5 // pred_fallthru
      _
    %p191 = scmp.le.s32.totalorder 1, %s12
    %p192 = scmp.lt.s32.totalorder %s12, 3
    %p193 = pnand %p191, %p192
    %p194 = pneg %p193
    // Predicated region
    $region29: #{block_forward.3} parent=5 // pred_check
      _
    $region30: #{block_forward.3} parent=5 // pred_check_branch
      %196 = sbr.rel (%p193) target = $region32
    $region31: #{block_forward.3} parent=5 // pred_region
      %s197 = ssub.s32 %s12, 1
      %p198 = scmp.lt.s32.totalorder %s17, 1
      %s199 = scalar_select %p198, %s17, 1
      %s200 = smul.addr %s199, 54
      %s201 = smul.addr %s200, 4
      %s202 = scalar_lea.vmem %s0, %s201
      %p203 = pneg %p38
      %p204 = pneg %p35
      %p205 = pneg %p59
      %p206 = pneg %p56
      %p207 = pneg %p80
      %p208 = pneg %p77
      %p209 = pneg %p106
      %p210 = pneg %p103
      %p211 = scmp.lt.s32.totalorder %s17, 1
      %s212 = scalar_select %p211, %s17, 1
      %s213 = smul.addr %s212, 32
      %s214 = smul.addr %s213, 8
      %s215 = scalar_lea.vmem %s3, %s214
      %p216 = pneg %p132
      %p217 = pneg %p129
      %p218 = scmp.lt.s32.totalorder %s17, 1
      %s219 = scalar_select %p218, %s17, 1
      %s220 = scalar_lea.vmem %s4, %s219
      %p221 = pneg %p158
      %p222 = pneg %p155
      %p223 = scmp.lt.s32.totalorder %s17, 1
      %s224 = scalar_select %p223, %s17, 1
      %s225 = scalar_lea.vmem %s5, %s224
      %p226 = scmp.lt.s32.totalorder %s17, 1
      %s227 = scalar_select %p226, %s17, 1
      %s228 = smul.addr %s227, 54
      %s229 = smul.addr %s228, 4
      %s230 = scalar_lea.vmem %s0, %s229
      %p231 = scmp.lt.s32.totalorder %s17, 1
      %s232 = scalar_select %p231, %s17, 1
      %s233 = smul.addr %s232, 32
      %s234 = smul.addr %s233, 8
      %s235 = scalar_lea.vmem %s3, %s234
      %p236 = scmp.lt.s32.totalorder %s17, 1
      %s237 = scalar_select %p236, %s17, 1
      %s238 = scalar_lea.vmem %s4, %s237
      %p239 = scmp.lt.s32.totalorder %s17, 1
      %s240 = scalar_select %p239, %s17, 1
      %s241 = scalar_lea.vmem %s5, %s240
      %v243 = vld [vmem:[%s230] sm:$0xf]
      %v244 = vld [vmem:[%s230 + $0x4] sm:$0xf]
      %v245 = vld [vmem:[%s230 + $0xc] sm:$0xf]
      %v246 = vld [vmem:[%s230 + $0x10] sm:$0xf]
      %v247 = vld [vmem:[%s230 + $0x18] sm:$0xf]
      %v248 = vld [vmem:[%s230 + $0x1c] sm:$0xf]
      %v249 = vld [vmem:[%s230 + $0x24] sm:$0xf]
      %v250 = vld [vmem:[%s230 + $0x28] sm:$0xf]
      %v251 = vld [vmem:[%s230 + $0x30] sm:$0xf]
      %v252 = vld [vmem:[%s230 + $0x34] sm:$0xf]
      %v253 = vld [vmem:[%s230 + $0x3c] sm:$0xf]
      %v254 = vld [vmem:[%s230 + $0x40] sm:$0xf]
      %v255 = vld [vmem:[%s230 + $0x48] sm:$0xf]
      %v256 = vld [vmem:[%s230 + $0x4c] sm:$0xf]
      %v257 = vld [vmem:[%s230 + $0x54] sm:$0xf]
      %v258 = vld [vmem:[%s230 + $0x58] sm:$0xf]
      %v259 = vld [vmem:[%s230 + $0x60] sm:$0xf]
      %v260 = vld [vmem:[%s230 + $0x64] sm:$0xf]
      %v261 = vld [vmem:[%s230 + $0x6c] sm:$0xf]
      %v262 = vld [vmem:[%s230 + $0x70] sm:$0xf]
      %v263 = vld [vmem:[%s230 + $0x78] sm:$0xf]
      %v264 = vld [vmem:[%s230 + $0x7c] sm:$0xf]
      %v265 = vld [vmem:[%s230 + $0x84] sm:$0xf]
      %v266 = vld [vmem:[%s230 + $0x88] sm:$0xf]
      %v267 = vld [vmem:[%s230 + $0x90] sm:$0xf]
      %v268 = vld [vmem:[%s230 + $0x94] sm:$0xf]
      %v269 = vld [vmem:[%s230 + $0x9c] sm:$0xf]
      %v270 = vld [vmem:[%s230 + $0xa0] sm:$0xf]
      %v271 = vld [vmem:[%s230 + $0xa8] sm:$0xf]
      %v272 = vld [vmem:[%s230 + $0xac] sm:$0xf]
      %v273 = vld [vmem:[%s230 + $0xb4] sm:$0xf]
      %v274 = vld [vmem:[%s230 + $0xb8] sm:$0xf]
      %v275 = vld [vmem:[%s1] sm:$0xf]
      %v276 = vld [vmem:[%s1 + $0x4] sm:$0xf]
      %v277 = vld [vmem:[%s1 + $0x8] sm:$0xf]
      %v278 = vld [vmem:[%s1 + $0xc] sm:$0xf]
      %v279 = vld [vmem:[%s1 + $0x10] sm:$0xf]
      %v280 = vld [vmem:[%s1 + $0x14] sm:$0xf]
      %v281 = vld [vmem:[%s1 + $0x18] sm:$0xf]
      %v282 = vld [vmem:[%s1 + $0x1c] sm:$0xf]
      %v283 = vld [vmem:[%s1 + $0x20] sm:$0xf]
      %v284 = vld [vmem:[%s1 + $0x24] sm:$0xf]
      %v285 = vld [vmem:[%s1 + $0x28] sm:$0xf]
      %v286 = vld [vmem:[%s1 + $0x2c] sm:$0xf]
      %v287 = vld [vmem:[%s1 + $0x30] sm:$0xf]
      %v288 = vld [vmem:[%s1 + $0x34] sm:$0xf]
      %v289 = vld [vmem:[%s1 + $0x38] sm:$0xf]
      %v290 = vld [vmem:[%s1 + $0x3c] sm:$0xf]
      %v291 = vld [vmem:[%s230 + $0x8] sm:$0x1]
      %v292 = vld [vmem:[%s230 + $0x14] sm:$0x1]
      %v293 = vld [vmem:[%s230 + $0x20] sm:$0x1]
      %v294 = vld [vmem:[%s230 + $0x2c] sm:$0x1]
      %v295 = vld [vmem:[%s230 + $0x38] sm:$0x1]
      %v296 = vld [vmem:[%s230 + $0x44] sm:$0x1]
      %v297 = vld [vmem:[%s230 + $0x50] sm:$0x1]
      %v298 = vld [vmem:[%s230 + $0x5c] sm:$0x1]
      %v299 = vld [vmem:[%s230 + $0x68] sm:$0x1]
      %v300 = vld [vmem:[%s230 + $0x74] sm:$0x1]
      %v301 = vld [vmem:[%s230 + $0x80] sm:$0x1]
      %v302 = vld [vmem:[%s230 + $0x8c] sm:$0x1]
      %v303 = vld [vmem:[%s230 + $0x98] sm:$0x1]
      %v304 = vld [vmem:[%s230 + $0xa4] sm:$0x1]
      %v305 = vld [vmem:[%s230 + $0xb0] sm:$0x1]
      %v306 = vld [vmem:[%s230 + $0xbc] sm:$0x1]
      %vm307 = vsmask.f32 3328
      %vm308 = vsmask.f32 7440
      %vm309 = vmor %vm307, %vm308
      %v311 = vshrl.u32 %v243, 16
      %v313 = vrot.slane %v311, 4
      %v314 = vshll.u32 %v243, 16
      %v316 = vrot.slane %v314, 5
      %v317 = vor.u32 %v313, %v316
      %v318 = vrot.slane %v317, 4
      %v320 = vshll.u32 %v244, 16
      %v322 = vrot.slane %v320, 5
      %v323 = vsel %vm309, %v318, %v322
      %v324 = vshrl.u32 %v244, 16
      %v326 = vrot.slane %v324, 4
      %v327 = vor.u32 %v326, %v322
      %v328 = vrot.slane %v327, 4
      %v330 = vshll.u32 %v291, 16
      %v332 = vrot.slane %v330, 5
      %v333 = vsel %vm309, %v328, %v332
      %v335 = vshrl.u32 %v245, 16
      %v337 = vrot.slane %v335, 4
      %v338 = vshll.u32 %v245, 16
      %v340 = vrot.slane %v338, 5
      %v341 = vor.u32 %v337, %v340
      %v342 = vrot.slane %v341, 4
      %v344 = vshll.u32 %v246, 16
      %v346 = vrot.slane %v344, 5
      %v347 = vsel %vm309, %v342, %v346
      %v348 = vshrl.u32 %v246, 16
      %v350 = vrot.slane %v348, 4
      %v351 = vor.u32 %v350, %v346
      %v352 = vrot.slane %v351, 4
      %v354 = vshll.u32 %v292, 16
      %v356 = vrot.slane %v354, 5
      %v357 = vsel %vm309, %v352, %v356
      %v359 = vshrl.u32 %v247, 16
      %v361 = vrot.slane %v359, 4
      %v362 = vshll.u32 %v247, 16
      %v364 = vrot.slane %v362, 5
      %v365 = vor.u32 %v361, %v364
      %v366 = vrot.slane %v365, 4
      %v368 = vshll.u32 %v248, 16
      %v370 = vrot.slane %v368, 5
      %v371 = vsel %vm309, %v366, %v370
      %v372 = vshrl.u32 %v248, 16
      %v374 = vrot.slane %v372, 4
      %v375 = vor.u32 %v374, %v370
      %v376 = vrot.slane %v375, 4
      %v378 = vshll.u32 %v293, 16
      %v380 = vrot.slane %v378, 5
      %v381 = vsel %vm309, %v376, %v380
      %v383 = vshrl.u32 %v249, 16
      %v385 = vrot.slane %v383, 4
      %v386 = vshll.u32 %v249, 16
      %v388 = vrot.slane %v386, 5
      %v389 = vor.u32 %v385, %v388
      %v390 = vrot.slane %v389, 4
      %v392 = vshll.u32 %v250, 16
      %v394 = vrot.slane %v392, 5
      %v395 = vsel %vm309, %v390, %v394
      %v396 = vshrl.u32 %v250, 16
      %v398 = vrot.slane %v396, 4
      %v399 = vor.u32 %v398, %v394
      %v400 = vrot.slane %v399, 4
      %v402 = vshll.u32 %v294, 16
      %v404 = vrot.slane %v402, 5
      %v405 = vsel %vm309, %v400, %v404
      %v407 = vshrl.u32 %v251, 16
      %v409 = vrot.slane %v407, 4
      %v410 = vshll.u32 %v251, 16
      %v412 = vrot.slane %v410, 5
      %v413 = vor.u32 %v409, %v412
      %v414 = vrot.slane %v413, 4
      %v416 = vshll.u32 %v252, 16
      %v418 = vrot.slane %v416, 5
      %v419 = vsel %vm309, %v414, %v418
      %v420 = vshrl.u32 %v252, 16
      %v422 = vrot.slane %v420, 4
      %v423 = vor.u32 %v422, %v418
      %v424 = vrot.slane %v423, 4
      %v426 = vshll.u32 %v295, 16
      %v428 = vrot.slane %v426, 5
      %v429 = vsel %vm309, %v424, %v428
      %v431 = vshrl.u32 %v253, 16
      %v433 = vrot.slane %v431, 4
      %v434 = vshll.u32 %v253, 16
      %v436 = vrot.slane %v434, 5
      %v437 = vor.u32 %v433, %v436
      %v438 = vrot.slane %v437, 4
      %v440 = vshll.u32 %v254, 16
      %v442 = vrot.slane %v440, 5
      %v443 = vsel %vm309, %v438, %v442
      %v444 = vshrl.u32 %v254, 16
      %v446 = vrot.slane %v444, 4
      %v447 = vor.u32 %v446, %v442
      %v448 = vrot.slane %v447, 4
      %v450 = vshll.u32 %v296, 16
      %v452 = vrot.slane %v450, 5
      %v453 = vsel %vm309, %v448, %v452
      %v455 = vshrl.u32 %v255, 16
      %v457 = vrot.slane %v455, 4
      %v458 = vshll.u32 %v255, 16
      %v460 = vrot.slane %v458, 5
      %v461 = vor.u32 %v457, %v460
      %v462 = vrot.slane %v461, 4
      %v464 = vshll.u32 %v256, 16
      %v466 = vrot.slane %v464, 5
      %v467 = vsel %vm309, %v462, %v466
      %v468 = vshrl.u32 %v256, 16
      %v470 = vrot.slane %v468, 4
      %v471 = vor.u32 %v470, %v466
      %v472 = vrot.slane %v471, 4
      %v474 = vshll.u32 %v297, 16
      %v476 = vrot.slane %v474, 5
      %v477 = vsel %vm309, %v472, %v476
      %v479 = vshrl.u32 %v257, 16
      %v481 = vrot.slane %v479, 4
      %v482 = vshll.u32 %v257, 16
      %v484 = vrot.slane %v482, 5
      %v485 = vor.u32 %v481, %v484
      %v486 = vrot.slane %v485, 4
      %v488 = vshll.u32 %v258, 16
      %v490 = vrot.slane %v488, 5
      %v491 = vsel %vm309, %v486, %v490
      %v492 = vshrl.u32 %v258, 16
      %v494 = vrot.slane %v492, 4
      %v495 = vor.u32 %v494, %v490
      %v496 = vrot.slane %v495, 4
      %v498 = vshll.u32 %v298, 16
      %v500 = vrot.slane %v498, 5
      %v501 = vsel %vm309, %v496, %v500
      %v503 = vshrl.u32 %v259, 16
      %v505 = vrot.slane %v503, 4
      %v506 = vshll.u32 %v259, 16
      %v508 = vrot.slane %v506, 5
      %v509 = vor.u32 %v505, %v508
      %v510 = vrot.slane %v509, 4
      %v512 = vshll.u32 %v260, 16
      %v514 = vrot.slane %v512, 5
      %v515 = vsel %vm309, %v510, %v514
      %v516 = vshrl.u32 %v260, 16
      %v518 = vrot.slane %v516, 4
      %v519 = vor.u32 %v518, %v514
      %v520 = vrot.slane %v519, 4
      %v522 = vshll.u32 %v299, 16
      %v524 = vrot.slane %v522, 5
      %v525 = vsel %vm309, %v520, %v524
      %v527 = vshrl.u32 %v261, 16
      %v529 = vrot.slane %v527, 4
      %v530 = vshll.u32 %v261, 16
      %v532 = vrot.slane %v530, 5
      %v533 = vor.u32 %v529, %v532
      %v534 = vrot.slane %v533, 4
      %v536 = vshll.u32 %v262, 16
      %v538 = vrot.slane %v536, 5
      %v539 = vsel %vm309, %v534, %v538
      %v540 = vshrl.u32 %v262, 16
      %v542 = vrot.slane %v540, 4
      %v543 = vor.u32 %v542, %v538
      %v544 = vrot.slane %v543, 4
      %v546 = vshll.u32 %v300, 16
      %v548 = vrot.slane %v546, 5
      %v549 = vsel %vm309, %v544, %v548
      %v551 = vshrl.u32 %v263, 16
      %v553 = vrot.slane %v551, 4
      %v554 = vshll.u32 %v263, 16
      %v556 = vrot.slane %v554, 5
      %v557 = vor.u32 %v553, %v556
      %v558 = vrot.slane %v557, 4
      %v560 = vshll.u32 %v264, 16
      %v562 = vrot.slane %v560, 5
      %v563 = vsel %vm309, %v558, %v562
      %v564 = vshrl.u32 %v264, 16
      %v566 = vrot.slane %v564, 4
      %v567 = vor.u32 %v566, %v562
      %v568 = vrot.slane %v567, 4
      %v570 = vshll.u32 %v301, 16
      %v572 = vrot.slane %v570, 5
      %v573 = vsel %vm309, %v568, %v572
      %v575 = vshrl.u32 %v265, 16
      %v577 = vrot.slane %v575, 4
      %v578 = vshll.u32 %v265, 16
      %v580 = vrot.slane %v578, 5
      %v581 = vor.u32 %v577, %v580
      %v582 = vrot.slane %v581, 4
      %v584 = vshll.u32 %v266, 16
      %v586 = vrot.slane %v584, 5
      %v587 = vsel %vm309, %v582, %v586
      %v588 = vshrl.u32 %v266, 16
      %v590 = vrot.slane %v588, 4
      %v591 = vor.u32 %v590, %v586
      %v592 = vrot.slane %v591, 4
      %v594 = vshll.u32 %v302, 16
      %v596 = vrot.slane %v594, 5
      %v597 = vsel %vm309, %v592, %v596
      %v599 = vshrl.u32 %v267, 16
      %v601 = vrot.slane %v599, 4
      %v602 = vshll.u32 %v267, 16
      %v604 = vrot.slane %v602, 5
      %v605 = vor.u32 %v601, %v604
      %v606 = vrot.slane %v605, 4
      %v608 = vshll.u32 %v268, 16
      %v610 = vrot.slane %v608, 5
      %v611 = vsel %vm309, %v606, %v610
      %v612 = vshrl.u32 %v268, 16
      %v614 = vrot.slane %v612, 4
      %v615 = vor.u32 %v614, %v610
      %v616 = vrot.slane %v615, 4
      %v618 = vshll.u32 %v303, 16
      %v620 = vrot.slane %v618, 5
      %v621 = vsel %vm309, %v616, %v620
      %v623 = vshrl.u32 %v269, 16
      %v625 = vrot.slane %v623, 4
      %v626 = vshll.u32 %v269, 16
      %v628 = vrot.slane %v626, 5
      %v629 = vor.u32 %v625, %v628
      %v630 = vrot.slane %v629, 4
      %v632 = vshll.u32 %v270, 16
      %v634 = vrot.slane %v632, 5
      %v635 = vsel %vm309, %v630, %v634
      %v636 = vshrl.u32 %v270, 16
      %v638 = vrot.slane %v636, 4
      %v639 = vor.u32 %v638, %v634
      %v640 = vrot.slane %v639, 4
      %v642 = vshll.u32 %v304, 16
      %v644 = vrot.slane %v642, 5
      %v645 = vsel %vm309, %v640, %v644
      %v647 = vshrl.u32 %v271, 16
      %v649 = vrot.slane %v647, 4
      %v650 = vshll.u32 %v271, 16
      %v652 = vrot.slane %v650, 5
      %v653 = vor.u32 %v649, %v652
      %v654 = vrot.slane %v653, 4
      %v656 = vshll.u32 %v272, 16
      %v658 = vrot.slane %v656, 5
      %v659 = vsel %vm309, %v654, %v658
      %v660 = vshrl.u32 %v272, 16
      %v662 = vrot.slane %v660, 4
      %v663 = vor.u32 %v662, %v658
      %v664 = vrot.slane %v663, 4
      %v666 = vshll.u32 %v305, 16
      %v668 = vrot.slane %v666, 5
      %v669 = vsel %vm309, %v664, %v668
      %v671 = vshrl.u32 %v273, 16
      %v673 = vrot.slane %v671, 4
      %v674 = vshll.u32 %v273, 16
      %v676 = vrot.slane %v674, 5
      %v677 = vor.u32 %v673, %v676
      %v678 = vrot.slane %v677, 4
      %v680 = vshll.u32 %v274, 16
      %v682 = vrot.slane %v680, 5
      %v683 = vsel %vm309, %v678, %v682
      %v684 = vshrl.u32 %v274, 16
      %v686 = vrot.slane %v684, 4
      %v687 = vor.u32 %v686, %v682
      %v688 = vrot.slane %v687, 4
      %v690 = vshll.u32 %v306, 16
      %v692 = vrot.slane %v690, 5
      %v693 = vsel %vm309, %v688, %v692
      %s694 = scalar_lea.vmem %s1, 64
      %v695 = vld [vmem:[%s694] sm:$0xf]
      %v696 = vld [vmem:[%s694 + $0x4] sm:$0xf]
      %v697 = vld [vmem:[%s694 + $0x8] sm:$0xf]
      %v698 = vld [vmem:[%s694 + $0xc] sm:$0xf]
      %v699 = vld [vmem:[%s694 + $0x10] sm:$0xf]
      %v700 = vld [vmem:[%s694 + $0x14] sm:$0xf]
      %v701 = vld [vmem:[%s694 + $0x18] sm:$0xf]
      %v702 = vld [vmem:[%s694 + $0x1c] sm:$0xf]
      %v703 = vld [vmem:[%s694 + $0x20] sm:$0xf]
      %v704 = vld [vmem:[%s694 + $0x24] sm:$0xf]
      %v705 = vld [vmem:[%s694 + $0x28] sm:$0xf]
      %v706 = vld [vmem:[%s694 + $0x2c] sm:$0xf]
      %v707 = vld [vmem:[%s694 + $0x30] sm:$0xf]
      %v708 = vld [vmem:[%s694 + $0x34] sm:$0xf]
      %v709 = vld [vmem:[%s694 + $0x38] sm:$0xf]
      %v710 = vld [vmem:[%s694 + $0x3c] sm:$0xf]
      %v711 = vunpack.c.l.b16 %v323
      %v712 = vunpack.c.l.b16 %v333
      %v713 = vunpack.c.l.b16 %v347
      %v714 = vunpack.c.l.b16 %v357
      %v715 = vunpack.c.l.b16 %v371
      %v716 = vunpack.c.l.b16 %v381
      %v717 = vunpack.c.l.b16 %v395
      %v718 = vunpack.c.l.b16 %v405
      %v719 = vunpack.c.l.b16 %v419
      %v720 = vunpack.c.l.b16 %v429
      %v721 = vunpack.c.l.b16 %v443
      %v722 = vunpack.c.l.b16 %v453
      %v723 = vunpack.c.l.b16 %v467
      %v724 = vunpack.c.l.b16 %v477
      %v725 = vunpack.c.l.b16 %v491
      %v726 = vunpack.c.l.b16 %v501
      %v727 = vunpack.c.l.b16 %v515
      %v728 = vunpack.c.l.b16 %v525
      %v729 = vunpack.c.l.b16 %v539
      %v730 = vunpack.c.l.b16 %v549
      %v731 = vunpack.c.l.b16 %v563
      %v732 = vunpack.c.l.b16 %v573
      %v733 = vunpack.c.l.b16 %v587
      %v734 = vunpack.c.l.b16 %v597
      %v735 = vunpack.c.l.b16 %v611
      %v736 = vunpack.c.l.b16 %v621
      %v737 = vunpack.c.l.b16 %v635
      %v738 = vunpack.c.l.b16 %v645
      %v739 = vunpack.c.l.b16 %v659
      %v740 = vunpack.c.l.b16 %v669
      %v741 = vunpack.c.l.b16 %v683
      %v742 = vunpack.c.l.b16 %v693
      %v743 = vpack.c.b16 %v712, %v711
      %v744 = vpack.c.b16 %v714, %v713
      %v745 = vpack.c.b16 %v716, %v715
      %v746 = vpack.c.b16 %v718, %v717
      %v747 = vpack.c.b16 %v720, %v719
      %v748 = vpack.c.b16 %v722, %v721
      %v749 = vpack.c.b16 %v724, %v723
      %v750 = vpack.c.b16 %v726, %v725
      %v751 = vpack.c.b16 %v728, %v727
      %v752 = vpack.c.b16 %v730, %v729
      %v753 = vpack.c.b16 %v732, %v731
      %v754 = vpack.c.b16 %v734, %v733
      %v755 = vpack.c.b16 %v736, %v735
      %v756 = vpack.c.b16 %v738, %v737
      %v757 = vpack.c.b16 %v740, %v739
      %v758 = vpack.c.b16 %v742, %v741
      %v791 = vunpack.c.l.b16 %v695
      %v792 = vunpack.c.l.b16 %v696
      %v793 = vunpack.c.l.b16 %v697
      %v794 = vunpack.c.l.b16 %v698
      %v795 = vunpack.c.l.b16 %v699
      %v796 = vunpack.c.l.b16 %v700
      %v797 = vunpack.c.l.b16 %v701
      %v798 = vunpack.c.l.b16 %v702
      %v799 = vunpack.c.l.b16 %v703
      %v800 = vunpack.c.l.b16 %v704
      %v801 = vunpack.c.l.b16 %v705
      %v802 = vunpack.c.l.b16 %v706
      %v803 = vunpack.c.l.b16 %v707
      %v804 = vunpack.c.l.b16 %v708
      %v805 = vunpack.c.l.b16 %v709
      %v806 = vunpack.c.l.b16 %v710
      %v807 = vpack.c.b16 %v792, %v791
      %v808 = vpack.c.b16 %v794, %v793
      %v809 = vpack.c.b16 %v796, %v795
      %v810 = vpack.c.b16 %v798, %v797
      %v811 = vpack.c.b16 %v800, %v799
      %v812 = vpack.c.b16 %v802, %v801
      %v813 = vpack.c.b16 %v804, %v803
      %v814 = vpack.c.b16 %v806, %v805
      %823 = vmatprep.subr.bf16.mxu0 0
      %824 = vmatpush1.bf16.msra.mxu0 %v814
      %825 = vmatprep.subr.bf16.mxu0 0
      %826 = vmatpush1.bf16.msra.mxu0 %v813
      %827 = vmatprep.subr.bf16.mxu0 0
      %828 = vmatpush1.bf16.msra.mxu0 %v812
      %829 = vmatprep.subr.bf16.mxu0 0
      %830 = vmatpush1.bf16.msra.mxu0 %v811
      %831 = vmatprep.subr.bf16.mxu0 0
      %832 = vmatpush1.bf16.msra.mxu0 %v810
      %833 = vmatprep.subr.bf16.mxu0 0
      %834 = vmatpush1.bf16.msra.mxu0 %v809
      %835 = vmatprep.subr.bf16.mxu0 0
      %836 = vmatpush1.bf16.msra.mxu0 %v808
      %837 = vmatprep.subr.bf16.mxu0 0
      %838 = vmatpush1.bf16.msra.mxu0 %v807
      %839 = vmatprep.subr.bf16.mxu0 0
      %840 = vmatpush2.bf16.msra.mxu0 0
      %841 = vmatprep.subr.bf16.mxu0 0
      %842 = vmatpush2.bf16.msra.mxu0 0
      %843 = vmatprep.subr.bf16.mxu0 0
      %844 = vmatpush2.bf16.msra.mxu0 0
      %845 = vmatprep.subr.bf16.mxu0 0
      %846 = vmatpush2.bf16.msra.mxu0 0
      %847 = vmatprep.subr.bf16.mxu0 0
      %848 = vmatpush2.bf16.msra.mxu0 0
      %849 = vmatprep.subr.bf16.mxu0 0
      %850 = vmatpush2.bf16.msra.mxu0 0
      %851 = vmatprep.subr.bf16.mxu0 0
      %852 = vmatpush2.bf16.msra.mxu0 0
      %853 = vmatprep.subr.bf16.mxu0 0
      %854 = vmatpush2.bf16.msra.mxu0 0
      %855 = vmatprep.mubr.bf16.mxu0 0
      %856 = vmatmul.mubr.bf16.gmra.mxu0 %v743
      %v857 = vpop.f32.mrf.mxu0
      %v858 = vadd.f32 0.0, %v857
      %v859 = vpop.f32.mrf.mxu0
      %v860 = vpop.f32.mrf.mxu0
      %v861 = vadd.f32 0.0, %v860
      %v862 = vpop.f32.mrf.mxu0
      %863 = vmatprep.mubr.bf16.mxu0 0
      %864 = vmatmul.mubr.bf16.gmra.mxu0 %v744
      %v865 = vpop.f32.mrf.mxu0
      %v866 = vadd.f32 0.0, %v865
      %v867 = vpop.f32.mrf.mxu0
      %v868 = vpop.f32.mrf.mxu0
      %v869 = vadd.f32 0.0, %v868
      %v870 = vpop.f32.mrf.mxu0
      %871 = vmatprep.mubr.bf16.mxu0 0
      %872 = vmatmul.mubr.bf16.gmra.mxu0 %v745
      %v873 = vpop.f32.mrf.mxu0
      %v874 = vadd.f32 0.0, %v873
      %v875 = vpop.f32.mrf.mxu0
      %v876 = vpop.f32.mrf.mxu0
      %v877 = vadd.f32 0.0, %v876
      %v878 = vpop.f32.mrf.mxu0
      %879 = vmatprep.mubr.bf16.mxu0 0
      %880 = vmatmul.mubr.bf16.gmra.mxu0 %v746
      %v881 = vpop.f32.mrf.mxu0
      %v882 = vadd.f32 0.0, %v881
      %v883 = vpop.f32.mrf.mxu0
      %v884 = vpop.f32.mrf.mxu0
      %v885 = vadd.f32 0.0, %v884
      %v886 = vpop.f32.mrf.mxu0
      %887 = vmatprep.mubr.bf16.mxu0 0
      %888 = vmatmul.mubr.bf16.gmra.mxu0 %v747
      %v889 = vpop.f32.mrf.mxu0
      %v890 = vadd.f32 0.0, %v889
      %v891 = vpop.f32.mrf.mxu0
      %v892 = vpop.f32.mrf.mxu0
      %v893 = vadd.f32 0.0, %v892
      %v894 = vpop.f32.mrf.mxu0
      %895 = vmatprep.mubr.bf16.mxu0 0
      %896 = vmatmul.mubr.bf16.gmra.mxu0 %v748
      %v897 = vpop.f32.mrf.mxu0
      %v898 = vadd.f32 0.0, %v897
      %v899 = vpop.f32.mrf.mxu0
      %v900 = vpop.f32.mrf.mxu0
      %v901 = vadd.f32 0.0, %v900
      %v902 = vpop.f32.mrf.mxu0
      %903 = vmatprep.mubr.bf16.mxu0 0
      %904 = vmatmul.mubr.bf16.gmra.mxu0 %v749
      %v905 = vpop.f32.mrf.mxu0
      %v906 = vadd.f32 0.0, %v905
      %v907 = vpop.f32.mrf.mxu0
      %v908 = vpop.f32.mrf.mxu0
      %v909 = vadd.f32 0.0, %v908
      %v910 = vpop.f32.mrf.mxu0
      %911 = vmatprep.mubr.bf16.mxu0 0
      %912 = vmatmul.mubr.bf16.gmra.mxu0 %v750
      %v913 = vpop.f32.mrf.mxu0
      %v914 = vadd.f32 0.0, %v913
      %v915 = vpop.f32.mrf.mxu0
      %v916 = vpop.f32.mrf.mxu0
      %v917 = vadd.f32 0.0, %v916
      %v918 = vpop.f32.mrf.mxu0
      %919 = vmatprep.mubr.bf16.mxu0 0
      %920 = vmatmul.mubr.bf16.gmra.mxu0 %v751
      %v921 = vpop.f32.mrf.mxu0
      %v922 = vadd.f32 0.0, %v921
      %v923 = vpop.f32.mrf.mxu0
      %v924 = vpop.f32.mrf.mxu0
      %v925 = vadd.f32 0.0, %v924
      %v926 = vpop.f32.mrf.mxu0
      %927 = vmatprep.mubr.bf16.mxu0 0
      %928 = vmatmul.mubr.bf16.gmra.mxu0 %v752
      %v929 = vpop.f32.mrf.mxu0
      %v930 = vadd.f32 0.0, %v929
      %v931 = vpop.f32.mrf.mxu0
      %v932 = vpop.f32.mrf.mxu0
      %v933 = vadd.f32 0.0, %v932
      %v934 = vpop.f32.mrf.mxu0
      %935 = vmatprep.mubr.bf16.mxu0 0
      %936 = vmatmul.mubr.bf16.gmra.mxu0 %v753
      %v937 = vpop.f32.mrf.mxu0
      %v938 = vadd.f32 0.0, %v937
      %v939 = vpop.f32.mrf.mxu0
      %v940 = vpop.f32.mrf.mxu0
      %v941 = vadd.f32 0.0, %v940
      %v942 = vpop.f32.mrf.mxu0
      %943 = vmatprep.mubr.bf16.mxu0 0
      %944 = vmatmul.mubr.bf16.gmra.mxu0 %v754
      %v945 = vpop.f32.mrf.mxu0
      %v946 = vadd.f32 0.0, %v945
      %v947 = vpop.f32.mrf.mxu0
      %v948 = vpop.f32.mrf.mxu0
      %v949 = vadd.f32 0.0, %v948
      %v950 = vpop.f32.mrf.mxu0
      %951 = vmatprep.mubr.bf16.mxu0 0
      %952 = vmatmul.mubr.bf16.gmra.mxu0 %v755
      %v953 = vpop.f32.mrf.mxu0
      %v954 = vadd.f32 0.0, %v953
      %v955 = vpop.f32.mrf.mxu0
      %v956 = vpop.f32.mrf.mxu0
      %v957 = vadd.f32 0.0, %v956
      %v958 = vpop.f32.mrf.mxu0
      %959 = vmatprep.mubr.bf16.mxu0 0
      %960 = vmatmul.mubr.bf16.gmra.mxu0 %v756
      %v961 = vpop.f32.mrf.mxu0
      %v962 = vadd.f32 0.0, %v961
      %v963 = vpop.f32.mrf.mxu0
      %v964 = vpop.f32.mrf.mxu0
      %v965 = vadd.f32 0.0, %v964
      %v966 = vpop.f32.mrf.mxu0
      %967 = vmatprep.mubr.bf16.mxu0 0
      %968 = vmatmul.mubr.bf16.gmra.mxu0 %v757
      %v969 = vpop.f32.mrf.mxu0
      %v970 = vadd.f32 0.0, %v969
      %v971 = vpop.f32.mrf.mxu0
      %v972 = vpop.f32.mrf.mxu0
      %v973 = vadd.f32 0.0, %v972
      %v974 = vpop.f32.mrf.mxu0
      %975 = vmatprep.mubr.bf16.mxu0 0
      %976 = vmatmul.mubr.bf16.gmra.mxu0 %v758
      %v977 = vpop.f32.mrf.mxu0
      %v978 = vadd.f32 0.0, %v977
      %v979 = vpop.f32.mrf.mxu0
      %v980 = vpop.f32.mrf.mxu0
      %v981 = vadd.f32 0.0, %v980
      %v982 = vpop.f32.mrf.mxu0
      %983 = vdwg.mxu0
      %v1016 = vunpack.c.l.b16 %v243
      %v1017 = vunpack.c.l.b16 %v244
      %v1018 = vunpack.c.l.b16 %v245
      %v1019 = vunpack.c.l.b16 %v246
      %v1020 = vunpack.c.l.b16 %v247
      %v1021 = vunpack.c.l.b16 %v248
      %v1022 = vunpack.c.l.b16 %v249
      %v1023 = vunpack.c.l.b16 %v250
      %v1024 = vunpack.c.l.b16 %v251
      %v1025 = vunpack.c.l.b16 %v252
      %v1026 = vunpack.c.l.b16 %v253
      %v1027 = vunpack.c.l.b16 %v254
      %v1028 = vunpack.c.l.b16 %v255
      %v1029 = vunpack.c.l.b16 %v256
      %v1030 = vunpack.c.l.b16 %v257
      %v1031 = vunpack.c.l.b16 %v258
      %v1032 = vunpack.c.l.b16 %v259
      %v1033 = vunpack.c.l.b16 %v260
      %v1034 = vunpack.c.l.b16 %v261
      %v1035 = vunpack.c.l.b16 %v262
      %v1036 = vunpack.c.l.b16 %v263
      %v1037 = vunpack.c.l.b16 %v264
      %v1038 = vunpack.c.l.b16 %v265
      %v1039 = vunpack.c.l.b16 %v266
      %v1040 = vunpack.c.l.b16 %v267
      %v1041 = vunpack.c.l.b16 %v268
      %v1042 = vunpack.c.l.b16 %v269
      %v1043 = vunpack.c.l.b16 %v270
      %v1044 = vunpack.c.l.b16 %v271
      %v1045 = vunpack.c.l.b16 %v272
      %v1046 = vunpack.c.l.b16 %v273
      %v1047 = vunpack.c.l.b16 %v274
      %v1048 = vpack.c.b16 %v1017, %v1016
      %v1049 = vpack.c.b16 %v1019, %v1018
      %v1050 = vpack.c.b16 %v1021, %v1020
      %v1051 = vpack.c.b16 %v1023, %v1022
      %v1052 = vpack.c.b16 %v1025, %v1024
      %v1053 = vpack.c.b16 %v1027, %v1026
      %v1054 = vpack.c.b16 %v1029, %v1028
      %v1055 = vpack.c.b16 %v1031, %v1030
      %v1056 = vpack.c.b16 %v1033, %v1032
      %v1057 = vpack.c.b16 %v1035, %v1034
      %v1058 = vpack.c.b16 %v1037, %v1036
      %v1059 = vpack.c.b16 %v1039, %v1038
      %v1060 = vpack.c.b16 %v1041, %v1040
      %v1061 = vpack.c.b16 %v1043, %v1042
      %v1062 = vpack.c.b16 %v1045, %v1044
      %v1063 = vpack.c.b16 %v1047, %v1046
      %v1096 = vunpack.c.l.b16 %v275
      %v1097 = vunpack.c.l.b16 %v276
      %v1098 = vunpack.c.l.b16 %v277
      %v1099 = vunpack.c.l.b16 %v278
      %v1100 = vunpack.c.l.b16 %v279
      %v1101 = vunpack.c.l.b16 %v280
      %v1102 = vunpack.c.l.b16 %v281
      %v1103 = vunpack.c.l.b16 %v282
      %v1104 = vunpack.c.l.b16 %v283
      %v1105 = vunpack.c.l.b16 %v284
      %v1106 = vunpack.c.l.b16 %v285
      %v1107 = vunpack.c.l.b16 %v286
      %v1108 = vunpack.c.l.b16 %v287
      %v1109 = vunpack.c.l.b16 %v288
      %v1110 = vunpack.c.l.b16 %v289
      %v1111 = vunpack.c.l.b16 %v290
      %v1112 = vpack.c.b16 %v1097, %v1096
      %v1113 = vpack.c.b16 %v1099, %v1098
      %v1114 = vpack.c.b16 %v1101, %v1100
      %v1115 = vpack.c.b16 %v1103, %v1102
      %v1116 = vpack.c.b16 %v1105, %v1104
      %v1117 = vpack.c.b16 %v1107, %v1106
      %v1118 = vpack.c.b16 %v1109, %v1108
      %v1119 = vpack.c.b16 %v1111, %v1110
      %1128 = vmatprep.subr.bf16.mxu0 0
      %1129 = vmatpush1.bf16.msra.mxu0 %v1119
      %1130 = vmatprep.subr.bf16.mxu0 0
      %1131 = vmatpush1.bf16.msra.mxu0 %v1118
      %1132 = vmatprep.subr.bf16.mxu0 0
      %1133 = vmatpush1.bf16.msra.mxu0 %v1117
      %1134 = vmatprep.subr.bf16.mxu0 0
      %1135 = vmatpush1.bf16.msra.mxu0 %v1116
      %1136 = vmatprep.subr.bf16.mxu0 0
      %1137 = vmatpush1.bf16.msra.mxu0 %v1115
      %1138 = vmatprep.subr.bf16.mxu0 0
      %1139 = vmatpush1.bf16.msra.mxu0 %v1114
      %1140 = vmatprep.subr.bf16.mxu0 0
      %1141 = vmatpush1.bf16.msra.mxu0 %v1113
      %1142 = vmatprep.subr.bf16.mxu0 0
      %1143 = vmatpush1.bf16.msra.mxu0 %v1112
      %1144 = vmatprep.subr.bf16.mxu0 0
      %1145 = vmatpush2.bf16.msra.mxu0 0
      %1146 = vmatprep.subr.bf16.mxu0 0
      %1147 = vmatpush2.bf16.msra.mxu0 0
      %1148 = vmatprep.subr.bf16.mxu0 0
      %1149 = vmatpush2.bf16.msra.mxu0 0
      %1150 = vmatprep.subr.bf16.mxu0 0
      %1151 = vmatpush2.bf16.msra.mxu0 0
      %1152 = vmatprep.subr.bf16.mxu0 0
      %1153 = vmatpush2.bf16.msra.mxu0 0
      %1154 = vmatprep.subr.bf16.mxu0 0
      %1155 = vmatpush2.bf16.msra.mxu0 0
      %1156 = vmatprep.subr.bf16.mxu0 0
      %1157 = vmatpush2.bf16.msra.mxu0 0
      %1158 = vmatprep.subr.bf16.mxu0 0
      %1159 = vmatpush2.bf16.msra.mxu0 0
      %1160 = vmatprep.mubr.bf16.mxu0 0
      %1161 = vmatmul.mubr.bf16.gmra.mxu0 %v1048
      %v1162 = vpop.f32.mrf.mxu0
      %v1163 = vadd.f32 %v858, %v1162
      %v1164 = vpop.f32.mrf.mxu0
      %v1165 = vpop.f32.mrf.mxu0
      %v1166 = vadd.f32 %v861, %v1165
      %v1167 = vpop.f32.mrf.mxu0
      %1168 = vmatprep.mubr.bf16.mxu0 0
      %1169 = vmatmul.mubr.bf16.gmra.mxu0 %v1049
      %v1170 = vpop.f32.mrf.mxu0
      %v1171 = vadd.f32 %v866, %v1170
      %v1172 = vpop.f32.mrf.mxu0
      %v1173 = vpop.f32.mrf.mxu0
      %v1174 = vadd.f32 %v869, %v1173
      %v1175 = vpop.f32.mrf.mxu0
      %1176 = vmatprep.mubr.bf16.mxu0 0
      %1177 = vmatmul.mubr.bf16.gmra.mxu0 %v1050
      %v1178 = vpop.f32.mrf.mxu0
      %v1179 = vadd.f32 %v874, %v1178
      %v1180 = vpop.f32.mrf.mxu0
      %v1181 = vpop.f32.mrf.mxu0
      %v1182 = vadd.f32 %v877, %v1181
      %v1183 = vpop.f32.mrf.mxu0
      %1184 = vmatprep.mubr.bf16.mxu0 0
      %1185 = vmatmul.mubr.bf16.gmra.mxu0 %v1051
      %v1186 = vpop.f32.mrf.mxu0
      %v1187 = vadd.f32 %v882, %v1186
      %v1188 = vpop.f32.mrf.mxu0
      %v1189 = vpop.f32.mrf.mxu0
      %v1190 = vadd.f32 %v885, %v1189
      %v1191 = vpop.f32.mrf.mxu0
      %1192 = vmatprep.mubr.bf16.mxu0 0
      %1193 = vmatmul.mubr.bf16.gmra.mxu0 %v1052
      %v1194 = vpop.f32.mrf.mxu0
      %v1195 = vadd.f32 %v890, %v1194
      %v1196 = vpop.f32.mrf.mxu0
      %v1197 = vpop.f32.mrf.mxu0
      %v1198 = vadd.f32 %v893, %v1197
      %v1199 = vpop.f32.mrf.mxu0
      %1200 = vmatprep.mubr.bf16.mxu0 0
      %1201 = vmatmul.mubr.bf16.gmra.mxu0 %v1053
      %v1202 = vpop.f32.mrf.mxu0
      %v1203 = vadd.f32 %v898, %v1202
      %v1204 = vpop.f32.mrf.mxu0
      %v1205 = vpop.f32.mrf.mxu0
      %v1206 = vadd.f32 %v901, %v1205
      %v1207 = vpop.f32.mrf.mxu0
      %1208 = vmatprep.mubr.bf16.mxu0 0
      %1209 = vmatmul.mubr.bf16.gmra.mxu0 %v1054
      %v1210 = vpop.f32.mrf.mxu0
      %v1211 = vadd.f32 %v906, %v1210
      %v1212 = vpop.f32.mrf.mxu0
      %v1213 = vpop.f32.mrf.mxu0
      %v1214 = vadd.f32 %v909, %v1213
      %v1215 = vpop.f32.mrf.mxu0
      %1216 = vmatprep.mubr.bf16.mxu0 0
      %1217 = vmatmul.mubr.bf16.gmra.mxu0 %v1055
      %v1218 = vpop.f32.mrf.mxu0
      %v1219 = vadd.f32 %v914, %v1218
      %v1220 = vpop.f32.mrf.mxu0
      %v1221 = vpop.f32.mrf.mxu0
      %v1222 = vadd.f32 %v917, %v1221
      %v1223 = vpop.f32.mrf.mxu0
      %1224 = vmatprep.mubr.bf16.mxu0 0
      %1225 = vmatmul.mubr.bf16.gmra.mxu0 %v1056
      %v1226 = vpop.f32.mrf.mxu0
      %v1227 = vadd.f32 %v922, %v1226
      %v1228 = vpop.f32.mrf.mxu0
      %v1229 = vpop.f32.mrf.mxu0
      %v1230 = vadd.f32 %v925, %v1229
      %v1231 = vpop.f32.mrf.mxu0
      %1232 = vmatprep.mubr.bf16.mxu0 0
      %1233 = vmatmul.mubr.bf16.gmra.mxu0 %v1057
      %v1234 = vpop.f32.mrf.mxu0
      %v1235 = vadd.f32 %v930, %v1234
      %v1236 = vpop.f32.mrf.mxu0
      %v1237 = vpop.f32.mrf.mxu0
      %v1238 = vadd.f32 %v933, %v1237
      %v1239 = vpop.f32.mrf.mxu0
      %1240 = vmatprep.mubr.bf16.mxu0 0
      %1241 = vmatmul.mubr.bf16.gmra.mxu0 %v1058
      %v1242 = vpop.f32.mrf.mxu0
      %v1243 = vadd.f32 %v938, %v1242
      %v1244 = vpop.f32.mrf.mxu0
      %v1245 = vpop.f32.mrf.mxu0
      %v1246 = vadd.f32 %v941, %v1245
      %v1247 = vpop.f32.mrf.mxu0
      %1248 = vmatprep.mubr.bf16.mxu0 0
      %1249 = vmatmul.mubr.bf16.gmra.mxu0 %v1059
      %v1250 = vpop.f32.mrf.mxu0
      %v1251 = vadd.f32 %v946, %v1250
      %v1252 = vpop.f32.mrf.mxu0
      %v1253 = vpop.f32.mrf.mxu0
      %v1254 = vadd.f32 %v949, %v1253
      %v1255 = vpop.f32.mrf.mxu0
      %1256 = vmatprep.mubr.bf16.mxu0 0
      %1257 = vmatmul.mubr.bf16.gmra.mxu0 %v1060
      %v1258 = vpop.f32.mrf.mxu0
      %v1259 = vadd.f32 %v954, %v1258
      %v1260 = vpop.f32.mrf.mxu0
      %v1261 = vpop.f32.mrf.mxu0
      %v1262 = vadd.f32 %v957, %v1261
      %v1263 = vpop.f32.mrf.mxu0
      %1264 = vmatprep.mubr.bf16.mxu0 0
      %1265 = vmatmul.mubr.bf16.gmra.mxu0 %v1061
      %v1266 = vpop.f32.mrf.mxu0
      %v1267 = vadd.f32 %v962, %v1266
      %v1268 = vpop.f32.mrf.mxu0
      %v1269 = vpop.f32.mrf.mxu0
      %v1270 = vadd.f32 %v965, %v1269
      %v1271 = vpop.f32.mrf.mxu0
      %1272 = vmatprep.mubr.bf16.mxu0 0
      %1273 = vmatmul.mubr.bf16.gmra.mxu0 %v1062
      %v1274 = vpop.f32.mrf.mxu0
      %v1275 = vadd.f32 %v970, %v1274
      %v1276 = vpop.f32.mrf.mxu0
      %v1277 = vpop.f32.mrf.mxu0
      %v1278 = vadd.f32 %v973, %v1277
      %v1279 = vpop.f32.mrf.mxu0
      %1280 = vmatprep.mubr.bf16.mxu0 0
      %1281 = vmatmul.mubr.bf16.gmra.mxu0 %v1063
      %v1282 = vpop.f32.mrf.mxu0
      %v1283 = vadd.f32 %v978, %v1282
      %v1284 = vpop.f32.mrf.mxu0
      %v1285 = vpop.f32.mrf.mxu0
      %v1286 = vadd.f32 %v981, %v1285
      %v1287 = vpop.f32.mrf.mxu0
      %1288 = vdwg.mxu0
      %v1289 = vld [vmem:[%s230] sm:$0xe]
      %v1290 = vld [vmem:[%s230 + $0xc] sm:$0xe]
      %v1291 = vld [vmem:[%s230 + $0x18] sm:$0xe]
      %v1292 = vld [vmem:[%s230 + $0x24] sm:$0xe]
      %v1293 = vld [vmem:[%s230 + $0x30] sm:$0xe]
      %v1294 = vld [vmem:[%s230 + $0x3c] sm:$0xe]
      %v1295 = vld [vmem:[%s230 + $0x48] sm:$0xe]
      %v1296 = vld [vmem:[%s230 + $0x54] sm:$0xe]
      %v1297 = vld [vmem:[%s230 + $0x60] sm:$0xe]
      %v1298 = vld [vmem:[%s230 + $0x6c] sm:$0xe]
      %v1299 = vld [vmem:[%s230 + $0x78] sm:$0xe]
      %v1300 = vld [vmem:[%s230 + $0x84] sm:$0xe]
      %v1301 = vld [vmem:[%s230 + $0x90] sm:$0xe]
      %v1302 = vld [vmem:[%s230 + $0x9c] sm:$0xe]
      %v1303 = vld [vmem:[%s230 + $0xa8] sm:$0xe]
      %v1304 = vld [vmem:[%s230 + $0xb4] sm:$0xe]
      %vm1337 = vcmask 1042432
      %vm1338 = vcmask 1046532
      %vm1339 = vmor %vm1337, %vm1338
      %v1340 = vrot.slane %v1289, 5
      %v1341 = vrot.slane %v1340, 4
      %v1342 = vrot.slane %v244, 5
      %v1343 = vsel %vm1339, %v1341, %v1342
      %v1344 = vrot.slane %v1342, 4
      %v1345 = vrot.slane %v291, 5
      %v1346 = vsel %vm1339, %v1344, %v1345
      %v1347 = vrot.slane %v1290, 5
      %v1348 = vrot.slane %v1347, 4
      %v1349 = vrot.slane %v246, 5
      %v1350 = vsel %vm1339, %v1348, %v1349
      %v1351 = vrot.slane %v1349, 4
      %v1352 = vrot.slane %v292, 5
      %v1353 = vsel %vm1339, %v1351, %v1352
      %v1354 = vrot.slane %v1291, 5
      %v1355 = vrot.slane %v1354, 4
      %v1356 = vrot.slane %v248, 5
      %v1357 = vsel %vm1339, %v1355, %v1356
      %v1358 = vrot.slane %v1356, 4
      %v1359 = vrot.slane %v293, 5
      %v1360 = vsel %vm1339, %v1358, %v1359
      %v1361 = vrot.slane %v1292, 5
      %v1362 = vrot.slane %v1361, 4
      %v1363 = vrot.slane %v250, 5
      %v1364 = vsel %vm1339, %v1362, %v1363
      %v1365 = vrot.slane %v1363, 4
      %v1366 = vrot.slane %v294, 5
      %v1367 = vsel %vm1339, %v1365, %v1366
      %v1368 = vrot.slane %v1293, 5
      %v1369 = vrot.slane %v1368, 4
      %v1370 = vrot.slane %v252, 5
      %v1371 = vsel %vm1339, %v1369, %v1370
      %v1372 = vrot.slane %v1370, 4
      %v1373 = vrot.slane %v295, 5
      %v1374 = vsel %vm1339, %v1372, %v1373
      %v1375 = vrot.slane %v1294, 5
      %v1376 = vrot.slane %v1375, 4
      %v1377 = vrot.slane %v254, 5
      %v1378 = vsel %vm1339, %v1376, %v1377
      %v1379 = vrot.slane %v1377, 4
      %v1380 = vrot.slane %v296, 5
      %v1381 = vsel %vm1339, %v1379, %v1380
      %v1382 = vrot.slane %v1295, 5
      %v1383 = vrot.slane %v1382, 4
      %v1384 = vrot.slane %v256, 5
      %v1385 = vsel %vm1339, %v1383, %v1384
      %v1386 = vrot.slane %v1384, 4
      %v1387 = vrot.slane %v297, 5
      %v1388 = vsel %vm1339, %v1386, %v1387
      %v1389 = vrot.slane %v1296, 5
      %v1390 = vrot.slane %v1389, 4
      %v1391 = vrot.slane %v258, 5
      %v1392 = vsel %vm1339, %v1390, %v1391
      %v1393 = vrot.slane %v1391, 4
      %v1394 = vrot.slane %v298, 5
      %v1395 = vsel %vm1339, %v1393, %v1394
      %v1396 = vrot.slane %v1297, 5
      %v1397 = vrot.slane %v1396, 4
      %v1398 = vrot.slane %v260, 5
      %v1399 = vsel %vm1339, %v1397, %v1398
      %v1400 = vrot.slane %v1398, 4
      %v1401 = vrot.slane %v299, 5
      %v1402 = vsel %vm1339, %v1400, %v1401
      %v1403 = vrot.slane %v1298, 5
      %v1404 = vrot.slane %v1403, 4
      %v1405 = vrot.slane %v262, 5
      %v1406 = vsel %vm1339, %v1404, %v1405
      %v1407 = vrot.slane %v1405, 4
      %v1408 = vrot.slane %v300, 5
      %v1409 = vsel %vm1339, %v1407, %v1408
      %v1410 = vrot.slane %v1299, 5
      %v1411 = vrot.slane %v1410, 4
      %v1412 = vrot.slane %v264, 5
      %v1413 = vsel %vm1339, %v1411, %v1412
      %v1414 = vrot.slane %v1412, 4
      %v1415 = vrot.slane %v301, 5
      %v1416 = vsel %vm1339, %v1414, %v1415
      %v1417 = vrot.slane %v1300, 5
      %v1418 = vrot.slane %v1417, 4
      %v1419 = vrot.slane %v266, 5
      %v1420 = vsel %vm1339, %v1418, %v1419
      %v1421 = vrot.slane %v1419, 4
      %v1422 = vrot.slane %v302, 5
      %v1423 = vsel %vm1339, %v1421, %v1422
      %v1424 = vrot.slane %v1301, 5
      %v1425 = vrot.slane %v1424, 4
      %v1426 = vrot.slane %v268, 5
      %v1427 = vsel %vm1339, %v1425, %v1426
      %v1428 = vrot.slane %v1426, 4
      %v1429 = vrot.slane %v303, 5
      %v1430 = vsel %vm1339, %v1428, %v1429
      %v1431 = vrot.slane %v1302, 5
      %v1432 = vrot.slane %v1431, 4
      %v1433 = vrot.slane %v270, 5
      %v1434 = vsel %vm1339, %v1432, %v1433
      %v1435 = vrot.slane %v1433, 4
      %v1436 = vrot.slane %v304, 5
      %v1437 = vsel %vm1339, %v1435, %v1436
      %v1438 = vrot.slane %v1303, 5
      %v1439 = vrot.slane %v1438, 4
      %v1440 = vrot.slane %v272, 5
      %v1441 = vsel %vm1339, %v1439, %v1440
      %v1442 = vrot.slane %v1440, 4
      %v1443 = vrot.slane %v305, 5
      %v1444 = vsel %vm1339, %v1442, %v1443
      %v1445 = vrot.slane %v1304, 5
      %v1446 = vrot.slane %v1445, 4
      %v1447 = vrot.slane %v274, 5
      %v1448 = vsel %vm1339, %v1446, %v1447
      %v1449 = vrot.slane %v1447, 4
      %v1450 = vrot.slane %v306, 5
      %v1451 = vsel %vm1339, %v1449, %v1450
      %s1452 = scalar_lea.vmem %s1, 128
      %v1453 = vld [vmem:[%s1452] sm:$0xf]
      %v1454 = vld [vmem:[%s1452 + $0x4] sm:$0xf]
      %v1455 = vld [vmem:[%s1452 + $0x8] sm:$0xf]
      %v1456 = vld [vmem:[%s1452 + $0xc] sm:$0xf]
      %v1457 = vld [vmem:[%s1452 + $0x10] sm:$0xf]
      %v1458 = vld [vmem:[%s1452 + $0x14] sm:$0xf]
      %v1459 = vld [vmem:[%s1452 + $0x18] sm:$0xf]
      %v1460 = vld [vmem:[%s1452 + $0x1c] sm:$0xf]
      %v1461 = vld [vmem:[%s1452 + $0x20] sm:$0xf]
      %v1462 = vld [vmem:[%s1452 + $0x24] sm:$0xf]
      %v1463 = vld [vmem:[%s1452 + $0x28] sm:$0xf]
      %v1464 = vld [vmem:[%s1452 + $0x2c] sm:$0xf]
      %v1465 = vld [vmem:[%s1452 + $0x30] sm:$0xf]
      %v1466 = vld [vmem:[%s1452 + $0x34] sm:$0xf]
      %v1467 = vld [vmem:[%s1452 + $0x38] sm:$0xf]
      %v1468 = vld [vmem:[%s1452 + $0x3c] sm:$0xf]
      %v1469 = vunpack.c.l.b16 %v1343
      %v1470 = vunpack.c.l.b16 %v1346
      %v1471 = vunpack.c.l.b16 %v1350
      %v1472 = vunpack.c.l.b16 %v1353
      %v1473 = vunpack.c.l.b16 %v1357
      %v1474 = vunpack.c.l.b16 %v1360
      %v1475 = vunpack.c.l.b16 %v1364
      %v1476 = vunpack.c.l.b16 %v1367
      %v1477 = vunpack.c.l.b16 %v1371
      %v1478 = vunpack.c.l.b16 %v1374
      %v1479 = vunpack.c.l.b16 %v1378
      %v1480 = vunpack.c.l.b16 %v1381
      %v1481 = vunpack.c.l.b16 %v1385
      %v1482 = vunpack.c.l.b16 %v1388
      %v1483 = vunpack.c.l.b16 %v1392
      %v1484 = vunpack.c.l.b16 %v1395
      %v1485 = vunpack.c.l.b16 %v1399
      %v1486 = vunpack.c.l.b16 %v1402
      %v1487 = vunpack.c.l.b16 %v1406
      %v1488 = vunpack.c.l.b16 %v1409
      %v1489 = vunpack.c.l.b16 %v1413
      %v1490 = vunpack.c.l.b16 %v1416
      %v1491 = vunpack.c.l.b16 %v1420
      %v1492 = vunpack.c.l.b16 %v1423
      %v1493 = vunpack.c.l.b16 %v1427
      %v1494 = vunpack.c.l.b16 %v1430
      %v1495 = vunpack.c.l.b16 %v1434
      %v1496 = vunpack.c.l.b16 %v1437
      %v1497 = vunpack.c.l.b16 %v1441
      %v1498 = vunpack.c.l.b16 %v1444
      %v1499 = vunpack.c.l.b16 %v1448
      %v1500 = vunpack.c.l.b16 %v1451
      %v1501 = vpack.c.b16 %v1470, %v1469
      %v1502 = vpack.c.b16 %v1472, %v1471
      %v1503 = vpack.c.b16 %v1474, %v1473
      %v1504 = vpack.c.b16 %v1476, %v1475
      %v1505 = vpack.c.b16 %v1478, %v1477
      %v1506 = vpack.c.b16 %v1480, %v1479
      %v1507 = vpack.c.b16 %v1482, %v1481
      %v1508 = vpack.c.b16 %v1484, %v1483
      %v1509 = vpack.c.b16 %v1486, %v1485
      %v1510 = vpack.c.b16 %v1488, %v1487
      %v1511 = vpack.c.b16 %v1490, %v1489
      %v1512 = vpack.c.b16 %v1492, %v1491
      %v1513 = vpack.c.b16 %v1494, %v1493
      %v1514 = vpack.c.b16 %v1496, %v1495
      %v1515 = vpack.c.b16 %v1498, %v1497
      %v1516 = vpack.c.b16 %v1500, %v1499
      %v1549 = vunpack.c.l.b16 %v1453
      %v1550 = vunpack.c.l.b16 %v1454
      %v1551 = vunpack.c.l.b16 %v1455
      %v1552 = vunpack.c.l.b16 %v1456
      %v1553 = vunpack.c.l.b16 %v1457
      %v1554 = vunpack.c.l.b16 %v1458
      %v1555 = vunpack.c.l.b16 %v1459
      %v1556 = vunpack.c.l.b16 %v1460
      %v1557 = vunpack.c.l.b16 %v1461
      %v1558 = vunpack.c.l.b16 %v1462
      %v1559 = vunpack.c.l.b16 %v1463
      %v1560 = vunpack.c.l.b16 %v1464
      %v1561 = vunpack.c.l.b16 %v1465
      %v1562 = vunpack.c.l.b16 %v1466
      %v1563 = vunpack.c.l.b16 %v1467
      %v1564 = vunpack.c.l.b16 %v1468
      %v1565 = vpack.c.b16 %v1550, %v1549
      %v1566 = vpack.c.b16 %v1552, %v1551
      %v1567 = vpack.c.b16 %v1554, %v1553
      %v1568 = vpack.c.b16 %v1556, %v1555
      %v1569 = vpack.c.b16 %v1558, %v1557
      %v1570 = vpack.c.b16 %v1560, %v1559
      %v1571 = vpack.c.b16 %v1562, %v1561
      %v1572 = vpack.c.b16 %v1564, %v1563
      %1581 = vmatprep.subr.bf16.mxu0 0
      %1582 = vmatpush1.bf16.msra.mxu0 %v1572
      %1583 = vmatprep.subr.bf16.mxu0 0
      %1584 = vmatpush1.bf16.msra.mxu0 %v1571
      %1585 = vmatprep.subr.bf16.mxu0 0
      %1586 = vmatpush1.bf16.msra.mxu0 %v1570
      %1587 = vmatprep.subr.bf16.mxu0 0
      %1588 = vmatpush1.bf16.msra.mxu0 %v1569
      %1589 = vmatprep.subr.bf16.mxu0 0
      %1590 = vmatpush1.bf16.msra.mxu0 %v1568
      %1591 = vmatprep.subr.bf16.mxu0 0
      %1592 = vmatpush1.bf16.msra.mxu0 %v1567
      %1593 = vmatprep.subr.bf16.mxu0 0
      %1594 = vmatpush1.bf16.msra.mxu0 %v1566
      %1595 = vmatprep.subr.bf16.mxu0 0
      %1596 = vmatpush1.bf16.msra.mxu0 %v1565
      %1597 = vmatprep.subr.bf16.mxu0 0
      %1598 = vmatpush2.bf16.msra.mxu0 0
      %1599 = vmatprep.subr.bf16.mxu0 0
      %1600 = vmatpush2.bf16.msra.mxu0 0
      %1601 = vmatprep.subr.bf16.mxu0 0
      %1602 = vmatpush2.bf16.msra.mxu0 0
      %1603 = vmatprep.subr.bf16.mxu0 0
      %1604 = vmatpush2.bf16.msra.mxu0 0
      %1605 = vmatprep.subr.bf16.mxu0 0
      %1606 = vmatpush2.bf16.msra.mxu0 0
      %1607 = vmatprep.subr.bf16.mxu0 0
      %1608 = vmatpush2.bf16.msra.mxu0 0
      %1609 = vmatprep.subr.bf16.mxu0 0
      %1610 = vmatpush2.bf16.msra.mxu0 0
      %1611 = vmatprep.subr.bf16.mxu0 0
      %1612 = vmatpush2.bf16.msra.mxu0 0
      %1613 = vmatprep.mubr.bf16.mxu0 0
      %1614 = vmatmul.mubr.bf16.gmra.mxu0 %v1501
      %v1615 = vpop.f32.mrf.mxu0
      %v1616 = vadd.f32 0.0, %v1615
      %v1617 = vpop.f32.mrf.mxu0
      %v1618 = vpop.f32.mrf.mxu0
      %v1619 = vadd.f32 0.0, %v1618
      %v1620 = vpop.f32.mrf.mxu0
      %1621 = vmatprep.mubr.bf16.mxu0 0
      %1622 = vmatmul.mubr.bf16.gmra.mxu0 %v1502
      %v1623 = vpop.f32.mrf.mxu0
      %v1624 = vadd.f32 0.0, %v1623
      %v1625 = vpop.f32.mrf.mxu0
      %v1626 = vpop.f32.mrf.mxu0
      %v1627 = vadd.f32 0.0, %v1626
      %v1628 = vpop.f32.mrf.mxu0
      %1629 = vmatprep.mubr.bf16.mxu0 0
      %1630 = vmatmul.mubr.bf16.gmra.mxu0 %v1503
      %v1631 = vpop.f32.mrf.mxu0
      %v1632 = vadd.f32 0.0, %v1631
      %v1633 = vpop.f32.mrf.mxu0
      %v1634 = vpop.f32.mrf.mxu0
      %v1635 = vadd.f32 0.0, %v1634
      %v1636 = vpop.f32.mrf.mxu0
      %1637 = vmatprep.mubr.bf16.mxu0 0
      %1638 = vmatmul.mubr.bf16.gmra.mxu0 %v1504
      %v1639 = vpop.f32.mrf.mxu0
      %v1640 = vadd.f32 0.0, %v1639
      %v1641 = vpop.f32.mrf.mxu0
      %v1642 = vpop.f32.mrf.mxu0
      %v1643 = vadd.f32 0.0, %v1642
      %v1644 = vpop.f32.mrf.mxu0
      %1645 = vmatprep.mubr.bf16.mxu0 0
      %1646 = vmatmul.mubr.bf16.gmra.mxu0 %v1505
      %v1647 = vpop.f32.mrf.mxu0
      %v1648 = vadd.f32 0.0, %v1647
      %v1649 = vpop.f32.mrf.mxu0
      %v1650 = vpop.f32.mrf.mxu0
      %v1651 = vadd.f32 0.0, %v1650
      %v1652 = vpop.f32.mrf.mxu0
      %1653 = vmatprep.mubr.bf16.mxu0 0
      %1654 = vmatmul.mubr.bf16.gmra.mxu0 %v1506
      %v1655 = vpop.f32.mrf.mxu0
      %v1656 = vadd.f32 0.0, %v1655
      %v1657 = vpop.f32.mrf.mxu0
      %v1658 = vpop.f32.mrf.mxu0
      %v1659 = vadd.f32 0.0, %v1658
      %v1660 = vpop.f32.mrf.mxu0
      %1661 = vmatprep.mubr.bf16.mxu0 0
      %1662 = vmatmul.mubr.bf16.gmra.mxu0 %v1507
      %v1663 = vpop.f32.mrf.mxu0
      %v1664 = vadd.f32 0.0, %v1663
      %v1665 = vpop.f32.mrf.mxu0
      %v1666 = vpop.f32.mrf.mxu0
      %v1667 = vadd.f32 0.0, %v1666
      %v1668 = vpop.f32.mrf.mxu0
      %1669 = vmatprep.mubr.bf16.mxu0 0
      %1670 = vmatmul.mubr.bf16.gmra.mxu0 %v1508
      %v1671 = vpop.f32.mrf.mxu0
      %v1672 = vadd.f32 0.0, %v1671
      %v1673 = vpop.f32.mrf.mxu0
      %v1674 = vpop.f32.mrf.mxu0
      %v1675 = vadd.f32 0.0, %v1674
      %v1676 = vpop.f32.mrf.mxu0
      %1677 = vmatprep.mubr.bf16.mxu0 0
      %1678 = vmatmul.mubr.bf16.gmra.mxu0 %v1509
      %v1679 = vpop.f32.mrf.mxu0
      %v1680 = vadd.f32 0.0, %v1679
      %v1681 = vpop.f32.mrf.mxu0
      %v1682 = vpop.f32.mrf.mxu0
      %v1683 = vadd.f32 0.0, %v1682
      %v1684 = vpop.f32.mrf.mxu0
      %1685 = vmatprep.mubr.bf16.mxu0 0
      %1686 = vmatmul.mubr.bf16.gmra.mxu0 %v1510
      %v1687 = vpop.f32.mrf.mxu0
      %v1688 = vadd.f32 0.0, %v1687
      %v1689 = vpop.f32.mrf.mxu0
      %v1690 = vpop.f32.mrf.mxu0
      %v1691 = vadd.f32 0.0, %v1690
      %v1692 = vpop.f32.mrf.mxu0
      %1693 = vmatprep.mubr.bf16.mxu0 0
      %1694 = vmatmul.mubr.bf16.gmra.mxu0 %v1511
      %v1695 = vpop.f32.mrf.mxu0
      %v1696 = vadd.f32 0.0, %v1695
      %v1697 = vpop.f32.mrf.mxu0
      %v1698 = vpop.f32.mrf.mxu0
      %v1699 = vadd.f32 0.0, %v1698
      %v1700 = vpop.f32.mrf.mxu0
      %1701 = vmatprep.mubr.bf16.mxu0 0
      %1702 = vmatmul.mubr.bf16.gmra.mxu0 %v1512
      %v1703 = vpop.f32.mrf.mxu0
      %v1704 = vadd.f32 0.0, %v1703
      %v1705 = vpop.f32.mrf.mxu0
      %v1706 = vpop.f32.mrf.mxu0
      %v1707 = vadd.f32 0.0, %v1706
      %v1708 = vpop.f32.mrf.mxu0
      %1709 = vmatprep.mubr.bf16.mxu0 0
      %1710 = vmatmul.mubr.bf16.gmra.mxu0 %v1513
      %v1711 = vpop.f32.mrf.mxu0
      %v1712 = vadd.f32 0.0, %v1711
      %v1713 = vpop.f32.mrf.mxu0
      %v1714 = vpop.f32.mrf.mxu0
      %v1715 = vadd.f32 0.0, %v1714
      %v1716 = vpop.f32.mrf.mxu0
      %1717 = vmatprep.mubr.bf16.mxu0 0
      %1718 = vmatmul.mubr.bf16.gmra.mxu0 %v1514
      %v1719 = vpop.f32.mrf.mxu0
      %v1720 = vadd.f32 0.0, %v1719
      %v1721 = vpop.f32.mrf.mxu0
      %v1722 = vpop.f32.mrf.mxu0
      %v1723 = vadd.f32 0.0, %v1722
      %v1724 = vpop.f32.mrf.mxu0
      %1725 = vmatprep.mubr.bf16.mxu0 0
      %1726 = vmatmul.mubr.bf16.gmra.mxu0 %v1515
      %v1727 = vpop.f32.mrf.mxu0
      %v1728 = vadd.f32 0.0, %v1727
      %v1729 = vpop.f32.mrf.mxu0
      %v1730 = vpop.f32.mrf.mxu0
      %v1731 = vadd.f32 0.0, %v1730
      %v1732 = vpop.f32.mrf.mxu0
      %1733 = vmatprep.mubr.bf16.mxu0 0
      %1734 = vmatmul.mubr.bf16.gmra.mxu0 %v1516
      %v1735 = vpop.f32.mrf.mxu0
      %v1736 = vadd.f32 0.0, %v1735
      %v1737 = vpop.f32.mrf.mxu0
      %v1738 = vpop.f32.mrf.mxu0
      %v1739 = vadd.f32 0.0, %v1738
      %v1740 = vpop.f32.mrf.mxu0
      %1741 = vdwg.mxu0
      %v1742 = vadd.f32 %v1163, %v1616
      %v1743 = vadd.f32 %v1166, %v1619
      %v1744 = vadd.f32 %v1171, %v1624
      %v1745 = vadd.f32 %v1174, %v1627
      %v1746 = vadd.f32 %v1179, %v1632
      %v1747 = vadd.f32 %v1182, %v1635
      %v1748 = vadd.f32 %v1187, %v1640
      %v1749 = vadd.f32 %v1190, %v1643
      %v1750 = vadd.f32 %v1195, %v1648
      %v1751 = vadd.f32 %v1198, %v1651
      %v1752 = vadd.f32 %v1203, %v1656
      %v1753 = vadd.f32 %v1206, %v1659
      %v1754 = vadd.f32 %v1211, %v1664
      %v1755 = vadd.f32 %v1214, %v1667
      %v1756 = vadd.f32 %v1219, %v1672
      %v1757 = vadd.f32 %v1222, %v1675
      %v1758 = vadd.f32 %v1227, %v1680
      %v1759 = vadd.f32 %v1230, %v1683
      %v1760 = vadd.f32 %v1235, %v1688
      %v1761 = vadd.f32 %v1238, %v1691
      %v1762 = vadd.f32 %v1243, %v1696
      %v1763 = vadd.f32 %v1246, %v1699
      %v1764 = vadd.f32 %v1251, %v1704
      %v1765 = vadd.f32 %v1254, %v1707
      %v1766 = vadd.f32 %v1259, %v1712
      %v1767 = vadd.f32 %v1262, %v1715
      %v1768 = vadd.f32 %v1267, %v1720
      %v1769 = vadd.f32 %v1270, %v1723
      %v1770 = vadd.f32 %v1275, %v1728
      %v1771 = vadd.f32 %v1278, %v1731
      %v1772 = vadd.f32 %v1283, %v1736
      %v1773 = vadd.f32 %v1286, %v1739
      %s1774 = scalar_lea.vmem %s230, 12
      %v1775 = vld [vmem:[%s1774] sm:$0xf]
      %v1776 = vld [vmem:[%s1774 + $0x4] sm:$0xf]
      %v1777 = vld [vmem:[%s1774 + $0xc] sm:$0xf]
      %v1778 = vld [vmem:[%s1774 + $0x10] sm:$0xf]
      %v1779 = vld [vmem:[%s1774 + $0x18] sm:$0xf]
      %v1780 = vld [vmem:[%s1774 + $0x1c] sm:$0xf]
      %v1781 = vld [vmem:[%s1774 + $0x24] sm:$0xf]
      %v1782 = vld [vmem:[%s1774 + $0x28] sm:$0xf]
      %v1783 = vld [vmem:[%s1774 + $0x30] sm:$0xf]
      %v1784 = vld [vmem:[%s1774 + $0x34] sm:$0xf]
      %v1785 = vld [vmem:[%s1774 + $0x3c] sm:$0xf]
      %v1786 = vld [vmem:[%s1774 + $0x40] sm:$0xf]
      %v1787 = vld [vmem:[%s1774 + $0x48] sm:$0xf]
      %v1788 = vld [vmem:[%s1774 + $0x4c] sm:$0xf]
      %v1789 = vld [vmem:[%s1774 + $0x54] sm:$0xf]
      %v1790 = vld [vmem:[%s1774 + $0x58] sm:$0xf]
      %v1791 = vld [vmem:[%s1774 + $0x60] sm:$0xf]
      %v1792 = vld [vmem:[%s1774 + $0x64] sm:$0xf]
      %v1793 = vld [vmem:[%s1774 + $0x6c] sm:$0xf]
      %v1794 = vld [vmem:[%s1774 + $0x70] sm:$0xf]
      %v1795 = vld [vmem:[%s1774 + $0x78] sm:$0xf]
      %v1796 = vld [vmem:[%s1774 + $0x7c] sm:$0xf]
      %v1797 = vld [vmem:[%s1774 + $0x84] sm:$0xf]
      %v1798 = vld [vmem:[%s1774 + $0x88] sm:$0xf]
      %v1799 = vld [vmem:[%s1774 + $0x90] sm:$0xf]
      %v1800 = vld [vmem:[%s1774 + $0x94] sm:$0xf]
      %v1801 = vld [vmem:[%s1774 + $0x9c] sm:$0xf]
      %v1802 = vld [vmem:[%s1774 + $0xa0] sm:$0xf]
      %v1803 = vld [vmem:[%s1774 + $0xa8] sm:$0xf]
      %v1804 = vld [vmem:[%s1774 + $0xac] sm:$0xf]
      %v1805 = vld [vmem:[%s1774 + $0xb4] sm:$0xf]
      %v1806 = vld [vmem:[%s1774 + $0xb8] sm:$0xf]
      %s1807 = scalar_lea.vmem %s1, 192
      %v1808 = vld [vmem:[%s1807] sm:$0xf]
      %v1809 = vld [vmem:[%s1807 + $0x4] sm:$0xf]
      %v1810 = vld [vmem:[%s1807 + $0x8] sm:$0xf]
      %v1811 = vld [vmem:[%s1807 + $0xc] sm:$0xf]
      %v1812 = vld [vmem:[%s1807 + $0x10] sm:$0xf]
      %v1813 = vld [vmem:[%s1807 + $0x14] sm:$0xf]
      %v1814 = vld [vmem:[%s1807 + $0x18] sm:$0xf]
      %v1815 = vld [vmem:[%s1807 + $0x1c] sm:$0xf]
      %v1816 = vld [vmem:[%s1807 + $0x20] sm:$0xf]
      %v1817 = vld [vmem:[%s1807 + $0x24] sm:$0xf]
      %v1818 = vld [vmem:[%s1807 + $0x28] sm:$0xf]
      %v1819 = vld [vmem:[%s1807 + $0x2c] sm:$0xf]
      %v1820 = vld [vmem:[%s1807 + $0x30] sm:$0xf]
      %v1821 = vld [vmem:[%s1807 + $0x34] sm:$0xf]
      %v1822 = vld [vmem:[%s1807 + $0x38] sm:$0xf]
      %v1823 = vld [vmem:[%s1807 + $0x3c] sm:$0xf]
      %v1856 = vunpack.c.l.b16 %v1775
      %v1857 = vunpack.c.l.b16 %v1776
      %v1858 = vunpack.c.l.b16 %v1777
      %v1859 = vunpack.c.l.b16 %v1778
      %v1860 = vunpack.c.l.b16 %v1779
      %v1861 = vunpack.c.l.b16 %v1780
      %v1862 = vunpack.c.l.b16 %v1781
      %v1863 = vunpack.c.l.b16 %v1782
      %v1864 = vunpack.c.l.b16 %v1783
      %v1865 = vunpack.c.l.b16 %v1784
      %v1866 = vunpack.c.l.b16 %v1785
      %v1867 = vunpack.c.l.b16 %v1786
      %v1868 = vunpack.c.l.b16 %v1787
      %v1869 = vunpack.c.l.b16 %v1788
      %v1870 = vunpack.c.l.b16 %v1789
      %v1871 = vunpack.c.l.b16 %v1790
      %v1872 = vunpack.c.l.b16 %v1791
      %v1873 = vunpack.c.l.b16 %v1792
      %v1874 = vunpack.c.l.b16 %v1793
      %v1875 = vunpack.c.l.b16 %v1794
      %v1876 = vunpack.c.l.b16 %v1795
      %v1877 = vunpack.c.l.b16 %v1796
      %v1878 = vunpack.c.l.b16 %v1797
      %v1879 = vunpack.c.l.b16 %v1798
      %v1880 = vunpack.c.l.b16 %v1799
      %v1881 = vunpack.c.l.b16 %v1800
      %v1882 = vunpack.c.l.b16 %v1801
      %v1883 = vunpack.c.l.b16 %v1802
      %v1884 = vunpack.c.l.b16 %v1803
      %v1885 = vunpack.c.l.b16 %v1804
      %v1886 = vunpack.c.l.b16 %v1805
      %v1887 = vunpack.c.l.b16 %v1806
      %v1888 = vpack.c.b16 %v1857, %v1856
      %v1889 = vpack.c.b16 %v1859, %v1858
      %v1890 = vpack.c.b16 %v1861, %v1860
      %v1891 = vpack.c.b16 %v1863, %v1862
      %v1892 = vpack.c.b16 %v1865, %v1864
      %v1893 = vpack.c.b16 %v1867, %v1866
      %v1894 = vpack.c.b16 %v1869, %v1868
      %v1895 = vpack.c.b16 %v1871, %v1870
      %v1896 = vpack.c.b16 %v1873, %v1872
      %v1897 = vpack.c.b16 %v1875, %v1874
      %v1898 = vpack.c.b16 %v1877, %v1876
      %v1899 = vpack.c.b16 %v1879, %v1878
      %v1900 = vpack.c.b16 %v1881, %v1880
      %v1901 = vpack.c.b16 %v1883, %v1882
      %v1902 = vpack.c.b16 %v1885, %v1884
      %v1903 = vpack.c.b16 %v1887, %v1886
      %v1936 = vunpack.c.l.b16 %v1808
      %v1937 = vunpack.c.l.b16 %v1809
      %v1938 = vunpack.c.l.b16 %v1810
      %v1939 = vunpack.c.l.b16 %v1811
      %v1940 = vunpack.c.l.b16 %v1812
      %v1941 = vunpack.c.l.b16 %v1813
      %v1942 = vunpack.c.l.b16 %v1814
      %v1943 = vunpack.c.l.b16 %v1815
      %v1944 = vunpack.c.l.b16 %v1816
      %v1945 = vunpack.c.l.b16 %v1817
      %v1946 = vunpack.c.l.b16 %v1818
      %v1947 = vunpack.c.l.b16 %v1819
      %v1948 = vunpack.c.l.b16 %v1820
      %v1949 = vunpack.c.l.b16 %v1821
      %v1950 = vunpack.c.l.b16 %v1822
      %v1951 = vunpack.c.l.b16 %v1823
      %v1952 = vpack.c.b16 %v1937, %v1936
      %v1953 = vpack.c.b16 %v1939, %v1938
      %v1954 = vpack.c.b16 %v1941, %v1940
      %v1955 = vpack.c.b16 %v1943, %v1942
      %v1956 = vpack.c.b16 %v1945, %v1944
      %v1957 = vpack.c.b16 %v1947, %v1946
      %v1958 = vpack.c.b16 %v1949, %v1948
      %v1959 = vpack.c.b16 %v1951, %v1950
      %1968 = vmatprep.subr.bf16.mxu0 0
      %1969 = vmatpush1.bf16.msra.mxu0 %v1959
      %1970 = vmatprep.subr.bf16.mxu0 0
      %1971 = vmatpush1.bf16.msra.mxu0 %v1958
      %1972 = vmatprep.subr.bf16.mxu0 0
      %1973 = vmatpush1.bf16.msra.mxu0 %v1957
      %1974 = vmatprep.subr.bf16.mxu0 0
      %1975 = vmatpush1.bf16.msra.mxu0 %v1956
      %1976 = vmatprep.subr.bf16.mxu0 0
      %1977 = vmatpush1.bf16.msra.mxu0 %v1955
      %1978 = vmatprep.subr.bf16.mxu0 0
      %1979 = vmatpush1.bf16.msra.mxu0 %v1954
      %1980 = vmatprep.subr.bf16.mxu0 0
      %1981 = vmatpush1.bf16.msra.mxu0 %v1953
      %1982 = vmatprep.subr.bf16.mxu0 0
      %1983 = vmatpush1.bf16.msra.mxu0 %v1952
      %1984 = vmatprep.subr.bf16.mxu0 0
      %1985 = vmatpush2.bf16.msra.mxu0 0
      %1986 = vmatprep.subr.bf16.mxu0 0
      %1987 = vmatpush2.bf16.msra.mxu0 0
      %1988 = vmatprep.subr.bf16.mxu0 0
      %1989 = vmatpush2.bf16.msra.mxu0 0
      %1990 = vmatprep.subr.bf16.mxu0 0
      %1991 = vmatpush2.bf16.msra.mxu0 0
      %1992 = vmatprep.subr.bf16.mxu0 0
      %1993 = vmatpush2.bf16.msra.mxu0 0
      %1994 = vmatprep.subr.bf16.mxu0 0
      %1995 = vmatpush2.bf16.msra.mxu0 0
      %1996 = vmatprep.subr.bf16.mxu0 0
      %1997 = vmatpush2.bf16.msra.mxu0 0
      %1998 = vmatprep.subr.bf16.mxu0 0
      %1999 = vmatpush2.bf16.msra.mxu0 0
      %2000 = vmatprep.mubr.bf16.mxu0 0
      %2001 = vmatmul.mubr.bf16.gmra.mxu0 %v1888
      %v2002 = vpop.f32.mrf.mxu0
      %v2003 = vadd.f32 0.0, %v2002
      %v2004 = vpop.f32.mrf.mxu0
      %v2005 = vpop.f32.mrf.mxu0
      %v2006 = vadd.f32 0.0, %v2005
      %v2007 = vpop.f32.mrf.mxu0
      %2008 = vmatprep.mubr.bf16.mxu0 0
      %2009 = vmatmul.mubr.bf16.gmra.mxu0 %v1889
      %v2010 = vpop.f32.mrf.mxu0
      %v2011 = vadd.f32 0.0, %v2010
      %v2012 = vpop.f32.mrf.mxu0
      %v2013 = vpop.f32.mrf.mxu0
      %v2014 = vadd.f32 0.0, %v2013
      %v2015 = vpop.f32.mrf.mxu0
      %2016 = vmatprep.mubr.bf16.mxu0 0
      %2017 = vmatmul.mubr.bf16.gmra.mxu0 %v1890
      %v2018 = vpop.f32.mrf.mxu0
      %v2019 = vadd.f32 0.0, %v2018
      %v2020 = vpop.f32.mrf.mxu0
      %v2021 = vpop.f32.mrf.mxu0
      %v2022 = vadd.f32 0.0, %v2021
      %v2023 = vpop.f32.mrf.mxu0
      %2024 = vmatprep.mubr.bf16.mxu0 0
      %2025 = vmatmul.mubr.bf16.gmra.mxu0 %v1891
      %v2026 = vpop.f32.mrf.mxu0
      %v2027 = vadd.f32 0.0, %v2026
      %v2028 = vpop.f32.mrf.mxu0
      %v2029 = vpop.f32.mrf.mxu0
      %v2030 = vadd.f32 0.0, %v2029
      %v2031 = vpop.f32.mrf.mxu0
      %2032 = vmatprep.mubr.bf16.mxu0 0
      %2033 = vmatmul.mubr.bf16.gmra.mxu0 %v1892
      %v2034 = vpop.f32.mrf.mxu0
      %v2035 = vadd.f32 0.0, %v2034
      %v2036 = vpop.f32.mrf.mxu0
      %v2037 = vpop.f32.mrf.mxu0
      %v2038 = vadd.f32 0.0, %v2037
      %v2039 = vpop.f32.mrf.mxu0
      %2040 = vmatprep.mubr.bf16.mxu0 0
      %2041 = vmatmul.mubr.bf16.gmra.mxu0 %v1893
      %v2042 = vpop.f32.mrf.mxu0
      %v2043 = vadd.f32 0.0, %v2042
      %v2044 = vpop.f32.mrf.mxu0
      %v2045 = vpop.f32.mrf.mxu0
      %v2046 = vadd.f32 0.0, %v2045
      %v2047 = vpop.f32.mrf.mxu0
      %2048 = vmatprep.mubr.bf16.mxu0 0
      %2049 = vmatmul.mubr.bf16.gmra.mxu0 %v1894
      %v2050 = vpop.f32.mrf.mxu0
      %v2051 = vadd.f32 0.0, %v2050
      %v2052 = vpop.f32.mrf.mxu0
      %v2053 = vpop.f32.mrf.mxu0
      %v2054 = vadd.f32 0.0, %v2053
      %v2055 = vpop.f32.mrf.mxu0
      %2056 = vmatprep.mubr.bf16.mxu0 0
      %2057 = vmatmul.mubr.bf16.gmra.mxu0 %v1895
      %v2058 = vpop.f32.mrf.mxu0
      %v2059 = vadd.f32 0.0, %v2058
      %v2060 = vpop.f32.mrf.mxu0
      %v2061 = vpop.f32.mrf.mxu0
      %v2062 = vadd.f32 0.0, %v2061
      %v2063 = vpop.f32.mrf.mxu0
      %2064 = vmatprep.mubr.bf16.mxu0 0
      %2065 = vmatmul.mubr.bf16.gmra.mxu0 %v1896
      %v2066 = vpop.f32.mrf.mxu0
      %v2067 = vadd.f32 0.0, %v2066
      %v2068 = vpop.f32.mrf.mxu0
      %v2069 = vpop.f32.mrf.mxu0
      %v2070 = vadd.f32 0.0, %v2069
      %v2071 = vpop.f32.mrf.mxu0
      %2072 = vmatprep.mubr.bf16.mxu0 0
      %2073 = vmatmul.mubr.bf16.gmra.mxu0 %v1897
      %v2074 = vpop.f32.mrf.mxu0
      %v2075 = vadd.f32 0.0, %v2074
      %v2076 = vpop.f32.mrf.mxu0
      %v2077 = vpop.f32.mrf.mxu0
      %v2078 = vadd.f32 0.0, %v2077
      %v2079 = vpop.f32.mrf.mxu0
      %2080 = vmatprep.mubr.bf16.mxu0 0
      %2081 = vmatmul.mubr.bf16.gmra.mxu0 %v1898
      %v2082 = vpop.f32.mrf.mxu0
      %v2083 = vadd.f32 0.0, %v2082
      %v2084 = vpop.f32.mrf.mxu0
      %v2085 = vpop.f32.mrf.mxu0
      %v2086 = vadd.f32 0.0, %v2085
      %v2087 = vpop.f32.mrf.mxu0
      %2088 = vmatprep.mubr.bf16.mxu0 0
      %2089 = vmatmul.mubr.bf16.gmra.mxu0 %v1899
      %v2090 = vpop.f32.mrf.mxu0
      %v2091 = vadd.f32 0.0, %v2090
      %v2092 = vpop.f32.mrf.mxu0
      %v2093 = vpop.f32.mrf.mxu0
      %v2094 = vadd.f32 0.0, %v2093
      %v2095 = vpop.f32.mrf.mxu0
      %2096 = vmatprep.mubr.bf16.mxu0 0
      %2097 = vmatmul.mubr.bf16.gmra.mxu0 %v1900
      %v2098 = vpop.f32.mrf.mxu0
      %v2099 = vadd.f32 0.0, %v2098
      %v2100 = vpop.f32.mrf.mxu0
      %v2101 = vpop.f32.mrf.mxu0
      %v2102 = vadd.f32 0.0, %v2101
      %v2103 = vpop.f32.mrf.mxu0
      %2104 = vmatprep.mubr.bf16.mxu0 0
      %2105 = vmatmul.mubr.bf16.gmra.mxu0 %v1901
      %v2106 = vpop.f32.mrf.mxu0
      %v2107 = vadd.f32 0.0, %v2106
      %v2108 = vpop.f32.mrf.mxu0
      %v2109 = vpop.f32.mrf.mxu0
      %v2110 = vadd.f32 0.0, %v2109
      %v2111 = vpop.f32.mrf.mxu0
      %2112 = vmatprep.mubr.bf16.mxu0 0
      %2113 = vmatmul.mubr.bf16.gmra.mxu0 %v1902
      %v2114 = vpop.f32.mrf.mxu0
      %v2115 = vadd.f32 0.0, %v2114
      %v2116 = vpop.f32.mrf.mxu0
      %v2117 = vpop.f32.mrf.mxu0
      %v2118 = vadd.f32 0.0, %v2117
      %v2119 = vpop.f32.mrf.mxu0
      %2120 = vmatprep.mubr.bf16.mxu0 0
      %2121 = vmatmul.mubr.bf16.gmra.mxu0 %v1903
      %v2122 = vpop.f32.mrf.mxu0
      %v2123 = vadd.f32 0.0, %v2122
      %v2124 = vpop.f32.mrf.mxu0
      %v2125 = vpop.f32.mrf.mxu0
      %v2126 = vadd.f32 0.0, %v2125
      %v2127 = vpop.f32.mrf.mxu0
      %2128 = vdwg.mxu0
      %v2129 = vadd.f32 %v1742, %v2003
      %v2130 = vadd.f32 %v1743, %v2006
      %v2131 = vadd.f32 %v1744, %v2011
      %v2132 = vadd.f32 %v1745, %v2014
      %v2133 = vadd.f32 %v1746, %v2019
      %v2134 = vadd.f32 %v1747, %v2022
      %v2135 = vadd.f32 %v1748, %v2027
      %v2136 = vadd.f32 %v1749, %v2030
      %v2137 = vadd.f32 %v1750, %v2035
      %v2138 = vadd.f32 %v1751, %v2038
      %v2139 = vadd.f32 %v1752, %v2043
      %v2140 = vadd.f32 %v1753, %v2046
      %v2141 = vadd.f32 %v1754, %v2051
      %v2142 = vadd.f32 %v1755, %v2054
      %v2143 = vadd.f32 %v1756, %v2059
      %v2144 = vadd.f32 %v1757, %v2062
      %v2145 = vadd.f32 %v1758, %v2067
      %v2146 = vadd.f32 %v1759, %v2070
      %v2147 = vadd.f32 %v1760, %v2075
      %v2148 = vadd.f32 %v1761, %v2078
      %v2149 = vadd.f32 %v1762, %v2083
      %v2150 = vadd.f32 %v1763, %v2086
      %v2151 = vadd.f32 %v1764, %v2091
      %v2152 = vadd.f32 %v1765, %v2094
      %v2153 = vadd.f32 %v1766, %v2099
      %v2154 = vadd.f32 %v1767, %v2102
      %v2155 = vadd.f32 %v1768, %v2107
      %v2156 = vadd.f32 %v1769, %v2110
      %v2157 = vadd.f32 %v1770, %v2115
      %v2158 = vadd.f32 %v1771, %v2118
      %v2159 = vadd.f32 %v1772, %v2123
      %v2160 = vadd.f32 %v1773, %v2126
      %v2161 = vld [vmem:[%s1774] sm:$0xf]
      %v2162 = vld [vmem:[%s1774 + $0x4] sm:$0xf]
      %v2163 = vld [vmem:[%s1774 + $0x8] sm:$0x1]
      %v2164 = vld [vmem:[%s1774 + $0xc] sm:$0xf]
      %v2165 = vld [vmem:[%s1774 + $0x10] sm:$0xf]
      %v2166 = vld [vmem:[%s1774 + $0x14] sm:$0x1]
      %v2167 = vld [vmem:[%s1774 + $0x18] sm:$0xf]
      %v2168 = vld [vmem:[%s1774 + $0x1c] sm:$0xf]
      %v2169 = vld [vmem:[%s1774 + $0x20] sm:$0x1]
      %v2170 = vld [vmem:[%s1774 + $0x24] sm:$0xf]
      %v2171 = vld [vmem:[%s1774 + $0x28] sm:$0xf]
      %v2172 = vld [vmem:[%s1774 + $0x2c] sm:$0x1]
      %v2173 = vld [vmem:[%s1774 + $0x30] sm:$0xf]
      %v2174 = vld [vmem:[%s1774 + $0x34] sm:$0xf]
      %v2175 = vld [vmem:[%s1774 + $0x38] sm:$0x1]
      %v2176 = vld [vmem:[%s1774 + $0x3c] sm:$0xf]
      %v2177 = vld [vmem:[%s1774 + $0x40] sm:$0xf]
      %v2178 = vld [vmem:[%s1774 + $0x44] sm:$0x1]
      %v2179 = vld [vmem:[%s1774 + $0x48] sm:$0xf]
      %v2180 = vld [vmem:[%s1774 + $0x4c] sm:$0xf]
      %v2181 = vld [vmem:[%s1774 + $0x50] sm:$0x1]
      %v2182 = vld [vmem:[%s1774 + $0x54] sm:$0xf]
      %v2183 = vld [vmem:[%s1774 + $0x58] sm:$0xf]
      %v2184 = vld [vmem:[%s1774 + $0x5c] sm:$0x1]
      %v2185 = vld [vmem:[%s1774 + $0x60] sm:$0xf]
      %v2186 = vld [vmem:[%s1774 + $0x64] sm:$0xf]
      %v2187 = vld [vmem:[%s1774 + $0x68] sm:$0x1]
      %v2188 = vld [vmem:[%s1774 + $0x6c] sm:$0xf]
      %v2189 = vld [vmem:[%s1774 + $0x70] sm:$0xf]
      %v2190 = vld [vmem:[%s1774 + $0x74] sm:$0x1]
      %v2191 = vld [vmem:[%s1774 + $0x78] sm:$0xf]
      %v2192 = vld [vmem:[%s1774 + $0x7c] sm:$0xf]
      %v2193 = vld [vmem:[%s1774 + $0x80] sm:$0x1]
      %v2194 = vld [vmem:[%s1774 + $0x84] sm:$0xf]
      %v2195 = vld [vmem:[%s1774 + $0x88] sm:$0xf]
      %v2196 = vld [vmem:[%s1774 + $0x8c] sm:$0x1]
      %v2197 = vld [vmem:[%s1774 + $0x90] sm:$0xf]
      %v2198 = vld [vmem:[%s1774 + $0x94] sm:$0xf]
      %v2199 = vld [vmem:[%s1774 + $0x98] sm:$0x1]
      %v2200 = vld [vmem:[%s1774 + $0x9c] sm:$0xf]
      %v2201 = vld [vmem:[%s1774 + $0xa0] sm:$0xf]
      %v2202 = vld [vmem:[%s1774 + $0xa4] sm:$0x1]
      %v2203 = vld [vmem:[%s1774 + $0xa8] sm:$0xf]
      %v2204 = vld [vmem:[%s1774 + $0xac] sm:$0xf]
      %v2205 = vld [vmem:[%s1774 + $0xb0] sm:$0x1]
      %v2206 = vld [vmem:[%s1774 + $0xb4] sm:$0xf]
      %v2207 = vld [vmem:[%s1774 + $0xb8] sm:$0xf]
      %v2208 = vld [vmem:[%s1774 + $0xbc] sm:$0x1]
      %v2210 = vshrl.u32 %v2161, 16
      %v2212 = vrot.slane %v2210, 4
      %v2213 = vshll.u32 %v2161, 16
      %v2215 = vrot.slane %v2213, 5
      %v2216 = vor.u32 %v2212, %v2215
      %v2217 = vrot.slane %v2216, 4
      %v2219 = vshll.u32 %v2162, 16
      %v2221 = vrot.slane %v2219, 5
      %v2222 = vsel %vm309, %v2217, %v2221
      %v2223 = vshrl.u32 %v2162, 16
      %v2225 = vrot.slane %v2223, 4
      %v2226 = vor.u32 %v2225, %v2221
      %v2227 = vrot.slane %v2226, 4
      %v2229 = vshll.u32 %v2163, 16
      %v2231 = vrot.slane %v2229, 5
      %v2232 = vsel %vm309, %v2227, %v2231
      %v2234 = vshrl.u32 %v2164, 16
      %v2236 = vrot.slane %v2234, 4
      %v2237 = vshll.u32 %v2164, 16
      %v2239 = vrot.slane %v2237, 5
      %v2240 = vor.u32 %v2236, %v2239
      %v2241 = vrot.slane %v2240, 4
      %v2243 = vshll.u32 %v2165, 16
      %v2245 = vrot.slane %v2243, 5
      %v2246 = vsel %vm309, %v2241, %v2245
      %v2247 = vshrl.u32 %v2165, 16
      %v2249 = vrot.slane %v2247, 4
      %v2250 = vor.u32 %v2249, %v2245
      %v2251 = vrot.slane %v2250, 4
      %v2253 = vshll.u32 %v2166, 16
      %v2255 = vrot.slane %v2253, 5
      %v2256 = vsel %vm309, %v2251, %v2255
      %v2258 = vshrl.u32 %v2167, 16
      %v2260 = vrot.slane %v2258, 4
      %v2261 = vshll.u32 %v2167, 16
      %v2263 = vrot.slane %v2261, 5
      %v2264 = vor.u32 %v2260, %v2263
      %v2265 = vrot.slane %v2264, 4
      %v2267 = vshll.u32 %v2168, 16
      %v2269 = vrot.slane %v2267, 5
      %v2270 = vsel %vm309, %v2265, %v2269
      %v2271 = vshrl.u32 %v2168, 16
      %v2273 = vrot.slane %v2271, 4
      %v2274 = vor.u32 %v2273, %v2269
      %v2275 = vrot.slane %v2274, 4
      %v2277 = vshll.u32 %v2169, 16
      %v2279 = vrot.slane %v2277, 5
      %v2280 = vsel %vm309, %v2275, %v2279
      %v2282 = vshrl.u32 %v2170, 16
      %v2284 = vrot.slane %v2282, 4
      %v2285 = vshll.u32 %v2170, 16
      %v2287 = vrot.slane %v2285, 5
      %v2288 = vor.u32 %v2284, %v2287
      %v2289 = vrot.slane %v2288, 4
      %v2291 = vshll.u32 %v2171, 16
      %v2293 = vrot.slane %v2291, 5
      %v2294 = vsel %vm309, %v2289, %v2293
      %v2295 = vshrl.u32 %v2171, 16
      %v2297 = vrot.slane %v2295, 4
      %v2298 = vor.u32 %v2297, %v2293
      %v2299 = vrot.slane %v2298, 4
      %v2301 = vshll.u32 %v2172, 16
      %v2303 = vrot.slane %v2301, 5
      %v2304 = vsel %vm309, %v2299, %v2303
      %v2306 = vshrl.u32 %v2173, 16
      %v2308 = vrot.slane %v2306, 4
      %v2309 = vshll.u32 %v2173, 16
      %v2311 = vrot.slane %v2309, 5
      %v2312 = vor.u32 %v2308, %v2311
      %v2313 = vrot.slane %v2312, 4
      %v2315 = vshll.u32 %v2174, 16
      %v2317 = vrot.slane %v2315, 5
      %v2318 = vsel %vm309, %v2313, %v2317
      %v2319 = vshrl.u32 %v2174, 16
      %v2321 = vrot.slane %v2319, 4
      %v2322 = vor.u32 %v2321, %v2317
      %v2323 = vrot.slane %v2322, 4
      %v2325 = vshll.u32 %v2175, 16
      %v2327 = vrot.slane %v2325, 5
      %v2328 = vsel %vm309, %v2323, %v2327
      %v2330 = vshrl.u32 %v2176, 16
      %v2332 = vrot.slane %v2330, 4
      %v2333 = vshll.u32 %v2176, 16
      %v2335 = vrot.slane %v2333, 5
      %v2336 = vor.u32 %v2332, %v2335
      %v2337 = vrot.slane %v2336, 4
      %v2339 = vshll.u32 %v2177, 16
      %v2341 = vrot.slane %v2339, 5
      %v2342 = vsel %vm309, %v2337, %v2341
      %v2343 = vshrl.u32 %v2177, 16
      %v2345 = vrot.slane %v2343, 4
      %v2346 = vor.u32 %v2345, %v2341
      %v2347 = vrot.slane %v2346, 4
      %v2349 = vshll.u32 %v2178, 16
      %v2351 = vrot.slane %v2349, 5
      %v2352 = vsel %vm309, %v2347, %v2351
      %v2354 = vshrl.u32 %v2179, 16
      %v2356 = vrot.slane %v2354, 4
      %v2357 = vshll.u32 %v2179, 16
      %v2359 = vrot.slane %v2357, 5
      %v2360 = vor.u32 %v2356, %v2359
      %v2361 = vrot.slane %v2360, 4
      %v2363 = vshll.u32 %v2180, 16
      %v2365 = vrot.slane %v2363, 5
      %v2366 = vsel %vm309, %v2361, %v2365
      %v2367 = vshrl.u32 %v2180, 16
      %v2369 = vrot.slane %v2367, 4
      %v2370 = vor.u32 %v2369, %v2365
      %v2371 = vrot.slane %v2370, 4
      %v2373 = vshll.u32 %v2181, 16
      %v2375 = vrot.slane %v2373, 5
      %v2376 = vsel %vm309, %v2371, %v2375
      %v2378 = vshrl.u32 %v2182, 16
      %v2380 = vrot.slane %v2378, 4
      %v2381 = vshll.u32 %v2182, 16
      %v2383 = vrot.slane %v2381, 5
      %v2384 = vor.u32 %v2380, %v2383
      %v2385 = vrot.slane %v2384, 4
      %v2387 = vshll.u32 %v2183, 16
      %v2389 = vrot.slane %v2387, 5
      %v2390 = vsel %vm309, %v2385, %v2389
      %v2391 = vshrl.u32 %v2183, 16
      %v2393 = vrot.slane %v2391, 4
      %v2394 = vor.u32 %v2393, %v2389
      %v2395 = vrot.slane %v2394, 4
      %v2397 = vshll.u32 %v2184, 16
      %v2399 = vrot.slane %v2397, 5
      %v2400 = vsel %vm309, %v2395, %v2399
      %v2402 = vshrl.u32 %v2185, 16
      %v2404 = vrot.slane %v2402, 4
      %v2405 = vshll.u32 %v2185, 16
      %v2407 = vrot.slane %v2405, 5
      %v2408 = vor.u32 %v2404, %v2407
      %v2409 = vrot.slane %v2408, 4
      %v2411 = vshll.u32 %v2186, 16
      %v2413 = vrot.slane %v2411, 5
      %v2414 = vsel %vm309, %v2409, %v2413
      %v2415 = vshrl.u32 %v2186, 16
      %v2417 = vrot.slane %v2415, 4
      %v2418 = vor.u32 %v2417, %v2413
      %v2419 = vrot.slane %v2418, 4
      %v2421 = vshll.u32 %v2187, 16
      %v2423 = vrot.slane %v2421, 5
      %v2424 = vsel %vm309, %v2419, %v2423
      %v2426 = vshrl.u32 %v2188, 16
      %v2428 = vrot.slane %v2426, 4
      %v2429 = vshll.u32 %v2188, 16
      %v2431 = vrot.slane %v2429, 5
      %v2432 = vor.u32 %v2428, %v2431
      %v2433 = vrot.slane %v2432, 4
      %v2435 = vshll.u32 %v2189, 16
      %v2437 = vrot.slane %v2435, 5
      %v2438 = vsel %vm309, %v2433, %v2437
      %v2439 = vshrl.u32 %v2189, 16
      %v2441 = vrot.slane %v2439, 4
      %v2442 = vor.u32 %v2441, %v2437
      %v2443 = vrot.slane %v2442, 4
      %v2445 = vshll.u32 %v2190, 16
      %v2447 = vrot.slane %v2445, 5
      %v2448 = vsel %vm309, %v2443, %v2447
      %v2450 = vshrl.u32 %v2191, 16
      %v2452 = vrot.slane %v2450, 4
      %v2453 = vshll.u32 %v2191, 16
      %v2455 = vrot.slane %v2453, 5
      %v2456 = vor.u32 %v2452, %v2455
      %v2457 = vrot.slane %v2456, 4
      %v2459 = vshll.u32 %v2192, 16
      %v2461 = vrot.slane %v2459, 5
      %v2462 = vsel %vm309, %v2457, %v2461
      %v2463 = vshrl.u32 %v2192, 16
      %v2465 = vrot.slane %v2463, 4
      %v2466 = vor.u32 %v2465, %v2461
      %v2467 = vrot.slane %v2466, 4
      %v2469 = vshll.u32 %v2193, 16
      %v2471 = vrot.slane %v2469, 5
      %v2472 = vsel %vm309, %v2467, %v2471
      %v2474 = vshrl.u32 %v2194, 16
      %v2476 = vrot.slane %v2474, 4
      %v2477 = vshll.u32 %v2194, 16
      %v2479 = vrot.slane %v2477, 5
      %v2480 = vor.u32 %v2476, %v2479
      %v2481 = vrot.slane %v2480, 4
      %v2483 = vshll.u32 %v2195, 16
      %v2485 = vrot.slane %v2483, 5
      %v2486 = vsel %vm309, %v2481, %v2485
      %v2487 = vshrl.u32 %v2195, 16
      %v2489 = vrot.slane %v2487, 4
      %v2490 = vor.u32 %v2489, %v2485
      %v2491 = vrot.slane %v2490, 4
      %v2493 = vshll.u32 %v2196, 16
      %v2495 = vrot.slane %v2493, 5
      %v2496 = vsel %vm309, %v2491, %v2495
      %v2498 = vshrl.u32 %v2197, 16
      %v2500 = vrot.slane %v2498, 4
      %v2501 = vshll.u32 %v2197, 16
      %v2503 = vrot.slane %v2501, 5
      %v2504 = vor.u32 %v2500, %v2503
      %v2505 = vrot.slane %v2504, 4
      %v2507 = vshll.u32 %v2198, 16
      %v2509 = vrot.slane %v2507, 5
      %v2510 = vsel %vm309, %v2505, %v2509
      %v2511 = vshrl.u32 %v2198, 16
      %v2513 = vrot.slane %v2511, 4
      %v2514 = vor.u32 %v2513, %v2509
      %v2515 = vrot.slane %v2514, 4
      %v2517 = vshll.u32 %v2199, 16
      %v2519 = vrot.slane %v2517, 5
      %v2520 = vsel %vm309, %v2515, %v2519
      %v2522 = vshrl.u32 %v2200, 16
      %v2524 = vrot.slane %v2522, 4
      %v2525 = vshll.u32 %v2200, 16
      %v2527 = vrot.slane %v2525, 5
      %v2528 = vor.u32 %v2524, %v2527
      %v2529 = vrot.slane %v2528, 4
      %v2531 = vshll.u32 %v2201, 16
      %v2533 = vrot.slane %v2531, 5
      %v2534 = vsel %vm309, %v2529, %v2533
      %v2535 = vshrl.u32 %v2201, 16
      %v2537 = vrot.slane %v2535, 4
      %v2538 = vor.u32 %v2537, %v2533
      %v2539 = vrot.slane %v2538, 4
      %v2541 = vshll.u32 %v2202, 16
      %v2543 = vrot.slane %v2541, 5
      %v2544 = vsel %vm309, %v2539, %v2543
      %v2546 = vshrl.u32 %v2203, 16
      %v2548 = vrot.slane %v2546, 4
      %v2549 = vshll.u32 %v2203, 16
      %v2551 = vrot.slane %v2549, 5
      %v2552 = vor.u32 %v2548, %v2551
      %v2553 = vrot.slane %v2552, 4
      %v2555 = vshll.u32 %v2204, 16
      %v2557 = vrot.slane %v2555, 5
      %v2558 = vsel %vm309, %v2553, %v2557
      %v2559 = vshrl.u32 %v2204, 16
      %v2561 = vrot.slane %v2559, 4
      %v2562 = vor.u32 %v2561, %v2557
      %v2563 = vrot.slane %v2562, 4
      %v2565 = vshll.u32 %v2205, 16
      %v2567 = vrot.slane %v2565, 5
      %v2568 = vsel %vm309, %v2563, %v2567
      %v2570 = vshrl.u32 %v2206, 16
      %v2572 = vrot.slane %v2570, 4
      %v2573 = vshll.u32 %v2206, 16
      %v2575 = vrot.slane %v2573, 5
      %v2576 = vor.u32 %v2572, %v2575
      %v2577 = vrot.slane %v2576, 4
      %v2579 = vshll.u32 %v2207, 16
      %v2581 = vrot.slane %v2579, 5
      %v2582 = vsel %vm309, %v2577, %v2581
      %v2583 = vshrl.u32 %v2207, 16
      %v2585 = vrot.slane %v2583, 4
      %v2586 = vor.u32 %v2585, %v2581
      %v2587 = vrot.slane %v2586, 4
      %v2589 = vshll.u32 %v2208, 16
      %v2591 = vrot.slane %v2589, 5
      %v2592 = vsel %vm309, %v2587, %v2591
      %s2593 = scalar_lea.vmem %s1, 256
      %v2594 = vld [vmem:[%s2593] sm:$0xf]
      %v2595 = vld [vmem:[%s2593 + $0x4] sm:$0xf]
      %v2596 = vld [vmem:[%s2593 + $0x8] sm:$0xf]
      %v2597 = vld [vmem:[%s2593 + $0xc] sm:$0xf]
      %v2598 = vld [vmem:[%s2593 + $0x10] sm:$0xf]
      %v2599 = vld [vmem:[%s2593 + $0x14] sm:$0xf]
      %v2600 = vld [vmem:[%s2593 + $0x18] sm:$0xf]
      %v2601 = vld [vmem:[%s2593 + $0x1c] sm:$0xf]
      %v2602 = vld [vmem:[%s2593 + $0x20] sm:$0xf]
      %v2603 = vld [vmem:[%s2593 + $0x24] sm:$0xf]
      %v2604 = vld [vmem:[%s2593 + $0x28] sm:$0xf]
      %v2605 = vld [vmem:[%s2593 + $0x2c] sm:$0xf]
      %v2606 = vld [vmem:[%s2593 + $0x30] sm:$0xf]
      %v2607 = vld [vmem:[%s2593 + $0x34] sm:$0xf]
      %v2608 = vld [vmem:[%s2593 + $0x38] sm:$0xf]
      %v2609 = vld [vmem:[%s2593 + $0x3c] sm:$0xf]
      %v2610 = vunpack.c.l.b16 %v2222
      %v2611 = vunpack.c.l.b16 %v2232
      %v2612 = vunpack.c.l.b16 %v2246
      %v2613 = vunpack.c.l.b16 %v2256
      %v2614 = vunpack.c.l.b16 %v2270
      %v2615 = vunpack.c.l.b16 %v2280
      %v2616 = vunpack.c.l.b16 %v2294
      %v2617 = vunpack.c.l.b16 %v2304
      %v2618 = vunpack.c.l.b16 %v2318
      %v2619 = vunpack.c.l.b16 %v2328
      %v2620 = vunpack.c.l.b16 %v2342
      %v2621 = vunpack.c.l.b16 %v2352
      %v2622 = vunpack.c.l.b16 %v2366
      %v2623 = vunpack.c.l.b16 %v2376
      %v2624 = vunpack.c.l.b16 %v2390
      %v2625 = vunpack.c.l.b16 %v2400
      %v2626 = vunpack.c.l.b16 %v2414
      %v2627 = vunpack.c.l.b16 %v2424
      %v2628 = vunpack.c.l.b16 %v2438
      %v2629 = vunpack.c.l.b16 %v2448
      %v2630 = vunpack.c.l.b16 %v2462
      %v2631 = vunpack.c.l.b16 %v2472
      %v2632 = vunpack.c.l.b16 %v2486
      %v2633 = vunpack.c.l.b16 %v2496
      %v2634 = vunpack.c.l.b16 %v2510
      %v2635 = vunpack.c.l.b16 %v2520
      %v2636 = vunpack.c.l.b16 %v2534
      %v2637 = vunpack.c.l.b16 %v2544
      %v2638 = vunpack.c.l.b16 %v2558
      %v2639 = vunpack.c.l.b16 %v2568
      %v2640 = vunpack.c.l.b16 %v2582
      %v2641 = vunpack.c.l.b16 %v2592
      %v2642 = vpack.c.b16 %v2611, %v2610
      %v2643 = vpack.c.b16 %v2613, %v2612
      %v2644 = vpack.c.b16 %v2615, %v2614
      %v2645 = vpack.c.b16 %v2617, %v2616
      %v2646 = vpack.c.b16 %v2619, %v2618
      %v2647 = vpack.c.b16 %v2621, %v2620
      %v2648 = vpack.c.b16 %v2623, %v2622
      %v2649 = vpack.c.b16 %v2625, %v2624
      %v2650 = vpack.c.b16 %v2627, %v2626
      %v2651 = vpack.c.b16 %v2629, %v2628
      %v2652 = vpack.c.b16 %v2631, %v2630
      %v2653 = vpack.c.b16 %v2633, %v2632
      %v2654 = vpack.c.b16 %v2635, %v2634
      %v2655 = vpack.c.b16 %v2637, %v2636
      %v2656 = vpack.c.b16 %v2639, %v2638
      %v2657 = vpack.c.b16 %v2641, %v2640
      %v2690 = vunpack.c.l.b16 %v2594
      %v2691 = vunpack.c.l.b16 %v2595
      %v2692 = vunpack.c.l.b16 %v2596
      %v2693 = vunpack.c.l.b16 %v2597
      %v2694 = vunpack.c.l.b16 %v2598
      %v2695 = vunpack.c.l.b16 %v2599
      %v2696 = vunpack.c.l.b16 %v2600
      %v2697 = vunpack.c.l.b16 %v2601
      %v2698 = vunpack.c.l.b16 %v2602
      %v2699 = vunpack.c.l.b16 %v2603
      %v2700 = vunpack.c.l.b16 %v2604
      %v2701 = vunpack.c.l.b16 %v2605
      %v2702 = vunpack.c.l.b16 %v2606
      %v2703 = vunpack.c.l.b16 %v2607
      %v2704 = vunpack.c.l.b16 %v2608
      %v2705 = vunpack.c.l.b16 %v2609
      %v2706 = vpack.c.b16 %v2691, %v2690
      %v2707 = vpack.c.b16 %v2693, %v2692
      %v2708 = vpack.c.b16 %v2695, %v2694
      %v2709 = vpack.c.b16 %v2697, %v2696
      %v2710 = vpack.c.b16 %v2699, %v2698
      %v2711 = vpack.c.b16 %v2701, %v2700
      %v2712 = vpack.c.b16 %v2703, %v2702
      %v2713 = vpack.c.b16 %v2705, %v2704
      %2722 = vmatprep.subr.bf16.mxu0 0
      %2723 = vmatpush1.bf16.msra.mxu0 %v2713
      %2724 = vmatprep.subr.bf16.mxu0 0
      %2725 = vmatpush1.bf16.msra.mxu0 %v2712
      %2726 = vmatprep.subr.bf16.mxu0 0
      %2727 = vmatpush1.bf16.msra.mxu0 %v2711
      %2728 = vmatprep.subr.bf16.mxu0 0
      %2729 = vmatpush1.bf16.msra.mxu0 %v2710
      %2730 = vmatprep.subr.bf16.mxu0 0
      %2731 = vmatpush1.bf16.msra.mxu0 %v2709
      %2732 = vmatprep.subr.bf16.mxu0 0
      %2733 = vmatpush1.bf16.msra.mxu0 %v2708
      %2734 = vmatprep.subr.bf16.mxu0 0
      %2735 = vmatpush1.bf16.msra.mxu0 %v2707
      %2736 = vmatprep.subr.bf16.mxu0 0
      %2737 = vmatpush1.bf16.msra.mxu0 %v2706
      %2738 = vmatprep.subr.bf16.mxu0 0
      %2739 = vmatpush2.bf16.msra.mxu0 0
      %2740 = vmatprep.subr.bf16.mxu0 0
      %2741 = vmatpush2.bf16.msra.mxu0 0
      %2742 = vmatprep.subr.bf16.mxu0 0
      %2743 = vmatpush2.bf16.msra.mxu0 0
      %2744 = vmatprep.subr.bf16.mxu0 0
      %2745 = vmatpush2.bf16.msra.mxu0 0
      %2746 = vmatprep.subr.bf16.mxu0 0
      %2747 = vmatpush2.bf16.msra.mxu0 0
      %2748 = vmatprep.subr.bf16.mxu0 0
      %2749 = vmatpush2.bf16.msra.mxu0 0
      %2750 = vmatprep.subr.bf16.mxu0 0
      %2751 = vmatpush2.bf16.msra.mxu0 0
      %2752 = vmatprep.subr.bf16.mxu0 0
      %2753 = vmatpush2.bf16.msra.mxu0 0
      %2754 = vmatprep.mubr.bf16.mxu0 0
      %2755 = vmatmul.mubr.bf16.gmra.mxu0 %v2642
      %v2756 = vpop.f32.mrf.mxu0
      %v2757 = vadd.f32 0.0, %v2756
      %v2758 = vpop.f32.mrf.mxu0
      %v2759 = vpop.f32.mrf.mxu0
      %v2760 = vadd.f32 0.0, %v2759
      %v2761 = vpop.f32.mrf.mxu0
      %2762 = vmatprep.mubr.bf16.mxu0 0
      %2763 = vmatmul.mubr.bf16.gmra.mxu0 %v2643
      %v2764 = vpop.f32.mrf.mxu0
      %v2765 = vadd.f32 0.0, %v2764
      %v2766 = vpop.f32.mrf.mxu0
      %v2767 = vpop.f32.mrf.mxu0
      %v2768 = vadd.f32 0.0, %v2767
      %v2769 = vpop.f32.mrf.mxu0
      %2770 = vmatprep.mubr.bf16.mxu0 0
      %2771 = vmatmul.mubr.bf16.gmra.mxu0 %v2644
      %v2772 = vpop.f32.mrf.mxu0
      %v2773 = vadd.f32 0.0, %v2772
      %v2774 = vpop.f32.mrf.mxu0
      %v2775 = vpop.f32.mrf.mxu0
      %v2776 = vadd.f32 0.0, %v2775
      %v2777 = vpop.f32.mrf.mxu0
      %2778 = vmatprep.mubr.bf16.mxu0 0
      %2779 = vmatmul.mubr.bf16.gmra.mxu0 %v2645
      %v2780 = vpop.f32.mrf.mxu0
      %v2781 = vadd.f32 0.0, %v2780
      %v2782 = vpop.f32.mrf.mxu0
      %v2783 = vpop.f32.mrf.mxu0
      %v2784 = vadd.f32 0.0, %v2783
      %v2785 = vpop.f32.mrf.mxu0
      %2786 = vmatprep.mubr.bf16.mxu0 0
      %2787 = vmatmul.mubr.bf16.gmra.mxu0 %v2646
      %v2788 = vpop.f32.mrf.mxu0
      %v2789 = vadd.f32 0.0, %v2788
      %v2790 = vpop.f32.mrf.mxu0
      %v2791 = vpop.f32.mrf.mxu0
      %v2792 = vadd.f32 0.0, %v2791
      %v2793 = vpop.f32.mrf.mxu0
      %2794 = vmatprep.mubr.bf16.mxu0 0
      %2795 = vmatmul.mubr.bf16.gmra.mxu0 %v2647
      %v2796 = vpop.f32.mrf.mxu0
      %v2797 = vadd.f32 0.0, %v2796
      %v2798 = vpop.f32.mrf.mxu0
      %v2799 = vpop.f32.mrf.mxu0
      %v2800 = vadd.f32 0.0, %v2799
      %v2801 = vpop.f32.mrf.mxu0
      %2802 = vmatprep.mubr.bf16.mxu0 0
      %2803 = vmatmul.mubr.bf16.gmra.mxu0 %v2648
      %v2804 = vpop.f32.mrf.mxu0
      %v2805 = vadd.f32 0.0, %v2804
      %v2806 = vpop.f32.mrf.mxu0
      %v2807 = vpop.f32.mrf.mxu0
      %v2808 = vadd.f32 0.0, %v2807
      %v2809 = vpop.f32.mrf.mxu0
      %2810 = vmatprep.mubr.bf16.mxu0 0
      %2811 = vmatmul.mubr.bf16.gmra.mxu0 %v2649
      %v2812 = vpop.f32.mrf.mxu0
      %v2813 = vadd.f32 0.0, %v2812
      %v2814 = vpop.f32.mrf.mxu0
      %v2815 = vpop.f32.mrf.mxu0
      %v2816 = vadd.f32 0.0, %v2815
      %v2817 = vpop.f32.mrf.mxu0
      %2818 = vmatprep.mubr.bf16.mxu0 0
      %2819 = vmatmul.mubr.bf16.gmra.mxu0 %v2650
      %v2820 = vpop.f32.mrf.mxu0
      %v2821 = vadd.f32 0.0, %v2820
      %v2822 = vpop.f32.mrf.mxu0
      %v2823 = vpop.f32.mrf.mxu0
      %v2824 = vadd.f32 0.0, %v2823
      %v2825 = vpop.f32.mrf.mxu0
      %2826 = vmatprep.mubr.bf16.mxu0 0
      %2827 = vmatmul.mubr.bf16.gmra.mxu0 %v2651
      %v2828 = vpop.f32.mrf.mxu0
      %v2829 = vadd.f32 0.0, %v2828
      %v2830 = vpop.f32.mrf.mxu0
      %v2831 = vpop.f32.mrf.mxu0
      %v2832 = vadd.f32 0.0, %v2831
      %v2833 = vpop.f32.mrf.mxu0
      %2834 = vmatprep.mubr.bf16.mxu0 0
      %2835 = vmatmul.mubr.bf16.gmra.mxu0 %v2652
      %v2836 = vpop.f32.mrf.mxu0
      %v2837 = vadd.f32 0.0, %v2836
      %v2838 = vpop.f32.mrf.mxu0
      %v2839 = vpop.f32.mrf.mxu0
      %v2840 = vadd.f32 0.0, %v2839
      %v2841 = vpop.f32.mrf.mxu0
      %2842 = vmatprep.mubr.bf16.mxu0 0
      %2843 = vmatmul.mubr.bf16.gmra.mxu0 %v2653
      %v2844 = vpop.f32.mrf.mxu0
      %v2845 = vadd.f32 0.0, %v2844
      %v2846 = vpop.f32.mrf.mxu0
      %v2847 = vpop.f32.mrf.mxu0
      %v2848 = vadd.f32 0.0, %v2847
      %v2849 = vpop.f32.mrf.mxu0
      %2850 = vmatprep.mubr.bf16.mxu0 0
      %2851 = vmatmul.mubr.bf16.gmra.mxu0 %v2654
      %v2852 = vpop.f32.mrf.mxu0
      %v2853 = vadd.f32 0.0, %v2852
      %v2854 = vpop.f32.mrf.mxu0
      %v2855 = vpop.f32.mrf.mxu0
      %v2856 = vadd.f32 0.0, %v2855
      %v2857 = vpop.f32.mrf.mxu0
      %2858 = vmatprep.mubr.bf16.mxu0 0
      %2859 = vmatmul.mubr.bf16.gmra.mxu0 %v2655
      %v2860 = vpop.f32.mrf.mxu0
      %v2861 = vadd.f32 0.0, %v2860
      %v2862 = vpop.f32.mrf.mxu0
      %v2863 = vpop.f32.mrf.mxu0
      %v2864 = vadd.f32 0.0, %v2863
      %v2865 = vpop.f32.mrf.mxu0
      %2866 = vmatprep.mubr.bf16.mxu0 0
      %2867 = vmatmul.mubr.bf16.gmra.mxu0 %v2656
      %v2868 = vpop.f32.mrf.mxu0
      %v2869 = vadd.f32 0.0, %v2868
      %v2870 = vpop.f32.mrf.mxu0
      %v2871 = vpop.f32.mrf.mxu0
      %v2872 = vadd.f32 0.0, %v2871
      %v2873 = vpop.f32.mrf.mxu0
      %2874 = vmatprep.mubr.bf16.mxu0 0
      %2875 = vmatmul.mubr.bf16.gmra.mxu0 %v2657
      %v2876 = vpop.f32.mrf.mxu0
      %v2877 = vadd.f32 0.0, %v2876
      %v2878 = vpop.f32.mrf.mxu0
      %v2879 = vpop.f32.mrf.mxu0
      %v2880 = vadd.f32 0.0, %v2879
      %v2881 = vpop.f32.mrf.mxu0
      %2882 = vdwg.mxu0
      %v2883 = vadd.f32 %v2129, %v2757
      %v2884 = vadd.f32 %v2130, %v2760
      %v2885 = vadd.f32 %v2131, %v2765
      %v2886 = vadd.f32 %v2132, %v2768
      %v2887 = vadd.f32 %v2133, %v2773
      %v2888 = vadd.f32 %v2134, %v2776
      %v2889 = vadd.f32 %v2135, %v2781
      %v2890 = vadd.f32 %v2136, %v2784
      %v2891 = vadd.f32 %v2137, %v2789
      %v2892 = vadd.f32 %v2138, %v2792
      %v2893 = vadd.f32 %v2139, %v2797
      %v2894 = vadd.f32 %v2140, %v2800
      %v2895 = vadd.f32 %v2141, %v2805
      %v2896 = vadd.f32 %v2142, %v2808
      %v2897 = vadd.f32 %v2143, %v2813
      %v2898 = vadd.f32 %v2144, %v2816
      %v2899 = vadd.f32 %v2145, %v2821
      %v2900 = vadd.f32 %v2146, %v2824
      %v2901 = vadd.f32 %v2147, %v2829
      %v2902 = vadd.f32 %v2148, %v2832
      %v2903 = vadd.f32 %v2149, %v2837
      %v2904 = vadd.f32 %v2150, %v2840
      %v2905 = vadd.f32 %v2151, %v2845
      %v2906 = vadd.f32 %v2152, %v2848
      %v2907 = vadd.f32 %v2153, %v2853
      %v2908 = vadd.f32 %v2154, %v2856
      %v2909 = vadd.f32 %v2155, %v2861
      %v2910 = vadd.f32 %v2156, %v2864
      %v2911 = vadd.f32 %v2157, %v2869
      %v2912 = vadd.f32 %v2158, %v2872
      %v2913 = vadd.f32 %v2159, %v2877
      %v2914 = vadd.f32 %v2160, %v2880
      %v2915 = vld [vmem:[%s1774] sm:$0xe]
      %v2916 = vld [vmem:[%s1774 + $0xc] sm:$0xe]
      %v2917 = vld [vmem:[%s1774 + $0x18] sm:$0xe]
      %v2918 = vld [vmem:[%s1774 + $0x24] sm:$0xe]
      %v2919 = vld [vmem:[%s1774 + $0x30] sm:$0xe]
      %v2920 = vld [vmem:[%s1774 + $0x3c] sm:$0xe]
      %v2921 = vld [vmem:[%s1774 + $0x48] sm:$0xe]
      %v2922 = vld [vmem:[%s1774 + $0x54] sm:$0xe]
      %v2923 = vld [vmem:[%s1774 + $0x60] sm:$0xe]
      %v2924 = vld [vmem:[%s1774 + $0x6c] sm:$0xe]
      %v2925 = vld [vmem:[%s1774 + $0x78] sm:$0xe]
      %v2926 = vld [vmem:[%s1774 + $0x84] sm:$0xe]
      %v2927 = vld [vmem:[%s1774 + $0x90] sm:$0xe]
      %v2928 = vld [vmem:[%s1774 + $0x9c] sm:$0xe]
      %v2929 = vld [vmem:[%s1774 + $0xa8] sm:$0xe]
      %v2930 = vld [vmem:[%s1774 + $0xb4] sm:$0xe]
      %v2979 = vrot.slane %v2915, 5
      %v2980 = vrot.slane %v2979, 4
      %v2981 = vrot.slane %v2162, 5
      %v2982 = vsel %vm1339, %v2980, %v2981
      %v2983 = vrot.slane %v2981, 4
      %v2984 = vrot.slane %v2163, 5
      %v2985 = vsel %vm1339, %v2983, %v2984
      %v2986 = vrot.slane %v2916, 5
      %v2987 = vrot.slane %v2986, 4
      %v2988 = vrot.slane %v2165, 5
      %v2989 = vsel %vm1339, %v2987, %v2988
      %v2990 = vrot.slane %v2988, 4
      %v2991 = vrot.slane %v2166, 5
      %v2992 = vsel %vm1339, %v2990, %v2991
      %v2993 = vrot.slane %v2917, 5
      %v2994 = vrot.slane %v2993, 4
      %v2995 = vrot.slane %v2168, 5
      %v2996 = vsel %vm1339, %v2994, %v2995
      %v2997 = vrot.slane %v2995, 4
      %v2998 = vrot.slane %v2169, 5
      %v2999 = vsel %vm1339, %v2997, %v2998
      %v3000 = vrot.slane %v2918, 5
      %v3001 = vrot.slane %v3000, 4
      %v3002 = vrot.slane %v2171, 5
      %v3003 = vsel %vm1339, %v3001, %v3002
      %v3004 = vrot.slane %v3002, 4
      %v3005 = vrot.slane %v2172, 5
      %v3006 = vsel %vm1339, %v3004, %v3005
      %v3007 = vrot.slane %v2919, 5
      %v3008 = vrot.slane %v3007, 4
      %v3009 = vrot.slane %v2174, 5
      %v3010 = vsel %vm1339, %v3008, %v3009
      %v3011 = vrot.slane %v3009, 4
      %v3012 = vrot.slane %v2175, 5
      %v3013 = vsel %vm1339, %v3011, %v3012
      %v3014 = vrot.slane %v2920, 5
      %v3015 = vrot.slane %v3014, 4
      %v3016 = vrot.slane %v2177, 5
      %v3017 = vsel %vm1339, %v3015, %v3016
      %v3018 = vrot.slane %v3016, 4
      %v3019 = vrot.slane %v2178, 5
      %v3020 = vsel %vm1339, %v3018, %v3019
      %v3021 = vrot.slane %v2921, 5
      %v3022 = vrot.slane %v3021, 4
      %v3023 = vrot.slane %v2180, 5
      %v3024 = vsel %vm1339, %v3022, %v3023
      %v3025 = vrot.slane %v3023, 4
      %v3026 = vrot.slane %v2181, 5
      %v3027 = vsel %vm1339, %v3025, %v3026
      %v3028 = vrot.slane %v2922, 5
      %v3029 = vrot.slane %v3028, 4
      %v3030 = vrot.slane %v2183, 5
      %v3031 = vsel %vm1339, %v3029, %v3030
      %v3032 = vrot.slane %v3030, 4
      %v3033 = vrot.slane %v2184, 5
      %v3034 = vsel %vm1339, %v3032, %v3033
      %v3035 = vrot.slane %v2923, 5
      %v3036 = vrot.slane %v3035, 4
      %v3037 = vrot.slane %v2186, 5
      %v3038 = vsel %vm1339, %v3036, %v3037
      %v3039 = vrot.slane %v3037, 4
      %v3040 = vrot.slane %v2187, 5
      %v3041 = vsel %vm1339, %v3039, %v3040
      %v3042 = vrot.slane %v2924, 5
      %v3043 = vrot.slane %v3042, 4
      %v3044 = vrot.slane %v2189, 5
      %v3045 = vsel %vm1339, %v3043, %v3044
      %v3046 = vrot.slane %v3044, 4
      %v3047 = vrot.slane %v2190, 5
      %v3048 = vsel %vm1339, %v3046, %v3047
      %v3049 = vrot.slane %v2925, 5
      %v3050 = vrot.slane %v3049, 4
      %v3051 = vrot.slane %v2192, 5
      %v3052 = vsel %vm1339, %v3050, %v3051
      %v3053 = vrot.slane %v3051, 4
      %v3054 = vrot.slane %v2193, 5
      %v3055 = vsel %vm1339, %v3053, %v3054
      %v3056 = vrot.slane %v2926, 5
      %v3057 = vrot.slane %v3056, 4
      %v3058 = vrot.slane %v2195, 5
      %v3059 = vsel %vm1339, %v3057, %v3058
      %v3060 = vrot.slane %v3058, 4
      %v3061 = vrot.slane %v2196, 5
      %v3062 = vsel %vm1339, %v3060, %v3061
      %v3063 = vrot.slane %v2927, 5
      %v3064 = vrot.slane %v3063, 4
      %v3065 = vrot.slane %v2198, 5
      %v3066 = vsel %vm1339, %v3064, %v3065
      %v3067 = vrot.slane %v3065, 4
      %v3068 = vrot.slane %v2199, 5
      %v3069 = vsel %vm1339, %v3067, %v3068
      %v3070 = vrot.slane %v2928, 5
      %v3071 = vrot.slane %v3070, 4
      %v3072 = vrot.slane %v2201, 5
      %v3073 = vsel %vm1339, %v3071, %v3072
      %v3074 = vrot.slane %v3072, 4
      %v3075 = vrot.slane %v2202, 5
      %v3076 = vsel %vm1339, %v3074, %v3075
      %v3077 = vrot.slane %v2929, 5
      %v3078 = vrot.slane %v3077, 4
      %v3079 = vrot.slane %v2204, 5
      %v3080 = vsel %vm1339, %v3078, %v3079
      %v3081 = vrot.slane %v3079, 4
      %v3082 = vrot.slane %v2205, 5
      %v3083 = vsel %vm1339, %v3081, %v3082
      %v3084 = vrot.slane %v2930, 5
      %v3085 = vrot.slane %v3084, 4
      %v3086 = vrot.slane %v2207, 5
      %v3087 = vsel %vm1339, %v3085, %v3086
      %v3088 = vrot.slane %v3086, 4
      %v3089 = vrot.slane %v2208, 5
      %v3090 = vsel %vm1339, %v3088, %v3089
      %s3091 = scalar_lea.vmem %s1, 320
      %v3092 = vld [vmem:[%s3091] sm:$0xf]
      %v3093 = vld [vmem:[%s3091 + $0x4] sm:$0xf]
      %v3094 = vld [vmem:[%s3091 + $0x8] sm:$0xf]
      %v3095 = vld [vmem:[%s3091 + $0xc] sm:$0xf]
      %v3096 = vld [vmem:[%s3091 + $0x10] sm:$0xf]
      %v3097 = vld [vmem:[%s3091 + $0x14] sm:$0xf]
      %v3098 = vld [vmem:[%s3091 + $0x18] sm:$0xf]
      %v3099 = vld [vmem:[%s3091 + $0x1c] sm:$0xf]
      %v3100 = vld [vmem:[%s3091 + $0x20] sm:$0xf]
      %v3101 = vld [vmem:[%s3091 + $0x24] sm:$0xf]
      %v3102 = vld [vmem:[%s3091 + $0x28] sm:$0xf]
      %v3103 = vld [vmem:[%s3091 + $0x2c] sm:$0xf]
      %v3104 = vld [vmem:[%s3091 + $0x30] sm:$0xf]
      %v3105 = vld [vmem:[%s3091 + $0x34] sm:$0xf]
      %v3106 = vld [vmem:[%s3091 + $0x38] sm:$0xf]
      %v3107 = vld [vmem:[%s3091 + $0x3c] sm:$0xf]
      %v3108 = vunpack.c.l.b16 %v2982
      %v3109 = vunpack.c.l.b16 %v2985
      %v3110 = vunpack.c.l.b16 %v2989
      %v3111 = vunpack.c.l.b16 %v2992
      %v3112 = vunpack.c.l.b16 %v2996
      %v3113 = vunpack.c.l.b16 %v2999
      %v3114 = vunpack.c.l.b16 %v3003
      %v3115 = vunpack.c.l.b16 %v3006
      %v3116 = vunpack.c.l.b16 %v3010
      %v3117 = vunpack.c.l.b16 %v3013
      %v3118 = vunpack.c.l.b16 %v3017
      %v3119 = vunpack.c.l.b16 %v3020
      %v3120 = vunpack.c.l.b16 %v3024
      %v3121 = vunpack.c.l.b16 %v3027
      %v3122 = vunpack.c.l.b16 %v3031
      %v3123 = vunpack.c.l.b16 %v3034
      %v3124 = vunpack.c.l.b16 %v3038
      %v3125 = vunpack.c.l.b16 %v3041
      %v3126 = vunpack.c.l.b16 %v3045
      %v3127 = vunpack.c.l.b16 %v3048
      %v3128 = vunpack.c.l.b16 %v3052
      %v3129 = vunpack.c.l.b16 %v3055
      %v3130 = vunpack.c.l.b16 %v3059
      %v3131 = vunpack.c.l.b16 %v3062
      %v3132 = vunpack.c.l.b16 %v3066
      %v3133 = vunpack.c.l.b16 %v3069
      %v3134 = vunpack.c.l.b16 %v3073
      %v3135 = vunpack.c.l.b16 %v3076
      %v3136 = vunpack.c.l.b16 %v3080
      %v3137 = vunpack.c.l.b16 %v3083
      %v3138 = vunpack.c.l.b16 %v3087
      %v3139 = vunpack.c.l.b16 %v3090
      %v3140 = vpack.c.b16 %v3109, %v3108
      %v3141 = vpack.c.b16 %v3111, %v3110
      %v3142 = vpack.c.b16 %v3113, %v3112
      %v3143 = vpack.c.b16 %v3115, %v3114
      %v3144 = vpack.c.b16 %v3117, %v3116
      %v3145 = vpack.c.b16 %v3119, %v3118
      %v3146 = vpack.c.b16 %v3121, %v3120
      %v3147 = vpack.c.b16 %v3123, %v3122
      %v3148 = vpack.c.b16 %v3125, %v3124
      %v3149 = vpack.c.b16 %v3127, %v3126
      %v3150 = vpack.c.b16 %v3129, %v3128
      %v3151 = vpack.c.b16 %v3131, %v3130
      %v3152 = vpack.c.b16 %v3133, %v3132
      %v3153 = vpack.c.b16 %v3135, %v3134
      %v3154 = vpack.c.b16 %v3137, %v3136
      %v3155 = vpack.c.b16 %v3139, %v3138
      %v3188 = vunpack.c.l.b16 %v3092
      %v3189 = vunpack.c.l.b16 %v3093
      %v3190 = vunpack.c.l.b16 %v3094
      %v3191 = vunpack.c.l.b16 %v3095
      %v3192 = vunpack.c.l.b16 %v3096
      %v3193 = vunpack.c.l.b16 %v3097
      %v3194 = vunpack.c.l.b16 %v3098
      %v3195 = vunpack.c.l.b16 %v3099
      %v3196 = vunpack.c.l.b16 %v3100
      %v3197 = vunpack.c.l.b16 %v3101
      %v3198 = vunpack.c.l.b16 %v3102
      %v3199 = vunpack.c.l.b16 %v3103
      %v3200 = vunpack.c.l.b16 %v3104
      %v3201 = vunpack.c.l.b16 %v3105
      %v3202 = vunpack.c.l.b16 %v3106
      %v3203 = vunpack.c.l.b16 %v3107
      %v3204 = vpack.c.b16 %v3189, %v3188
      %v3205 = vpack.c.b16 %v3191, %v3190
      %v3206 = vpack.c.b16 %v3193, %v3192
      %v3207 = vpack.c.b16 %v3195, %v3194
      %v3208 = vpack.c.b16 %v3197, %v3196
      %v3209 = vpack.c.b16 %v3199, %v3198
      %v3210 = vpack.c.b16 %v3201, %v3200
      %v3211 = vpack.c.b16 %v3203, %v3202
      %3220 = vmatprep.subr.bf16.mxu0 0
      %3221 = vmatpush1.bf16.msra.mxu0 %v3211
      %3222 = vmatprep.subr.bf16.mxu0 0
      %3223 = vmatpush1.bf16.msra.mxu0 %v3210
      %3224 = vmatprep.subr.bf16.mxu0 0
      %3225 = vmatpush1.bf16.msra.mxu0 %v3209
      %3226 = vmatprep.subr.bf16.mxu0 0
      %3227 = vmatpush1.bf16.msra.mxu0 %v3208
      %3228 = vmatprep.subr.bf16.mxu0 0
      %3229 = vmatpush1.bf16.msra.mxu0 %v3207
      %3230 = vmatprep.subr.bf16.mxu0 0
      %3231 = vmatpush1.bf16.msra.mxu0 %v3206
      %3232 = vmatprep.subr.bf16.mxu0 0
      %3233 = vmatpush1.bf16.msra.mxu0 %v3205
      %3234 = vmatprep.subr.bf16.mxu0 0
      %3235 = vmatpush1.bf16.msra.mxu0 %v3204
      %3236 = vmatprep.subr.bf16.mxu0 0
      %3237 = vmatpush2.bf16.msra.mxu0 0
      %3238 = vmatprep.subr.bf16.mxu0 0
      %3239 = vmatpush2.bf16.msra.mxu0 0
      %3240 = vmatprep.subr.bf16.mxu0 0
      %3241 = vmatpush2.bf16.msra.mxu0 0
      %3242 = vmatprep.subr.bf16.mxu0 0
      %3243 = vmatpush2.bf16.msra.mxu0 0
      %3244 = vmatprep.subr.bf16.mxu0 0
      %3245 = vmatpush2.bf16.msra.mxu0 0
      %3246 = vmatprep.subr.bf16.mxu0 0
      %3247 = vmatpush2.bf16.msra.mxu0 0
      %3248 = vmatprep.subr.bf16.mxu0 0
      %3249 = vmatpush2.bf16.msra.mxu0 0
      %3250 = vmatprep.subr.bf16.mxu0 0
      %3251 = vmatpush2.bf16.msra.mxu0 0
      %3252 = vmatprep.mubr.bf16.mxu0 0
      %3253 = vmatmul.mubr.bf16.gmra.mxu0 %v3140
      %v3254 = vpop.f32.mrf.mxu0
      %v3255 = vadd.f32 0.0, %v3254
      %v3256 = vpop.f32.mrf.mxu0
      %v3257 = vpop.f32.mrf.mxu0
      %v3258 = vadd.f32 0.0, %v3257
      %v3259 = vpop.f32.mrf.mxu0
      %3260 = vmatprep.mubr.bf16.mxu0 0
      %3261 = vmatmul.mubr.bf16.gmra.mxu0 %v3141
      %v3262 = vpop.f32.mrf.mxu0
      %v3263 = vadd.f32 0.0, %v3262
      %v3264 = vpop.f32.mrf.mxu0
      %v3265 = vpop.f32.mrf.mxu0
      %v3266 = vadd.f32 0.0, %v3265
      %v3267 = vpop.f32.mrf.mxu0
      %3268 = vmatprep.mubr.bf16.mxu0 0
      %3269 = vmatmul.mubr.bf16.gmra.mxu0 %v3142
      %v3270 = vpop.f32.mrf.mxu0
      %v3271 = vadd.f32 0.0, %v3270
      %v3272 = vpop.f32.mrf.mxu0
      %v3273 = vpop.f32.mrf.mxu0
      %v3274 = vadd.f32 0.0, %v3273
      %v3275 = vpop.f32.mrf.mxu0
      %3276 = vmatprep.mubr.bf16.mxu0 0
      %3277 = vmatmul.mubr.bf16.gmra.mxu0 %v3143
      %v3278 = vpop.f32.mrf.mxu0
      %v3279 = vadd.f32 0.0, %v3278
      %v3280 = vpop.f32.mrf.mxu0
      %v3281 = vpop.f32.mrf.mxu0
      %v3282 = vadd.f32 0.0, %v3281
      %v3283 = vpop.f32.mrf.mxu0
      %3284 = vmatprep.mubr.bf16.mxu0 0
      %3285 = vmatmul.mubr.bf16.gmra.mxu0 %v3144
      %v3286 = vpop.f32.mrf.mxu0
      %v3287 = vadd.f32 0.0, %v3286
      %v3288 = vpop.f32.mrf.mxu0
      %v3289 = vpop.f32.mrf.mxu0
      %v3290 = vadd.f32 0.0, %v3289
      %v3291 = vpop.f32.mrf.mxu0
      %3292 = vmatprep.mubr.bf16.mxu0 0
      %3293 = vmatmul.mubr.bf16.gmra.mxu0 %v3145
      %v3294 = vpop.f32.mrf.mxu0
      %v3295 = vadd.f32 0.0, %v3294
      %v3296 = vpop.f32.mrf.mxu0
      %v3297 = vpop.f32.mrf.mxu0
      %v3298 = vadd.f32 0.0, %v3297
      %v3299 = vpop.f32.mrf.mxu0
      %3300 = vmatprep.mubr.bf16.mxu0 0
      %3301 = vmatmul.mubr.bf16.gmra.mxu0 %v3146
      %v3302 = vpop.f32.mrf.mxu0
      %v3303 = vadd.f32 0.0, %v3302
      %v3304 = vpop.f32.mrf.mxu0
      %v3305 = vpop.f32.mrf.mxu0
      %v3306 = vadd.f32 0.0, %v3305
      %v3307 = vpop.f32.mrf.mxu0
      %3308 = vmatprep.mubr.bf16.mxu0 0
      %3309 = vmatmul.mubr.bf16.gmra.mxu0 %v3147
      %v3310 = vpop.f32.mrf.mxu0
      %v3311 = vadd.f32 0.0, %v3310
      %v3312 = vpop.f32.mrf.mxu0
      %v3313 = vpop.f32.mrf.mxu0
      %v3314 = vadd.f32 0.0, %v3313
      %v3315 = vpop.f32.mrf.mxu0
      %3316 = vmatprep.mubr.bf16.mxu0 0
      %3317 = vmatmul.mubr.bf16.gmra.mxu0 %v3148
      %v3318 = vpop.f32.mrf.mxu0
      %v3319 = vadd.f32 0.0, %v3318
      %v3320 = vpop.f32.mrf.mxu0
      %v3321 = vpop.f32.mrf.mxu0
      %v3322 = vadd.f32 0.0, %v3321
      %v3323 = vpop.f32.mrf.mxu0
      %3324 = vmatprep.mubr.bf16.mxu0 0
      %3325 = vmatmul.mubr.bf16.gmra.mxu0 %v3149
      %v3326 = vpop.f32.mrf.mxu0
      %v3327 = vadd.f32 0.0, %v3326
      %v3328 = vpop.f32.mrf.mxu0
      %v3329 = vpop.f32.mrf.mxu0
      %v3330 = vadd.f32 0.0, %v3329
      %v3331 = vpop.f32.mrf.mxu0
      %3332 = vmatprep.mubr.bf16.mxu0 0
      %3333 = vmatmul.mubr.bf16.gmra.mxu0 %v3150
      %v3334 = vpop.f32.mrf.mxu0
      %v3335 = vadd.f32 0.0, %v3334
      %v3336 = vpop.f32.mrf.mxu0
      %v3337 = vpop.f32.mrf.mxu0
      %v3338 = vadd.f32 0.0, %v3337
      %v3339 = vpop.f32.mrf.mxu0
      %3340 = vmatprep.mubr.bf16.mxu0 0
      %3341 = vmatmul.mubr.bf16.gmra.mxu0 %v3151
      %v3342 = vpop.f32.mrf.mxu0
      %v3343 = vadd.f32 0.0, %v3342
      %v3344 = vpop.f32.mrf.mxu0
      %v3345 = vpop.f32.mrf.mxu0
      %v3346 = vadd.f32 0.0, %v3345
      %v3347 = vpop.f32.mrf.mxu0
      %3348 = vmatprep.mubr.bf16.mxu0 0
      %3349 = vmatmul.mubr.bf16.gmra.mxu0 %v3152
      %v3350 = vpop.f32.mrf.mxu0
      %v3351 = vadd.f32 0.0, %v3350
      %v3352 = vpop.f32.mrf.mxu0
      %v3353 = vpop.f32.mrf.mxu0
      %v3354 = vadd.f32 0.0, %v3353
      %v3355 = vpop.f32.mrf.mxu0
      %3356 = vmatprep.mubr.bf16.mxu0 0
      %3357 = vmatmul.mubr.bf16.gmra.mxu0 %v3153
      %v3358 = vpop.f32.mrf.mxu0
      %v3359 = vadd.f32 0.0, %v3358
      %v3360 = vpop.f32.mrf.mxu0
      %v3361 = vpop.f32.mrf.mxu0
      %v3362 = vadd.f32 0.0, %v3361
      %v3363 = vpop.f32.mrf.mxu0
      %3364 = vmatprep.mubr.bf16.mxu0 0
      %3365 = vmatmul.mubr.bf16.gmra.mxu0 %v3154
      %v3366 = vpop.f32.mrf.mxu0
      %v3367 = vadd.f32 0.0, %v3366
      %v3368 = vpop.f32.mrf.mxu0
      %v3369 = vpop.f32.mrf.mxu0
      %v3370 = vadd.f32 0.0, %v3369
      %v3371 = vpop.f32.mrf.mxu0
      %3372 = vmatprep.mubr.bf16.mxu0 0
      %3373 = vmatmul.mubr.bf16.gmra.mxu0 %v3155
      %v3374 = vpop.f32.mrf.mxu0
      %v3375 = vadd.f32 0.0, %v3374
      %v3376 = vpop.f32.mrf.mxu0
      %v3377 = vpop.f32.mrf.mxu0
      %v3378 = vadd.f32 0.0, %v3377
      %v3379 = vpop.f32.mrf.mxu0
      %3380 = vdwg.mxu0
      %v3381 = vadd.f32 %v2883, %v3255
      %v3382 = vadd.f32 %v2884, %v3258
      %v3383 = vadd.f32 %v2885, %v3263
      %v3384 = vadd.f32 %v2886, %v3266
      %v3385 = vadd.f32 %v2887, %v3271
      %v3386 = vadd.f32 %v2888, %v3274
      %v3387 = vadd.f32 %v2889, %v3279
      %v3388 = vadd.f32 %v2890, %v3282
      %v3389 = vadd.f32 %v2891, %v3287
      %v3390 = vadd.f32 %v2892, %v3290
      %v3391 = vadd.f32 %v2893, %v3295
      %v3392 = vadd.f32 %v2894, %v3298
      %v3393 = vadd.f32 %v2895, %v3303
      %v3394 = vadd.f32 %v2896, %v3306
      %v3395 = vadd.f32 %v2897, %v3311
      %v3396 = vadd.f32 %v2898, %v3314
      %v3397 = vadd.f32 %v2899, %v3319
      %v3398 = vadd.f32 %v2900, %v3322
      %v3399 = vadd.f32 %v2901, %v3327
      %v3400 = vadd.f32 %v2902, %v3330
      %v3401 = vadd.f32 %v2903, %v3335
      %v3402 = vadd.f32 %v2904, %v3338
      %v3403 = vadd.f32 %v2905, %v3343
      %v3404 = vadd.f32 %v2906, %v3346
      %v3405 = vadd.f32 %v2907, %v3351
      %v3406 = vadd.f32 %v2908, %v3354
      %v3407 = vadd.f32 %v2909, %v3359
      %v3408 = vadd.f32 %v2910, %v3362
      %v3409 = vadd.f32 %v2911, %v3367
      %v3410 = vadd.f32 %v2912, %v3370
      %v3411 = vadd.f32 %v2913, %v3375
      %v3412 = vadd.f32 %v2914, %v3378
      %s3413 = scalar_lea.vmem %s230, 24
      %v3414 = vld [vmem:[%s3413] sm:$0xf]
      %v3415 = vld [vmem:[%s3413 + $0x4] sm:$0xf]
      %v3416 = vld [vmem:[%s3413 + $0xc] sm:$0xf]
      %v3417 = vld [vmem:[%s3413 + $0x10] sm:$0xf]
      %v3418 = vld [vmem:[%s3413 + $0x18] sm:$0xf]
      %v3419 = vld [vmem:[%s3413 + $0x1c] sm:$0xf]
      %v3420 = vld [vmem:[%s3413 + $0x24] sm:$0xf]
      %v3421 = vld [vmem:[%s3413 + $0x28] sm:$0xf]
      %v3422 = vld [vmem:[%s3413 + $0x30] sm:$0xf]
      %v3423 = vld [vmem:[%s3413 + $0x34] sm:$0xf]
      %v3424 = vld [vmem:[%s3413 + $0x3c] sm:$0xf]
      %v3425 = vld [vmem:[%s3413 + $0x40] sm:$0xf]
      %v3426 = vld [vmem:[%s3413 + $0x48] sm:$0xf]
      %v3427 = vld [vmem:[%s3413 + $0x4c] sm:$0xf]
      %v3428 = vld [vmem:[%s3413 + $0x54] sm:$0xf]
      %v3429 = vld [vmem:[%s3413 + $0x58] sm:$0xf]
      %v3430 = vld [vmem:[%s3413 + $0x60] sm:$0xf]
      %v3431 = vld [vmem:[%s3413 + $0x64] sm:$0xf]
      %v3432 = vld [vmem:[%s3413 + $0x6c] sm:$0xf]
      %v3433 = vld [vmem:[%s3413 + $0x70] sm:$0xf]
      %v3434 = vld [vmem:[%s3413 + $0x78] sm:$0xf]
      %v3435 = vld [vmem:[%s3413 + $0x7c] sm:$0xf]
      %v3436 = vld [vmem:[%s3413 + $0x84] sm:$0xf]
      %v3437 = vld [vmem:[%s3413 + $0x88] sm:$0xf]
      %v3438 = vld [vmem:[%s3413 + $0x90] sm:$0xf]
      %v3439 = vld [vmem:[%s3413 + $0x94] sm:$0xf]
      %v3440 = vld [vmem:[%s3413 + $0x9c] sm:$0xf]
      %v3441 = vld [vmem:[%s3413 + $0xa0] sm:$0xf]
      %v3442 = vld [vmem:[%s3413 + $0xa8] sm:$0xf]
      %v3443 = vld [vmem:[%s3413 + $0xac] sm:$0xf]
      %v3444 = vld [vmem:[%s3413 + $0xb4] sm:$0xf]
      %v3445 = vld [vmem:[%s3413 + $0xb8] sm:$0xf]
      %s3446 = scalar_lea.vmem %s1, 384
      %v3447 = vld [vmem:[%s3446] sm:$0xf]
      %v3448 = vld [vmem:[%s3446 + $0x4] sm:$0xf]
      %v3449 = vld [vmem:[%s3446 + $0x8] sm:$0xf]
      %v3450 = vld [vmem:[%s3446 + $0xc] sm:$0xf]
      %v3451 = vld [vmem:[%s3446 + $0x10] sm:$0xf]
      %v3452 = vld [vmem:[%s3446 + $0x14] sm:$0xf]
      %v3453 = vld [vmem:[%s3446 + $0x18] sm:$0xf]
      %v3454 = vld [vmem:[%s3446 + $0x1c] sm:$0xf]
      %v3455 = vld [vmem:[%s3446 + $0x20] sm:$0xf]
      %v3456 = vld [vmem:[%s3446 + $0x24] sm:$0xf]
      %v3457 = vld [vmem:[%s3446 + $0x28] sm:$0xf]
      %v3458 = vld [vmem:[%s3446 + $0x2c] sm:$0xf]
      %v3459 = vld [vmem:[%s3446 + $0x30] sm:$0xf]
      %v3460 = vld [vmem:[%s3446 + $0x34] sm:$0xf]
      %v3461 = vld [vmem:[%s3446 + $0x38] sm:$0xf]
      %v3462 = vld [vmem:[%s3446 + $0x3c] sm:$0xf]
      %v3495 = vunpack.c.l.b16 %v3414
      %v3496 = vunpack.c.l.b16 %v3415
      %v3497 = vunpack.c.l.b16 %v3416
      %v3498 = vunpack.c.l.b16 %v3417
      %v3499 = vunpack.c.l.b16 %v3418
      %v3500 = vunpack.c.l.b16 %v3419
      %v3501 = vunpack.c.l.b16 %v3420
      %v3502 = vunpack.c.l.b16 %v3421
      %v3503 = vunpack.c.l.b16 %v3422
      %v3504 = vunpack.c.l.b16 %v3423
      %v3505 = vunpack.c.l.b16 %v3424
      %v3506 = vunpack.c.l.b16 %v3425
      %v3507 = vunpack.c.l.b16 %v3426
      %v3508 = vunpack.c.l.b16 %v3427
      %v3509 = vunpack.c.l.b16 %v3428
      %v3510 = vunpack.c.l.b16 %v3429
      %v3511 = vunpack.c.l.b16 %v3430
      %v3512 = vunpack.c.l.b16 %v3431
      %v3513 = vunpack.c.l.b16 %v3432
      %v3514 = vunpack.c.l.b16 %v3433
      %v3515 = vunpack.c.l.b16 %v3434
      %v3516 = vunpack.c.l.b16 %v3435
      %v3517 = vunpack.c.l.b16 %v3436
      %v3518 = vunpack.c.l.b16 %v3437
      %v3519 = vunpack.c.l.b16 %v3438
      %v3520 = vunpack.c.l.b16 %v3439
      %v3521 = vunpack.c.l.b16 %v3440
      %v3522 = vunpack.c.l.b16 %v3441
      %v3523 = vunpack.c.l.b16 %v3442
      %v3524 = vunpack.c.l.b16 %v3443
      %v3525 = vunpack.c.l.b16 %v3444
      %v3526 = vunpack.c.l.b16 %v3445
      %v3527 = vpack.c.b16 %v3496, %v3495
      %v3528 = vpack.c.b16 %v3498, %v3497
      %v3529 = vpack.c.b16 %v3500, %v3499
      %v3530 = vpack.c.b16 %v3502, %v3501
      %v3531 = vpack.c.b16 %v3504, %v3503
      %v3532 = vpack.c.b16 %v3506, %v3505
      %v3533 = vpack.c.b16 %v3508, %v3507
      %v3534 = vpack.c.b16 %v3510, %v3509
      %v3535 = vpack.c.b16 %v3512, %v3511
      %v3536 = vpack.c.b16 %v3514, %v3513
      %v3537 = vpack.c.b16 %v3516, %v3515
      %v3538 = vpack.c.b16 %v3518, %v3517
      %v3539 = vpack.c.b16 %v3520, %v3519
      %v3540 = vpack.c.b16 %v3522, %v3521
      %v3541 = vpack.c.b16 %v3524, %v3523
      %v3542 = vpack.c.b16 %v3526, %v3525
      %v3575 = vunpack.c.l.b16 %v3447
      %v3576 = vunpack.c.l.b16 %v3448
      %v3577 = vunpack.c.l.b16 %v3449
      %v3578 = vunpack.c.l.b16 %v3450
      %v3579 = vunpack.c.l.b16 %v3451
      %v3580 = vunpack.c.l.b16 %v3452
      %v3581 = vunpack.c.l.b16 %v3453
      %v3582 = vunpack.c.l.b16 %v3454
      %v3583 = vunpack.c.l.b16 %v3455
      %v3584 = vunpack.c.l.b16 %v3456
      %v3585 = vunpack.c.l.b16 %v3457
      %v3586 = vunpack.c.l.b16 %v3458
      %v3587 = vunpack.c.l.b16 %v3459
      %v3588 = vunpack.c.l.b16 %v3460
      %v3589 = vunpack.c.l.b16 %v3461
      %v3590 = vunpack.c.l.b16 %v3462
      %v3591 = vpack.c.b16 %v3576, %v3575
      %v3592 = vpack.c.b16 %v3578, %v3577
      %v3593 = vpack.c.b16 %v3580, %v3579
      %v3594 = vpack.c.b16 %v3582, %v3581
      %v3595 = vpack.c.b16 %v3584, %v3583
      %v3596 = vpack.c.b16 %v3586, %v3585
      %v3597 = vpack.c.b16 %v3588, %v3587
      %v3598 = vpack.c.b16 %v3590, %v3589
      %3607 = vmatprep.subr.bf16.mxu0 0
      %3608 = vmatpush1.bf16.msra.mxu0 %v3598
      %3609 = vmatprep.subr.bf16.mxu0 0
      %3610 = vmatpush1.bf16.msra.mxu0 %v3597
      %3611 = vmatprep.subr.bf16.mxu0 0
      %3612 = vmatpush1.bf16.msra.mxu0 %v3596
      %3613 = vmatprep.subr.bf16.mxu0 0
      %3614 = vmatpush1.bf16.msra.mxu0 %v3595
      %3615 = vmatprep.subr.bf16.mxu0 0
      %3616 = vmatpush1.bf16.msra.mxu0 %v3594
      %3617 = vmatprep.subr.bf16.mxu0 0
      %3618 = vmatpush1.bf16.msra.mxu0 %v3593
      %3619 = vmatprep.subr.bf16.mxu0 0
      %3620 = vmatpush1.bf16.msra.mxu0 %v3592
      %3621 = vmatprep.subr.bf16.mxu0 0
      %3622 = vmatpush1.bf16.msra.mxu0 %v3591
      %3623 = vmatprep.subr.bf16.mxu0 0
      %3624 = vmatpush2.bf16.msra.mxu0 0
      %3625 = vmatprep.subr.bf16.mxu0 0
      %3626 = vmatpush2.bf16.msra.mxu0 0
      %3627 = vmatprep.subr.bf16.mxu0 0
      %3628 = vmatpush2.bf16.msra.mxu0 0
      %3629 = vmatprep.subr.bf16.mxu0 0
      %3630 = vmatpush2.bf16.msra.mxu0 0
      %3631 = vmatprep.subr.bf16.mxu0 0
      %3632 = vmatpush2.bf16.msra.mxu0 0
      %3633 = vmatprep.subr.bf16.mxu0 0
      %3634 = vmatpush2.bf16.msra.mxu0 0
      %3635 = vmatprep.subr.bf16.mxu0 0
      %3636 = vmatpush2.bf16.msra.mxu0 0
      %3637 = vmatprep.subr.bf16.mxu0 0
      %3638 = vmatpush2.bf16.msra.mxu0 0
      %3639 = vmatprep.mubr.bf16.mxu0 0
      %3640 = vmatmul.mubr.bf16.gmra.mxu0 %v3527
      %v3641 = vpop.f32.mrf.mxu0
      %v3642 = vadd.f32 0.0, %v3641
      %v3643 = vpop.f32.mrf.mxu0
      %v3644 = vpop.f32.mrf.mxu0
      %v3645 = vadd.f32 0.0, %v3644
      %v3646 = vpop.f32.mrf.mxu0
      %3647 = vmatprep.mubr.bf16.mxu0 0
      %3648 = vmatmul.mubr.bf16.gmra.mxu0 %v3528
      %v3649 = vpop.f32.mrf.mxu0
      %v3650 = vadd.f32 0.0, %v3649
      %v3651 = vpop.f32.mrf.mxu0
      %v3652 = vpop.f32.mrf.mxu0
      %v3653 = vadd.f32 0.0, %v3652
      %v3654 = vpop.f32.mrf.mxu0
      %3655 = vmatprep.mubr.bf16.mxu0 0
      %3656 = vmatmul.mubr.bf16.gmra.mxu0 %v3529
      %v3657 = vpop.f32.mrf.mxu0
      %v3658 = vadd.f32 0.0, %v3657
      %v3659 = vpop.f32.mrf.mxu0
      %v3660 = vpop.f32.mrf.mxu0
      %v3661 = vadd.f32 0.0, %v3660
      %v3662 = vpop.f32.mrf.mxu0
      %3663 = vmatprep.mubr.bf16.mxu0 0
      %3664 = vmatmul.mubr.bf16.gmra.mxu0 %v3530
      %v3665 = vpop.f32.mrf.mxu0
      %v3666 = vadd.f32 0.0, %v3665
      %v3667 = vpop.f32.mrf.mxu0
      %v3668 = vpop.f32.mrf.mxu0
      %v3669 = vadd.f32 0.0, %v3668
      %v3670 = vpop.f32.mrf.mxu0
      %3671 = vmatprep.mubr.bf16.mxu0 0
      %3672 = vmatmul.mubr.bf16.gmra.mxu0 %v3531
      %v3673 = vpop.f32.mrf.mxu0
      %v3674 = vadd.f32 0.0, %v3673
      %v3675 = vpop.f32.mrf.mxu0
      %v3676 = vpop.f32.mrf.mxu0
      %v3677 = vadd.f32 0.0, %v3676
      %v3678 = vpop.f32.mrf.mxu0
      %3679 = vmatprep.mubr.bf16.mxu0 0
      %3680 = vmatmul.mubr.bf16.gmra.mxu0 %v3532
      %v3681 = vpop.f32.mrf.mxu0
      %v3682 = vadd.f32 0.0, %v3681
      %v3683 = vpop.f32.mrf.mxu0
      %v3684 = vpop.f32.mrf.mxu0
      %v3685 = vadd.f32 0.0, %v3684
      %v3686 = vpop.f32.mrf.mxu0
      %3687 = vmatprep.mubr.bf16.mxu0 0
      %3688 = vmatmul.mubr.bf16.gmra.mxu0 %v3533
      %v3689 = vpop.f32.mrf.mxu0
      %v3690 = vadd.f32 0.0, %v3689
      %v3691 = vpop.f32.mrf.mxu0
      %v3692 = vpop.f32.mrf.mxu0
      %v3693 = vadd.f32 0.0, %v3692
      %v3694 = vpop.f32.mrf.mxu0
      %3695 = vmatprep.mubr.bf16.mxu0 0
      %3696 = vmatmul.mubr.bf16.gmra.mxu0 %v3534
      %v3697 = vpop.f32.mrf.mxu0
      %v3698 = vadd.f32 0.0, %v3697
      %v3699 = vpop.f32.mrf.mxu0
      %v3700 = vpop.f32.mrf.mxu0
      %v3701 = vadd.f32 0.0, %v3700
      %v3702 = vpop.f32.mrf.mxu0
      %3703 = vmatprep.mubr.bf16.mxu0 0
      %3704 = vmatmul.mubr.bf16.gmra.mxu0 %v3535
      %v3705 = vpop.f32.mrf.mxu0
      %v3706 = vadd.f32 0.0, %v3705
      %v3707 = vpop.f32.mrf.mxu0
      %v3708 = vpop.f32.mrf.mxu0
      %v3709 = vadd.f32 0.0, %v3708
      %v3710 = vpop.f32.mrf.mxu0
      %3711 = vmatprep.mubr.bf16.mxu0 0
      %3712 = vmatmul.mubr.bf16.gmra.mxu0 %v3536
      %v3713 = vpop.f32.mrf.mxu0
      %v3714 = vadd.f32 0.0, %v3713
      %v3715 = vpop.f32.mrf.mxu0
      %v3716 = vpop.f32.mrf.mxu0
      %v3717 = vadd.f32 0.0, %v3716
      %v3718 = vpop.f32.mrf.mxu0
      %3719 = vmatprep.mubr.bf16.mxu0 0
      %3720 = vmatmul.mubr.bf16.gmra.mxu0 %v3537
      %v3721 = vpop.f32.mrf.mxu0
      %v3722 = vadd.f32 0.0, %v3721
      %v3723 = vpop.f32.mrf.mxu0
      %v3724 = vpop.f32.mrf.mxu0
      %v3725 = vadd.f32 0.0, %v3724
      %v3726 = vpop.f32.mrf.mxu0
      %3727 = vmatprep.mubr.bf16.mxu0 0
      %3728 = vmatmul.mubr.bf16.gmra.mxu0 %v3538
      %v3729 = vpop.f32.mrf.mxu0
      %v3730 = vadd.f32 0.0, %v3729
      %v3731 = vpop.f32.mrf.mxu0
      %v3732 = vpop.f32.mrf.mxu0
      %v3733 = vadd.f32 0.0, %v3732
      %v3734 = vpop.f32.mrf.mxu0
      %3735 = vmatprep.mubr.bf16.mxu0 0
      %3736 = vmatmul.mubr.bf16.gmra.mxu0 %v3539
      %v3737 = vpop.f32.mrf.mxu0
      %v3738 = vadd.f32 0.0, %v3737
      %v3739 = vpop.f32.mrf.mxu0
      %v3740 = vpop.f32.mrf.mxu0
      %v3741 = vadd.f32 0.0, %v3740
      %v3742 = vpop.f32.mrf.mxu0
      %3743 = vmatprep.mubr.bf16.mxu0 0
      %3744 = vmatmul.mubr.bf16.gmra.mxu0 %v3540
      %v3745 = vpop.f32.mrf.mxu0
      %v3746 = vadd.f32 0.0, %v3745
      %v3747 = vpop.f32.mrf.mxu0
      %v3748 = vpop.f32.mrf.mxu0
      %v3749 = vadd.f32 0.0, %v3748
      %v3750 = vpop.f32.mrf.mxu0
      %3751 = vmatprep.mubr.bf16.mxu0 0
      %3752 = vmatmul.mubr.bf16.gmra.mxu0 %v3541
      %v3753 = vpop.f32.mrf.mxu0
      %v3754 = vadd.f32 0.0, %v3753
      %v3755 = vpop.f32.mrf.mxu0
      %v3756 = vpop.f32.mrf.mxu0
      %v3757 = vadd.f32 0.0, %v3756
      %v3758 = vpop.f32.mrf.mxu0
      %3759 = vmatprep.mubr.bf16.mxu0 0
      %3760 = vmatmul.mubr.bf16.gmra.mxu0 %v3542
      %v3761 = vpop.f32.mrf.mxu0
      %v3762 = vadd.f32 0.0, %v3761
      %v3763 = vpop.f32.mrf.mxu0
      %v3764 = vpop.f32.mrf.mxu0
      %v3765 = vadd.f32 0.0, %v3764
      %v3766 = vpop.f32.mrf.mxu0
      %3767 = vdwg.mxu0
      %v3768 = vadd.f32 %v3381, %v3642
      %v3769 = vadd.f32 %v3382, %v3645
      %v3770 = vadd.f32 %v3383, %v3650
      %v3771 = vadd.f32 %v3384, %v3653
      %v3772 = vadd.f32 %v3385, %v3658
      %v3773 = vadd.f32 %v3386, %v3661
      %v3774 = vadd.f32 %v3387, %v3666
      %v3775 = vadd.f32 %v3388, %v3669
      %v3776 = vadd.f32 %v3389, %v3674
      %v3777 = vadd.f32 %v3390, %v3677
      %v3778 = vadd.f32 %v3391, %v3682
      %v3779 = vadd.f32 %v3392, %v3685
      %v3780 = vadd.f32 %v3393, %v3690
      %v3781 = vadd.f32 %v3394, %v3693
      %v3782 = vadd.f32 %v3395, %v3698
      %v3783 = vadd.f32 %v3396, %v3701
      %v3784 = vadd.f32 %v3397, %v3706
      %v3785 = vadd.f32 %v3398, %v3709
      %v3786 = vadd.f32 %v3399, %v3714
      %v3787 = vadd.f32 %v3400, %v3717
      %v3788 = vadd.f32 %v3401, %v3722
      %v3789 = vadd.f32 %v3402, %v3725
      %v3790 = vadd.f32 %v3403, %v3730
      %v3791 = vadd.f32 %v3404, %v3733
      %v3792 = vadd.f32 %v3405, %v3738
      %v3793 = vadd.f32 %v3406, %v3741
      %v3794 = vadd.f32 %v3407, %v3746
      %v3795 = vadd.f32 %v3408, %v3749
      %v3796 = vadd.f32 %v3409, %v3754
      %v3797 = vadd.f32 %v3410, %v3757
      %v3798 = vadd.f32 %v3411, %v3762
      %v3799 = vadd.f32 %v3412, %v3765
      %v3800 = vld [vmem:[%s3413] sm:$0xf]
      %v3801 = vld [vmem:[%s3413 + $0x4] sm:$0xf]
      %v3802 = vld [vmem:[%s3413 + $0x8] sm:$0x1]
      %v3803 = vld [vmem:[%s3413 + $0xc] sm:$0xf]
      %v3804 = vld [vmem:[%s3413 + $0x10] sm:$0xf]
      %v3805 = vld [vmem:[%s3413 + $0x14] sm:$0x1]
      %v3806 = vld [vmem:[%s3413 + $0x18] sm:$0xf]
      %v3807 = vld [vmem:[%s3413 + $0x1c] sm:$0xf]
      %v3808 = vld [vmem:[%s3413 + $0x20] sm:$0x1]
      %v3809 = vld [vmem:[%s3413 + $0x24] sm:$0xf]
      %v3810 = vld [vmem:[%s3413 + $0x28] sm:$0xf]
      %v3811 = vld [vmem:[%s3413 + $0x2c] sm:$0x1]
      %v3812 = vld [vmem:[%s3413 + $0x30] sm:$0xf]
      %v3813 = vld [vmem:[%s3413 + $0x34] sm:$0xf]
      %v3814 = vld [vmem:[%s3413 + $0x38] sm:$0x1]
      %v3815 = vld [vmem:[%s3413 + $0x3c] sm:$0xf]
      %v3816 = vld [vmem:[%s3413 + $0x40] sm:$0xf]
      %v3817 = vld [vmem:[%s3413 + $0x44] sm:$0x1]
      %v3818 = vld [vmem:[%s3413 + $0x48] sm:$0xf]
      %v3819 = vld [vmem:[%s3413 + $0x4c] sm:$0xf]
      %v3820 = vld [vmem:[%s3413 + $0x50] sm:$0x1]
      %v3821 = vld [vmem:[%s3413 + $0x54] sm:$0xf]
      %v3822 = vld [vmem:[%s3413 + $0x58] sm:$0xf]
      %v3823 = vld [vmem:[%s3413 + $0x5c] sm:$0x1]
      %v3824 = vld [vmem:[%s3413 + $0x60] sm:$0xf]
      %v3825 = vld [vmem:[%s3413 + $0x64] sm:$0xf]
      %v3826 = vld [vmem:[%s3413 + $0x68] sm:$0x1]
      %v3827 = vld [vmem:[%s3413 + $0x6c] sm:$0xf]
      %v3828 = vld [vmem:[%s3413 + $0x70] sm:$0xf]
      %v3829 = vld [vmem:[%s3413 + $0x74] sm:$0x1]
      %v3830 = vld [vmem:[%s3413 + $0x78] sm:$0xf]
      %v3831 = vld [vmem:[%s3413 + $0x7c] sm:$0xf]
      %v3832 = vld [vmem:[%s3413 + $0x80] sm:$0x1]
      %v3833 = vld [vmem:[%s3413 + $0x84] sm:$0xf]
      %v3834 = vld [vmem:[%s3413 + $0x88] sm:$0xf]
      %v3835 = vld [vmem:[%s3413 + $0x8c] sm:$0x1]
      %v3836 = vld [vmem:[%s3413 + $0x90] sm:$0xf]
      %v3837 = vld [vmem:[%s3413 + $0x94] sm:$0xf]
      %v3838 = vld [vmem:[%s3413 + $0x98] sm:$0x1]
      %v3839 = vld [vmem:[%s3413 + $0x9c] sm:$0xf]
      %v3840 = vld [vmem:[%s3413 + $0xa0] sm:$0xf]
      %v3841 = vld [vmem:[%s3413 + $0xa4] sm:$0x1]
      %v3842 = vld [vmem:[%s3413 + $0xa8] sm:$0xf]
      %v3843 = vld [vmem:[%s3413 + $0xac] sm:$0xf]
      %v3844 = vld [vmem:[%s3413 + $0xb0] sm:$0x1]
      %v3845 = vld [vmem:[%s3413 + $0xb4] sm:$0xf]
      %v3846 = vld [vmem:[%s3413 + $0xb8] sm:$0xf]
      %v3847 = vld [vmem:[%s3413 + $0xbc] sm:$0x1]
      %v3849 = vshrl.u32 %v3800, 16
      %v3851 = vrot.slane %v3849, 4
      %v3852 = vshll.u32 %v3800, 16
      %v3854 = vrot.slane %v3852, 5
      %v3855 = vor.u32 %v3851, %v3854
      %v3856 = vrot.slane %v3855, 4
      %v3858 = vshll.u32 %v3801, 16
      %v3860 = vrot.slane %v3858, 5
      %v3861 = vsel %vm309, %v3856, %v3860
      %v3862 = vshrl.u32 %v3801, 16
      %v3864 = vrot.slane %v3862, 4
      %v3865 = vor.u32 %v3864, %v3860
      %v3866 = vrot.slane %v3865, 4
      %v3868 = vshll.u32 %v3802, 16
      %v3870 = vrot.slane %v3868, 5
      %v3871 = vsel %vm309, %v3866, %v3870
      %v3873 = vshrl.u32 %v3803, 16
      %v3875 = vrot.slane %v3873, 4
      %v3876 = vshll.u32 %v3803, 16
      %v3878 = vrot.slane %v3876, 5
      %v3879 = vor.u32 %v3875, %v3878
      %v3880 = vrot.slane %v3879, 4
      %v3882 = vshll.u32 %v3804, 16
      %v3884 = vrot.slane %v3882, 5
      %v3885 = vsel %vm309, %v3880, %v3884
      %v3886 = vshrl.u32 %v3804, 16
      %v3888 = vrot.slane %v3886, 4
      %v3889 = vor.u32 %v3888, %v3884
      %v3890 = vrot.slane %v3889, 4
      %v3892 = vshll.u32 %v3805, 16
      %v3894 = vrot.slane %v3892, 5
      %v3895 = vsel %vm309, %v3890, %v3894
      %v3897 = vshrl.u32 %v3806, 16
      %v3899 = vrot.slane %v3897, 4
      %v3900 = vshll.u32 %v3806, 16
      %v3902 = vrot.slane %v3900, 5
      %v3903 = vor.u32 %v3899, %v3902
      %v3904 = vrot.slane %v3903, 4
      %v3906 = vshll.u32 %v3807, 16
      %v3908 = vrot.slane %v3906, 5
      %v3909 = vsel %vm309, %v3904, %v3908
      %v3910 = vshrl.u32 %v3807, 16
      %v3912 = vrot.slane %v3910, 4
      %v3913 = vor.u32 %v3912, %v3908
      %v3914 = vrot.slane %v3913, 4
      %v3916 = vshll.u32 %v3808, 16
      %v3918 = vrot.slane %v3916, 5
      %v3919 = vsel %vm309, %v3914, %v3918
      %v3921 = vshrl.u32 %v3809, 16
      %v3923 = vrot.slane %v3921, 4
      %v3924 = vshll.u32 %v3809, 16
      %v3926 = vrot.slane %v3924, 5
      %v3927 = vor.u32 %v3923, %v3926
      %v3928 = vrot.slane %v3927, 4
      %v3930 = vshll.u32 %v3810, 16
      %v3932 = vrot.slane %v3930, 5
      %v3933 = vsel %vm309, %v3928, %v3932
      %v3934 = vshrl.u32 %v3810, 16
      %v3936 = vrot.slane %v3934, 4
      %v3937 = vor.u32 %v3936, %v3932
      %v3938 = vrot.slane %v3937, 4
      %v3940 = vshll.u32 %v3811, 16
      %v3942 = vrot.slane %v3940, 5
      %v3943 = vsel %vm309, %v3938, %v3942
      %v3945 = vshrl.u32 %v3812, 16
      %v3947 = vrot.slane %v3945, 4
      %v3948 = vshll.u32 %v3812, 16
      %v3950 = vrot.slane %v3948, 5
      %v3951 = vor.u32 %v3947, %v3950
      %v3952 = vrot.slane %v3951, 4
      %v3954 = vshll.u32 %v3813, 16
      %v3956 = vrot.slane %v3954, 5
      %v3957 = vsel %vm309, %v3952, %v3956
      %v3958 = vshrl.u32 %v3813, 16
      %v3960 = vrot.slane %v3958, 4
      %v3961 = vor.u32 %v3960, %v3956
      %v3962 = vrot.slane %v3961, 4
      %v3964 = vshll.u32 %v3814, 16
      %v3966 = vrot.slane %v3964, 5
      %v3967 = vsel %vm309, %v3962, %v3966
      %v3969 = vshrl.u32 %v3815, 16
      %v3971 = vrot.slane %v3969, 4
      %v3972 = vshll.u32 %v3815, 16
      %v3974 = vrot.slane %v3972, 5
      %v3975 = vor.u32 %v3971, %v3974
      %v3976 = vrot.slane %v3975, 4
      %v3978 = vshll.u32 %v3816, 16
      %v3980 = vrot.slane %v3978, 5
      %v3981 = vsel %vm309, %v3976, %v3980
      %v3982 = vshrl.u32 %v3816, 16
      %v3984 = vrot.slane %v3982, 4
      %v3985 = vor.u32 %v3984, %v3980
      %v3986 = vrot.slane %v3985, 4
      %v3988 = vshll.u32 %v3817, 16
      %v3990 = vrot.slane %v3988, 5
      %v3991 = vsel %vm309, %v3986, %v3990
      %v3993 = vshrl.u32 %v3818, 16
      %v3995 = vrot.slane %v3993, 4
      %v3996 = vshll.u32 %v3818, 16
      %v3998 = vrot.slane %v3996, 5
      %v3999 = vor.u32 %v3995, %v3998
      %v4000 = vrot.slane %v3999, 4
      %v4002 = vshll.u32 %v3819, 16
      %v4004 = vrot.slane %v4002, 5
      %v4005 = vsel %vm309, %v4000, %v4004
      %v4006 = vshrl.u32 %v3819, 16
      %v4008 = vrot.slane %v4006, 4
      %v4009 = vor.u32 %v4008, %v4004
      %v4010 = vrot.slane %v4009, 4
      %v4012 = vshll.u32 %v3820, 16
      %v4014 = vrot.slane %v4012, 5
      %v4015 = vsel %vm309, %v4010, %v4014
      %v4017 = vshrl.u32 %v3821, 16
      %v4019 = vrot.slane %v4017, 4
      %v4020 = vshll.u32 %v3821, 16
      %v4022 = vrot.slane %v4020, 5
      %v4023 = vor.u32 %v4019, %v4022
      %v4024 = vrot.slane %v4023, 4
      %v4026 = vshll.u32 %v3822, 16
      %v4028 = vrot.slane %v4026, 5
      %v4029 = vsel %vm309, %v4024, %v4028
      %v4030 = vshrl.u32 %v3822, 16
      %v4032 = vrot.slane %v4030, 4
      %v4033 = vor.u32 %v4032, %v4028
      %v4034 = vrot.slane %v4033, 4
      %v4036 = vshll.u32 %v3823, 16
      %v4038 = vrot.slane %v4036, 5
      %v4039 = vsel %vm309, %v4034, %v4038
      %v4041 = vshrl.u32 %v3824, 16
      %v4043 = vrot.slane %v4041, 4
      %v4044 = vshll.u32 %v3824, 16
      %v4046 = vrot.slane %v4044, 5
      %v4047 = vor.u32 %v4043, %v4046
      %v4048 = vrot.slane %v4047, 4
      %v4050 = vshll.u32 %v3825, 16
      %v4052 = vrot.slane %v4050, 5
      %v4053 = vsel %vm309, %v4048, %v4052
      %v4054 = vshrl.u32 %v3825, 16
      %v4056 = vrot.slane %v4054, 4
      %v4057 = vor.u32 %v4056, %v4052
      %v4058 = vrot.slane %v4057, 4
      %v4060 = vshll.u32 %v3826, 16
      %v4062 = vrot.slane %v4060, 5
      %v4063 = vsel %vm309, %v4058, %v4062
      %v4065 = vshrl.u32 %v3827, 16
      %v4067 = vrot.slane %v4065, 4
      %v4068 = vshll.u32 %v3827, 16
      %v4070 = vrot.slane %v4068, 5
      %v4071 = vor.u32 %v4067, %v4070
      %v4072 = vrot.slane %v4071, 4
      %v4074 = vshll.u32 %v3828, 16
      %v4076 = vrot.slane %v4074, 5
      %v4077 = vsel %vm309, %v4072, %v4076
      %v4078 = vshrl.u32 %v3828, 16
      %v4080 = vrot.slane %v4078, 4
      %v4081 = vor.u32 %v4080, %v4076
      %v4082 = vrot.slane %v4081, 4
      %v4084 = vshll.u32 %v3829, 16
      %v4086 = vrot.slane %v4084, 5
      %v4087 = vsel %vm309, %v4082, %v4086
      %v4089 = vshrl.u32 %v3830, 16
      %v4091 = vrot.slane %v4089, 4
      %v4092 = vshll.u32 %v3830, 16
      %v4094 = vrot.slane %v4092, 5
      %v4095 = vor.u32 %v4091, %v4094
      %v4096 = vrot.slane %v4095, 4
      %v4098 = vshll.u32 %v3831, 16
      %v4100 = vrot.slane %v4098, 5
      %v4101 = vsel %vm309, %v4096, %v4100
      %v4102 = vshrl.u32 %v3831, 16
      %v4104 = vrot.slane %v4102, 4
      %v4105 = vor.u32 %v4104, %v4100
      %v4106 = vrot.slane %v4105, 4
      %v4108 = vshll.u32 %v3832, 16
      %v4110 = vrot.slane %v4108, 5
      %v4111 = vsel %vm309, %v4106, %v4110
      %v4113 = vshrl.u32 %v3833, 16
      %v4115 = vrot.slane %v4113, 4
      %v4116 = vshll.u32 %v3833, 16
      %v4118 = vrot.slane %v4116, 5
      %v4119 = vor.u32 %v4115, %v4118
      %v4120 = vrot.slane %v4119, 4
      %v4122 = vshll.u32 %v3834, 16
      %v4124 = vrot.slane %v4122, 5
      %v4125 = vsel %vm309, %v4120, %v4124
      %v4126 = vshrl.u32 %v3834, 16
      %v4128 = vrot.slane %v4126, 4
      %v4129 = vor.u32 %v4128, %v4124
      %v4130 = vrot.slane %v4129, 4
      %v4132 = vshll.u32 %v3835, 16
      %v4134 = vrot.slane %v4132, 5
      %v4135 = vsel %vm309, %v4130, %v4134
      %v4137 = vshrl.u32 %v3836, 16
      %v4139 = vrot.slane %v4137, 4
      %v4140 = vshll.u32 %v3836, 16
      %v4142 = vrot.slane %v4140, 5
      %v4143 = vor.u32 %v4139, %v4142
      %v4144 = vrot.slane %v4143, 4
      %v4146 = vshll.u32 %v3837, 16
      %v4148 = vrot.slane %v4146, 5
      %v4149 = vsel %vm309, %v4144, %v4148
      %v4150 = vshrl.u32 %v3837, 16
      %v4152 = vrot.slane %v4150, 4
      %v4153 = vor.u32 %v4152, %v4148
      %v4154 = vrot.slane %v4153, 4
      %v4156 = vshll.u32 %v3838, 16
      %v4158 = vrot.slane %v4156, 5
      %v4159 = vsel %vm309, %v4154, %v4158
      %v4161 = vshrl.u32 %v3839, 16
      %v4163 = vrot.slane %v4161, 4
      %v4164 = vshll.u32 %v3839, 16
      %v4166 = vrot.slane %v4164, 5
      %v4167 = vor.u32 %v4163, %v4166
      %v4168 = vrot.slane %v4167, 4
      %v4170 = vshll.u32 %v3840, 16
      %v4172 = vrot.slane %v4170, 5
      %v4173 = vsel %vm309, %v4168, %v4172
      %v4174 = vshrl.u32 %v3840, 16
      %v4176 = vrot.slane %v4174, 4
      %v4177 = vor.u32 %v4176, %v4172
      %v4178 = vrot.slane %v4177, 4
      %v4180 = vshll.u32 %v3841, 16
      %v4182 = vrot.slane %v4180, 5
      %v4183 = vsel %vm309, %v4178, %v4182
      %v4185 = vshrl.u32 %v3842, 16
      %v4187 = vrot.slane %v4185, 4
      %v4188 = vshll.u32 %v3842, 16
      %v4190 = vrot.slane %v4188, 5
      %v4191 = vor.u32 %v4187, %v4190
      %v4192 = vrot.slane %v4191, 4
      %v4194 = vshll.u32 %v3843, 16
      %v4196 = vrot.slane %v4194, 5
      %v4197 = vsel %vm309, %v4192, %v4196
      %v4198 = vshrl.u32 %v3843, 16
      %v4200 = vrot.slane %v4198, 4
      %v4201 = vor.u32 %v4200, %v4196
      %v4202 = vrot.slane %v4201, 4
      %v4204 = vshll.u32 %v3844, 16
      %v4206 = vrot.slane %v4204, 5
      %v4207 = vsel %vm309, %v4202, %v4206
      %v4209 = vshrl.u32 %v3845, 16
      %v4211 = vrot.slane %v4209, 4
      %v4212 = vshll.u32 %v3845, 16
      %v4214 = vrot.slane %v4212, 5
      %v4215 = vor.u32 %v4211, %v4214
      %v4216 = vrot.slane %v4215, 4
      %v4218 = vshll.u32 %v3846, 16
      %v4220 = vrot.slane %v4218, 5
      %v4221 = vsel %vm309, %v4216, %v4220
      %v4222 = vshrl.u32 %v3846, 16
      %v4224 = vrot.slane %v4222, 4
      %v4225 = vor.u32 %v4224, %v4220
      %v4226 = vrot.slane %v4225, 4
      %v4228 = vshll.u32 %v3847, 16
      %v4230 = vrot.slane %v4228, 5
      %v4231 = vsel %vm309, %v4226, %v4230
      %s4232 = scalar_lea.vmem %s1, 448
      %v4233 = vld [vmem:[%s4232] sm:$0xf]
      %v4234 = vld [vmem:[%s4232 + $0x4] sm:$0xf]
      %v4235 = vld [vmem:[%s4232 + $0x8] sm:$0xf]
      %v4236 = vld [vmem:[%s4232 + $0xc] sm:$0xf]
      %v4237 = vld [vmem:[%s4232 + $0x10] sm:$0xf]
      %v4238 = vld [vmem:[%s4232 + $0x14] sm:$0xf]
      %v4239 = vld [vmem:[%s4232 + $0x18] sm:$0xf]
      %v4240 = vld [vmem:[%s4232 + $0x1c] sm:$0xf]
      %v4241 = vld [vmem:[%s4232 + $0x20] sm:$0xf]
      %v4242 = vld [vmem:[%s4232 + $0x24] sm:$0xf]
      %v4243 = vld [vmem:[%s4232 + $0x28] sm:$0xf]
      %v4244 = vld [vmem:[%s4232 + $0x2c] sm:$0xf]
      %v4245 = vld [vmem:[%s4232 + $0x30] sm:$0xf]
      %v4246 = vld [vmem:[%s4232 + $0x34] sm:$0xf]
      %v4247 = vld [vmem:[%s4232 + $0x38] sm:$0xf]
      %v4248 = vld [vmem:[%s4232 + $0x3c] sm:$0xf]
      %v4249 = vunpack.c.l.b16 %v3861
      %v4250 = vunpack.c.l.b16 %v3871
      %v4251 = vunpack.c.l.b16 %v3885
      %v4252 = vunpack.c.l.b16 %v3895
      %v4253 = vunpack.c.l.b16 %v3909
      %v4254 = vunpack.c.l.b16 %v3919
      %v4255 = vunpack.c.l.b16 %v3933
      %v4256 = vunpack.c.l.b16 %v3943
      %v4257 = vunpack.c.l.b16 %v3957
      %v4258 = vunpack.c.l.b16 %v3967
      %v4259 = vunpack.c.l.b16 %v3981
      %v4260 = vunpack.c.l.b16 %v3991
      %v4261 = vunpack.c.l.b16 %v4005
      %v4262 = vunpack.c.l.b16 %v4015
      %v4263 = vunpack.c.l.b16 %v4029
      %v4264 = vunpack.c.l.b16 %v4039
      %v4265 = vunpack.c.l.b16 %v4053
      %v4266 = vunpack.c.l.b16 %v4063
      %v4267 = vunpack.c.l.b16 %v4077
      %v4268 = vunpack.c.l.b16 %v4087
      %v4269 = vunpack.c.l.b16 %v4101
      %v4270 = vunpack.c.l.b16 %v4111
      %v4271 = vunpack.c.l.b16 %v4125
      %v4272 = vunpack.c.l.b16 %v4135
      %v4273 = vunpack.c.l.b16 %v4149
      %v4274 = vunpack.c.l.b16 %v4159
      %v4275 = vunpack.c.l.b16 %v4173
      %v4276 = vunpack.c.l.b16 %v4183
      %v4277 = vunpack.c.l.b16 %v4197
      %v4278 = vunpack.c.l.b16 %v4207
      %v4279 = vunpack.c.l.b16 %v4221
      %v4280 = vunpack.c.l.b16 %v4231
      %v4281 = vpack.c.b16 %v4250, %v4249
      %v4282 = vpack.c.b16 %v4252, %v4251
      %v4283 = vpack.c.b16 %v4254, %v4253
      %v4284 = vpack.c.b16 %v4256, %v4255
      %v4285 = vpack.c.b16 %v4258, %v4257
      %v4286 = vpack.c.b16 %v4260, %v4259
      %v4287 = vpack.c.b16 %v4262, %v4261
      %v4288 = vpack.c.b16 %v4264, %v4263
      %v4289 = vpack.c.b16 %v4266, %v4265
      %v4290 = vpack.c.b16 %v4268, %v4267
      %v4291 = vpack.c.b16 %v4270, %v4269
      %v4292 = vpack.c.b16 %v4272, %v4271
      %v4293 = vpack.c.b16 %v4274, %v4273
      %v4294 = vpack.c.b16 %v4276, %v4275
      %v4295 = vpack.c.b16 %v4278, %v4277
      %v4296 = vpack.c.b16 %v4280, %v4279
      %v4329 = vunpack.c.l.b16 %v4233
      %v4330 = vunpack.c.l.b16 %v4234
      %v4331 = vunpack.c.l.b16 %v4235
      %v4332 = vunpack.c.l.b16 %v4236
      %v4333 = vunpack.c.l.b16 %v4237
      %v4334 = vunpack.c.l.b16 %v4238
      %v4335 = vunpack.c.l.b16 %v4239
      %v4336 = vunpack.c.l.b16 %v4240
      %v4337 = vunpack.c.l.b16 %v4241
      %v4338 = vunpack.c.l.b16 %v4242
      %v4339 = vunpack.c.l.b16 %v4243
      %v4340 = vunpack.c.l.b16 %v4244
      %v4341 = vunpack.c.l.b16 %v4245
      %v4342 = vunpack.c.l.b16 %v4246
      %v4343 = vunpack.c.l.b16 %v4247
      %v4344 = vunpack.c.l.b16 %v4248
      %v4345 = vpack.c.b16 %v4330, %v4329
      %v4346 = vpack.c.b16 %v4332, %v4331
      %v4347 = vpack.c.b16 %v4334, %v4333
      %v4348 = vpack.c.b16 %v4336, %v4335
      %v4349 = vpack.c.b16 %v4338, %v4337
      %v4350 = vpack.c.b16 %v4340, %v4339
      %v4351 = vpack.c.b16 %v4342, %v4341
      %v4352 = vpack.c.b16 %v4344, %v4343
      %4361 = vmatprep.subr.bf16.mxu0 0
      %4362 = vmatpush1.bf16.msra.mxu0 %v4352
      %4363 = vmatprep.subr.bf16.mxu0 0
      %4364 = vmatpush1.bf16.msra.mxu0 %v4351
      %4365 = vmatprep.subr.bf16.mxu0 0
      %4366 = vmatpush1.bf16.msra.mxu0 %v4350
      %4367 = vmatprep.subr.bf16.mxu0 0
      %4368 = vmatpush1.bf16.msra.mxu0 %v4349
      %4369 = vmatprep.subr.bf16.mxu0 0
      %4370 = vmatpush1.bf16.msra.mxu0 %v4348
      %4371 = vmatprep.subr.bf16.mxu0 0
      %4372 = vmatpush1.bf16.msra.mxu0 %v4347
      %4373 = vmatprep.subr.bf16.mxu0 0
      %4374 = vmatpush1.bf16.msra.mxu0 %v4346
      %4375 = vmatprep.subr.bf16.mxu0 0
      %4376 = vmatpush1.bf16.msra.mxu0 %v4345
      %4377 = vmatprep.subr.bf16.mxu0 0
      %4378 = vmatpush2.bf16.msra.mxu0 0
      %4379 = vmatprep.subr.bf16.mxu0 0
      %4380 = vmatpush2.bf16.msra.mxu0 0
      %4381 = vmatprep.subr.bf16.mxu0 0
      %4382 = vmatpush2.bf16.msra.mxu0 0
      %4383 = vmatprep.subr.bf16.mxu0 0
      %4384 = vmatpush2.bf16.msra.mxu0 0
      %4385 = vmatprep.subr.bf16.mxu0 0
      %4386 = vmatpush2.bf16.msra.mxu0 0
      %4387 = vmatprep.subr.bf16.mxu0 0
      %4388 = vmatpush2.bf16.msra.mxu0 0
      %4389 = vmatprep.subr.bf16.mxu0 0
      %4390 = vmatpush2.bf16.msra.mxu0 0
      %4391 = vmatprep.subr.bf16.mxu0 0
      %4392 = vmatpush2.bf16.msra.mxu0 0
      %4393 = vmatprep.mubr.bf16.mxu0 0
      %4394 = vmatmul.mubr.bf16.gmra.mxu0 %v4281
      %v4395 = vpop.f32.mrf.mxu0
      %v4396 = vadd.f32 0.0, %v4395
      %v4397 = vpop.f32.mrf.mxu0
      %v4398 = vpop.f32.mrf.mxu0
      %v4399 = vadd.f32 0.0, %v4398
      %v4400 = vpop.f32.mrf.mxu0
      %4401 = vmatprep.mubr.bf16.mxu0 0
      %4402 = vmatmul.mubr.bf16.gmra.mxu0 %v4282
      %v4403 = vpop.f32.mrf.mxu0
      %v4404 = vadd.f32 0.0, %v4403
      %v4405 = vpop.f32.mrf.mxu0
      %v4406 = vpop.f32.mrf.mxu0
      %v4407 = vadd.f32 0.0, %v4406
      %v4408 = vpop.f32.mrf.mxu0
      %4409 = vmatprep.mubr.bf16.mxu0 0
      %4410 = vmatmul.mubr.bf16.gmra.mxu0 %v4283
      %v4411 = vpop.f32.mrf.mxu0
      %v4412 = vadd.f32 0.0, %v4411
      %v4413 = vpop.f32.mrf.mxu0
      %v4414 = vpop.f32.mrf.mxu0
      %v4415 = vadd.f32 0.0, %v4414
      %v4416 = vpop.f32.mrf.mxu0
      %4417 = vmatprep.mubr.bf16.mxu0 0
      %4418 = vmatmul.mubr.bf16.gmra.mxu0 %v4284
      %v4419 = vpop.f32.mrf.mxu0
      %v4420 = vadd.f32 0.0, %v4419
      %v4421 = vpop.f32.mrf.mxu0
      %v4422 = vpop.f32.mrf.mxu0
      %v4423 = vadd.f32 0.0, %v4422
      %v4424 = vpop.f32.mrf.mxu0
      %4425 = vmatprep.mubr.bf16.mxu0 0
      %4426 = vmatmul.mubr.bf16.gmra.mxu0 %v4285
      %v4427 = vpop.f32.mrf.mxu0
      %v4428 = vadd.f32 0.0, %v4427
      %v4429 = vpop.f32.mrf.mxu0
      %v4430 = vpop.f32.mrf.mxu0
      %v4431 = vadd.f32 0.0, %v4430
      %v4432 = vpop.f32.mrf.mxu0
      %4433 = vmatprep.mubr.bf16.mxu0 0
      %4434 = vmatmul.mubr.bf16.gmra.mxu0 %v4286
      %v4435 = vpop.f32.mrf.mxu0
      %v4436 = vadd.f32 0.0, %v4435
      %v4437 = vpop.f32.mrf.mxu0
      %v4438 = vpop.f32.mrf.mxu0
      %v4439 = vadd.f32 0.0, %v4438
      %v4440 = vpop.f32.mrf.mxu0
      %4441 = vmatprep.mubr.bf16.mxu0 0
      %4442 = vmatmul.mubr.bf16.gmra.mxu0 %v4287
      %v4443 = vpop.f32.mrf.mxu0
      %v4444 = vadd.f32 0.0, %v4443
      %v4445 = vpop.f32.mrf.mxu0
      %v4446 = vpop.f32.mrf.mxu0
      %v4447 = vadd.f32 0.0, %v4446
      %v4448 = vpop.f32.mrf.mxu0
      %4449 = vmatprep.mubr.bf16.mxu0 0
      %4450 = vmatmul.mubr.bf16.gmra.mxu0 %v4288
      %v4451 = vpop.f32.mrf.mxu0
      %v4452 = vadd.f32 0.0, %v4451
      %v4453 = vpop.f32.mrf.mxu0
      %v4454 = vpop.f32.mrf.mxu0
      %v4455 = vadd.f32 0.0, %v4454
      %v4456 = vpop.f32.mrf.mxu0
      %4457 = vmatprep.mubr.bf16.mxu0 0
      %4458 = vmatmul.mubr.bf16.gmra.mxu0 %v4289
      %v4459 = vpop.f32.mrf.mxu0
      %v4460 = vadd.f32 0.0, %v4459
      %v4461 = vpop.f32.mrf.mxu0
      %v4462 = vpop.f32.mrf.mxu0
      %v4463 = vadd.f32 0.0, %v4462
      %v4464 = vpop.f32.mrf.mxu0
      %4465 = vmatprep.mubr.bf16.mxu0 0
      %4466 = vmatmul.mubr.bf16.gmra.mxu0 %v4290
      %v4467 = vpop.f32.mrf.mxu0
      %v4468 = vadd.f32 0.0, %v4467
      %v4469 = vpop.f32.mrf.mxu0
      %v4470 = vpop.f32.mrf.mxu0
      %v4471 = vadd.f32 0.0, %v4470
      %v4472 = vpop.f32.mrf.mxu0
      %4473 = vmatprep.mubr.bf16.mxu0 0
      %4474 = vmatmul.mubr.bf16.gmra.mxu0 %v4291
      %v4475 = vpop.f32.mrf.mxu0
      %v4476 = vadd.f32 0.0, %v4475
      %v4477 = vpop.f32.mrf.mxu0
      %v4478 = vpop.f32.mrf.mxu0
      %v4479 = vadd.f32 0.0, %v4478
      %v4480 = vpop.f32.mrf.mxu0
      %4481 = vmatprep.mubr.bf16.mxu0 0
      %4482 = vmatmul.mubr.bf16.gmra.mxu0 %v4292
      %v4483 = vpop.f32.mrf.mxu0
      %v4484 = vadd.f32 0.0, %v4483
      %v4485 = vpop.f32.mrf.mxu0
      %v4486 = vpop.f32.mrf.mxu0
      %v4487 = vadd.f32 0.0, %v4486
      %v4488 = vpop.f32.mrf.mxu0
      %4489 = vmatprep.mubr.bf16.mxu0 0
      %4490 = vmatmul.mubr.bf16.gmra.mxu0 %v4293
      %v4491 = vpop.f32.mrf.mxu0
      %v4492 = vadd.f32 0.0, %v4491
      %v4493 = vpop.f32.mrf.mxu0
      %v4494 = vpop.f32.mrf.mxu0
      %v4495 = vadd.f32 0.0, %v4494
      %v4496 = vpop.f32.mrf.mxu0
      %4497 = vmatprep.mubr.bf16.mxu0 0
      %4498 = vmatmul.mubr.bf16.gmra.mxu0 %v4294
      %v4499 = vpop.f32.mrf.mxu0
      %v4500 = vadd.f32 0.0, %v4499
      %v4501 = vpop.f32.mrf.mxu0
      %v4502 = vpop.f32.mrf.mxu0
      %v4503 = vadd.f32 0.0, %v4502
      %v4504 = vpop.f32.mrf.mxu0
      %4505 = vmatprep.mubr.bf16.mxu0 0
      %4506 = vmatmul.mubr.bf16.gmra.mxu0 %v4295
      %v4507 = vpop.f32.mrf.mxu0
      %v4508 = vadd.f32 0.0, %v4507
      %v4509 = vpop.f32.mrf.mxu0
      %v4510 = vpop.f32.mrf.mxu0
      %v4511 = vadd.f32 0.0, %v4510
      %v4512 = vpop.f32.mrf.mxu0
      %4513 = vmatprep.mubr.bf16.mxu0 0
      %4514 = vmatmul.mubr.bf16.gmra.mxu0 %v4296
      %v4515 = vpop.f32.mrf.mxu0
      %v4516 = vadd.f32 0.0, %v4515
      %v4517 = vpop.f32.mrf.mxu0
      %v4518 = vpop.f32.mrf.mxu0
      %v4519 = vadd.f32 0.0, %v4518
      %v4520 = vpop.f32.mrf.mxu0
      %4521 = vdwg.mxu0
      %v4522 = vadd.f32 %v3768, %v4396
      %v4523 = vadd.f32 %v3769, %v4399
      %v4524 = vadd.f32 %v3770, %v4404
      %v4525 = vadd.f32 %v3771, %v4407
      %v4526 = vadd.f32 %v3772, %v4412
      %v4527 = vadd.f32 %v3773, %v4415
      %v4528 = vadd.f32 %v3774, %v4420
      %v4529 = vadd.f32 %v3775, %v4423
      %v4530 = vadd.f32 %v3776, %v4428
      %v4531 = vadd.f32 %v3777, %v4431
      %v4532 = vadd.f32 %v3778, %v4436
      %v4533 = vadd.f32 %v3779, %v4439
      %v4534 = vadd.f32 %v3780, %v4444
      %v4535 = vadd.f32 %v3781, %v4447
      %v4536 = vadd.f32 %v3782, %v4452
      %v4537 = vadd.f32 %v3783, %v4455
      %v4538 = vadd.f32 %v3784, %v4460
      %v4539 = vadd.f32 %v3785, %v4463
      %v4540 = vadd.f32 %v3786, %v4468
      %v4541 = vadd.f32 %v3787, %v4471
      %v4542 = vadd.f32 %v3788, %v4476
      %v4543 = vadd.f32 %v3789, %v4479
      %v4544 = vadd.f32 %v3790, %v4484
      %v4545 = vadd.f32 %v3791, %v4487
      %v4546 = vadd.f32 %v3792, %v4492
      %v4547 = vadd.f32 %v3793, %v4495
      %v4548 = vadd.f32 %v3794, %v4500
      %v4549 = vadd.f32 %v3795, %v4503
      %v4550 = vadd.f32 %v3796, %v4508
      %v4551 = vadd.f32 %v3797, %v4511
      %v4552 = vadd.f32 %v3798, %v4516
      %v4553 = vadd.f32 %v3799, %v4519
      %v4554 = vld [vmem:[%s3413] sm:$0xe]
      %v4555 = vld [vmem:[%s3413 + $0xc] sm:$0xe]
      %v4556 = vld [vmem:[%s3413 + $0x18] sm:$0xe]
      %v4557 = vld [vmem:[%s3413 + $0x24] sm:$0xe]
      %v4558 = vld [vmem:[%s3413 + $0x30] sm:$0xe]
      %v4559 = vld [vmem:[%s3413 + $0x3c] sm:$0xe]
      %v4560 = vld [vmem:[%s3413 + $0x48] sm:$0xe]
      %v4561 = vld [vmem:[%s3413 + $0x54] sm:$0xe]
      %v4562 = vld [vmem:[%s3413 + $0x60] sm:$0xe]
      %v4563 = vld [vmem:[%s3413 + $0x6c] sm:$0xe]
      %v4564 = vld [vmem:[%s3413 + $0x78] sm:$0xe]
      %v4565 = vld [vmem:[%s3413 + $0x84] sm:$0xe]
      %v4566 = vld [vmem:[%s3413 + $0x90] sm:$0xe]
      %v4567 = vld [vmem:[%s3413 + $0x9c] sm:$0xe]
      %v4568 = vld [vmem:[%s3413 + $0xa8] sm:$0xe]
      %v4569 = vld [vmem:[%s3413 + $0xb4] sm:$0xe]
      %v4618 = vrot.slane %v4554, 5
      %v4619 = vrot.slane %v4618, 4
      %v4620 = vrot.slane %v3801, 5
      %v4621 = vsel %vm1339, %v4619, %v4620
      %v4622 = vrot.slane %v4620, 4
      %v4623 = vrot.slane %v3802, 5
      %v4624 = vsel %vm1339, %v4622, %v4623
      %v4625 = vrot.slane %v4555, 5
      %v4626 = vrot.slane %v4625, 4
      %v4627 = vrot.slane %v3804, 5
      %v4628 = vsel %vm1339, %v4626, %v4627
      %v4629 = vrot.slane %v4627, 4
      %v4630 = vrot.slane %v3805, 5
      %v4631 = vsel %vm1339, %v4629, %v4630
      %v4632 = vrot.slane %v4556, 5
      %v4633 = vrot.slane %v4632, 4
      %v4634 = vrot.slane %v3807, 5
      %v4635 = vsel %vm1339, %v4633, %v4634
      %v4636 = vrot.slane %v4634, 4
      %v4637 = vrot.slane %v3808, 5
      %v4638 = vsel %vm1339, %v4636, %v4637
      %v4639 = vrot.slane %v4557, 5
      %v4640 = vrot.slane %v4639, 4
      %v4641 = vrot.slane %v3810, 5
      %v4642 = vsel %vm1339, %v4640, %v4641
      %v4643 = vrot.slane %v4641, 4
      %v4644 = vrot.slane %v3811, 5
      %v4645 = vsel %vm1339, %v4643, %v4644
      %v4646 = vrot.slane %v4558, 5
      %v4647 = vrot.slane %v4646, 4
      %v4648 = vrot.slane %v3813, 5
      %v4649 = vsel %vm1339, %v4647, %v4648
      %v4650 = vrot.slane %v4648, 4
      %v4651 = vrot.slane %v3814, 5
      %v4652 = vsel %vm1339, %v4650, %v4651
      %v4653 = vrot.slane %v4559, 5
      %v4654 = vrot.slane %v4653, 4
      %v4655 = vrot.slane %v3816, 5
      %v4656 = vsel %vm1339, %v4654, %v4655
      %v4657 = vrot.slane %v4655, 4
      %v4658 = vrot.slane %v3817, 5
      %v4659 = vsel %vm1339, %v4657, %v4658
      %v4660 = vrot.slane %v4560, 5
      %v4661 = vrot.slane %v4660, 4
      %v4662 = vrot.slane %v3819, 5
      %v4663 = vsel %vm1339, %v4661, %v4662
      %v4664 = vrot.slane %v4662, 4
      %v4665 = vrot.slane %v3820, 5
      %v4666 = vsel %vm1339, %v4664, %v4665
      %v4667 = vrot.slane %v4561, 5
      %v4668 = vrot.slane %v4667, 4
      %v4669 = vrot.slane %v3822, 5
      %v4670 = vsel %vm1339, %v4668, %v4669
      %v4671 = vrot.slane %v4669, 4
      %v4672 = vrot.slane %v3823, 5
      %v4673 = vsel %vm1339, %v4671, %v4672
      %v4674 = vrot.slane %v4562, 5
      %v4675 = vrot.slane %v4674, 4
      %v4676 = vrot.slane %v3825, 5
      %v4677 = vsel %vm1339, %v4675, %v4676
      %v4678 = vrot.slane %v4676, 4
      %v4679 = vrot.slane %v3826, 5
      %v4680 = vsel %vm1339, %v4678, %v4679
      %v4681 = vrot.slane %v4563, 5
      %v4682 = vrot.slane %v4681, 4
      %v4683 = vrot.slane %v3828, 5
      %v4684 = vsel %vm1339, %v4682, %v4683
      %v4685 = vrot.slane %v4683, 4
      %v4686 = vrot.slane %v3829, 5
      %v4687 = vsel %vm1339, %v4685, %v4686
      %v4688 = vrot.slane %v4564, 5
      %v4689 = vrot.slane %v4688, 4
      %v4690 = vrot.slane %v3831, 5
      %v4691 = vsel %vm1339, %v4689, %v4690
      %v4692 = vrot.slane %v4690, 4
      %v4693 = vrot.slane %v3832, 5
      %v4694 = vsel %vm1339, %v4692, %v4693
      %v4695 = vrot.slane %v4565, 5
      %v4696 = vrot.slane %v4695, 4
      %v4697 = vrot.slane %v3834, 5
      %v4698 = vsel %vm1339, %v4696, %v4697
      %v4699 = vrot.slane %v4697, 4
      %v4700 = vrot.slane %v3835, 5
      %v4701 = vsel %vm1339, %v4699, %v4700
      %v4702 = vrot.slane %v4566, 5
      %v4703 = vrot.slane %v4702, 4
      %v4704 = vrot.slane %v3837, 5
      %v4705 = vsel %vm1339, %v4703, %v4704
      %v4706 = vrot.slane %v4704, 4
      %v4707 = vrot.slane %v3838, 5
      %v4708 = vsel %vm1339, %v4706, %v4707
      %v4709 = vrot.slane %v4567, 5
      %v4710 = vrot.slane %v4709, 4
      %v4711 = vrot.slane %v3840, 5
      %v4712 = vsel %vm1339, %v4710, %v4711
      %v4713 = vrot.slane %v4711, 4
      %v4714 = vrot.slane %v3841, 5
      %v4715 = vsel %vm1339, %v4713, %v4714
      %v4716 = vrot.slane %v4568, 5
      %v4717 = vrot.slane %v4716, 4
      %v4718 = vrot.slane %v3843, 5
      %v4719 = vsel %vm1339, %v4717, %v4718
      %v4720 = vrot.slane %v4718, 4
      %v4721 = vrot.slane %v3844, 5
      %v4722 = vsel %vm1339, %v4720, %v4721
      %v4723 = vrot.slane %v4569, 5
      %v4724 = vrot.slane %v4723, 4
      %v4725 = vrot.slane %v3846, 5
      %v4726 = vsel %vm1339, %v4724, %v4725
      %v4727 = vrot.slane %v4725, 4
      %v4728 = vrot.slane %v3847, 5
      %v4729 = vsel %vm1339, %v4727, %v4728
      %s4730 = scalar_lea.vmem %s1, 512
      %v4731 = vld [vmem:[%s4730] sm:$0xf]
      %v4732 = vld [vmem:[%s4730 + $0x4] sm:$0xf]
      %v4733 = vld [vmem:[%s4730 + $0x8] sm:$0xf]
      %v4734 = vld [vmem:[%s4730 + $0xc] sm:$0xf]
      %v4735 = vld [vmem:[%s4730 + $0x10] sm:$0xf]
      %v4736 = vld [vmem:[%s4730 + $0x14] sm:$0xf]
      %v4737 = vld [vmem:[%s4730 + $0x18] sm:$0xf]
      %v4738 = vld [vmem:[%s4730 + $0x1c] sm:$0xf]
      %v4739 = vld [vmem:[%s4730 + $0x20] sm:$0xf]
      %v4740 = vld [vmem:[%s4730 + $0x24] sm:$0xf]
      %v4741 = vld [vmem:[%s4730 + $0x28] sm:$0xf]
      %v4742 = vld [vmem:[%s4730 + $0x2c] sm:$0xf]
      %v4743 = vld [vmem:[%s4730 + $0x30] sm:$0xf]
      %v4744 = vld [vmem:[%s4730 + $0x34] sm:$0xf]
      %v4745 = vld [vmem:[%s4730 + $0x38] sm:$0xf]
      %v4746 = vld [vmem:[%s4730 + $0x3c] sm:$0xf]
      %v4747 = vunpack.c.l.b16 %v4621
      %v4748 = vunpack.c.l.b16 %v4624
      %v4749 = vunpack.c.l.b16 %v4628
      %v4750 = vunpack.c.l.b16 %v4631
      %v4751 = vunpack.c.l.b16 %v4635
      %v4752 = vunpack.c.l.b16 %v4638
      %v4753 = vunpack.c.l.b16 %v4642
      %v4754 = vunpack.c.l.b16 %v4645
      %v4755 = vunpack.c.l.b16 %v4649
      %v4756 = vunpack.c.l.b16 %v4652
      %v4757 = vunpack.c.l.b16 %v4656
      %v4758 = vunpack.c.l.b16 %v4659
      %v4759 = vunpack.c.l.b16 %v4663
      %v4760 = vunpack.c.l.b16 %v4666
      %v4761 = vunpack.c.l.b16 %v4670
      %v4762 = vunpack.c.l.b16 %v4673
      %v4763 = vunpack.c.l.b16 %v4677
      %v4764 = vunpack.c.l.b16 %v4680
      %v4765 = vunpack.c.l.b16 %v4684
      %v4766 = vunpack.c.l.b16 %v4687
      %v4767 = vunpack.c.l.b16 %v4691
      %v4768 = vunpack.c.l.b16 %v4694
      %v4769 = vunpack.c.l.b16 %v4698
      %v4770 = vunpack.c.l.b16 %v4701
      %v4771 = vunpack.c.l.b16 %v4705
      %v4772 = vunpack.c.l.b16 %v4708
      %v4773 = vunpack.c.l.b16 %v4712
      %v4774 = vunpack.c.l.b16 %v4715
      %v4775 = vunpack.c.l.b16 %v4719
      %v4776 = vunpack.c.l.b16 %v4722
      %v4777 = vunpack.c.l.b16 %v4726
      %v4778 = vunpack.c.l.b16 %v4729
      %v4779 = vpack.c.b16 %v4748, %v4747
      %v4780 = vpack.c.b16 %v4750, %v4749
      %v4781 = vpack.c.b16 %v4752, %v4751
      %v4782 = vpack.c.b16 %v4754, %v4753
      %v4783 = vpack.c.b16 %v4756, %v4755
      %v4784 = vpack.c.b16 %v4758, %v4757
      %v4785 = vpack.c.b16 %v4760, %v4759
      %v4786 = vpack.c.b16 %v4762, %v4761
      %v4787 = vpack.c.b16 %v4764, %v4763
      %v4788 = vpack.c.b16 %v4766, %v4765
      %v4789 = vpack.c.b16 %v4768, %v4767
      %v4790 = vpack.c.b16 %v4770, %v4769
      %v4791 = vpack.c.b16 %v4772, %v4771
      %v4792 = vpack.c.b16 %v4774, %v4773
      %v4793 = vpack.c.b16 %v4776, %v4775
      %v4794 = vpack.c.b16 %v4778, %v4777
      %v4827 = vunpack.c.l.b16 %v4731
      %v4828 = vunpack.c.l.b16 %v4732
      %v4829 = vunpack.c.l.b16 %v4733
      %v4830 = vunpack.c.l.b16 %v4734
      %v4831 = vunpack.c.l.b16 %v4735
      %v4832 = vunpack.c.l.b16 %v4736
      %v4833 = vunpack.c.l.b16 %v4737
      %v4834 = vunpack.c.l.b16 %v4738
      %v4835 = vunpack.c.l.b16 %v4739
      %v4836 = vunpack.c.l.b16 %v4740
      %v4837 = vunpack.c.l.b16 %v4741
      %v4838 = vunpack.c.l.b16 %v4742
      %v4839 = vunpack.c.l.b16 %v4743
      %v4840 = vunpack.c.l.b16 %v4744
      %v4841 = vunpack.c.l.b16 %v4745
      %v4842 = vunpack.c.l.b16 %v4746
      %v4843 = vpack.c.b16 %v4828, %v4827
      %v4844 = vpack.c.b16 %v4830, %v4829
      %v4845 = vpack.c.b16 %v4832, %v4831
      %v4846 = vpack.c.b16 %v4834, %v4833
      %v4847 = vpack.c.b16 %v4836, %v4835
      %v4848 = vpack.c.b16 %v4838, %v4837
      %v4849 = vpack.c.b16 %v4840, %v4839
      %v4850 = vpack.c.b16 %v4842, %v4841
      %4859 = vmatprep.subr.bf16.mxu0 0
      %4860 = vmatpush1.bf16.msra.mxu0 %v4850
      %4861 = vmatprep.subr.bf16.mxu0 0
      %4862 = vmatpush1.bf16.msra.mxu0 %v4849
      %4863 = vmatprep.subr.bf16.mxu0 0
      %4864 = vmatpush1.bf16.msra.mxu0 %v4848
      %4865 = vmatprep.subr.bf16.mxu0 0
      %4866 = vmatpush1.bf16.msra.mxu0 %v4847
      %4867 = vmatprep.subr.bf16.mxu0 0
      %4868 = vmatpush1.bf16.msra.mxu0 %v4846
      %4869 = vmatprep.subr.bf16.mxu0 0
      %4870 = vmatpush1.bf16.msra.mxu0 %v4845
      %4871 = vmatprep.subr.bf16.mxu0 0
      %4872 = vmatpush1.bf16.msra.mxu0 %v4844
      %4873 = vmatprep.subr.bf16.mxu0 0
      %4874 = vmatpush1.bf16.msra.mxu0 %v4843
      %4875 = vmatprep.subr.bf16.mxu0 0
      %4876 = vmatpush2.bf16.msra.mxu0 0
      %4877 = vmatprep.subr.bf16.mxu0 0
      %4878 = vmatpush2.bf16.msra.mxu0 0
      %4879 = vmatprep.subr.bf16.mxu0 0
      %4880 = vmatpush2.bf16.msra.mxu0 0
      %4881 = vmatprep.subr.bf16.mxu0 0
      %4882 = vmatpush2.bf16.msra.mxu0 0
      %4883 = vmatprep.subr.bf16.mxu0 0
      %4884 = vmatpush2.bf16.msra.mxu0 0
      %4885 = vmatprep.subr.bf16.mxu0 0
      %4886 = vmatpush2.bf16.msra.mxu0 0
      %4887 = vmatprep.subr.bf16.mxu0 0
      %4888 = vmatpush2.bf16.msra.mxu0 0
      %4889 = vmatprep.subr.bf16.mxu0 0
      %4890 = vmatpush2.bf16.msra.mxu0 0
      %4891 = vmatprep.mubr.bf16.mxu0 0
      %4892 = vmatmul.mubr.bf16.gmra.mxu0 %v4779
      %v4893 = vpop.f32.mrf.mxu0
      %v4894 = vadd.f32 0.0, %v4893
      %v4895 = vpop.f32.mrf.mxu0
      %v4896 = vpop.f32.mrf.mxu0
      %v4897 = vadd.f32 0.0, %v4896
      %v4898 = vpop.f32.mrf.mxu0
      %4899 = vmatprep.mubr.bf16.mxu0 0
      %4900 = vmatmul.mubr.bf16.gmra.mxu0 %v4780
      %v4901 = vpop.f32.mrf.mxu0
      %v4902 = vadd.f32 0.0, %v4901
      %v4903 = vpop.f32.mrf.mxu0
      %v4904 = vpop.f32.mrf.mxu0
      %v4905 = vadd.f32 0.0, %v4904
      %v4906 = vpop.f32.mrf.mxu0
      %4907 = vmatprep.mubr.bf16.mxu0 0
      %4908 = vmatmul.mubr.bf16.gmra.mxu0 %v4781
      %v4909 = vpop.f32.mrf.mxu0
      %v4910 = vadd.f32 0.0, %v4909
      %v4911 = vpop.f32.mrf.mxu0
      %v4912 = vpop.f32.mrf.mxu0
      %v4913 = vadd.f32 0.0, %v4912
      %v4914 = vpop.f32.mrf.mxu0
      %4915 = vmatprep.mubr.bf16.mxu0 0
      %4916 = vmatmul.mubr.bf16.gmra.mxu0 %v4782
      %v4917 = vpop.f32.mrf.mxu0
      %v4918 = vadd.f32 0.0, %v4917
      %v4919 = vpop.f32.mrf.mxu0
      %v4920 = vpop.f32.mrf.mxu0
      %v4921 = vadd.f32 0.0, %v4920
      %v4922 = vpop.f32.mrf.mxu0
      %4923 = vmatprep.mubr.bf16.mxu0 0
      %4924 = vmatmul.mubr.bf16.gmra.mxu0 %v4783
      %v4925 = vpop.f32.mrf.mxu0
      %v4926 = vadd.f32 0.0, %v4925
      %v4927 = vpop.f32.mrf.mxu0
      %v4928 = vpop.f32.mrf.mxu0
      %v4929 = vadd.f32 0.0, %v4928
      %v4930 = vpop.f32.mrf.mxu0
      %4931 = vmatprep.mubr.bf16.mxu0 0
      %4932 = vmatmul.mubr.bf16.gmra.mxu0 %v4784
      %v4933 = vpop.f32.mrf.mxu0
      %v4934 = vadd.f32 0.0, %v4933
      %v4935 = vpop.f32.mrf.mxu0
      %v4936 = vpop.f32.mrf.mxu0
      %v4937 = vadd.f32 0.0, %v4936
      %v4938 = vpop.f32.mrf.mxu0
      %4939 = vmatprep.mubr.bf16.mxu0 0
      %4940 = vmatmul.mubr.bf16.gmra.mxu0 %v4785
      %v4941 = vpop.f32.mrf.mxu0
      %v4942 = vadd.f32 0.0, %v4941
      %v4943 = vpop.f32.mrf.mxu0
      %v4944 = vpop.f32.mrf.mxu0
      %v4945 = vadd.f32 0.0, %v4944
      %v4946 = vpop.f32.mrf.mxu0
      %4947 = vmatprep.mubr.bf16.mxu0 0
      %4948 = vmatmul.mubr.bf16.gmra.mxu0 %v4786
      %v4949 = vpop.f32.mrf.mxu0
      %v4950 = vadd.f32 0.0, %v4949
      %v4951 = vpop.f32.mrf.mxu0
      %v4952 = vpop.f32.mrf.mxu0
      %v4953 = vadd.f32 0.0, %v4952
      %v4954 = vpop.f32.mrf.mxu0
      %4955 = vmatprep.mubr.bf16.mxu0 0
      %4956 = vmatmul.mubr.bf16.gmra.mxu0 %v4787
      %v4957 = vpop.f32.mrf.mxu0
      %v4958 = vadd.f32 0.0, %v4957
      %v4959 = vpop.f32.mrf.mxu0
      %v4960 = vpop.f32.mrf.mxu0
      %v4961 = vadd.f32 0.0, %v4960
      %v4962 = vpop.f32.mrf.mxu0
      %4963 = vmatprep.mubr.bf16.mxu0 0
      %4964 = vmatmul.mubr.bf16.gmra.mxu0 %v4788
      %v4965 = vpop.f32.mrf.mxu0
      %v4966 = vadd.f32 0.0, %v4965
      %v4967 = vpop.f32.mrf.mxu0
      %v4968 = vpop.f32.mrf.mxu0
      %v4969 = vadd.f32 0.0, %v4968
      %v4970 = vpop.f32.mrf.mxu0
      %4971 = vmatprep.mubr.bf16.mxu0 0
      %4972 = vmatmul.mubr.bf16.gmra.mxu0 %v4789
      %v4973 = vpop.f32.mrf.mxu0
      %v4974 = vadd.f32 0.0, %v4973
      %v4975 = vpop.f32.mrf.mxu0
      %v4976 = vpop.f32.mrf.mxu0
      %v4977 = vadd.f32 0.0, %v4976
      %v4978 = vpop.f32.mrf.mxu0
      %4979 = vmatprep.mubr.bf16.mxu0 0
      %4980 = vmatmul.mubr.bf16.gmra.mxu0 %v4790
      %v4981 = vpop.f32.mrf.mxu0
      %v4982 = vadd.f32 0.0, %v4981
      %v4983 = vpop.f32.mrf.mxu0
      %v4984 = vpop.f32.mrf.mxu0
      %v4985 = vadd.f32 0.0, %v4984
      %v4986 = vpop.f32.mrf.mxu0
      %4987 = vmatprep.mubr.bf16.mxu0 0
      %4988 = vmatmul.mubr.bf16.gmra.mxu0 %v4791
      %v4989 = vpop.f32.mrf.mxu0
      %v4990 = vadd.f32 0.0, %v4989
      %v4991 = vpop.f32.mrf.mxu0
      %v4992 = vpop.f32.mrf.mxu0
      %v4993 = vadd.f32 0.0, %v4992
      %v4994 = vpop.f32.mrf.mxu0
      %4995 = vmatprep.mubr.bf16.mxu0 0
      %4996 = vmatmul.mubr.bf16.gmra.mxu0 %v4792
      %v4997 = vpop.f32.mrf.mxu0
      %v4998 = vadd.f32 0.0, %v4997
      %v4999 = vpop.f32.mrf.mxu0
      %v5000 = vpop.f32.mrf.mxu0
      %v5001 = vadd.f32 0.0, %v5000
      %v5002 = vpop.f32.mrf.mxu0
      %5003 = vmatprep.mubr.bf16.mxu0 0
      %5004 = vmatmul.mubr.bf16.gmra.mxu0 %v4793
      %v5005 = vpop.f32.mrf.mxu0
      %v5006 = vadd.f32 0.0, %v5005
      %v5007 = vpop.f32.mrf.mxu0
      %v5008 = vpop.f32.mrf.mxu0
      %v5009 = vadd.f32 0.0, %v5008
      %v5010 = vpop.f32.mrf.mxu0
      %5011 = vmatprep.mubr.bf16.mxu0 0
      %5012 = vmatmul.mubr.bf16.gmra.mxu0 %v4794
      %v5013 = vpop.f32.mrf.mxu0
      %v5014 = vadd.f32 0.0, %v5013
      %v5015 = vpop.f32.mrf.mxu0
      %v5016 = vpop.f32.mrf.mxu0
      %v5017 = vadd.f32 0.0, %v5016
      %v5018 = vpop.f32.mrf.mxu0
      %5019 = vdwg.mxu0
      %v5020 = vadd.f32 %v4522, %v4894
      %v5021 = vadd.f32 %v4523, %v4897
      %v5022 = vadd.f32 %v4524, %v4902
      %v5023 = vadd.f32 %v4525, %v4905
      %v5024 = vadd.f32 %v4526, %v4910
      %v5025 = vadd.f32 %v4527, %v4913
      %v5026 = vadd.f32 %v4528, %v4918
      %v5027 = vadd.f32 %v4529, %v4921
      %v5028 = vadd.f32 %v4530, %v4926
      %v5029 = vadd.f32 %v4531, %v4929
      %v5030 = vadd.f32 %v4532, %v4934
      %v5031 = vadd.f32 %v4533, %v4937
      %v5032 = vadd.f32 %v4534, %v4942
      %v5033 = vadd.f32 %v4535, %v4945
      %v5034 = vadd.f32 %v4536, %v4950
      %v5035 = vadd.f32 %v4537, %v4953
      %v5036 = vadd.f32 %v4538, %v4958
      %v5037 = vadd.f32 %v4539, %v4961
      %v5038 = vadd.f32 %v4540, %v4966
      %v5039 = vadd.f32 %v4541, %v4969
      %v5040 = vadd.f32 %v4542, %v4974
      %v5041 = vadd.f32 %v4543, %v4977
      %v5042 = vadd.f32 %v4544, %v4982
      %v5043 = vadd.f32 %v4545, %v4985
      %v5044 = vadd.f32 %v4546, %v4990
      %v5045 = vadd.f32 %v4547, %v4993
      %v5046 = vadd.f32 %v4548, %v4998
      %v5047 = vadd.f32 %v4549, %v5001
      %v5048 = vadd.f32 %v4550, %v5006
      %v5049 = vadd.f32 %v4551, %v5009
      %v5050 = vadd.f32 %v4552, %v5014
      %v5051 = vadd.f32 %v4553, %v5017
      %v5052 = vld [vmem:[%s2] sm:$0x1]
      %v5054 = vlaneseq
      %v5055 = vshrl.u32 %v5054, 7
      %v5056 = vsub.s32 0, %v5055
      %v5057 = vrot.slane %v5052, %v5056
      %v5059 = vadd.f32 %v5020, %v5057
      %v5060 = vadd.f32 %v5021, %v5057
      %v5061 = vadd.f32 %v5022, %v5057
      %v5062 = vadd.f32 %v5023, %v5057
      %v5063 = vadd.f32 %v5024, %v5057
      %v5064 = vadd.f32 %v5025, %v5057
      %v5065 = vadd.f32 %v5026, %v5057
      %v5066 = vadd.f32 %v5027, %v5057
      %v5067 = vadd.f32 %v5028, %v5057
      %v5068 = vadd.f32 %v5029, %v5057
      %v5069 = vadd.f32 %v5030, %v5057
      %v5070 = vadd.f32 %v5031, %v5057
      %v5071 = vadd.f32 %v5032, %v5057
      %v5072 = vadd.f32 %v5033, %v5057
      %v5073 = vadd.f32 %v5034, %v5057
      %v5074 = vadd.f32 %v5035, %v5057
      %v5075 = vadd.f32 %v5036, %v5057
      %v5076 = vadd.f32 %v5037, %v5057
      %v5077 = vadd.f32 %v5038, %v5057
      %v5078 = vadd.f32 %v5039, %v5057
      %v5079 = vadd.f32 %v5040, %v5057
      %v5080 = vadd.f32 %v5041, %v5057
      %v5081 = vadd.f32 %v5042, %v5057
      %v5082 = vadd.f32 %v5043, %v5057
      %v5083 = vadd.f32 %v5044, %v5057
      %v5084 = vadd.f32 %v5045, %v5057
      %v5085 = vadd.f32 %v5046, %v5057
      %v5086 = vadd.f32 %v5047, %v5057
      %v5087 = vadd.f32 %v5048, %v5057
      %v5088 = vadd.f32 %v5049, %v5057
      %v5089 = vadd.f32 %v5050, %v5057
      %v5090 = vadd.f32 %v5051, %v5057
      %5091 = vst [vmem:[%s235] sm:$0xff] %v5059
      %5092 = vst [vmem:[%s235 + $0x8] sm:$0xff] %v5060
      %5093 = vst [vmem:[%s235 + $0x10] sm:$0xff] %v5061
      %5094 = vst [vmem:[%s235 + $0x18] sm:$0xff] %v5062
      %5095 = vst [vmem:[%s235 + $0x20] sm:$0xff] %v5063
      %5096 = vst [vmem:[%s235 + $0x28] sm:$0xff] %v5064
      %5097 = vst [vmem:[%s235 + $0x30] sm:$0xff] %v5065
      %5098 = vst [vmem:[%s235 + $0x38] sm:$0xff] %v5066
      %5099 = vst [vmem:[%s235 + $0x40] sm:$0xff] %v5067
      %5100 = vst [vmem:[%s235 + $0x48] sm:$0xff] %v5068
      %5101 = vst [vmem:[%s235 + $0x50] sm:$0xff] %v5069
      %5102 = vst [vmem:[%s235 + $0x58] sm:$0xff] %v5070
      %5103 = vst [vmem:[%s235 + $0x60] sm:$0xff] %v5071
      %5104 = vst [vmem:[%s235 + $0x68] sm:$0xff] %v5072
      %5105 = vst [vmem:[%s235 + $0x70] sm:$0xff] %v5073
      %5106 = vst [vmem:[%s235 + $0x78] sm:$0xff] %v5074
      %5107 = vst [vmem:[%s235 + $0x80] sm:$0xff] %v5075
      %5108 = vst [vmem:[%s235 + $0x88] sm:$0xff] %v5076
      %5109 = vst [vmem:[%s235 + $0x90] sm:$0xff] %v5077
      %5110 = vst [vmem:[%s235 + $0x98] sm:$0xff] %v5078
      %5111 = vst [vmem:[%s235 + $0xa0] sm:$0xff] %v5079
      %5112 = vst [vmem:[%s235 + $0xa8] sm:$0xff] %v5080
      %5113 = vst [vmem:[%s235 + $0xb0] sm:$0xff] %v5081
      %5114 = vst [vmem:[%s235 + $0xb8] sm:$0xff] %v5082
      %5115 = vst [vmem:[%s235 + $0xc0] sm:$0xff] %v5083
      %5116 = vst [vmem:[%s235 + $0xc8] sm:$0xff] %v5084
      %5117 = vst [vmem:[%s235 + $0xd0] sm:$0xff] %v5085
      %5118 = vst [vmem:[%s235 + $0xd8] sm:$0xff] %v5086
      %5119 = vst [vmem:[%s235 + $0xe0] sm:$0xff] %v5087
      %5120 = vst [vmem:[%s235 + $0xe8] sm:$0xff] %v5088
      %5121 = vst [vmem:[%s235 + $0xf0] sm:$0xff] %v5089
      %5122 = vst [vmem:[%s235 + $0xf8] sm:$0xff] %v5090
      %v5123 = vadd.f32 %v5059, %v5060
      %v5124 = vadd.f32 %v5123, %v5061
      %v5125 = vadd.f32 %v5124, %v5062
      %v5126 = vadd.f32 %v5125, %v5063
      %v5127 = vadd.f32 %v5126, %v5064
      %v5128 = vadd.f32 %v5127, %v5065
      %v5129 = vadd.f32 %v5128, %v5066
      %v5130 = vadd.f32 %v5129, %v5067
      %v5131 = vadd.f32 %v5130, %v5068
      %v5132 = vadd.f32 %v5131, %v5069
      %v5133 = vadd.f32 %v5132, %v5070
      %v5134 = vadd.f32 %v5133, %v5071
      %v5135 = vadd.f32 %v5134, %v5072
      %v5136 = vadd.f32 %v5135, %v5073
      %v5137 = vadd.f32 %v5136, %v5074
      %v5138 = vadd.f32 %v5137, %v5075
      %v5139 = vadd.f32 %v5138, %v5076
      %v5140 = vadd.f32 %v5139, %v5077
      %v5141 = vadd.f32 %v5140, %v5078
      %v5142 = vadd.f32 %v5141, %v5079
      %v5143 = vadd.f32 %v5142, %v5080
      %v5144 = vadd.f32 %v5143, %v5081
      %v5145 = vadd.f32 %v5144, %v5082
      %v5146 = vadd.f32 %v5145, %v5083
      %v5147 = vadd.f32 %v5146, %v5084
      %v5148 = vadd.f32 %v5147, %v5085
      %v5149 = vadd.f32 %v5148, %v5086
      %v5150 = vadd.f32 %v5149, %v5087
      %v5151 = vadd.f32 %v5150, %v5088
      %v5152 = vadd.f32 %v5151, %v5089
      %v5153 = vadd.f32 %v5152, %v5090
      %v5154 = vrot.slane %v5153, 4
      %v5155 = vadd.f32 %v5153, %v5154
      %v5156 = vrot.slane %v5155, 2
      %v5157 = vadd.f32 %v5155, %v5156
      %v5158 = vrot.slane %v5157, 1
      %v5159 = vadd.f32 %v5157, %v5158
      %5160 = vst [vmem:[%s238] sm:$0x1] %v5159
      %v5161 = vmul.f32 %v5059, %v5059
      %v5162 = vmul.f32 %v5060, %v5060
      %v5163 = vmul.f32 %v5061, %v5061
      %v5164 = vmul.f32 %v5062, %v5062
      %v5165 = vmul.f32 %v5063, %v5063
      %v5166 = vmul.f32 %v5064, %v5064
      %v5167 = vmul.f32 %v5065, %v5065
      %v5168 = vmul.f32 %v5066, %v5066
      %v5169 = vmul.f32 %v5067, %v5067
      %v5170 = vmul.f32 %v5068, %v5068
      %v5171 = vmul.f32 %v5069, %v5069
      %v5172 = vmul.f32 %v5070, %v5070
      %v5173 = vmul.f32 %v5071, %v5071
      %v5174 = vmul.f32 %v5072, %v5072
      %v5175 = vmul.f32 %v5073, %v5073
      %v5176 = vmul.f32 %v5074, %v5074
      %v5177 = vmul.f32 %v5075, %v5075
      %v5178 = vmul.f32 %v5076, %v5076
      %v5179 = vmul.f32 %v5077, %v5077
      %v5180 = vmul.f32 %v5078, %v5078
      %v5181 = vmul.f32 %v5079, %v5079
      %v5182 = vmul.f32 %v5080, %v5080
      %v5183 = vmul.f32 %v5081, %v5081
      %v5184 = vmul.f32 %v5082, %v5082
      %v5185 = vmul.f32 %v5083, %v5083
      %v5186 = vmul.f32 %v5084, %v5084
      %v5187 = vmul.f32 %v5085, %v5085
      %v5188 = vmul.f32 %v5086, %v5086
      %v5189 = vmul.f32 %v5087, %v5087
      %v5190 = vmul.f32 %v5088, %v5088
      %v5191 = vmul.f32 %v5089, %v5089
      %v5192 = vmul.f32 %v5090, %v5090
      %v5193 = vadd.f32 %v5161, %v5162
      %v5194 = vadd.f32 %v5193, %v5163
      %v5195 = vadd.f32 %v5194, %v5164
      %v5196 = vadd.f32 %v5195, %v5165
      %v5197 = vadd.f32 %v5196, %v5166
      %v5198 = vadd.f32 %v5197, %v5167
      %v5199 = vadd.f32 %v5198, %v5168
      %v5200 = vadd.f32 %v5199, %v5169
      %v5201 = vadd.f32 %v5200, %v5170
      %v5202 = vadd.f32 %v5201, %v5171
      %v5203 = vadd.f32 %v5202, %v5172
      %v5204 = vadd.f32 %v5203, %v5173
      %v5205 = vadd.f32 %v5204, %v5174
      %v5206 = vadd.f32 %v5205, %v5175
      %v5207 = vadd.f32 %v5206, %v5176
      %v5208 = vadd.f32 %v5207, %v5177
      %v5209 = vadd.f32 %v5208, %v5178
      %v5210 = vadd.f32 %v5209, %v5179
      %v5211 = vadd.f32 %v5210, %v5180
      %v5212 = vadd.f32 %v5211, %v5181
      %v5213 = vadd.f32 %v5212, %v5182
      %v5214 = vadd.f32 %v5213, %v5183
      %v5215 = vadd.f32 %v5214, %v5184
      %v5216 = vadd.f32 %v5215, %v5185
      %v5217 = vadd.f32 %v5216, %v5186
      %v5218 = vadd.f32 %v5217, %v5187
      %v5219 = vadd.f32 %v5218, %v5188
      %v5220 = vadd.f32 %v5219, %v5189
      %v5221 = vadd.f32 %v5220, %v5190
      %v5222 = vadd.f32 %v5221, %v5191
      %v5223 = vadd.f32 %v5222, %v5192
      %v5224 = vrot.slane %v5223, 4
      %v5225 = vadd.f32 %v5223, %v5224
      %v5226 = vrot.slane %v5225, 2
      %v5227 = vadd.f32 %v5225, %v5226
      %v5228 = vrot.slane %v5227, 1
      %v5229 = vadd.f32 %v5227, %v5228
      %5230 = vst [vmem:[%s241] sm:$0x1] %v5229
      %p5231 = scmp.lt.s32.totalorder %s17, 1
      %s5232 = scalar_select %p5231, %s17, 1
      %s5233 = smul.addr %s5232, 32
      %s5234 = smul.addr %s5233, 8
      %s5235 = scalar_lea.vmem %s3, %s5234
      %p5236 = scmp.lt.s32.totalorder %s17, 1
      %s5237 = scalar_select %p5236, %s17, 1
      %s5238 = scalar_lea.vmem %s4, %s5237
      %p5239 = scmp.lt.s32.totalorder %s17, 1
      %s5240 = scalar_select %p5239, %s17, 1
      %s5241 = scalar_lea.vmem %s5, %s5240
      // Predicated region
      $region33: #{block_forward.3} parent=31 // pred_check
        %p5242 = pneg %p103
      $region34: #{block_forward.3} parent=31 // pred_check_branch
        %5244 = sbr.rel (%p5242) target = $region36
      $region35: #{block_forward.3} parent=31 // pred_region
        _
      $region36: #{block_forward.3} parent=31 // pred_fallthru
        _
      // Predicated region
      $region37: #{block_forward.3} parent=31 // pred_check
        %p5245 = pneg %p129
      $region38: #{block_forward.3} parent=31 // pred_check_branch
        %5247 = sbr.rel (%p5245) target = $region40
      $region39: #{block_forward.3} parent=31 // pred_region
        _
      $region40: #{block_forward.3} parent=31 // pred_fallthru
        _
      // Predicated region
      $region41: #{block_forward.3} parent=31 // pred_check
        %p5248 = pneg %p155
      $region42: #{block_forward.3} parent=31 // pred_check_branch
        %5250 = sbr.rel (%p5248) target = $region44
      $region43: #{block_forward.3} parent=31 // pred_region
        _
      $region44: #{block_forward.3} parent=31 // pred_fallthru
        _
    $region32: #{block_forward.3} parent=5 // pred_fallthru
      _
    %p5251 = scmp.le.s32.totalorder 2, %s12
    // Predicated region
    $region45: #{block_forward.3} parent=5 // pred_check
      %p5252 = pneg %p5251
    $region46: #{block_forward.3} parent=5 // pred_check_branch
      %5254 = sbr.rel (%p5252) target = $region48
    $region47: #{block_forward.3} parent=5 // pred_region
      %s5255 = ssub.s32 %s12, 2
      // Predicated region
      $region49: #{block_forward.3} parent=47 // pred_check
        %p5256 = pneg %p109
      $region50: #{block_forward.3} parent=47 // pred_check_branch
        %5258 = sbr.rel (%p5256) target = $region52
      $region51: #{block_forward.3} parent=47 // pred_region
        %p5259 = scmp.lt.s32.totalorder %s18, 1
        %s5260 = scalar_select %p5259, %s18, 1
        %s5261 = smul.addr %s5260, 32
        %s5262 = smul.addr %s5261, 8
        %s5263 = scalar_lea.vmem %s3, %s5262
      $region52: #{block_forward.3} parent=47 // pred_fallthru
        _
      // Predicated region
      $region53: #{block_forward.3} parent=47 // pred_check
        %p5264 = pneg %p135
      $region54: #{block_forward.3} parent=47 // pred_check_branch
        %5266 = sbr.rel (%p5264) target = $region56
      $region55: #{block_forward.3} parent=47 // pred_region
        %p5267 = scmp.lt.s32.totalorder %s18, 1
        %s5268 = scalar_select %p5267, %s18, 1
        %s5269 = scalar_lea.vmem %s4, %s5268
      $region56: #{block_forward.3} parent=47 // pred_fallthru
        _
      // Predicated region
      $region57: #{block_forward.3} parent=47 // pred_check
        %p5270 = pneg %p161
      $region58: #{block_forward.3} parent=47 // pred_check_branch
        %5272 = sbr.rel (%p5270) target = $region60
      $region59: #{block_forward.3} parent=47 // pred_region
        %p5273 = scmp.lt.s32.totalorder %s18, 1
        %s5274 = scalar_select %p5273, %s18, 1
        %s5275 = scalar_lea.vmem %s5, %s5274
      $region60: #{block_forward.3} parent=47 // pred_fallthru
        _
    $region48: #{block_forward.3} parent=5 // pred_fallthru
      _
  $region6: #{block_forward.3} parent=0 // loop_footer
    %s16 = sadd.s32 1, %s12
  $region7: #{block_forward.3} parent=0 // loop_footer_branch
    %11 = sbr.rel target = $region3
  $region8: #{block_forward.3} parent=0 // loop_exit
    _

</llo_original>
